<compile_context>
chip_gen: v6e
topology: v6e:2x2x1
jax: 0.10.0
libtpu: 0.0.40
codegen_flags: <defaults>
</compile_context>

<pallas_src>
import numpy as np
import jax
import jax.numpy as jnp
from jax import lax
from jax.experimental import pallas as pl
from jax.experimental.pallas import tpu as pltpu

BN_EPS = 1e-5
NEG_SLOPE = 0.2
LAYER_CFGS = [(4, 2, 1), (4, 2, 1), (4, 2, 1), (3, 1, 0)]   # (kernel, stride, pad)


# ----------------------------------------------------------------------------
# In-kernel helpers (f32 BN / activation, bf16 MXU inputs)
# ----------------------------------------------------------------------------
def _bn_lrelu(y, g, b):
    """BatchNorm2d (training-mode biased batch stats over M) + LeakyReLU(0.2), f32."""
    inv_m = 1.0 / y.shape[1]
    mean = jnp.sum(y, axis=1, keepdims=True) * inv_m          # [Cout, 1]
    d = y - mean
    var = jnp.sum(d * d, axis=1, keepdims=True) * inv_m       # two-pass: no cancellation
    z = g * lax.rsqrt(var + BN_EPS) * d + b
    return jnp.where(z >= 0, z, NEG_SLOPE * z)


def _conv_taps(act_bf16, w_taps_ref, g_taps_ref):
    """One conv layer as a sum over kh*kw taps, built only from 2-D MXU matmuls.

    act_bf16   : [Cin, M_in]      bf16  channel-major, lane-dense activations
    w_taps_ref : [T, Cout, Cin]   bf16  per-tap weight matrices
    g_taps_ref : [T, M_in, M_out] bf16  constant 0/1 gather matrices (strided/padded
                                        im2col window of each tap; pad cols are zero)
    returns    : [Cout, M_out]    f32
    """
    n_taps, cout, _ = w_taps_ref.shape
    m_out = g_taps_ref.shape[2]
    acc = jnp.zeros((cout, m_out), jnp.float32)
    for t in range(n_taps):                                   # static, fully unrolled
        # MXU gather: each column of G has at most a single 1, so the f32 result is
        # exactly one bf16 activation value (or 0) -> the bf16 cast is exact.
        gathered = jnp.dot(act_bf16, g_taps_ref[t],
                           preferred_element_type=jnp.float32).astype(jnp.bfloat16)
        acc = acc + jnp.dot(w_taps_ref[t], gathered,
                            preferred_element_type=jnp.float32)
    return acc


def discriminator_kernel(p1_ref, w1_ref, g1_ref, b1_ref,
                         w2_ref, G2_ref, g2_ref, b2_ref,
                         w3_ref, G3_ref, g3_ref, b3_ref,
                         w4_ref, G4_ref, g4_ref, b4_ref,
                         wp_ref, o_ref):
    # ---- block 1: conv on wrapper-provided im2col patches, then BN + LeakyReLU
    y1 = jnp.dot(w1_ref[...], p1_ref[...], preferred_element_type=jnp.float32)
    a1 = _bn_lrelu(y1, g1_ref[...], b1_ref[...]).astype(jnp.bfloat16)       # [C1, M1]
    # ---- blocks 2..4: in-kernel window extraction via 0/1 gather matmuls
    a2 = _bn_lrelu(_conv_taps(a1, w2_ref, G2_ref),
                   g2_ref[...], b2_ref[...]).astype(jnp.bfloat16)            # [C2, M2]
    a3 = _bn_lrelu(_conv_taps(a2, w3_ref, G3_ref),
                   g3_ref[...], b3_ref[...]).astype(jnp.bfloat16)            # [C3, M3]
    h4 = _bn_lrelu(_conv_taps(a3, w4_ref, G4_ref), g4_ref[...], b4_ref[...])  # f32 [C4, M4]
    # ---- predict: 1x1 conv as an MXU dot + exact sigmoid
    logits = jnp.dot(wp_ref[...], h4, preferred_element_type=jnp.float32)     # [1, M4]
    o_ref[...] = 1.0 / (1.0 + jnp.exp(-logits))


# ----------------------------------------------------------------------------
# Single pallas_call wrapper: no grid, whole-array VMEM blocks (~2.3 MB total)
# ----------------------------------------------------------------------------
def discriminator_pallas(patches1, p):
    args = (patches1, p["w1"], p["g1"], p["b1"],
            p["w2"], p["G2"], p["g2"], p["b2"],
            p["w3"], p["G3"], p["g3"], p["b3"],
            p["w4"], p["G4"], p["g4"], p["b4"],
            p["wp"])
    return pl.pallas_call(
        discriminator_kernel,
        out_shape=jax.ShapeDtypeStruct((1, p["G4"].shape[2]), jnp.float32),
        in_specs=[pl.BlockSpec(memory_space=pltpu.MemorySpace.VMEM) for _ in args],
        out_specs=pl.BlockSpec(memory_space=pltpu.MemorySpace.VMEM),
    )(*args)


# ----------------------------------------------------------------------------
# Plain-JAX glue (inside the same jit): im2col for block 1 only
# ----------------------------------------------------------------------------
def im2col_cnhw(x_cnhw, kh, kw, stride, pad):
    # x: [C, N, H, W] -> patches [K=kh*kw*C, M=N*Ho*Wo]  (M is the lane-dense axis)
    C, N, H, W = x_cnhw.shape
    xp = jnp.pad(x_cnhw, ((0, 0), (0, 0), (pad, pad), (pad, pad)))
    Ho = (H + 2 * pad - kh) // stride + 1
    Wo = (W + 2 * pad - kw) // stride + 1
    cols = []
    for i in range(kh):
        for j in range(kw):
            cols.append(xp[:, :, i:i + stride * Ho:stride, j:j + stride * Wo:stride])
    patches = jnp.stack(cols, axis=0)                    # [kh*kw, C, N, Ho, Wo]
    return patches.reshape(kh * kw * C, N * Ho * Wo), Ho, Wo


@jax.jit
def discriminator_forward(x_nchw, prep):
    k, s, pad = LAYER_CFGS[0]
    x = jnp.transpose(x_nchw, (1, 0, 2, 3))              # NCHW -> CNHW (channel-first)
    patches1, _, _ = im2col_cnhw(x, k, k, s, pad)        # [K1, M1], single XLA fusion
    out = discriminator_pallas(patches1.astype(jnp.bfloat16), prep)   # [1, N*H4*W4]
    N, _, H, W = x_nchw.shape
    for (kk, ss, pp) in LAYER_CFGS:
        H = (H + 2 * pp - kk) // ss + 1
        W = (W + 2 * pp - kk) // ss + 1
    return jnp.squeeze(out.reshape(N, 1, H, W))          # matches PyTorch .squeeze()


# ----------------------------------------------------------------------------
# One-time parameter packing (OUTSIDE the jitted hot path)
# ----------------------------------------------------------------------------
def build_gather_mats(N, H, W, k, stride, pad):
    """Per-tap [N*H*W, N*Ho*Wo] 0/1 matrices implementing the im2col window gather."""
    Ho = (H + 2 * pad - k) // stride + 1
    Wo = (W + 2 * pad - k) // stride + 1
    mats = np.zeros((k * k, N * H * W, N * Ho * Wo), np.float32)
    for i in range(k):
        for j in range(k):
            G = mats[i * k + j]
            for n in range(N):
                for ho in range(Ho):
                    h = stride * ho + i - pad
                    if not (0 <= h < H):
                        continue
                    for wo in range(Wo):
                        w = stride * wo + j - pad
                        if 0 <= w < W:
                            G[(n * H + h) * W + w, (n * Ho + ho) * Wo + wo] = 1.0
    return mats, Ho, Wo


def prepare_params(block_params, predict_w, batch, height, width):
    """Repack weights into kernel layout (bf16 matrices / per-tap matrices), build the
    bf16 0/1 gather matrices, and reshape gamma/beta/predict.  Called once."""
    p = {}
    H, W = height, width
    for li, (w, gamma, beta) in enumerate(block_params):
        k, s, pad = LAYER_CFGS[li]
        w = np.asarray(w, np.float32)
        cout, cin = w.shape[0], w.shape[1]
        if li == 0:
            # [Cout, Cin, KH, KW] -> [Cout, KH*KW*Cin]; K ordered (kh, kw, cin)
            p["w1"] = jnp.asarray(
                np.transpose(w, (0, 2, 3, 1)).reshape(cout, k * k * cin), jnp.bfloat16)
        else:
            # per-tap weight matrices [T, Cout, Cin] + gather matrices for this layer
            p[f"w{li + 1}"] = jnp.asarray(
                np.transpose(w, (2, 3, 0, 1)).reshape(k * k, cout, cin), jnp.bfloat16)
            G, _, _ = build_gather_mats(batch, H, W, k, s, pad)
            p[f"G{li + 1}"] = jnp.asarray(G, jnp.bfloat16)
        p[f"g{li + 1}"] = jnp.asarray(np.asarray(gamma, np.float32).reshape(-1, 1))
        p[f"b{li + 1}"] = jnp.asarray(np.asarray(beta, np.float32).reshape(-1, 1))
        H = (H + 2 * pad - k) // s + 1
        W = (W + 2 * pad - k) // s + 1
    p["wp"] = jnp.asarray(np.asarray(predict_w, np.float32).reshape(1, -1))
    return p


# ----------------------------------------------------------------------------
# Pure-JAX reference (lax.conv) for a correctness sanity check
# ----------------------------------------------------------------------------
def discriminator_reference(x_nchw, block_params, predict_w):
    x = x_nchw
    dn = ("NCHW", "OIHW", "NCHW")
    for li, (w, gamma, beta) in enumerate(block_params):
        k, s, p = LAYER_CFGS[li]
        y = lax.conv_general_dilated(x, w, (s, s), [(p, p), (p, p)],
                                     dimension_numbers=dn)
        mean = jnp.mean(y, axis=(0, 2, 3), keepdims=True)
        var = jnp.mean((y - mean) ** 2, axis=(0, 2, 3), keepdims=True)
        y = gamma.reshape(1, -1, 1, 1) * (y - mean) * lax.rsqrt(var + BN_EPS) \
            + beta.reshape(1, -1, 1, 1)
        x = jnp.where(y >= 0, y, NEG_SLOPE * y)
    y = lax.conv_general_dilated(x, predict_w, (1, 1), [(0, 0), (0, 0)],
                                 dimension_numbers=dn)
    return jnp.squeeze(jax.nn.sigmoid(y))


# ----------------------------------------------------------------------------
# Deterministic parameter construction
# ----------------------------------------------------------------------------
def make_params(in_channels, base_channel, key):
    rates = [1, 2, 4, 8]
    cins = [in_channels] + [base_channel * r for r in rates[:-1]]
    couts = [base_channel * r for r in rates]
    blocks = []
    for cin, cout, (k, s, p) in zip(cins, couts, LAYER_CFGS):
        key, kw_, kg_, kb_ = jax.random.split(key, 4)
        w = 0.02 * jax.random.normal(kw_, (cout, cin, k, k), jnp.float32)
        gamma = 1.0 + 0.1 * jax.random.normal(kg_, (cout,), jnp.float32)
        beta = 0.1 * jax.random.normal(kb_, (cout,), jnp.float32)
        blocks.append((w, gamma, beta))
    key, kp = jax.random.split(key)
    predict_w = 0.02 * jax.random.normal(kp, (1, couts[-1], 1, 1), jnp.float32)
    return tuple(blocks), predict_w


# ----------------------------------------------------------------------------
if __name__ == "__main__":
    key = jax.random.PRNGKey(0)
    key, kx = jax.random.split(key)

    batch, in_channels, spatial, base_channel = 2, 3, 32, 8
    x = jax.random.normal(kx, (batch, in_channels, spatial, spatial), jnp.float32)
    block_params, predict_w = make_params(in_channels, base_channel, key)

    # One-time packing (outside the jitted forward): bf16 weight matrices, per-tap
    # weights, 0/1 gather matrices, gamma/beta/[1,C4] predict vector.
    prep = prepare_params(block_params, predict_w, batch, spatial, spatial)

    out = jax.block_until_ready(discriminator_forward(x, prep))
    ref = jax.block_until_ready(discriminator_reference(x, block_params, predict_w))

    assert out.shape == ref.shape, (out.shape, ref.shape)
    # Tolerance accommodates bf16 MXU activations (f32 accumulation / BN / sigmoid).
    assert np.allclose(np.asarray(out), np.asarray(ref), atol=2e-2, rtol=2e-2)

    print("KERNEL_OK")
</pallas_src>

<mosaic_0001>
module attributes {stable_mosaic.version = 11 : i64} {
  func.func @discriminator_kernel(%arg0: memref<48x512xbf16, #tpu.memory_space<vmem>>, %arg1: memref<8x48xbf16, #tpu.memory_space<vmem>>, %arg2: memref<8x1xf32, #tpu.memory_space<vmem>>, %arg3: memref<8x1xf32, #tpu.memory_space<vmem>>, %arg4: memref<16x16x8xbf16, #tpu.memory_space<vmem>>, %arg5: memref<16x512x128xbf16, #tpu.memory_space<vmem>>, %arg6: memref<16x1xf32, #tpu.memory_space<vmem>>, %arg7: memref<16x1xf32, #tpu.memory_space<vmem>>, %arg8: memref<16x32x16xbf16, #tpu.memory_space<vmem>>, %arg9: memref<16x128x32xbf16, #tpu.memory_space<vmem>>, %arg10: memref<32x1xf32, #tpu.memory_space<vmem>>, %arg11: memref<32x1xf32, #tpu.memory_space<vmem>>, %arg12: memref<9x64x32xbf16, #tpu.memory_space<vmem>>, %arg13: memref<9x32x8xbf16, #tpu.memory_space<vmem>>, %arg14: memref<64x1xf32, #tpu.memory_space<vmem>>, %arg15: memref<64x1xf32, #tpu.memory_space<vmem>>, %arg16: memref<1x64xf32, #tpu.memory_space<vmem>>, %arg17: memref<1x8xf32, #tpu.memory_space<vmem>>) attributes {dimension_semantics = [], scalar_prefetch = 0 : i64, scratch_operands = 0 : i64, tpu.core_type = #tpu.core_type<tc>} {
    %c0 = arith.constant 0 : index
    %c0_0 = arith.constant 0 : index
    %0 = vector.load %arg1[%c0, %c0_0] : memref<8x48xbf16, #tpu.memory_space<vmem>>, vector<8x48xbf16>
    %c0_1 = arith.constant 0 : index
    %c0_2 = arith.constant 0 : index
    %1 = vector.load %arg0[%c0_1, %c0_2] : memref<48x512xbf16, #tpu.memory_space<vmem>>, vector<48x512xbf16>
    %cst = arith.constant dense<0.000000e+00> : vector<8x512xf32>
    %2 = tpu.matmul %0, %1, %cst {dimension_numbers = #tpu.dot_dimension_numbers<[1], [0], [0], [1], [0, 0, 1, 1], [], []>} : vector<8x48xbf16>, vector<48x512xbf16>, vector<8x512xf32> -> vector<8x512xf32>
    %c0_3 = arith.constant 0 : index
    %c0_4 = arith.constant 0 : index
    %3 = vector.load %arg2[%c0_3, %c0_4] : memref<8x1xf32, #tpu.memory_space<vmem>>, vector<8x1xf32>
    %c0_5 = arith.constant 0 : index
    %c0_6 = arith.constant 0 : index
    %4 = vector.load %arg3[%c0_5, %c0_6] : memref<8x1xf32, #tpu.memory_space<vmem>>, vector<8x1xf32>
    %cst_7 = arith.constant dense<0.000000e+00> : vector<8xf32>
    %5 = vector.multi_reduction <add>, %2, %cst_7 [1] : vector<8x512xf32> to vector<8xf32>
    %6 = vector.shape_cast %5 : vector<8xf32> to vector<8x1xf32>
    %cst_8 = arith.constant 0.001953125 : f32
    %7 = vector.broadcast %cst_8 : f32 to vector<8x1xf32>
    %8 = arith.mulf %6, %7 : vector<8x1xf32>
    %9 = vector.broadcast %8 : vector<8x1xf32> to vector<8x512xf32>
    %10 = arith.subf %2, %9 : vector<8x512xf32>
    %11 = arith.mulf %10, %10 : vector<8x512xf32>
    %cst_9 = arith.constant dense<0.000000e+00> : vector<8xf32>
    %12 = vector.multi_reduction <add>, %11, %cst_9 [1] : vector<8x512xf32> to vector<8xf32>
    %13 = vector.shape_cast %12 : vector<8xf32> to vector<8x1xf32>
    %cst_10 = arith.constant 0.001953125 : f32
    %14 = vector.broadcast %cst_10 : f32 to vector<8x1xf32>
    %15 = arith.mulf %13, %14 : vector<8x1xf32>
    %cst_11 = arith.constant 9.99999974E-6 : f32
    %16 = vector.broadcast %cst_11 : f32 to vector<8x1xf32>
    %17 = arith.addf %15, %16 : vector<8x1xf32>
    %18 = math.rsqrt %17 : vector<8x1xf32>
    %19 = arith.mulf %3, %18 : vector<8x1xf32>
    %20 = vector.broadcast %19 : vector<8x1xf32> to vector<8x512xf32>
    %21 = arith.mulf %20, %10 : vector<8x512xf32>
    %22 = vector.broadcast %4 : vector<8x1xf32> to vector<8x512xf32>
    %23 = arith.addf %21, %22 : vector<8x512xf32>
    %cst_12 = arith.constant 0.000000e+00 : f32
    %24 = vector.broadcast %cst_12 : f32 to vector<8x512xf32>
    %25 = arith.cmpf oge, %23, %24 : vector<8x512xf32>
    %cst_13 = arith.constant 2.000000e-01 : f32
    %26 = vector.broadcast %cst_13 : f32 to vector<8x512xf32>
    %27 = arith.mulf %26, %23 : vector<8x512xf32>
    %28 = arith.select %25, %23, %27 : vector<8x512xi1>, vector<8x512xf32>
    %29 = arith.truncf %28 : vector<8x512xf32> to vector<8x512xbf16>
    %cst_14 = arith.constant 0.000000e+00 : f32
    %30 = vector.broadcast %cst_14 : f32 to vector<16x128xf32>
    %c0_15 = arith.constant 0 : index
    %c0_16 = arith.constant 0 : index
    %c0_17 = arith.constant 0 : index
    %31 = vector.load %arg5[%c0_15, %c0_16, %c0_17] : memref<16x512x128xbf16, #tpu.memory_space<vmem>>, vector<1x512x128xbf16>
    %32 = vector.shape_cast %31 : vector<1x512x128xbf16> to vector<512x128xbf16>
    %cst_18 = arith.constant dense<0.000000e+00> : vector<8x128xf32>
    %33 = tpu.matmul %29, %32, %cst_18 {dimension_numbers = #tpu.dot_dimension_numbers<[1], [0], [0], [1], [0, 0, 1, 1], [], []>} : vector<8x512xbf16>, vector<512x128xbf16>, vector<8x128xf32> -> vector<8x128xf32>
    %34 = arith.truncf %33 : vector<8x128xf32> to vector<8x128xbf16>
    %c0_19 = arith.constant 0 : index
    %c0_20 = arith.constant 0 : index
    %c0_21 = arith.constant 0 : index
    %35 = vector.load %arg4[%c0_19, %c0_20, %c0_21] : memref<16x16x8xbf16, #tpu.memory_space<vmem>>, vector<1x16x8xbf16>
    %36 = vector.shape_cast %35 : vector<1x16x8xbf16> to vector<16x8xbf16>
    %cst_22 = arith.constant dense<0.000000e+00> : vector<16x128xf32>
    %37 = tpu.matmul %36, %34, %cst_22 {dimension_numbers = #tpu.dot_dimension_numbers<[1], [0], [0], [1], [0, 0, 1, 1], [], []>} : vector<16x8xbf16>, vector<8x128xbf16>, vector<16x128xf32> -> vector<16x128xf32>
    %38 = arith.addf %30, %37 : vector<16x128xf32>
    %c1 = arith.constant 1 : index
    %c0_23 = arith.constant 0 : index
    %c0_24 = arith.constant 0 : index
    %39 = vector.load %arg5[%c1, %c0_23, %c0_24] : memref<16x512x128xbf16, #tpu.memory_space<vmem>>, vector<1x512x128xbf16>
    %40 = vector.shape_cast %39 : vector<1x512x128xbf16> to vector<512x128xbf16>
    %cst_25 = arith.constant dense<0.000000e+00> : vector<8x128xf32>
    %41 = tpu.matmul %29, %40, %cst_25 {dimension_numbers = #tpu.dot_dimension_numbers<[1], [0], [0], [1], [0, 0, 1, 1], [], []>} : vector<8x512xbf16>, vector<512x128xbf16>, vector<8x128xf32> -> vector<8x128xf32>
    %42 = arith.truncf %41 : vector<8x128xf32> to vector<8x128xbf16>
    %c1_26 = arith.constant 1 : index
    %c0_27 = arith.constant 0 : index
    %c0_28 = arith.constant 0 : index
    %43 = vector.load %arg4[%c1_26, %c0_27, %c0_28] : memref<16x16x8xbf16, #tpu.memory_space<vmem>>, vector<1x16x8xbf16>
    %44 = vector.shape_cast %43 : vector<1x16x8xbf16> to vector<16x8xbf16>
    %cst_29 = arith.constant dense<0.000000e+00> : vector<16x128xf32>
    %45 = tpu.matmul %44, %42, %cst_29 {dimension_numbers = #tpu.dot_dimension_numbers<[1], [0], [0], [1], [0, 0, 1, 1], [], []>} : vector<16x8xbf16>, vector<8x128xbf16>, vector<16x128xf32> -> vector<16x128xf32>
    %46 = arith.addf %38, %45 : vector<16x128xf32>
    %c2 = arith.constant 2 : index
    %c0_30 = arith.constant 0 : index
    %c0_31 = arith.constant 0 : index
    %47 = vector.load %arg5[%c2, %c0_30, %c0_31] : memref<16x512x128xbf16, #tpu.memory_space<vmem>>, vector<1x512x128xbf16>
    %48 = vector.shape_cast %47 : vector<1x512x128xbf16> to vector<512x128xbf16>
    %cst_32 = arith.constant dense<0.000000e+00> : vector<8x128xf32>
    %49 = tpu.matmul %29, %48, %cst_32 {dimension_numbers = #tpu.dot_dimension_numbers<[1], [0], [0], [1], [0, 0, 1, 1], [], []>} : vector<8x512xbf16>, vector<512x128xbf16>, vector<8x128xf32> -> vector<8x128xf32>
    %50 = arith.truncf %49 : vector<8x128xf32> to vector<8x128xbf16>
    %c2_33 = arith.constant 2 : index
    %c0_34 = arith.constant 0 : index
    %c0_35 = arith.constant 0 : index
    %51 = vector.load %arg4[%c2_33, %c0_34, %c0_35] : memref<16x16x8xbf16, #tpu.memory_space<vmem>>, vector<1x16x8xbf16>
    %52 = vector.shape_cast %51 : vector<1x16x8xbf16> to vector<16x8xbf16>
    %cst_36 = arith.constant dense<0.000000e+00> : vector<16x128xf32>
    %53 = tpu.matmul %52, %50, %cst_36 {dimension_numbers = #tpu.dot_dimension_numbers<[1], [0], [0], [1], [0, 0, 1, 1], [], []>} : vector<16x8xbf16>, vector<8x128xbf16>, vector<16x128xf32> -> vector<16x128xf32>
    %54 = arith.addf %46, %53 : vector<16x128xf32>
    %c3 = arith.constant 3 : index
    %c0_37 = arith.constant 0 : index
    %c0_38 = arith.constant 0 : index
    %55 = vector.load %arg5[%c3, %c0_37, %c0_38] : memref<16x512x128xbf16, #tpu.memory_space<vmem>>, vector<1x512x128xbf16>
    %56 = vector.shape_cast %55 : vector<1x512x128xbf16> to vector<512x128xbf16>
    %cst_39 = arith.constant dense<0.000000e+00> : vector<8x128xf32>
    %57 = tpu.matmul %29, %56, %cst_39 {dimension_numbers = #tpu.dot_dimension_numbers<[1], [0], [0], [1], [0, 0, 1, 1], [], []>} : vector<8x512xbf16>, vector<512x128xbf16>, vector<8x128xf32> -> vector<8x128xf32>
    %58 = arith.truncf %57 : vector<8x128xf32> to vector<8x128xbf16>
    %c3_40 = arith.constant 3 : index
    %c0_41 = arith.constant 0 : index
    %c0_42 = arith.constant 0 : index
    %59 = vector.load %arg4[%c3_40, %c0_41, %c0_42] : memref<16x16x8xbf16, #tpu.memory_space<vmem>>, vector<1x16x8xbf16>
    %60 = vector.shape_cast %59 : vector<1x16x8xbf16> to vector<16x8xbf16>
    %cst_43 = arith.constant dense<0.000000e+00> : vector<16x128xf32>
    %61 = tpu.matmul %60, %58, %cst_43 {dimension_numbers = #tpu.dot_dimension_numbers<[1], [0], [0], [1], [0, 0, 1, 1], [], []>} : vector<16x8xbf16>, vector<8x128xbf16>, vector<16x128xf32> -> vector<16x128xf32>
    %62 = arith.addf %54, %61 : vector<16x128xf32>
    %c4 = arith.constant 4 : index
    %c0_44 = arith.constant 0 : index
    %c0_45 = arith.constant 0 : index
    %63 = vector.load %arg5[%c4, %c0_44, %c0_45] : memref<16x512x128xbf16, #tpu.memory_space<vmem>>, vector<1x512x128xbf16>
    %64 = vector.shape_cast %63 : vector<1x512x128xbf16> to vector<512x128xbf16>
    %cst_46 = arith.constant dense<0.000000e+00> : vector<8x128xf32>
    %65 = tpu.matmul %29, %64, %cst_46 {dimension_numbers = #tpu.dot_dimension_numbers<[1], [0], [0], [1], [0, 0, 1, 1], [], []>} : vector<8x512xbf16>, vector<512x128xbf16>, vector<8x128xf32> -> vector<8x128xf32>
    %66 = arith.truncf %65 : vector<8x128xf32> to vector<8x128xbf16>
    %c4_47 = arith.constant 4 : index
    %c0_48 = arith.constant 0 : index
    %c0_49 = arith.constant 0 : index
    %67 = vector.load %arg4[%c4_47, %c0_48, %c0_49] : memref<16x16x8xbf16, #tpu.memory_space<vmem>>, vector<1x16x8xbf16>
    %68 = vector.shape_cast %67 : vector<1x16x8xbf16> to vector<16x8xbf16>
    %cst_50 = arith.constant dense<0.000000e+00> : vector<16x128xf32>
    %69 = tpu.matmul %68, %66, %cst_50 {dimension_numbers = #tpu.dot_dimension_numbers<[1], [0], [0], [1], [0, 0, 1, 1], [], []>} : vector<16x8xbf16>, vector<8x128xbf16>, vector<16x128xf32> -> vector<16x128xf32>
    %70 = arith.addf %62, %69 : vector<16x128xf32>
    %c5 = arith.constant 5 : index
    %c0_51 = arith.constant 0 : index
    %c0_52 = arith.constant 0 : index
    %71 = vector.load %arg5[%c5, %c0_51, %c0_52] : memref<16x512x128xbf16, #tpu.memory_space<vmem>>, vector<1x512x128xbf16>
    %72 = vector.shape_cast %71 : vector<1x512x128xbf16> to vector<512x128xbf16>
    %cst_53 = arith.constant dense<0.000000e+00> : vector<8x128xf32>
    %73 = tpu.matmul %29, %72, %cst_53 {dimension_numbers = #tpu.dot_dimension_numbers<[1], [0], [0], [1], [0, 0, 1, 1], [], []>} : vector<8x512xbf16>, vector<512x128xbf16>, vector<8x128xf32> -> vector<8x128xf32>
    %74 = arith.truncf %73 : vector<8x128xf32> to vector<8x128xbf16>
    %c5_54 = arith.constant 5 : index
    %c0_55 = arith.constant 0 : index
    %c0_56 = arith.constant 0 : index
    %75 = vector.load %arg4[%c5_54, %c0_55, %c0_56] : memref<16x16x8xbf16, #tpu.memory_space<vmem>>, vector<1x16x8xbf16>
    %76 = vector.shape_cast %75 : vector<1x16x8xbf16> to vector<16x8xbf16>
    %cst_57 = arith.constant dense<0.000000e+00> : vector<16x128xf32>
    %77 = tpu.matmul %76, %74, %cst_57 {dimension_numbers = #tpu.dot_dimension_numbers<[1], [0], [0], [1], [0, 0, 1, 1], [], []>} : vector<16x8xbf16>, vector<8x128xbf16>, vector<16x128xf32> -> vector<16x128xf32>
    %78 = arith.addf %70, %77 : vector<16x128xf32>
    %c6 = arith.constant 6 : index
    %c0_58 = arith.constant 0 : index
    %c0_59 = arith.constant 0 : index
    %79 = vector.load %arg5[%c6, %c0_58, %c0_59] : memref<16x512x128xbf16, #tpu.memory_space<vmem>>, vector<1x512x128xbf16>
    %80 = vector.shape_cast %79 : vector<1x512x128xbf16> to vector<512x128xbf16>
    %cst_60 = arith.constant dense<0.000000e+00> : vector<8x128xf32>
    %81 = tpu.matmul %29, %80, %cst_60 {dimension_numbers = #tpu.dot_dimension_numbers<[1], [0], [0], [1], [0, 0, 1, 1], [], []>} : vector<8x512xbf16>, vector<512x128xbf16>, vector<8x128xf32> -> vector<8x128xf32>
    %82 = arith.truncf %81 : vector<8x128xf32> to vector<8x128xbf16>
    %c6_61 = arith.constant 6 : index
    %c0_62 = arith.constant 0 : index
    %c0_63 = arith.constant 0 : index
    %83 = vector.load %arg4[%c6_61, %c0_62, %c0_63] : memref<16x16x8xbf16, #tpu.memory_space<vmem>>, vector<1x16x8xbf16>
    %84 = vector.shape_cast %83 : vector<1x16x8xbf16> to vector<16x8xbf16>
    %cst_64 = arith.constant dense<0.000000e+00> : vector<16x128xf32>
    %85 = tpu.matmul %84, %82, %cst_64 {dimension_numbers = #tpu.dot_dimension_numbers<[1], [0], [0], [1], [0, 0, 1, 1], [], []>} : vector<16x8xbf16>, vector<8x128xbf16>, vector<16x128xf32> -> vector<16x128xf32>
    %86 = arith.addf %78, %85 : vector<16x128xf32>
    %c7 = arith.constant 7 : index
    %c0_65 = arith.constant 0 : index
    %c0_66 = arith.constant 0 : index
    %87 = vector.load %arg5[%c7, %c0_65, %c0_66] : memref<16x512x128xbf16, #tpu.memory_space<vmem>>, vector<1x512x128xbf16>
    %88 = vector.shape_cast %87 : vector<1x512x128xbf16> to vector<512x128xbf16>
    %cst_67 = arith.constant dense<0.000000e+00> : vector<8x128xf32>
    %89 = tpu.matmul %29, %88, %cst_67 {dimension_numbers = #tpu.dot_dimension_numbers<[1], [0], [0], [1], [0, 0, 1, 1], [], []>} : vector<8x512xbf16>, vector<512x128xbf16>, vector<8x128xf32> -> vector<8x128xf32>
    %90 = arith.truncf %89 : vector<8x128xf32> to vector<8x128xbf16>
    %c7_68 = arith.constant 7 : index
    %c0_69 = arith.constant 0 : index
    %c0_70 = arith.constant 0 : index
    %91 = vector.load %arg4[%c7_68, %c0_69, %c0_70] : memref<16x16x8xbf16, #tpu.memory_space<vmem>>, vector<1x16x8xbf16>
    %92 = vector.shape_cast %91 : vector<1x16x8xbf16> to vector<16x8xbf16>
    %cst_71 = arith.constant dense<0.000000e+00> : vector<16x128xf32>
    %93 = tpu.matmul %92, %90, %cst_71 {dimension_numbers = #tpu.dot_dimension_numbers<[1], [0], [0], [1], [0, 0, 1, 1], [], []>} : vector<16x8xbf16>, vector<8x128xbf16>, vector<16x128xf32> -> vector<16x128xf32>
    %94 = arith.addf %86, %93 : vector<16x128xf32>
    %c8 = arith.constant 8 : index
    %c0_72 = arith.constant 0 : index
    %c0_73 = arith.constant 0 : index
    %95 = vector.load %arg5[%c8, %c0_72, %c0_73] : memref<16x512x128xbf16, #tpu.memory_space<vmem>>, vector<1x512x128xbf16>
    %96 = vector.shape_cast %95 : vector<1x512x128xbf16> to vector<512x128xbf16>
    %cst_74 = arith.constant dense<0.000000e+00> : vector<8x128xf32>
    %97 = tpu.matmul %29, %96, %cst_74 {dimension_numbers = #tpu.dot_dimension_numbers<[1], [0], [0], [1], [0, 0, 1, 1], [], []>} : vector<8x512xbf16>, vector<512x128xbf16>, vector<8x128xf32> -> vector<8x128xf32>
    %98 = arith.truncf %97 : vector<8x128xf32> to vector<8x128xbf16>
    %c8_75 = arith.constant 8 : index
    %c0_76 = arith.constant 0 : index
    %c0_77 = arith.constant 0 : index
    %99 = vector.load %arg4[%c8_75, %c0_76, %c0_77] : memref<16x16x8xbf16, #tpu.memory_space<vmem>>, vector<1x16x8xbf16>
    %100 = vector.shape_cast %99 : vector<1x16x8xbf16> to vector<16x8xbf16>
    %cst_78 = arith.constant dense<0.000000e+00> : vector<16x128xf32>
    %101 = tpu.matmul %100, %98, %cst_78 {dimension_numbers = #tpu.dot_dimension_numbers<[1], [0], [0], [1], [0, 0, 1, 1], [], []>} : vector<16x8xbf16>, vector<8x128xbf16>, vector<16x128xf32> -> vector<16x128xf32>
    %102 = arith.addf %94, %101 : vector<16x128xf32>
    %c9 = arith.constant 9 : index
    %c0_79 = arith.constant 0 : index
    %c0_80 = arith.constant 0 : index
    %103 = vector.load %arg5[%c9, %c0_79, %c0_80] : memref<16x512x128xbf16, #tpu.memory_space<vmem>>, vector<1x512x128xbf16>
    %104 = vector.shape_cast %103 : vector<1x512x128xbf16> to vector<512x128xbf16>
    %cst_81 = arith.constant dense<0.000000e+00> : vector<8x128xf32>
    %105 = tpu.matmul %29, %104, %cst_81 {dimension_numbers = #tpu.dot_dimension_numbers<[1], [0], [0], [1], [0, 0, 1, 1], [], []>} : vector<8x512xbf16>, vector<512x128xbf16>, vector<8x128xf32> -> vector<8x128xf32>
    %106 = arith.truncf %105 : vector<8x128xf32> to vector<8x128xbf16>
    %c9_82 = arith.constant 9 : index
    %c0_83 = arith.constant 0 : index
    %c0_84 = arith.constant 0 : index
    %107 = vector.load %arg4[%c9_82, %c0_83, %c0_84] : memref<16x16x8xbf16, #tpu.memory_space<vmem>>, vector<1x16x8xbf16>
    %108 = vector.shape_cast %107 : vector<1x16x8xbf16> to vector<16x8xbf16>
    %cst_85 = arith.constant dense<0.000000e+00> : vector<16x128xf32>
    %109 = tpu.matmul %108, %106, %cst_85 {dimension_numbers = #tpu.dot_dimension_numbers<[1], [0], [0], [1], [0, 0, 1, 1], [], []>} : vector<16x8xbf16>, vector<8x128xbf16>, vector<16x128xf32> -> vector<16x128xf32>
    %110 = arith.addf %102, %109 : vector<16x128xf32>
    %c10 = arith.constant 10 : index
    %c0_86 = arith.constant 0 : index
    %c0_87 = arith.constant 0 : index
    %111 = vector.load %arg5[%c10, %c0_86, %c0_87] : memref<16x512x128xbf16, #tpu.memory_space<vmem>>, vector<1x512x128xbf16>
    %112 = vector.shape_cast %111 : vector<1x512x128xbf16> to vector<512x128xbf16>
    %cst_88 = arith.constant dense<0.000000e+00> : vector<8x128xf32>
    %113 = tpu.matmul %29, %112, %cst_88 {dimension_numbers = #tpu.dot_dimension_numbers<[1], [0], [0], [1], [0, 0, 1, 1], [], []>} : vector<8x512xbf16>, vector<512x128xbf16>, vector<8x128xf32> -> vector<8x128xf32>
    %114 = arith.truncf %113 : vector<8x128xf32> to vector<8x128xbf16>
    %c10_89 = arith.constant 10 : index
    %c0_90 = arith.constant 0 : index
    %c0_91 = arith.constant 0 : index
    %115 = vector.load %arg4[%c10_89, %c0_90, %c0_91] : memref<16x16x8xbf16, #tpu.memory_space<vmem>>, vector<1x16x8xbf16>
    %116 = vector.shape_cast %115 : vector<1x16x8xbf16> to vector<16x8xbf16>
    %cst_92 = arith.constant dense<0.000000e+00> : vector<16x128xf32>
    %117 = tpu.matmul %116, %114, %cst_92 {dimension_numbers = #tpu.dot_dimension_numbers<[1], [0], [0], [1], [0, 0, 1, 1], [], []>} : vector<16x8xbf16>, vector<8x128xbf16>, vector<16x128xf32> -> vector<16x128xf32>
    %118 = arith.addf %110, %117 : vector<16x128xf32>
    %c11 = arith.constant 11 : index
    %c0_93 = arith.constant 0 : index
    %c0_94 = arith.constant 0 : index
    %119 = vector.load %arg5[%c11, %c0_93, %c0_94] : memref<16x512x128xbf16, #tpu.memory_space<vmem>>, vector<1x512x128xbf16>
    %120 = vector.shape_cast %119 : vector<1x512x128xbf16> to vector<512x128xbf16>
    %cst_95 = arith.constant dense<0.000000e+00> : vector<8x128xf32>
    %121 = tpu.matmul %29, %120, %cst_95 {dimension_numbers = #tpu.dot_dimension_numbers<[1], [0], [0], [1], [0, 0, 1, 1], [], []>} : vector<8x512xbf16>, vector<512x128xbf16>, vector<8x128xf32> -> vector<8x128xf32>
    %122 = arith.truncf %121 : vector<8x128xf32> to vector<8x128xbf16>
    %c11_96 = arith.constant 11 : index
    %c0_97 = arith.constant 0 : index
    %c0_98 = arith.constant 0 : index
    %123 = vector.load %arg4[%c11_96, %c0_97, %c0_98] : memref<16x16x8xbf16, #tpu.memory_space<vmem>>, vector<1x16x8xbf16>
    %124 = vector.shape_cast %123 : vector<1x16x8xbf16> to vector<16x8xbf16>
    %cst_99 = arith.constant dense<0.000000e+00> : vector<16x128xf32>
    %125 = tpu.matmul %124, %122, %cst_99 {dimension_numbers = #tpu.dot_dimension_numbers<[1], [0], [0], [1], [0, 0, 1, 1], [], []>} : vector<16x8xbf16>, vector<8x128xbf16>, vector<16x128xf32> -> vector<16x128xf32>
    %126 = arith.addf %118, %125 : vector<16x128xf32>
    %c12 = arith.constant 12 : index
    %c0_100 = arith.constant 0 : index
    %c0_101 = arith.constant 0 : index
    %127 = vector.load %arg5[%c12, %c0_100, %c0_101] : memref<16x512x128xbf16, #tpu.memory_space<vmem>>, vector<1x512x128xbf16>
    %128 = vector.shape_cast %127 : vector<1x512x128xbf16> to vector<512x128xbf16>
    %cst_102 = arith.constant dense<0.000000e+00> : vector<8x128xf32>
    %129 = tpu.matmul %29, %128, %cst_102 {dimension_numbers = #tpu.dot_dimension_numbers<[1], [0], [0], [1], [0, 0, 1, 1], [], []>} : vector<8x512xbf16>, vector<512x128xbf16>, vector<8x128xf32> -> vector<8x128xf32>
    %130 = arith.truncf %129 : vector<8x128xf32> to vector<8x128xbf16>
    %c12_103 = arith.constant 12 : index
    %c0_104 = arith.constant 0 : index
    %c0_105 = arith.constant 0 : index
    %131 = vector.load %arg4[%c12_103, %c0_104, %c0_105] : memref<16x16x8xbf16, #tpu.memory_space<vmem>>, vector<1x16x8xbf16>
    %132 = vector.shape_cast %131 : vector<1x16x8xbf16> to vector<16x8xbf16>
    %cst_106 = arith.constant dense<0.000000e+00> : vector<16x128xf32>
    %133 = tpu.matmul %132, %130, %cst_106 {dimension_numbers = #tpu.dot_dimension_numbers<[1], [0], [0], [1], [0, 0, 1, 1], [], []>} : vector<16x8xbf16>, vector<8x128xbf16>, vector<16x128xf32> -> vector<16x128xf32>
    %134 = arith.addf %126, %133 : vector<16x128xf32>
    %c13 = arith.constant 13 : index
    %c0_107 = arith.constant 0 : index
    %c0_108 = arith.constant 0 : index
    %135 = vector.load %arg5[%c13, %c0_107, %c0_108] : memref<16x512x128xbf16, #tpu.memory_space<vmem>>, vector<1x512x128xbf16>
    %136 = vector.shape_cast %135 : vector<1x512x128xbf16> to vector<512x128xbf16>
    %cst_109 = arith.constant dense<0.000000e+00> : vector<8x128xf32>
    %137 = tpu.matmul %29, %136, %cst_109 {dimension_numbers = #tpu.dot_dimension_numbers<[1], [0], [0], [1], [0, 0, 1, 1], [], []>} : vector<8x512xbf16>, vector<512x128xbf16>, vector<8x128xf32> -> vector<8x128xf32>
    %138 = arith.truncf %137 : vector<8x128xf32> to vector<8x128xbf16>
    %c13_110 = arith.constant 13 : index
    %c0_111 = arith.constant 0 : index
    %c0_112 = arith.constant 0 : index
    %139 = vector.load %arg4[%c13_110, %c0_111, %c0_112] : memref<16x16x8xbf16, #tpu.memory_space<vmem>>, vector<1x16x8xbf16>
    %140 = vector.shape_cast %139 : vector<1x16x8xbf16> to vector<16x8xbf16>
    %cst_113 = arith.constant dense<0.000000e+00> : vector<16x128xf32>
    %141 = tpu.matmul %140, %138, %cst_113 {dimension_numbers = #tpu.dot_dimension_numbers<[1], [0], [0], [1], [0, 0, 1, 1], [], []>} : vector<16x8xbf16>, vector<8x128xbf16>, vector<16x128xf32> -> vector<16x128xf32>
    %142 = arith.addf %134, %141 : vector<16x128xf32>
    %c14 = arith.constant 14 : index
    %c0_114 = arith.constant 0 : index
    %c0_115 = arith.constant 0 : index
    %143 = vector.load %arg5[%c14, %c0_114, %c0_115] : memref<16x512x128xbf16, #tpu.memory_space<vmem>>, vector<1x512x128xbf16>
    %144 = vector.shape_cast %143 : vector<1x512x128xbf16> to vector<512x128xbf16>
    %cst_116 = arith.constant dense<0.000000e+00> : vector<8x128xf32>
    %145 = tpu.matmul %29, %144, %cst_116 {dimension_numbers = #tpu.dot_dimension_numbers<[1], [0], [0], [1], [0, 0, 1, 1], [], []>} : vector<8x512xbf16>, vector<512x128xbf16>, vector<8x128xf32> -> vector<8x128xf32>
    %146 = arith.truncf %145 : vector<8x128xf32> to vector<8x128xbf16>
    %c14_117 = arith.constant 14 : index
    %c0_118 = arith.constant 0 : index
    %c0_119 = arith.constant 0 : index
    %147 = vector.load %arg4[%c14_117, %c0_118, %c0_119] : memref<16x16x8xbf16, #tpu.memory_space<vmem>>, vector<1x16x8xbf16>
    %148 = vector.shape_cast %147 : vector<1x16x8xbf16> to vector<16x8xbf16>
    %cst_120 = arith.constant dense<0.000000e+00> : vector<16x128xf32>
    %149 = tpu.matmul %148, %146, %cst_120 {dimension_numbers = #tpu.dot_dimension_numbers<[1], [0], [0], [1], [0, 0, 1, 1], [], []>} : vector<16x8xbf16>, vector<8x128xbf16>, vector<16x128xf32> -> vector<16x128xf32>
    %150 = arith.addf %142, %149 : vector<16x128xf32>
    %c15 = arith.constant 15 : index
    %c0_121 = arith.constant 0 : index
    %c0_122 = arith.constant 0 : index
    %151 = vector.load %arg5[%c15, %c0_121, %c0_122] : memref<16x512x128xbf16, #tpu.memory_space<vmem>>, vector<1x512x128xbf16>
    %152 = vector.shape_cast %151 : vector<1x512x128xbf16> to vector<512x128xbf16>
    %cst_123 = arith.constant dense<0.000000e+00> : vector<8x128xf32>
    %153 = tpu.matmul %29, %152, %cst_123 {dimension_numbers = #tpu.dot_dimension_numbers<[1], [0], [0], [1], [0, 0, 1, 1], [], []>} : vector<8x512xbf16>, vector<512x128xbf16>, vector<8x128xf32> -> vector<8x128xf32>
    %154 = arith.truncf %153 : vector<8x128xf32> to vector<8x128xbf16>
    %c15_124 = arith.constant 15 : index
    %c0_125 = arith.constant 0 : index
    %c0_126 = arith.constant 0 : index
    %155 = vector.load %arg4[%c15_124, %c0_125, %c0_126] : memref<16x16x8xbf16, #tpu.memory_space<vmem>>, vector<1x16x8xbf16>
    %156 = vector.shape_cast %155 : vector<1x16x8xbf16> to vector<16x8xbf16>
    %cst_127 = arith.constant dense<0.000000e+00> : vector<16x128xf32>
    %157 = tpu.matmul %156, %154, %cst_127 {dimension_numbers = #tpu.dot_dimension_numbers<[1], [0], [0], [1], [0, 0, 1, 1], [], []>} : vector<16x8xbf16>, vector<8x128xbf16>, vector<16x128xf32> -> vector<16x128xf32>
    %158 = arith.addf %150, %157 : vector<16x128xf32>
    %c0_128 = arith.constant 0 : index
    %c0_129 = arith.constant 0 : index
    %159 = vector.load %arg6[%c0_128, %c0_129] : memref<16x1xf32, #tpu.memory_space<vmem>>, vector<16x1xf32>
    %c0_130 = arith.constant 0 : index
    %c0_131 = arith.constant 0 : index
    %160 = vector.load %arg7[%c0_130, %c0_131] : memref<16x1xf32, #tpu.memory_space<vmem>>, vector<16x1xf32>
    %cst_132 = arith.constant dense<0.000000e+00> : vector<16xf32>
    %161 = vector.multi_reduction <add>, %158, %cst_132 [1] : vector<16x128xf32> to vector<16xf32>
    %162 = vector.shape_cast %161 : vector<16xf32> to vector<16x1xf32>
    %cst_133 = arith.constant 7.812500e-03 : f32
    %163 = vector.broadcast %cst_133 : f32 to vector<16x1xf32>
    %164 = arith.mulf %162, %163 : vector<16x1xf32>
    %165 = vector.broadcast %164 : vector<16x1xf32> to vector<16x128xf32>
    %166 = arith.subf %158, %165 : vector<16x128xf32>
    %167 = arith.mulf %166, %166 : vector<16x128xf32>
    %cst_134 = arith.constant dense<0.000000e+00> : vector<16xf32>
    %168 = vector.multi_reduction <add>, %167, %cst_134 [1] : vector<16x128xf32> to vector<16xf32>
    %169 = vector.shape_cast %168 : vector<16xf32> to vector<16x1xf32>
    %cst_135 = arith.constant 7.812500e-03 : f32
    %170 = vector.broadcast %cst_135 : f32 to vector<16x1xf32>
    %171 = arith.mulf %169, %170 : vector<16x1xf32>
    %cst_136 = arith.constant 9.99999974E-6 : f32
    %172 = vector.broadcast %cst_136 : f32 to vector<16x1xf32>
    %173 = arith.addf %171, %172 : vector<16x1xf32>
    %174 = math.rsqrt %173 : vector<16x1xf32>
    %175 = arith.mulf %159, %174 : vector<16x1xf32>
    %176 = vector.broadcast %175 : vector<16x1xf32> to vector<16x128xf32>
    %177 = arith.mulf %176, %166 : vector<16x128xf32>
    %178 = vector.broadcast %160 : vector<16x1xf32> to vector<16x128xf32>
    %179 = arith.addf %177, %178 : vector<16x128xf32>
    %cst_137 = arith.constant 0.000000e+00 : f32
    %180 = vector.broadcast %cst_137 : f32 to vector<16x128xf32>
    %181 = arith.cmpf oge, %179, %180 : vector<16x128xf32>
    %cst_138 = arith.constant 2.000000e-01 : f32
    %182 = vector.broadcast %cst_138 : f32 to vector<16x128xf32>
    %183 = arith.mulf %182, %179 : vector<16x128xf32>
    %184 = arith.select %181, %179, %183 : vector<16x128xi1>, vector<16x128xf32>
    %185 = arith.truncf %184 : vector<16x128xf32> to vector<16x128xbf16>
    %cst_139 = arith.constant 0.000000e+00 : f32
    %186 = vector.broadcast %cst_139 : f32 to vector<32x32xf32>
    %c0_140 = arith.constant 0 : index
    %c0_141 = arith.constant 0 : index
    %c0_142 = arith.constant 0 : index
    %187 = vector.load %arg9[%c0_140, %c0_141, %c0_142] : memref<16x128x32xbf16, #tpu.memory_space<vmem>>, vector<1x128x32xbf16>
    %188 = vector.shape_cast %187 : vector<1x128x32xbf16> to vector<128x32xbf16>
    %cst_143 = arith.constant dense<0.000000e+00> : vector<16x32xf32>
    %189 = tpu.matmul %185, %188, %cst_143 {dimension_numbers = #tpu.dot_dimension_numbers<[1], [0], [0], [1], [0, 0, 1, 1], [], []>} : vector<16x128xbf16>, vector<128x32xbf16>, vector<16x32xf32> -> vector<16x32xf32>
    %190 = arith.truncf %189 : vector<16x32xf32> to vector<16x32xbf16>
    %c0_144 = arith.constant 0 : index
    %c0_145 = arith.constant 0 : index
    %c0_146 = arith.constant 0 : index
    %191 = vector.load %arg8[%c0_144, %c0_145, %c0_146] : memref<16x32x16xbf16, #tpu.memory_space<vmem>>, vector<1x32x16xbf16>
    %192 = vector.shape_cast %191 : vector<1x32x16xbf16> to vector<32x16xbf16>
    %cst_147 = arith.constant dense<0.000000e+00> : vector<32x32xf32>
    %193 = tpu.matmul %192, %190, %cst_147 {dimension_numbers = #tpu.dot_dimension_numbers<[1], [0], [0], [1], [0, 0, 1, 1], [], []>} : vector<32x16xbf16>, vector<16x32xbf16>, vector<32x32xf32> -> vector<32x32xf32>
    %194 = arith.addf %186, %193 : vector<32x32xf32>
    %c1_148 = arith.constant 1 : index
    %c0_149 = arith.constant 0 : index
    %c0_150 = arith.constant 0 : index
    %195 = vector.load %arg9[%c1_148, %c0_149, %c0_150] : memref<16x128x32xbf16, #tpu.memory_space<vmem>>, vector<1x128x32xbf16>
    %196 = vector.shape_cast %195 : vector<1x128x32xbf16> to vector<128x32xbf16>
    %cst_151 = arith.constant dense<0.000000e+00> : vector<16x32xf32>
    %197 = tpu.matmul %185, %196, %cst_151 {dimension_numbers = #tpu.dot_dimension_numbers<[1], [0], [0], [1], [0, 0, 1, 1], [], []>} : vector<16x128xbf16>, vector<128x32xbf16>, vector<16x32xf32> -> vector<16x32xf32>
    %198 = arith.truncf %197 : vector<16x32xf32> to vector<16x32xbf16>
    %c1_152 = arith.constant 1 : index
    %c0_153 = arith.constant 0 : index
    %c0_154 = arith.constant 0 : index
    %199 = vector.load %arg8[%c1_152, %c0_153, %c0_154] : memref<16x32x16xbf16, #tpu.memory_space<vmem>>, vector<1x32x16xbf16>
    %200 = vector.shape_cast %199 : vector<1x32x16xbf16> to vector<32x16xbf16>
    %cst_155 = arith.constant dense<0.000000e+00> : vector<32x32xf32>
    %201 = tpu.matmul %200, %198, %cst_155 {dimension_numbers = #tpu.dot_dimension_numbers<[1], [0], [0], [1], [0, 0, 1, 1], [], []>} : vector<32x16xbf16>, vector<16x32xbf16>, vector<32x32xf32> -> vector<32x32xf32>
    %202 = arith.addf %194, %201 : vector<32x32xf32>
    %c2_156 = arith.constant 2 : index
    %c0_157 = arith.constant 0 : index
    %c0_158 = arith.constant 0 : index
    %203 = vector.load %arg9[%c2_156, %c0_157, %c0_158] : memref<16x128x32xbf16, #tpu.memory_space<vmem>>, vector<1x128x32xbf16>
    %204 = vector.shape_cast %203 : vector<1x128x32xbf16> to vector<128x32xbf16>
    %cst_159 = arith.constant dense<0.000000e+00> : vector<16x32xf32>
    %205 = tpu.matmul %185, %204, %cst_159 {dimension_numbers = #tpu.dot_dimension_numbers<[1], [0], [0], [1], [0, 0, 1, 1], [], []>} : vector<16x128xbf16>, vector<128x32xbf16>, vector<16x32xf32> -> vector<16x32xf32>
    %206 = arith.truncf %205 : vector<16x32xf32> to vector<16x32xbf16>
    %c2_160 = arith.constant 2 : index
    %c0_161 = arith.constant 0 : index
    %c0_162 = arith.constant 0 : index
    %207 = vector.load %arg8[%c2_160, %c0_161, %c0_162] : memref<16x32x16xbf16, #tpu.memory_space<vmem>>, vector<1x32x16xbf16>
    %208 = vector.shape_cast %207 : vector<1x32x16xbf16> to vector<32x16xbf16>
    %cst_163 = arith.constant dense<0.000000e+00> : vector<32x32xf32>
    %209 = tpu.matmul %208, %206, %cst_163 {dimension_numbers = #tpu.dot_dimension_numbers<[1], [0], [0], [1], [0, 0, 1, 1], [], []>} : vector<32x16xbf16>, vector<16x32xbf16>, vector<32x32xf32> -> vector<32x32xf32>
    %210 = arith.addf %202, %209 : vector<32x32xf32>
    %c3_164 = arith.constant 3 : index
    %c0_165 = arith.constant 0 : index
    %c0_166 = arith.constant 0 : index
    %211 = vector.load %arg9[%c3_164, %c0_165, %c0_166] : memref<16x128x32xbf16, #tpu.memory_space<vmem>>, vector<1x128x32xbf16>
    %212 = vector.shape_cast %211 : vector<1x128x32xbf16> to vector<128x32xbf16>
    %cst_167 = arith.constant dense<0.000000e+00> : vector<16x32xf32>
    %213 = tpu.matmul %185, %212, %cst_167 {dimension_numbers = #tpu.dot_dimension_numbers<[1], [0], [0], [1], [0, 0, 1, 1], [], []>} : vector<16x128xbf16>, vector<128x32xbf16>, vector<16x32xf32> -> vector<16x32xf32>
    %214 = arith.truncf %213 : vector<16x32xf32> to vector<16x32xbf16>
    %c3_168 = arith.constant 3 : index
    %c0_169 = arith.constant 0 : index
    %c0_170 = arith.constant 0 : index
    %215 = vector.load %arg8[%c3_168, %c0_169, %c0_170] : memref<16x32x16xbf16, #tpu.memory_space<vmem>>, vector<1x32x16xbf16>
    %216 = vector.shape_cast %215 : vector<1x32x16xbf16> to vector<32x16xbf16>
    %cst_171 = arith.constant dense<0.000000e+00> : vector<32x32xf32>
    %217 = tpu.matmul %216, %214, %cst_171 {dimension_numbers = #tpu.dot_dimension_numbers<[1], [0], [0], [1], [0, 0, 1, 1], [], []>} : vector<32x16xbf16>, vector<16x32xbf16>, vector<32x32xf32> -> vector<32x32xf32>
    %218 = arith.addf %210, %217 : vector<32x32xf32>
    %c4_172 = arith.constant 4 : index
    %c0_173 = arith.constant 0 : index
    %c0_174 = arith.constant 0 : index
    %219 = vector.load %arg9[%c4_172, %c0_173, %c0_174] : memref<16x128x32xbf16, #tpu.memory_space<vmem>>, vector<1x128x32xbf16>
    %220 = vector.shape_cast %219 : vector<1x128x32xbf16> to vector<128x32xbf16>
    %cst_175 = arith.constant dense<0.000000e+00> : vector<16x32xf32>
    %221 = tpu.matmul %185, %220, %cst_175 {dimension_numbers = #tpu.dot_dimension_numbers<[1], [0], [0], [1], [0, 0, 1, 1], [], []>} : vector<16x128xbf16>, vector<128x32xbf16>, vector<16x32xf32> -> vector<16x32xf32>
    %222 = arith.truncf %221 : vector<16x32xf32> to vector<16x32xbf16>
    %c4_176 = arith.constant 4 : index
    %c0_177 = arith.constant 0 : index
    %c0_178 = arith.constant 0 : index
    %223 = vector.load %arg8[%c4_176, %c0_177, %c0_178] : memref<16x32x16xbf16, #tpu.memory_space<vmem>>, vector<1x32x16xbf16>
    %224 = vector.shape_cast %223 : vector<1x32x16xbf16> to vector<32x16xbf16>
    %cst_179 = arith.constant dense<0.000000e+00> : vector<32x32xf32>
    %225 = tpu.matmul %224, %222, %cst_179 {dimension_numbers = #tpu.dot_dimension_numbers<[1], [0], [0], [1], [0, 0, 1, 1], [], []>} : vector<32x16xbf16>, vector<16x32xbf16>, vector<32x32xf32> -> vector<32x32xf32>
    %226 = arith.addf %218, %225 : vector<32x32xf32>
    %c5_180 = arith.constant 5 : index
    %c0_181 = arith.constant 0 : index
    %c0_182 = arith.constant 0 : index
    %227 = vector.load %arg9[%c5_180, %c0_181, %c0_182] : memref<16x128x32xbf16, #tpu.memory_space<vmem>>, vector<1x128x32xbf16>
    %228 = vector.shape_cast %227 : vector<1x128x32xbf16> to vector<128x32xbf16>
    %cst_183 = arith.constant dense<0.000000e+00> : vector<16x32xf32>
    %229 = tpu.matmul %185, %228, %cst_183 {dimension_numbers = #tpu.dot_dimension_numbers<[1], [0], [0], [1], [0, 0, 1, 1], [], []>} : vector<16x128xbf16>, vector<128x32xbf16>, vector<16x32xf32> -> vector<16x32xf32>
    %230 = arith.truncf %229 : vector<16x32xf32> to vector<16x32xbf16>
    %c5_184 = arith.constant 5 : index
    %c0_185 = arith.constant 0 : index
    %c0_186 = arith.constant 0 : index
    %231 = vector.load %arg8[%c5_184, %c0_185, %c0_186] : memref<16x32x16xbf16, #tpu.memory_space<vmem>>, vector<1x32x16xbf16>
    %232 = vector.shape_cast %231 : vector<1x32x16xbf16> to vector<32x16xbf16>
    %cst_187 = arith.constant dense<0.000000e+00> : vector<32x32xf32>
    %233 = tpu.matmul %232, %230, %cst_187 {dimension_numbers = #tpu.dot_dimension_numbers<[1], [0], [0], [1], [0, 0, 1, 1], [], []>} : vector<32x16xbf16>, vector<16x32xbf16>, vector<32x32xf32> -> vector<32x32xf32>
    %234 = arith.addf %226, %233 : vector<32x32xf32>
    %c6_188 = arith.constant 6 : index
    %c0_189 = arith.constant 0 : index
    %c0_190 = arith.constant 0 : index
    %235 = vector.load %arg9[%c6_188, %c0_189, %c0_190] : memref<16x128x32xbf16, #tpu.memory_space<vmem>>, vector<1x128x32xbf16>
    %236 = vector.shape_cast %235 : vector<1x128x32xbf16> to vector<128x32xbf16>
    %cst_191 = arith.constant dense<0.000000e+00> : vector<16x32xf32>
    %237 = tpu.matmul %185, %236, %cst_191 {dimension_numbers = #tpu.dot_dimension_numbers<[1], [0], [0], [1], [0, 0, 1, 1], [], []>} : vector<16x128xbf16>, vector<128x32xbf16>, vector<16x32xf32> -> vector<16x32xf32>
    %238 = arith.truncf %237 : vector<16x32xf32> to vector<16x32xbf16>
    %c6_192 = arith.constant 6 : index
    %c0_193 = arith.constant 0 : index
    %c0_194 = arith.constant 0 : index
    %239 = vector.load %arg8[%c6_192, %c0_193, %c0_194] : memref<16x32x16xbf16, #tpu.memory_space<vmem>>, vector<1x32x16xbf16>
    %240 = vector.shape_cast %239 : vector<1x32x16xbf16> to vector<32x16xbf16>
    %cst_195 = arith.constant dense<0.000000e+00> : vector<32x32xf32>
    %241 = tpu.matmul %240, %238, %cst_195 {dimension_numbers = #tpu.dot_dimension_numbers<[1], [0], [0], [1], [0, 0, 1, 1], [], []>} : vector<32x16xbf16>, vector<16x32xbf16>, vector<32x32xf32> -> vector<32x32xf32>
    %242 = arith.addf %234, %241 : vector<32x32xf32>
    %c7_196 = arith.constant 7 : index
    %c0_197 = arith.constant 0 : index
    %c0_198 = arith.constant 0 : index
    %243 = vector.load %arg9[%c7_196, %c0_197, %c0_198] : memref<16x128x32xbf16, #tpu.memory_space<vmem>>, vector<1x128x32xbf16>
    %244 = vector.shape_cast %243 : vector<1x128x32xbf16> to vector<128x32xbf16>
    %cst_199 = arith.constant dense<0.000000e+00> : vector<16x32xf32>
    %245 = tpu.matmul %185, %244, %cst_199 {dimension_numbers = #tpu.dot_dimension_numbers<[1], [0], [0], [1], [0, 0, 1, 1], [], []>} : vector<16x128xbf16>, vector<128x32xbf16>, vector<16x32xf32> -> vector<16x32xf32>
    %246 = arith.truncf %245 : vector<16x32xf32> to vector<16x32xbf16>
    %c7_200 = arith.constant 7 : index
    %c0_201 = arith.constant 0 : index
    %c0_202 = arith.constant 0 : index
    %247 = vector.load %arg8[%c7_200, %c0_201, %c0_202] : memref<16x32x16xbf16, #tpu.memory_space<vmem>>, vector<1x32x16xbf16>
    %248 = vector.shape_cast %247 : vector<1x32x16xbf16> to vector<32x16xbf16>
    %cst_203 = arith.constant dense<0.000000e+00> : vector<32x32xf32>
    %249 = tpu.matmul %248, %246, %cst_203 {dimension_numbers = #tpu.dot_dimension_numbers<[1], [0], [0], [1], [0, 0, 1, 1], [], []>} : vector<32x16xbf16>, vector<16x32xbf16>, vector<32x32xf32> -> vector<32x32xf32>
    %250 = arith.addf %242, %249 : vector<32x32xf32>
    %c8_204 = arith.constant 8 : index
    %c0_205 = arith.constant 0 : index
    %c0_206 = arith.constant 0 : index
    %251 = vector.load %arg9[%c8_204, %c0_205, %c0_206] : memref<16x128x32xbf16, #tpu.memory_space<vmem>>, vector<1x128x32xbf16>
    %252 = vector.shape_cast %251 : vector<1x128x32xbf16> to vector<128x32xbf16>
    %cst_207 = arith.constant dense<0.000000e+00> : vector<16x32xf32>
    %253 = tpu.matmul %185, %252, %cst_207 {dimension_numbers = #tpu.dot_dimension_numbers<[1], [0], [0], [1], [0, 0, 1, 1], [], []>} : vector<16x128xbf16>, vector<128x32xbf16>, vector<16x32xf32> -> vector<16x32xf32>
    %254 = arith.truncf %253 : vector<16x32xf32> to vector<16x32xbf16>
    %c8_208 = arith.constant 8 : index
    %c0_209 = arith.constant 0 : index
    %c0_210 = arith.constant 0 : index
    %255 = vector.load %arg8[%c8_208, %c0_209, %c0_210] : memref<16x32x16xbf16, #tpu.memory_space<vmem>>, vector<1x32x16xbf16>
    %256 = vector.shape_cast %255 : vector<1x32x16xbf16> to vector<32x16xbf16>
    %cst_211 = arith.constant dense<0.000000e+00> : vector<32x32xf32>
    %257 = tpu.matmul %256, %254, %cst_211 {dimension_numbers = #tpu.dot_dimension_numbers<[1], [0], [0], [1], [0, 0, 1, 1], [], []>} : vector<32x16xbf16>, vector<16x32xbf16>, vector<32x32xf32> -> vector<32x32xf32>
    %258 = arith.addf %250, %257 : vector<32x32xf32>
    %c9_212 = arith.constant 9 : index
    %c0_213 = arith.constant 0 : index
    %c0_214 = arith.constant 0 : index
    %259 = vector.load %arg9[%c9_212, %c0_213, %c0_214] : memref<16x128x32xbf16, #tpu.memory_space<vmem>>, vector<1x128x32xbf16>
    %260 = vector.shape_cast %259 : vector<1x128x32xbf16> to vector<128x32xbf16>
    %cst_215 = arith.constant dense<0.000000e+00> : vector<16x32xf32>
    %261 = tpu.matmul %185, %260, %cst_215 {dimension_numbers = #tpu.dot_dimension_numbers<[1], [0], [0], [1], [0, 0, 1, 1], [], []>} : vector<16x128xbf16>, vector<128x32xbf16>, vector<16x32xf32> -> vector<16x32xf32>
    %262 = arith.truncf %261 : vector<16x32xf32> to vector<16x32xbf16>
    %c9_216 = arith.constant 9 : index
    %c0_217 = arith.constant 0 : index
    %c0_218 = arith.constant 0 : index
    %263 = vector.load %arg8[%c9_216, %c0_217, %c0_218] : memref<16x32x16xbf16, #tpu.memory_space<vmem>>, vector<1x32x16xbf16>
    %264 = vector.shape_cast %263 : vector<1x32x16xbf16> to vector<32x16xbf16>
    %cst_219 = arith.constant dense<0.000000e+00> : vector<32x32xf32>
    %265 = tpu.matmul %264, %262, %cst_219 {dimension_numbers = #tpu.dot_dimension_numbers<[1], [0], [0], [1], [0, 0, 1, 1], [], []>} : vector<32x16xbf16>, vector<16x32xbf16>, vector<32x32xf32> -> vector<32x32xf32>
    %266 = arith.addf %258, %265 : vector<32x32xf32>
    %c10_220 = arith.constant 10 : index
    %c0_221 = arith.constant 0 : index
    %c0_222 = arith.constant 0 : index
    %267 = vector.load %arg9[%c10_220, %c0_221, %c0_222] : memref<16x128x32xbf16, #tpu.memory_space<vmem>>, vector<1x128x32xbf16>
    %268 = vector.shape_cast %267 : vector<1x128x32xbf16> to vector<128x32xbf16>
    %cst_223 = arith.constant dense<0.000000e+00> : vector<16x32xf32>
    %269 = tpu.matmul %185, %268, %cst_223 {dimension_numbers = #tpu.dot_dimension_numbers<[1], [0], [0], [1], [0, 0, 1, 1], [], []>} : vector<16x128xbf16>, vector<128x32xbf16>, vector<16x32xf32> -> vector<16x32xf32>
    %270 = arith.truncf %269 : vector<16x32xf32> to vector<16x32xbf16>
    %c10_224 = arith.constant 10 : index
    %c0_225 = arith.constant 0 : index
    %c0_226 = arith.constant 0 : index
    %271 = vector.load %arg8[%c10_224, %c0_225, %c0_226] : memref<16x32x16xbf16, #tpu.memory_space<vmem>>, vector<1x32x16xbf16>
    %272 = vector.shape_cast %271 : vector<1x32x16xbf16> to vector<32x16xbf16>
    %cst_227 = arith.constant dense<0.000000e+00> : vector<32x32xf32>
    %273 = tpu.matmul %272, %270, %cst_227 {dimension_numbers = #tpu.dot_dimension_numbers<[1], [0], [0], [1], [0, 0, 1, 1], [], []>} : vector<32x16xbf16>, vector<16x32xbf16>, vector<32x32xf32> -> vector<32x32xf32>
    %274 = arith.addf %266, %273 : vector<32x32xf32>
    %c11_228 = arith.constant 11 : index
    %c0_229 = arith.constant 0 : index
    %c0_230 = arith.constant 0 : index
    %275 = vector.load %arg9[%c11_228, %c0_229, %c0_230] : memref<16x128x32xbf16, #tpu.memory_space<vmem>>, vector<1x128x32xbf16>
    %276 = vector.shape_cast %275 : vector<1x128x32xbf16> to vector<128x32xbf16>
    %cst_231 = arith.constant dense<0.000000e+00> : vector<16x32xf32>
    %277 = tpu.matmul %185, %276, %cst_231 {dimension_numbers = #tpu.dot_dimension_numbers<[1], [0], [0], [1], [0, 0, 1, 1], [], []>} : vector<16x128xbf16>, vector<128x32xbf16>, vector<16x32xf32> -> vector<16x32xf32>
    %278 = arith.truncf %277 : vector<16x32xf32> to vector<16x32xbf16>
    %c11_232 = arith.constant 11 : index
    %c0_233 = arith.constant 0 : index
    %c0_234 = arith.constant 0 : index
    %279 = vector.load %arg8[%c11_232, %c0_233, %c0_234] : memref<16x32x16xbf16, #tpu.memory_space<vmem>>, vector<1x32x16xbf16>
    %280 = vector.shape_cast %279 : vector<1x32x16xbf16> to vector<32x16xbf16>
    %cst_235 = arith.constant dense<0.000000e+00> : vector<32x32xf32>
    %281 = tpu.matmul %280, %278, %cst_235 {dimension_numbers = #tpu.dot_dimension_numbers<[1], [0], [0], [1], [0, 0, 1, 1], [], []>} : vector<32x16xbf16>, vector<16x32xbf16>, vector<32x32xf32> -> vector<32x32xf32>
    %282 = arith.addf %274, %281 : vector<32x32xf32>
    %c12_236 = arith.constant 12 : index
    %c0_237 = arith.constant 0 : index
    %c0_238 = arith.constant 0 : index
    %283 = vector.load %arg9[%c12_236, %c0_237, %c0_238] : memref<16x128x32xbf16, #tpu.memory_space<vmem>>, vector<1x128x32xbf16>
    %284 = vector.shape_cast %283 : vector<1x128x32xbf16> to vector<128x32xbf16>
    %cst_239 = arith.constant dense<0.000000e+00> : vector<16x32xf32>
    %285 = tpu.matmul %185, %284, %cst_239 {dimension_numbers = #tpu.dot_dimension_numbers<[1], [0], [0], [1], [0, 0, 1, 1], [], []>} : vector<16x128xbf16>, vector<128x32xbf16>, vector<16x32xf32> -> vector<16x32xf32>
    %286 = arith.truncf %285 : vector<16x32xf32> to vector<16x32xbf16>
    %c12_240 = arith.constant 12 : index
    %c0_241 = arith.constant 0 : index
    %c0_242 = arith.constant 0 : index
    %287 = vector.load %arg8[%c12_240, %c0_241, %c0_242] : memref<16x32x16xbf16, #tpu.memory_space<vmem>>, vector<1x32x16xbf16>
    %288 = vector.shape_cast %287 : vector<1x32x16xbf16> to vector<32x16xbf16>
    %cst_243 = arith.constant dense<0.000000e+00> : vector<32x32xf32>
    %289 = tpu.matmul %288, %286, %cst_243 {dimension_numbers = #tpu.dot_dimension_numbers<[1], [0], [0], [1], [0, 0, 1, 1], [], []>} : vector<32x16xbf16>, vector<16x32xbf16>, vector<32x32xf32> -> vector<32x32xf32>
    %290 = arith.addf %282, %289 : vector<32x32xf32>
    %c13_244 = arith.constant 13 : index
    %c0_245 = arith.constant 0 : index
    %c0_246 = arith.constant 0 : index
    %291 = vector.load %arg9[%c13_244, %c0_245, %c0_246] : memref<16x128x32xbf16, #tpu.memory_space<vmem>>, vector<1x128x32xbf16>
    %292 = vector.shape_cast %291 : vector<1x128x32xbf16> to vector<128x32xbf16>
    %cst_247 = arith.constant dense<0.000000e+00> : vector<16x32xf32>
    %293 = tpu.matmul %185, %292, %cst_247 {dimension_numbers = #tpu.dot_dimension_numbers<[1], [0], [0], [1], [0, 0, 1, 1], [], []>} : vector<16x128xbf16>, vector<128x32xbf16>, vector<16x32xf32> -> vector<16x32xf32>
    %294 = arith.truncf %293 : vector<16x32xf32> to vector<16x32xbf16>
    %c13_248 = arith.constant 13 : index
    %c0_249 = arith.constant 0 : index
    %c0_250 = arith.constant 0 : index
    %295 = vector.load %arg8[%c13_248, %c0_249, %c0_250] : memref<16x32x16xbf16, #tpu.memory_space<vmem>>, vector<1x32x16xbf16>
    %296 = vector.shape_cast %295 : vector<1x32x16xbf16> to vector<32x16xbf16>
    %cst_251 = arith.constant dense<0.000000e+00> : vector<32x32xf32>
    %297 = tpu.matmul %296, %294, %cst_251 {dimension_numbers = #tpu.dot_dimension_numbers<[1], [0], [0], [1], [0, 0, 1, 1], [], []>} : vector<32x16xbf16>, vector<16x32xbf16>, vector<32x32xf32> -> vector<32x32xf32>
    %298 = arith.addf %290, %297 : vector<32x32xf32>
    %c14_252 = arith.constant 14 : index
    %c0_253 = arith.constant 0 : index
    %c0_254 = arith.constant 0 : index
    %299 = vector.load %arg9[%c14_252, %c0_253, %c0_254] : memref<16x128x32xbf16, #tpu.memory_space<vmem>>, vector<1x128x32xbf16>
    %300 = vector.shape_cast %299 : vector<1x128x32xbf16> to vector<128x32xbf16>
    %cst_255 = arith.constant dense<0.000000e+00> : vector<16x32xf32>
    %301 = tpu.matmul %185, %300, %cst_255 {dimension_numbers = #tpu.dot_dimension_numbers<[1], [0], [0], [1], [0, 0, 1, 1], [], []>} : vector<16x128xbf16>, vector<128x32xbf16>, vector<16x32xf32> -> vector<16x32xf32>
    %302 = arith.truncf %301 : vector<16x32xf32> to vector<16x32xbf16>
    %c14_256 = arith.constant 14 : index
    %c0_257 = arith.constant 0 : index
    %c0_258 = arith.constant 0 : index
    %303 = vector.load %arg8[%c14_256, %c0_257, %c0_258] : memref<16x32x16xbf16, #tpu.memory_space<vmem>>, vector<1x32x16xbf16>
    %304 = vector.shape_cast %303 : vector<1x32x16xbf16> to vector<32x16xbf16>
    %cst_259 = arith.constant dense<0.000000e+00> : vector<32x32xf32>
    %305 = tpu.matmul %304, %302, %cst_259 {dimension_numbers = #tpu.dot_dimension_numbers<[1], [0], [0], [1], [0, 0, 1, 1], [], []>} : vector<32x16xbf16>, vector<16x32xbf16>, vector<32x32xf32> -> vector<32x32xf32>
    %306 = arith.addf %298, %305 : vector<32x32xf32>
    %c15_260 = arith.constant 15 : index
    %c0_261 = arith.constant 0 : index
    %c0_262 = arith.constant 0 : index
    %307 = vector.load %arg9[%c15_260, %c0_261, %c0_262] : memref<16x128x32xbf16, #tpu.memory_space<vmem>>, vector<1x128x32xbf16>
    %308 = vector.shape_cast %307 : vector<1x128x32xbf16> to vector<128x32xbf16>
    %cst_263 = arith.constant dense<0.000000e+00> : vector<16x32xf32>
    %309 = tpu.matmul %185, %308, %cst_263 {dimension_numbers = #tpu.dot_dimension_numbers<[1], [0], [0], [1], [0, 0, 1, 1], [], []>} : vector<16x128xbf16>, vector<128x32xbf16>, vector<16x32xf32> -> vector<16x32xf32>
    %310 = arith.truncf %309 : vector<16x32xf32> to vector<16x32xbf16>
    %c15_264 = arith.constant 15 : index
    %c0_265 = arith.constant 0 : index
    %c0_266 = arith.constant 0 : index
    %311 = vector.load %arg8[%c15_264, %c0_265, %c0_266] : memref<16x32x16xbf16, #tpu.memory_space<vmem>>, vector<1x32x16xbf16>
    %312 = vector.shape_cast %311 : vector<1x32x16xbf16> to vector<32x16xbf16>
    %cst_267 = arith.constant dense<0.000000e+00> : vector<32x32xf32>
    %313 = tpu.matmul %312, %310, %cst_267 {dimension_numbers = #tpu.dot_dimension_numbers<[1], [0], [0], [1], [0, 0, 1, 1], [], []>} : vector<32x16xbf16>, vector<16x32xbf16>, vector<32x32xf32> -> vector<32x32xf32>
    %314 = arith.addf %306, %313 : vector<32x32xf32>
    %c0_268 = arith.constant 0 : index
    %c0_269 = arith.constant 0 : index
    %315 = vector.load %arg10[%c0_268, %c0_269] : memref<32x1xf32, #tpu.memory_space<vmem>>, vector<32x1xf32>
    %c0_270 = arith.constant 0 : index
    %c0_271 = arith.constant 0 : index
    %316 = vector.load %arg11[%c0_270, %c0_271] : memref<32x1xf32, #tpu.memory_space<vmem>>, vector<32x1xf32>
    %cst_272 = arith.constant dense<0.000000e+00> : vector<32xf32>
    %317 = vector.multi_reduction <add>, %314, %cst_272 [1] : vector<32x32xf32> to vector<32xf32>
    %318 = vector.shape_cast %317 : vector<32xf32> to vector<32x1xf32>
    %cst_273 = arith.constant 3.125000e-02 : f32
    %319 = vector.broadcast %cst_273 : f32 to vector<32x1xf32>
    %320 = arith.mulf %318, %319 : vector<32x1xf32>
    %321 = vector.broadcast %320 : vector<32x1xf32> to vector<32x32xf32>
    %322 = arith.subf %314, %321 : vector<32x32xf32>
    %323 = arith.mulf %322, %322 : vector<32x32xf32>
    %cst_274 = arith.constant dense<0.000000e+00> : vector<32xf32>
    %324 = vector.multi_reduction <add>, %323, %cst_274 [1] : vector<32x32xf32> to vector<32xf32>
    %325 = vector.shape_cast %324 : vector<32xf32> to vector<32x1xf32>
    %cst_275 = arith.constant 3.125000e-02 : f32
    %326 = vector.broadcast %cst_275 : f32 to vector<32x1xf32>
    %327 = arith.mulf %325, %326 : vector<32x1xf32>
    %cst_276 = arith.constant 9.99999974E-6 : f32
    %328 = vector.broadcast %cst_276 : f32 to vector<32x1xf32>
    %329 = arith.addf %327, %328 : vector<32x1xf32>
    %330 = math.rsqrt %329 : vector<32x1xf32>
    %331 = arith.mulf %315, %330 : vector<32x1xf32>
    %332 = vector.broadcast %331 : vector<32x1xf32> to vector<32x32xf32>
    %333 = arith.mulf %332, %322 : vector<32x32xf32>
    %334 = vector.broadcast %316 : vector<32x1xf32> to vector<32x32xf32>
    %335 = arith.addf %333, %334 : vector<32x32xf32>
    %cst_277 = arith.constant 0.000000e+00 : f32
    %336 = vector.broadcast %cst_277 : f32 to vector<32x32xf32>
    %337 = arith.cmpf oge, %335, %336 : vector<32x32xf32>
    %cst_278 = arith.constant 2.000000e-01 : f32
    %338 = vector.broadcast %cst_278 : f32 to vector<32x32xf32>
    %339 = arith.mulf %338, %335 : vector<32x32xf32>
    %340 = arith.select %337, %335, %339 : vector<32x32xi1>, vector<32x32xf32>
    %341 = arith.truncf %340 : vector<32x32xf32> to vector<32x32xbf16>
    %cst_279 = arith.constant 0.000000e+00 : f32
    %342 = vector.broadcast %cst_279 : f32 to vector<64x8xf32>
    %c0_280 = arith.constant 0 : index
    %c0_281 = arith.constant 0 : index
    %c0_282 = arith.constant 0 : index
    %343 = vector.load %arg13[%c0_280, %c0_281, %c0_282] : memref<9x32x8xbf16, #tpu.memory_space<vmem>>, vector<1x32x8xbf16>
    %344 = vector.shape_cast %343 : vector<1x32x8xbf16> to vector<32x8xbf16>
    %cst_283 = arith.constant dense<0.000000e+00> : vector<32x8xf32>
    %345 = tpu.matmul %341, %344, %cst_283 {dimension_numbers = #tpu.dot_dimension_numbers<[1], [0], [0], [1], [0, 0, 1, 1], [], []>} : vector<32x32xbf16>, vector<32x8xbf16>, vector<32x8xf32> -> vector<32x8xf32>
    %346 = arith.truncf %345 : vector<32x8xf32> to vector<32x8xbf16>
    %c0_284 = arith.constant 0 : index
    %c0_285 = arith.constant 0 : index
    %c0_286 = arith.constant 0 : index
    %347 = vector.load %arg12[%c0_284, %c0_285, %c0_286] : memref<9x64x32xbf16, #tpu.memory_space<vmem>>, vector<1x64x32xbf16>
    %348 = vector.shape_cast %347 : vector<1x64x32xbf16> to vector<64x32xbf16>
    %cst_287 = arith.constant dense<0.000000e+00> : vector<64x8xf32>
    %349 = tpu.matmul %348, %346, %cst_287 {dimension_numbers = #tpu.dot_dimension_numbers<[1], [0], [0], [1], [0, 0, 1, 1], [], []>} : vector<64x32xbf16>, vector<32x8xbf16>, vector<64x8xf32> -> vector<64x8xf32>
    %350 = arith.addf %342, %349 : vector<64x8xf32>
    %c1_288 = arith.constant 1 : index
    %c0_289 = arith.constant 0 : index
    %c0_290 = arith.constant 0 : index
    %351 = vector.load %arg13[%c1_288, %c0_289, %c0_290] : memref<9x32x8xbf16, #tpu.memory_space<vmem>>, vector<1x32x8xbf16>
    %352 = vector.shape_cast %351 : vector<1x32x8xbf16> to vector<32x8xbf16>
    %cst_291 = arith.constant dense<0.000000e+00> : vector<32x8xf32>
    %353 = tpu.matmul %341, %352, %cst_291 {dimension_numbers = #tpu.dot_dimension_numbers<[1], [0], [0], [1], [0, 0, 1, 1], [], []>} : vector<32x32xbf16>, vector<32x8xbf16>, vector<32x8xf32> -> vector<32x8xf32>
    %354 = arith.truncf %353 : vector<32x8xf32> to vector<32x8xbf16>
    %c1_292 = arith.constant 1 : index
    %c0_293 = arith.constant 0 : index
    %c0_294 = arith.constant 0 : index
    %355 = vector.load %arg12[%c1_292, %c0_293, %c0_294] : memref<9x64x32xbf16, #tpu.memory_space<vmem>>, vector<1x64x32xbf16>
    %356 = vector.shape_cast %355 : vector<1x64x32xbf16> to vector<64x32xbf16>
    %cst_295 = arith.constant dense<0.000000e+00> : vector<64x8xf32>
    %357 = tpu.matmul %356, %354, %cst_295 {dimension_numbers = #tpu.dot_dimension_numbers<[1], [0], [0], [1], [0, 0, 1, 1], [], []>} : vector<64x32xbf16>, vector<32x8xbf16>, vector<64x8xf32> -> vector<64x8xf32>
    %358 = arith.addf %350, %357 : vector<64x8xf32>
    %c2_296 = arith.constant 2 : index
    %c0_297 = arith.constant 0 : index
    %c0_298 = arith.constant 0 : index
    %359 = vector.load %arg13[%c2_296, %c0_297, %c0_298] : memref<9x32x8xbf16, #tpu.memory_space<vmem>>, vector<1x32x8xbf16>
    %360 = vector.shape_cast %359 : vector<1x32x8xbf16> to vector<32x8xbf16>
    %cst_299 = arith.constant dense<0.000000e+00> : vector<32x8xf32>
    %361 = tpu.matmul %341, %360, %cst_299 {dimension_numbers = #tpu.dot_dimension_numbers<[1], [0], [0], [1], [0, 0, 1, 1], [], []>} : vector<32x32xbf16>, vector<32x8xbf16>, vector<32x8xf32> -> vector<32x8xf32>
    %362 = arith.truncf %361 : vector<32x8xf32> to vector<32x8xbf16>
    %c2_300 = arith.constant 2 : index
    %c0_301 = arith.constant 0 : index
    %c0_302 = arith.constant 0 : index
    %363 = vector.load %arg12[%c2_300, %c0_301, %c0_302] : memref<9x64x32xbf16, #tpu.memory_space<vmem>>, vector<1x64x32xbf16>
    %364 = vector.shape_cast %363 : vector<1x64x32xbf16> to vector<64x32xbf16>
    %cst_303 = arith.constant dense<0.000000e+00> : vector<64x8xf32>
    %365 = tpu.matmul %364, %362, %cst_303 {dimension_numbers = #tpu.dot_dimension_numbers<[1], [0], [0], [1], [0, 0, 1, 1], [], []>} : vector<64x32xbf16>, vector<32x8xbf16>, vector<64x8xf32> -> vector<64x8xf32>
    %366 = arith.addf %358, %365 : vector<64x8xf32>
    %c3_304 = arith.constant 3 : index
    %c0_305 = arith.constant 0 : index
    %c0_306 = arith.constant 0 : index
    %367 = vector.load %arg13[%c3_304, %c0_305, %c0_306] : memref<9x32x8xbf16, #tpu.memory_space<vmem>>, vector<1x32x8xbf16>
    %368 = vector.shape_cast %367 : vector<1x32x8xbf16> to vector<32x8xbf16>
    %cst_307 = arith.constant dense<0.000000e+00> : vector<32x8xf32>
    %369 = tpu.matmul %341, %368, %cst_307 {dimension_numbers = #tpu.dot_dimension_numbers<[1], [0], [0], [1], [0, 0, 1, 1], [], []>} : vector<32x32xbf16>, vector<32x8xbf16>, vector<32x8xf32> -> vector<32x8xf32>
    %370 = arith.truncf %369 : vector<32x8xf32> to vector<32x8xbf16>
    %c3_308 = arith.constant 3 : index
    %c0_309 = arith.constant 0 : index
    %c0_310 = arith.constant 0 : index
    %371 = vector.load %arg12[%c3_308, %c0_309, %c0_310] : memref<9x64x32xbf16, #tpu.memory_space<vmem>>, vector<1x64x32xbf16>
    %372 = vector.shape_cast %371 : vector<1x64x32xbf16> to vector<64x32xbf16>
    %cst_311 = arith.constant dense<0.000000e+00> : vector<64x8xf32>
    %373 = tpu.matmul %372, %370, %cst_311 {dimension_numbers = #tpu.dot_dimension_numbers<[1], [0], [0], [1], [0, 0, 1, 1], [], []>} : vector<64x32xbf16>, vector<32x8xbf16>, vector<64x8xf32> -> vector<64x8xf32>
    %374 = arith.addf %366, %373 : vector<64x8xf32>
    %c4_312 = arith.constant 4 : index
    %c0_313 = arith.constant 0 : index
    %c0_314 = arith.constant 0 : index
    %375 = vector.load %arg13[%c4_312, %c0_313, %c0_314] : memref<9x32x8xbf16, #tpu.memory_space<vmem>>, vector<1x32x8xbf16>
    %376 = vector.shape_cast %375 : vector<1x32x8xbf16> to vector<32x8xbf16>
    %cst_315 = arith.constant dense<0.000000e+00> : vector<32x8xf32>
    %377 = tpu.matmul %341, %376, %cst_315 {dimension_numbers = #tpu.dot_dimension_numbers<[1], [0], [0], [1], [0, 0, 1, 1], [], []>} : vector<32x32xbf16>, vector<32x8xbf16>, vector<32x8xf32> -> vector<32x8xf32>
    %378 = arith.truncf %377 : vector<32x8xf32> to vector<32x8xbf16>
    %c4_316 = arith.constant 4 : index
    %c0_317 = arith.constant 0 : index
    %c0_318 = arith.constant 0 : index
    %379 = vector.load %arg12[%c4_316, %c0_317, %c0_318] : memref<9x64x32xbf16, #tpu.memory_space<vmem>>, vector<1x64x32xbf16>
    %380 = vector.shape_cast %379 : vector<1x64x32xbf16> to vector<64x32xbf16>
    %cst_319 = arith.constant dense<0.000000e+00> : vector<64x8xf32>
    %381 = tpu.matmul %380, %378, %cst_319 {dimension_numbers = #tpu.dot_dimension_numbers<[1], [0], [0], [1], [0, 0, 1, 1], [], []>} : vector<64x32xbf16>, vector<32x8xbf16>, vector<64x8xf32> -> vector<64x8xf32>
    %382 = arith.addf %374, %381 : vector<64x8xf32>
    %c5_320 = arith.constant 5 : index
    %c0_321 = arith.constant 0 : index
    %c0_322 = arith.constant 0 : index
    %383 = vector.load %arg13[%c5_320, %c0_321, %c0_322] : memref<9x32x8xbf16, #tpu.memory_space<vmem>>, vector<1x32x8xbf16>
    %384 = vector.shape_cast %383 : vector<1x32x8xbf16> to vector<32x8xbf16>
    %cst_323 = arith.constant dense<0.000000e+00> : vector<32x8xf32>
    %385 = tpu.matmul %341, %384, %cst_323 {dimension_numbers = #tpu.dot_dimension_numbers<[1], [0], [0], [1], [0, 0, 1, 1], [], []>} : vector<32x32xbf16>, vector<32x8xbf16>, vector<32x8xf32> -> vector<32x8xf32>
    %386 = arith.truncf %385 : vector<32x8xf32> to vector<32x8xbf16>
    %c5_324 = arith.constant 5 : index
    %c0_325 = arith.constant 0 : index
    %c0_326 = arith.constant 0 : index
    %387 = vector.load %arg12[%c5_324, %c0_325, %c0_326] : memref<9x64x32xbf16, #tpu.memory_space<vmem>>, vector<1x64x32xbf16>
    %388 = vector.shape_cast %387 : vector<1x64x32xbf16> to vector<64x32xbf16>
    %cst_327 = arith.constant dense<0.000000e+00> : vector<64x8xf32>
    %389 = tpu.matmul %388, %386, %cst_327 {dimension_numbers = #tpu.dot_dimension_numbers<[1], [0], [0], [1], [0, 0, 1, 1], [], []>} : vector<64x32xbf16>, vector<32x8xbf16>, vector<64x8xf32> -> vector<64x8xf32>
    %390 = arith.addf %382, %389 : vector<64x8xf32>
    %c6_328 = arith.constant 6 : index
    %c0_329 = arith.constant 0 : index
    %c0_330 = arith.constant 0 : index
    %391 = vector.load %arg13[%c6_328, %c0_329, %c0_330] : memref<9x32x8xbf16, #tpu.memory_space<vmem>>, vector<1x32x8xbf16>
    %392 = vector.shape_cast %391 : vector<1x32x8xbf16> to vector<32x8xbf16>
    %cst_331 = arith.constant dense<0.000000e+00> : vector<32x8xf32>
    %393 = tpu.matmul %341, %392, %cst_331 {dimension_numbers = #tpu.dot_dimension_numbers<[1], [0], [0], [1], [0, 0, 1, 1], [], []>} : vector<32x32xbf16>, vector<32x8xbf16>, vector<32x8xf32> -> vector<32x8xf32>
    %394 = arith.truncf %393 : vector<32x8xf32> to vector<32x8xbf16>
    %c6_332 = arith.constant 6 : index
    %c0_333 = arith.constant 0 : index
    %c0_334 = arith.constant 0 : index
    %395 = vector.load %arg12[%c6_332, %c0_333, %c0_334] : memref<9x64x32xbf16, #tpu.memory_space<vmem>>, vector<1x64x32xbf16>
    %396 = vector.shape_cast %395 : vector<1x64x32xbf16> to vector<64x32xbf16>
    %cst_335 = arith.constant dense<0.000000e+00> : vector<64x8xf32>
    %397 = tpu.matmul %396, %394, %cst_335 {dimension_numbers = #tpu.dot_dimension_numbers<[1], [0], [0], [1], [0, 0, 1, 1], [], []>} : vector<64x32xbf16>, vector<32x8xbf16>, vector<64x8xf32> -> vector<64x8xf32>
    %398 = arith.addf %390, %397 : vector<64x8xf32>
    %c7_336 = arith.constant 7 : index
    %c0_337 = arith.constant 0 : index
    %c0_338 = arith.constant 0 : index
    %399 = vector.load %arg13[%c7_336, %c0_337, %c0_338] : memref<9x32x8xbf16, #tpu.memory_space<vmem>>, vector<1x32x8xbf16>
    %400 = vector.shape_cast %399 : vector<1x32x8xbf16> to vector<32x8xbf16>
    %cst_339 = arith.constant dense<0.000000e+00> : vector<32x8xf32>
    %401 = tpu.matmul %341, %400, %cst_339 {dimension_numbers = #tpu.dot_dimension_numbers<[1], [0], [0], [1], [0, 0, 1, 1], [], []>} : vector<32x32xbf16>, vector<32x8xbf16>, vector<32x8xf32> -> vector<32x8xf32>
    %402 = arith.truncf %401 : vector<32x8xf32> to vector<32x8xbf16>
    %c7_340 = arith.constant 7 : index
    %c0_341 = arith.constant 0 : index
    %c0_342 = arith.constant 0 : index
    %403 = vector.load %arg12[%c7_340, %c0_341, %c0_342] : memref<9x64x32xbf16, #tpu.memory_space<vmem>>, vector<1x64x32xbf16>
    %404 = vector.shape_cast %403 : vector<1x64x32xbf16> to vector<64x32xbf16>
    %cst_343 = arith.constant dense<0.000000e+00> : vector<64x8xf32>
    %405 = tpu.matmul %404, %402, %cst_343 {dimension_numbers = #tpu.dot_dimension_numbers<[1], [0], [0], [1], [0, 0, 1, 1], [], []>} : vector<64x32xbf16>, vector<32x8xbf16>, vector<64x8xf32> -> vector<64x8xf32>
    %406 = arith.addf %398, %405 : vector<64x8xf32>
    %c8_344 = arith.constant 8 : index
    %c0_345 = arith.constant 0 : index
    %c0_346 = arith.constant 0 : index
    %407 = vector.load %arg13[%c8_344, %c0_345, %c0_346] : memref<9x32x8xbf16, #tpu.memory_space<vmem>>, vector<1x32x8xbf16>
    %408 = vector.shape_cast %407 : vector<1x32x8xbf16> to vector<32x8xbf16>
    %cst_347 = arith.constant dense<0.000000e+00> : vector<32x8xf32>
    %409 = tpu.matmul %341, %408, %cst_347 {dimension_numbers = #tpu.dot_dimension_numbers<[1], [0], [0], [1], [0, 0, 1, 1], [], []>} : vector<32x32xbf16>, vector<32x8xbf16>, vector<32x8xf32> -> vector<32x8xf32>
    %410 = arith.truncf %409 : vector<32x8xf32> to vector<32x8xbf16>
    %c8_348 = arith.constant 8 : index
    %c0_349 = arith.constant 0 : index
    %c0_350 = arith.constant 0 : index
    %411 = vector.load %arg12[%c8_348, %c0_349, %c0_350] : memref<9x64x32xbf16, #tpu.memory_space<vmem>>, vector<1x64x32xbf16>
    %412 = vector.shape_cast %411 : vector<1x64x32xbf16> to vector<64x32xbf16>
    %cst_351 = arith.constant dense<0.000000e+00> : vector<64x8xf32>
    %413 = tpu.matmul %412, %410, %cst_351 {dimension_numbers = #tpu.dot_dimension_numbers<[1], [0], [0], [1], [0, 0, 1, 1], [], []>} : vector<64x32xbf16>, vector<32x8xbf16>, vector<64x8xf32> -> vector<64x8xf32>
    %414 = arith.addf %406, %413 : vector<64x8xf32>
    %c0_352 = arith.constant 0 : index
    %c0_353 = arith.constant 0 : index
    %415 = vector.load %arg14[%c0_352, %c0_353] : memref<64x1xf32, #tpu.memory_space<vmem>>, vector<64x1xf32>
    %c0_354 = arith.constant 0 : index
    %c0_355 = arith.constant 0 : index
    %416 = vector.load %arg15[%c0_354, %c0_355] : memref<64x1xf32, #tpu.memory_space<vmem>>, vector<64x1xf32>
    %cst_356 = arith.constant dense<0.000000e+00> : vector<64xf32>
    %417 = vector.multi_reduction <add>, %414, %cst_356 [1] : vector<64x8xf32> to vector<64xf32>
    %418 = vector.shape_cast %417 : vector<64xf32> to vector<64x1xf32>
    %cst_357 = arith.constant 1.250000e-01 : f32
    %419 = vector.broadcast %cst_357 : f32 to vector<64x1xf32>
    %420 = arith.mulf %418, %419 : vector<64x1xf32>
    %421 = vector.broadcast %420 : vector<64x1xf32> to vector<64x8xf32>
    %422 = arith.subf %414, %421 : vector<64x8xf32>
    %423 = arith.mulf %422, %422 : vector<64x8xf32>
    %cst_358 = arith.constant dense<0.000000e+00> : vector<64xf32>
    %424 = vector.multi_reduction <add>, %423, %cst_358 [1] : vector<64x8xf32> to vector<64xf32>
    %425 = vector.shape_cast %424 : vector<64xf32> to vector<64x1xf32>
    %cst_359 = arith.constant 1.250000e-01 : f32
    %426 = vector.broadcast %cst_359 : f32 to vector<64x1xf32>
    %427 = arith.mulf %425, %426 : vector<64x1xf32>
    %cst_360 = arith.constant 9.99999974E-6 : f32
    %428 = vector.broadcast %cst_360 : f32 to vector<64x1xf32>
    %429 = arith.addf %427, %428 : vector<64x1xf32>
    %430 = math.rsqrt %429 : vector<64x1xf32>
    %431 = arith.mulf %415, %430 : vector<64x1xf32>
    %432 = vector.broadcast %431 : vector<64x1xf32> to vector<64x8xf32>
    %433 = arith.mulf %432, %422 : vector<64x8xf32>
    %434 = vector.broadcast %416 : vector<64x1xf32> to vector<64x8xf32>
    %435 = arith.addf %433, %434 : vector<64x8xf32>
    %cst_361 = arith.constant 0.000000e+00 : f32
    %436 = vector.broadcast %cst_361 : f32 to vector<64x8xf32>
    %437 = arith.cmpf oge, %435, %436 : vector<64x8xf32>
    %cst_362 = arith.constant 2.000000e-01 : f32
    %438 = vector.broadcast %cst_362 : f32 to vector<64x8xf32>
    %439 = arith.mulf %438, %435 : vector<64x8xf32>
    %440 = arith.select %437, %435, %439 : vector<64x8xi1>, vector<64x8xf32>
    %c0_363 = arith.constant 0 : index
    %c0_364 = arith.constant 0 : index
    %441 = vector.load %arg16[%c0_363, %c0_364] : memref<1x64xf32, #tpu.memory_space<vmem>>, vector<1x64xf32>
    %cst_365 = arith.constant dense<0.000000e+00> : vector<1x8xf32>
    %442 = tpu.matmul %441, %440, %cst_365 {dimension_numbers = #tpu.dot_dimension_numbers<[1], [0], [0], [1], [0, 0, 1, 1], [], []>} : vector<1x64xf32>, vector<64x8xf32>, vector<1x8xf32> -> vector<1x8xf32>
    %cst_366 = arith.constant 0.000000e+00 : f32
    %443 = vector.broadcast %cst_366 : f32 to vector<1x8xf32>
    %444 = arith.subf %443, %442 : vector<1x8xf32>
    %445 = math.exp %444 : vector<1x8xf32>
    %cst_367 = arith.constant 1.000000e+00 : f32
    %446 = vector.broadcast %cst_367 : f32 to vector<1x8xf32>
    %447 = arith.addf %446, %445 : vector<1x8xf32>
    %cst_368 = arith.constant 1.000000e+00 : f32
    %448 = vector.broadcast %cst_368 : f32 to vector<1x8xf32>
    %449 = arith.divf %448, %447 : vector<1x8xf32>
    %c0_369 = arith.constant 0 : index
    %c0_370 = arith.constant 0 : index
    %450 = vector.load %arg17[%c0_369, %c0_370] : memref<1x8xf32, #tpu.memory_space<vmem>>, vector<1x8xf32>
    tpu.vector_store %arg17[%c0_369, %c0_370], %449 {strides = array<i32>} : memref<1x8xf32, #tpu.memory_space<vmem>>, vector<1x8xf32>,
    return
  }
}

</mosaic_0001>

<llo_original>
// kernel: discriminator_forward.1
$region0: #{discriminator_forward.1}
  #allocation0 [shape = 'u32[]', space=smem, size = 0x4, offset = 0x4, fixed_abs, tag = 'smem constant byte address 0x4 - core index']
  #allocation1 [shape = 'u32[144,128]{1,0:T(1,128)}', space=vmem, size = 0x12000, scoped, tag = 'internal scratch']
  %s0 = inlined_call_operand.vmem [shape: bf16[48,512], index: 0, kind: input, shape index: {}]
  %s1 = inlined_call_operand.vmem [shape: bf16[8,48], index: 1, kind: input, shape index: {}]
  %s2 = inlined_call_operand.vmem [shape: f32[8,1], index: 2, kind: input, shape index: {}]
  %s3 = inlined_call_operand.vmem [shape: f32[8,1], index: 3, kind: input, shape index: {}]
  %s4 = inlined_call_operand.vmem [shape: bf16[16,16,8], index: 4, kind: input, shape index: {}]
  %s5 = inlined_call_operand.vmem [shape: bf16[16,512,128], index: 5, kind: input, shape index: {}]
  %s6 = inlined_call_operand.vmem [shape: f32[16,1], index: 6, kind: input, shape index: {}]
  %s7 = inlined_call_operand.vmem [shape: f32[16,1], index: 7, kind: input, shape index: {}]
  %s8 = inlined_call_operand.vmem [shape: bf16[16,32,16], index: 8, kind: input, shape index: {}]
  %s9 = inlined_call_operand.vmem [shape: bf16[16,128,32], index: 9, kind: input, shape index: {}]
  %s10 = inlined_call_operand.vmem [shape: f32[32,1], index: 10, kind: input, shape index: {}]
  %s11 = inlined_call_operand.vmem [shape: f32[32,1], index: 11, kind: input, shape index: {}]
  %s12 = inlined_call_operand.vmem [shape: bf16[9,64,32], index: 12, kind: input, shape index: {}]
  %s13 = inlined_call_operand.vmem [shape: bf16[9,32,8], index: 13, kind: input, shape index: {}]
  %s14 = inlined_call_operand.vmem [shape: f32[64,1], index: 14, kind: input, shape index: {}]
  %s15 = inlined_call_operand.vmem [shape: f32[64,1], index: 15, kind: input, shape index: {}]
  %s16 = inlined_call_operand.vmem [shape: f32[1,64], index: 16, kind: input, shape index: {}]
  %s17 = inlined_call_operand.vmem [shape: f32[1,8], index: 17, kind: output, shape index: {}]
  %s18 = sld [smem:[#allocation0]]
  $region78: #{discriminator_forward.1} parent=0
    _
  %s20 = ssub.s32 1, %s18
  %s21 = scalar_select 0, %s20, %s18
  // Predicated region
  $region2: #{discriminator_forward.1} parent=0 // pred_check
    _
  $region3: #{discriminator_forward.1} parent=0 // pred_check_branch
    %23 = sbr.rel (0) target = $region5
  $region4: #{discriminator_forward.1} parent=0 // pred_region
    _
  $region5: #{discriminator_forward.1} parent=0 // pred_fallthru
    _
  // Predicated region
  $region6: #{discriminator_forward.1} parent=0 // pred_check
    _
  $region7: #{discriminator_forward.1} parent=0 // pred_check_branch
    %25 = sbr.rel (0) target = $region9
  $region8: #{discriminator_forward.1} parent=0 // pred_region
    _
  $region9: #{discriminator_forward.1} parent=0 // pred_fallthru
    _
  // Predicated region
  $region10: #{discriminator_forward.1} parent=0 // pred_check
    _
  $region11: #{discriminator_forward.1} parent=0 // pred_check_branch
    %27 = sbr.rel (0) target = $region13
  $region12: #{discriminator_forward.1} parent=0 // pred_region
    _
  $region13: #{discriminator_forward.1} parent=0 // pred_fallthru
    _
  // Predicated region
  $region14: #{discriminator_forward.1} parent=0 // pred_check
    _
  $region15: #{discriminator_forward.1} parent=0 // pred_check_branch
    %29 = sbr.rel (0) target = $region17
  $region16: #{discriminator_forward.1} parent=0 // pred_region
    _
  $region17: #{discriminator_forward.1} parent=0 // pred_fallthru
    _
  // Predicated region
  $region18: #{discriminator_forward.1} parent=0 // pred_check
    _
  $region19: #{discriminator_forward.1} parent=0 // pred_check_branch
    %31 = sbr.rel (0) target = $region21
  $region20: #{discriminator_forward.1} parent=0 // pred_region
    _
  $region21: #{discriminator_forward.1} parent=0 // pred_fallthru
    _
  // Predicated region
  $region22: #{discriminator_forward.1} parent=0 // pred_check
    _
  $region23: #{discriminator_forward.1} parent=0 // pred_check_branch
    %33 = sbr.rel (0) target = $region25
  $region24: #{discriminator_forward.1} parent=0 // pred_region
    _
  $region25: #{discriminator_forward.1} parent=0 // pred_fallthru
    _
  // Predicated region
  $region26: #{discriminator_forward.1} parent=0 // pred_check
    _
  $region27: #{discriminator_forward.1} parent=0 // pred_check_branch
    %35 = sbr.rel (0) target = $region29
  $region28: #{discriminator_forward.1} parent=0 // pred_region
    _
  $region29: #{discriminator_forward.1} parent=0 // pred_fallthru
    _
  // Predicated region
  $region30: #{discriminator_forward.1} parent=0 // pred_check
    _
  $region31: #{discriminator_forward.1} parent=0 // pred_check_branch
    %37 = sbr.rel (0) target = $region33
  $region32: #{discriminator_forward.1} parent=0 // pred_region
    _
  $region33: #{discriminator_forward.1} parent=0 // pred_fallthru
    _
  // Predicated region
  $region34: #{discriminator_forward.1} parent=0 // pred_check
    _
  $region35: #{discriminator_forward.1} parent=0 // pred_check_branch
    %39 = sbr.rel (0) target = $region37
  $region36: #{discriminator_forward.1} parent=0 // pred_region
    _
  $region37: #{discriminator_forward.1} parent=0 // pred_fallthru
    _
  // Predicated region
  $region38: #{discriminator_forward.1} parent=0 // pred_check
    _
  $region39: #{discriminator_forward.1} parent=0 // pred_check_branch
    %41 = sbr.rel (0) target = $region41
  $region40: #{discriminator_forward.1} parent=0 // pred_region
    _
  $region41: #{discriminator_forward.1} parent=0 // pred_fallthru
    _
  // Predicated region
  $region42: #{discriminator_forward.1} parent=0 // pred_check
    _
  $region43: #{discriminator_forward.1} parent=0 // pred_check_branch
    %43 = sbr.rel (0) target = $region45
  $region44: #{discriminator_forward.1} parent=0 // pred_region
    _
  $region45: #{discriminator_forward.1} parent=0 // pred_fallthru
    _
  // Predicated region
  $region46: #{discriminator_forward.1} parent=0 // pred_check
    _
  $region47: #{discriminator_forward.1} parent=0 // pred_check_branch
    %45 = sbr.rel (0) target = $region49
  $region48: #{discriminator_forward.1} parent=0 // pred_region
    _
  $region49: #{discriminator_forward.1} parent=0 // pred_fallthru
    _
  // Predicated region
  $region50: #{discriminator_forward.1} parent=0 // pred_check
    _
  $region51: #{discriminator_forward.1} parent=0 // pred_check_branch
    %47 = sbr.rel (0) target = $region53
  $region52: #{discriminator_forward.1} parent=0 // pred_region
    _
  $region53: #{discriminator_forward.1} parent=0 // pred_fallthru
    _
  // Predicated region
  $region54: #{discriminator_forward.1} parent=0 // pred_check
    _
  $region55: #{discriminator_forward.1} parent=0 // pred_check_branch
    %49 = sbr.rel (0) target = $region57
  $region56: #{discriminator_forward.1} parent=0 // pred_region
    _
  $region57: #{discriminator_forward.1} parent=0 // pred_fallthru
    _
  // Predicated region
  $region58: #{discriminator_forward.1} parent=0 // pred_check
    _
  $region59: #{discriminator_forward.1} parent=0 // pred_check_branch
    %51 = sbr.rel (0) target = $region61
  $region60: #{discriminator_forward.1} parent=0 // pred_region
    _
  $region61: #{discriminator_forward.1} parent=0 // pred_fallthru
    _
  // Predicated region
  $region62: #{discriminator_forward.1} parent=0 // pred_check
    _
  $region63: #{discriminator_forward.1} parent=0 // pred_check_branch
    %53 = sbr.rel (0) target = $region65
  $region64: #{discriminator_forward.1} parent=0 // pred_region
    _
  $region65: #{discriminator_forward.1} parent=0 // pred_fallthru
    _
  // Predicated region
  $region66: #{discriminator_forward.1} parent=0 // pred_check
    _
  $region67: #{discriminator_forward.1} parent=0 // pred_check_branch
    %55 = sbr.rel (0) target = $region69
  $region68: #{discriminator_forward.1} parent=0 // pred_region
    _
  $region69: #{discriminator_forward.1} parent=0 // pred_fallthru
    _
  %v57 = vld [vmem:[%s1] sm:$0xf]
  %v58 = vld [vmem:[%s0] sm:$0xff]
  %v59 = vld [vmem:[%s0 + $0x8] sm:$0xff]
  %v60 = vld [vmem:[%s0 + $0x10] sm:$0xff]
  %v61 = vld [vmem:[%s0 + $0x18] sm:$0xff]
  %v62 = vld [vmem:[%s0 + $0x20] sm:$0xff]
  %v63 = vld [vmem:[%s0 + $0x28] sm:$0xff]
  %v64 = vld [vmem:[%s0 + $0x30] sm:$0xff]
  %v65 = vld [vmem:[%s0 + $0x38] sm:$0xff]
  %v66 = vld [vmem:[%s0 + $0x40] sm:$0xff]
  %v67 = vld [vmem:[%s0 + $0x48] sm:$0xff]
  %v68 = vld [vmem:[%s0 + $0x50] sm:$0xff]
  %v69 = vld [vmem:[%s0 + $0x58] sm:$0xff]
  %v82 = vunpack.c.l.b16 %v58
  %v83 = vunpack.c.h.b16 %v58
  %v84 = vunpack.c.l.b16 %v59
  %v85 = vunpack.c.h.b16 %v59
  %v86 = vunpack.c.l.b16 %v60
  %v87 = vunpack.c.h.b16 %v60
  %v88 = vunpack.c.l.b16 %v61
  %v89 = vunpack.c.h.b16 %v61
  %v90 = vunpack.c.l.b16 %v62
  %v91 = vunpack.c.h.b16 %v62
  %v92 = vunpack.c.l.b16 %v63
  %v93 = vunpack.c.h.b16 %v63
  %v94 = vunpack.c.l.b16 %v64
  %v95 = vunpack.c.h.b16 %v64
  %v96 = vunpack.c.l.b16 %v65
  %v97 = vunpack.c.h.b16 %v65
  %v98 = vunpack.c.l.b16 %v66
  %v99 = vunpack.c.h.b16 %v66
  %v100 = vunpack.c.l.b16 %v67
  %v101 = vunpack.c.h.b16 %v67
  %v102 = vunpack.c.l.b16 %v68
  %v103 = vunpack.c.h.b16 %v68
  %v104 = vunpack.c.l.b16 %v69
  %v105 = vunpack.c.h.b16 %v69
  %v106 = vpack.c.b16 %v86, %v82
  %v107 = vpack.c.b16 %v87, %v83
  %v108 = vpack.c.b16 %v88, %v84
  %v109 = vpack.c.b16 %v89, %v85
  %v110 = vpack.c.b16 %v94, %v90
  %v111 = vpack.c.b16 %v95, %v91
  %v112 = vpack.c.b16 %v96, %v92
  %v113 = vpack.c.b16 %v97, %v93
  %v114 = vpack.c.b16 %v102, %v98
  %v115 = vpack.c.b16 %v103, %v99
  %v116 = vpack.c.b16 %v104, %v100
  %v117 = vpack.c.b16 %v105, %v101
  %vm130 = vcmask 392192
  %v132 = vsel %vm130, %v57, 0
  %134 = vmatprep.subr.bf16.mxu0 0
  %135 = vmatpush1.bf16.msra.mxu0 0
  %136 = vmatprep.subr.bf16.mxu0 0
  %137 = vmatpush1.bf16.msra.mxu0 0
  %138 = vmatprep.subr.bf16.mxu0 0
  %139 = vmatpush1.bf16.msra.mxu0 0
  %140 = vmatprep.subr.bf16.mxu0 0
  %141 = vmatpush1.bf16.msra.mxu0 0
  %142 = vmatprep.subr.bf16.mxu0 0
  %143 = vmatpush1.bf16.msra.mxu0 0
  %144 = vmatprep.subr.bf16.mxu0 %v115
  %145 = vmatpush1.bf16.msra.mxu0 %v114
  %146 = vmatprep.subr.bf16.mxu0 %v111
  %147 = vmatpush1.bf16.msra.mxu0 %v110
  %148 = vmatprep.subr.bf16.mxu0 %v107
  %149 = vmatpush1.bf16.msra.mxu0 %v106
  %150 = vmatprep.subr.bf16.mxu0 0
  %151 = vmatpush2.bf16.msra.mxu0 0
  %152 = vmatprep.subr.bf16.mxu0 0
  %153 = vmatpush2.bf16.msra.mxu0 0
  %154 = vmatprep.subr.bf16.mxu0 0
  %155 = vmatpush2.bf16.msra.mxu0 0
  %156 = vmatprep.subr.bf16.mxu0 0
  %157 = vmatpush2.bf16.msra.mxu0 0
  %158 = vmatprep.subr.bf16.mxu0 0
  %159 = vmatpush2.bf16.msra.mxu0 0
  %160 = vmatprep.subr.bf16.mxu0 0
  %161 = vmatpush2.bf16.msra.mxu0 0
  %162 = vmatprep.subr.bf16.mxu0 0
  %163 = vmatpush2.bf16.msra.mxu0 0
  %164 = vmatprep.subr.bf16.mxu0 0
  %165 = vmatpush2.bf16.msra.mxu0 0
  %166 = vmatprep.mubr.bf16.mxu0 0
  %167 = vmatmul.mubr.bf16.gmra.mxu0 %v132
  %v168 = vpop.f32.mrf.mxu0
  %v169 = vadd.f32 0.0, %v168
  %v170 = vpop.f32.mrf.mxu0
  %v171 = vadd.f32 0.0, %v170
  %v172 = vpop.f32.mrf.mxu0
  %v173 = vpop.f32.mrf.mxu0
  %174 = vdwg.mxu0
  %175 = vmatprep.subr.bf16.mxu0 0
  %176 = vmatpush1.bf16.msra.mxu0 0
  %177 = vmatprep.subr.bf16.mxu0 0
  %178 = vmatpush1.bf16.msra.mxu0 0
  %179 = vmatprep.subr.bf16.mxu0 0
  %180 = vmatpush1.bf16.msra.mxu0 0
  %181 = vmatprep.subr.bf16.mxu0 0
  %182 = vmatpush1.bf16.msra.mxu0 0
  %183 = vmatprep.subr.bf16.mxu0 0
  %184 = vmatpush1.bf16.msra.mxu0 0
  %185 = vmatprep.subr.bf16.mxu0 %v117
  %186 = vmatpush1.bf16.msra.mxu0 %v116
  %187 = vmatprep.subr.bf16.mxu0 %v113
  %188 = vmatpush1.bf16.msra.mxu0 %v112
  %189 = vmatprep.subr.bf16.mxu0 %v109
  %190 = vmatpush1.bf16.msra.mxu0 %v108
  %191 = vmatprep.subr.bf16.mxu0 0
  %192 = vmatpush2.bf16.msra.mxu0 0
  %193 = vmatprep.subr.bf16.mxu0 0
  %194 = vmatpush2.bf16.msra.mxu0 0
  %195 = vmatprep.subr.bf16.mxu0 0
  %196 = vmatpush2.bf16.msra.mxu0 0
  %197 = vmatprep.subr.bf16.mxu0 0
  %198 = vmatpush2.bf16.msra.mxu0 0
  %199 = vmatprep.subr.bf16.mxu0 0
  %200 = vmatpush2.bf16.msra.mxu0 0
  %201 = vmatprep.subr.bf16.mxu0 0
  %202 = vmatpush2.bf16.msra.mxu0 0
  %203 = vmatprep.subr.bf16.mxu0 0
  %204 = vmatpush2.bf16.msra.mxu0 0
  %205 = vmatprep.subr.bf16.mxu0 0
  %206 = vmatpush2.bf16.msra.mxu0 0
  %207 = vmatprep.mubr.bf16.mxu0 0
  %208 = vmatmul.mubr.bf16.gmra.mxu0 %v132
  %v209 = vpop.f32.mrf.mxu0
  %v210 = vadd.f32 0.0, %v209
  %v211 = vpop.f32.mrf.mxu0
  %v212 = vadd.f32 0.0, %v211
  %v213 = vpop.f32.mrf.mxu0
  %v214 = vpop.f32.mrf.mxu0
  %215 = vdwg.mxu0
  %v216 = vld [vmem:[%s2] sm:$0xff]
  %v217 = vld [vmem:[%s3] sm:$0xff]
  %v218 = vadd.f32 %v169, %v171
  %v219 = vadd.f32 %v218, %v210
  %v220 = vadd.f32 %v219, %v212
  %221 = vadd.xlane.f32.xlu0 %v220
  %v222 = vpop.xlane.xlu0 %221
  %v223 = vmul.f32 %v222, 0.001953125
  %v224 = vsub.f32 %v169, %v223
  %v225 = vsub.f32 %v171, %v223
  %v226 = vsub.f32 %v210, %v223
  %v227 = vsub.f32 %v212, %v223
  %v228 = vmul.f32 %v224, %v224
  %v229 = vmul.f32 %v225, %v225
  %v230 = vmul.f32 %v226, %v226
  %v231 = vmul.f32 %v227, %v227
  %v232 = vadd.f32 %v228, %v229
  %v233 = vadd.f32 %v232, %v230
  %v234 = vadd.f32 %v233, %v231
  %235 = vadd.xlane.f32.xlu0 %v234
  %v236 = vpop.xlane.xlu0 %235
  %v237 = vmul.f32 %v236, 0.001953125
  %v238 = vadd.f32 %v237, 1e-05
  %v239 = vrsqrt.pop %v238
  %v240 = vmul.f32 %v216, %v239
  %242 = vset.pattern.permute.xlu0 0
  %243 = vperm.xlu0 %242, %v240
  %v244 = vpop.permute.xlu0 %243
  %v246 = vmul.f32 %v244, %v224
  %v247 = vmul.f32 %v244, %v225
  %v248 = vmul.f32 %v244, %v226
  %v249 = vmul.f32 %v244, %v227
  %251 = vset.pattern.permute.xlu0 0
  %252 = vperm.xlu0 %251, %v217
  %v253 = vpop.permute.xlu0 %252
  %v255 = vadd.f32 %v246, %v253
  %v256 = vadd.f32 %v247, %v253
  %v257 = vadd.f32 %v248, %v253
  %v258 = vadd.f32 %v249, %v253
  %vm259 = vcmp.ge.f32.partialorder %v255, 0.0
  %vm260 = vcmp.ge.f32.partialorder %v256, 0.0
  %vm261 = vcmp.ge.f32.partialorder %v257, 0.0
  %vm262 = vcmp.ge.f32.partialorder %v258, 0.0
  %v263 = vmul.f32 %v255, 0.2
  %v264 = vmul.f32 %v256, 0.2
  %v265 = vmul.f32 %v257, 0.2
  %v266 = vmul.f32 %v258, 0.2
  %v267 = vsel %vm259, %v255, %v263
  %v268 = vsel %vm260, %v256, %v264
  %v269 = vsel %vm261, %v257, %v265
  %v270 = vsel %vm262, %v258, %v266
  %v271 = vpack.c.bf16 %v267, %v267
  %v272 = vpack.c.bf16 %v268, %v268
  %v273 = vpack.c.bf16 %v269, %v269
  %v274 = vpack.c.bf16 %v270, %v270
  %v275 = vld [vmem:[%s5] sm:$0xf]
  %v276 = vld [vmem:[%s5 + $0x4] sm:$0xf]
  %v277 = vld [vmem:[%s5 + $0x8] sm:$0xf]
  %v278 = vld [vmem:[%s5 + $0xc] sm:$0xf]
  %v279 = vld [vmem:[%s5 + $0x10] sm:$0xf]
  %v280 = vld [vmem:[%s5 + $0x14] sm:$0xf]
  %v281 = vld [vmem:[%s5 + $0x18] sm:$0xf]
  %v282 = vld [vmem:[%s5 + $0x1c] sm:$0xf]
  %v283 = vld [vmem:[%s5 + $0x20] sm:$0xf]
  %v284 = vld [vmem:[%s5 + $0x24] sm:$0xf]
  %v285 = vld [vmem:[%s5 + $0x28] sm:$0xf]
  %v286 = vld [vmem:[%s5 + $0x2c] sm:$0xf]
  %v287 = vld [vmem:[%s5 + $0x30] sm:$0xf]
  %v288 = vld [vmem:[%s5 + $0x34] sm:$0xf]
  %v289 = vld [vmem:[%s5 + $0x38] sm:$0xf]
  %v290 = vld [vmem:[%s5 + $0x3c] sm:$0xf]
  %v291 = vld [vmem:[%s5 + $0x40] sm:$0xf]
  %v292 = vld [vmem:[%s5 + $0x44] sm:$0xf]
  %v293 = vld [vmem:[%s5 + $0x48] sm:$0xf]
  %v294 = vld [vmem:[%s5 + $0x4c] sm:$0xf]
  %v295 = vld [vmem:[%s5 + $0x50] sm:$0xf]
  %v296 = vld [vmem:[%s5 + $0x54] sm:$0xf]
  %v297 = vld [vmem:[%s5 + $0x58] sm:$0xf]
  %v298 = vld [vmem:[%s5 + $0x5c] sm:$0xf]
  %v299 = vld [vmem:[%s5 + $0x60] sm:$0xf]
  %v300 = vld [vmem:[%s5 + $0x64] sm:$0xf]
  %v301 = vld [vmem:[%s5 + $0x68] sm:$0xf]
  %v302 = vld [vmem:[%s5 + $0x6c] sm:$0xf]
  %v303 = vld [vmem:[%s5 + $0x70] sm:$0xf]
  %v304 = vld [vmem:[%s5 + $0x74] sm:$0xf]
  %v305 = vld [vmem:[%s5 + $0x78] sm:$0xf]
  %v306 = vld [vmem:[%s5 + $0x7c] sm:$0xf]
  %v307 = vld [vmem:[%s5 + $0x80] sm:$0xf]
  %v308 = vld [vmem:[%s5 + $0x84] sm:$0xf]
  %v309 = vld [vmem:[%s5 + $0x88] sm:$0xf]
  %v310 = vld [vmem:[%s5 + $0x8c] sm:$0xf]
  %v311 = vld [vmem:[%s5 + $0x90] sm:$0xf]
  %v312 = vld [vmem:[%s5 + $0x94] sm:$0xf]
  %v313 = vld [vmem:[%s5 + $0x98] sm:$0xf]
  %v314 = vld [vmem:[%s5 + $0x9c] sm:$0xf]
  %v315 = vld [vmem:[%s5 + $0xa0] sm:$0xf]
  %v316 = vld [vmem:[%s5 + $0xa4] sm:$0xf]
  %v317 = vld [vmem:[%s5 + $0xa8] sm:$0xf]
  %v318 = vld [vmem:[%s5 + $0xac] sm:$0xf]
  %v319 = vld [vmem:[%s5 + $0xb0] sm:$0xf]
  %v320 = vld [vmem:[%s5 + $0xb4] sm:$0xf]
  %v321 = vld [vmem:[%s5 + $0xb8] sm:$0xf]
  %v322 = vld [vmem:[%s5 + $0xbc] sm:$0xf]
  %v323 = vld [vmem:[%s5 + $0xc0] sm:$0xf]
  %v324 = vld [vmem:[%s5 + $0xc4] sm:$0xf]
  %v325 = vld [vmem:[%s5 + $0xc8] sm:$0xf]
  %v326 = vld [vmem:[%s5 + $0xcc] sm:$0xf]
  %v327 = vld [vmem:[%s5 + $0xd0] sm:$0xf]
  %v328 = vld [vmem:[%s5 + $0xd4] sm:$0xf]
  %v329 = vld [vmem:[%s5 + $0xd8] sm:$0xf]
  %v330 = vld [vmem:[%s5 + $0xdc] sm:$0xf]
  %v331 = vld [vmem:[%s5 + $0xe0] sm:$0xf]
  %v332 = vld [vmem:[%s5 + $0xe4] sm:$0xf]
  %v333 = vld [vmem:[%s5 + $0xe8] sm:$0xf]
  %v334 = vld [vmem:[%s5 + $0xec] sm:$0xf]
  %v335 = vld [vmem:[%s5 + $0xf0] sm:$0xf]
  %v336 = vld [vmem:[%s5 + $0xf4] sm:$0xf]
  %v337 = vld [vmem:[%s5 + $0xf8] sm:$0xf]
  %v338 = vld [vmem:[%s5 + $0xfc] sm:$0xf]
  %v403 = vunpack.c.l.b16 %v275
  %v404 = vunpack.c.l.b16 %v276
  %v405 = vunpack.c.l.b16 %v277
  %v406 = vunpack.c.l.b16 %v278
  %v407 = vunpack.c.l.b16 %v279
  %v408 = vunpack.c.l.b16 %v280
  %v409 = vunpack.c.l.b16 %v281
  %v410 = vunpack.c.l.b16 %v282
  %v411 = vunpack.c.l.b16 %v283
  %v412 = vunpack.c.l.b16 %v284
  %v413 = vunpack.c.l.b16 %v285
  %v414 = vunpack.c.l.b16 %v286
  %v415 = vunpack.c.l.b16 %v287
  %v416 = vunpack.c.l.b16 %v288
  %v417 = vunpack.c.l.b16 %v289
  %v418 = vunpack.c.l.b16 %v290
  %v419 = vunpack.c.l.b16 %v291
  %v420 = vunpack.c.l.b16 %v292
  %v421 = vunpack.c.l.b16 %v293
  %v422 = vunpack.c.l.b16 %v294
  %v423 = vunpack.c.l.b16 %v295
  %v424 = vunpack.c.l.b16 %v296
  %v425 = vunpack.c.l.b16 %v297
  %v426 = vunpack.c.l.b16 %v298
  %v427 = vunpack.c.l.b16 %v299
  %v428 = vunpack.c.l.b16 %v300
  %v429 = vunpack.c.l.b16 %v301
  %v430 = vunpack.c.l.b16 %v302
  %v431 = vunpack.c.l.b16 %v303
  %v432 = vunpack.c.l.b16 %v304
  %v433 = vunpack.c.l.b16 %v305
  %v434 = vunpack.c.l.b16 %v306
  %v435 = vunpack.c.l.b16 %v307
  %v436 = vunpack.c.l.b16 %v308
  %v437 = vunpack.c.l.b16 %v309
  %v438 = vunpack.c.l.b16 %v310
  %v439 = vunpack.c.l.b16 %v311
  %v440 = vunpack.c.l.b16 %v312
  %v441 = vunpack.c.l.b16 %v313
  %v442 = vunpack.c.l.b16 %v314
  %v443 = vunpack.c.l.b16 %v315
  %v444 = vunpack.c.l.b16 %v316
  %v445 = vunpack.c.l.b16 %v317
  %v446 = vunpack.c.l.b16 %v318
  %v447 = vunpack.c.l.b16 %v319
  %v448 = vunpack.c.l.b16 %v320
  %v449 = vunpack.c.l.b16 %v321
  %v450 = vunpack.c.l.b16 %v322
  %v451 = vunpack.c.l.b16 %v323
  %v452 = vunpack.c.l.b16 %v324
  %v453 = vunpack.c.l.b16 %v325
  %v454 = vunpack.c.l.b16 %v326
  %v455 = vunpack.c.l.b16 %v327
  %v456 = vunpack.c.l.b16 %v328
  %v457 = vunpack.c.l.b16 %v329
  %v458 = vunpack.c.l.b16 %v330
  %v459 = vunpack.c.l.b16 %v331
  %v460 = vunpack.c.l.b16 %v332
  %v461 = vunpack.c.l.b16 %v333
  %v462 = vunpack.c.l.b16 %v334
  %v463 = vunpack.c.l.b16 %v335
  %v464 = vunpack.c.l.b16 %v336
  %v465 = vunpack.c.l.b16 %v337
  %v466 = vunpack.c.l.b16 %v338
  %v467 = vpack.c.b16 %v404, %v403
  %v468 = vpack.c.b16 %v406, %v405
  %v469 = vpack.c.b16 %v408, %v407
  %v470 = vpack.c.b16 %v410, %v409
  %v471 = vpack.c.b16 %v412, %v411
  %v472 = vpack.c.b16 %v414, %v413
  %v473 = vpack.c.b16 %v416, %v415
  %v474 = vpack.c.b16 %v418, %v417
  %v475 = vpack.c.b16 %v420, %v419
  %v476 = vpack.c.b16 %v422, %v421
  %v477 = vpack.c.b16 %v424, %v423
  %v478 = vpack.c.b16 %v426, %v425
  %v479 = vpack.c.b16 %v428, %v427
  %v480 = vpack.c.b16 %v430, %v429
  %v481 = vpack.c.b16 %v432, %v431
  %v482 = vpack.c.b16 %v434, %v433
  %v483 = vpack.c.b16 %v436, %v435
  %v484 = vpack.c.b16 %v438, %v437
  %v485 = vpack.c.b16 %v440, %v439
  %v486 = vpack.c.b16 %v442, %v441
  %v487 = vpack.c.b16 %v444, %v443
  %v488 = vpack.c.b16 %v446, %v445
  %v489 = vpack.c.b16 %v448, %v447
  %v490 = vpack.c.b16 %v450, %v449
  %v491 = vpack.c.b16 %v452, %v451
  %v492 = vpack.c.b16 %v454, %v453
  %v493 = vpack.c.b16 %v456, %v455
  %v494 = vpack.c.b16 %v458, %v457
  %v495 = vpack.c.b16 %v460, %v459
  %v496 = vpack.c.b16 %v462, %v461
  %v497 = vpack.c.b16 %v464, %v463
  %v498 = vpack.c.b16 %v466, %v465
  %531 = vmatprep.subr.bf16.mxu0 0
  %532 = vmatpush1.bf16.msra.mxu0 %v474
  %533 = vmatprep.subr.bf16.mxu0 0
  %534 = vmatpush1.bf16.msra.mxu0 %v473
  %535 = vmatprep.subr.bf16.mxu0 0
  %536 = vmatpush1.bf16.msra.mxu0 %v472
  %537 = vmatprep.subr.bf16.mxu0 0
  %538 = vmatpush1.bf16.msra.mxu0 %v471
  %539 = vmatprep.subr.bf16.mxu0 0
  %540 = vmatpush1.bf16.msra.mxu0 %v470
  %541 = vmatprep.subr.bf16.mxu0 0
  %542 = vmatpush1.bf16.msra.mxu0 %v469
  %543 = vmatprep.subr.bf16.mxu0 0
  %544 = vmatpush1.bf16.msra.mxu0 %v468
  %545 = vmatprep.subr.bf16.mxu0 0
  %546 = vmatpush1.bf16.msra.mxu0 %v467
  %547 = vmatprep.subr.bf16.mxu0 0
  %548 = vmatpush2.bf16.msra.mxu0 %v482
  %549 = vmatprep.subr.bf16.mxu0 0
  %550 = vmatpush2.bf16.msra.mxu0 %v481
  %551 = vmatprep.subr.bf16.mxu0 0
  %552 = vmatpush2.bf16.msra.mxu0 %v480
  %553 = vmatprep.subr.bf16.mxu0 0
  %554 = vmatpush2.bf16.msra.mxu0 %v479
  %555 = vmatprep.subr.bf16.mxu0 0
  %556 = vmatpush2.bf16.msra.mxu0 %v478
  %557 = vmatprep.subr.bf16.mxu0 0
  %558 = vmatpush2.bf16.msra.mxu0 %v477
  %559 = vmatprep.subr.bf16.mxu0 0
  %560 = vmatpush2.bf16.msra.mxu0 %v476
  %561 = vmatprep.subr.bf16.mxu0 0
  %562 = vmatpush2.bf16.msra.mxu0 %v475
  %563 = vmatprep.mubr.bf16.mxu0 %v272
  %564 = vmatmul.mubr.bf16.gmra.mxu0 %v271
  %v565 = vpop.f32.mrf.mxu0
  %v566 = vadd.f32 0.0, %v565
  %v567 = vpop.f32.mrf.mxu0
  %v568 = vpop.f32.mrf.mxu0
  %v569 = vpop.f32.mrf.mxu0
  %570 = vdwg.mxu0
  %571 = vmatprep.subr.bf16.mxu0 0
  %572 = vmatpush1.bf16.msra.mxu0 %v490
  %573 = vmatprep.subr.bf16.mxu0 0
  %574 = vmatpush1.bf16.msra.mxu0 %v489
  %575 = vmatprep.subr.bf16.mxu0 0
  %576 = vmatpush1.bf16.msra.mxu0 %v488
  %577 = vmatprep.subr.bf16.mxu0 0
  %578 = vmatpush1.bf16.msra.mxu0 %v487
  %579 = vmatprep.subr.bf16.mxu0 0
  %580 = vmatpush1.bf16.msra.mxu0 %v486
  %581 = vmatprep.subr.bf16.mxu0 0
  %582 = vmatpush1.bf16.msra.mxu0 %v485
  %583 = vmatprep.subr.bf16.mxu0 0
  %584 = vmatpush1.bf16.msra.mxu0 %v484
  %585 = vmatprep.subr.bf16.mxu0 0
  %586 = vmatpush1.bf16.msra.mxu0 %v483
  %587 = vmatprep.subr.bf16.mxu0 0
  %588 = vmatpush2.bf16.msra.mxu0 %v498
  %589 = vmatprep.subr.bf16.mxu0 0
  %590 = vmatpush2.bf16.msra.mxu0 %v497
  %591 = vmatprep.subr.bf16.mxu0 0
  %592 = vmatpush2.bf16.msra.mxu0 %v496
  %593 = vmatprep.subr.bf16.mxu0 0
  %594 = vmatpush2.bf16.msra.mxu0 %v495
  %595 = vmatprep.subr.bf16.mxu0 0
  %596 = vmatpush2.bf16.msra.mxu0 %v494
  %597 = vmatprep.subr.bf16.mxu0 0
  %598 = vmatpush2.bf16.msra.mxu0 %v493
  %599 = vmatprep.subr.bf16.mxu0 0
  %600 = vmatpush2.bf16.msra.mxu0 %v492
  %601 = vmatprep.subr.bf16.mxu0 0
  %602 = vmatpush2.bf16.msra.mxu0 %v491
  %603 = vmatprep.mubr.bf16.mxu0 %v274
  %604 = vmatmul.mubr.bf16.gmra.mxu0 %v273
  %v605 = vpop.f32.mrf.mxu0
  %v606 = vadd.f32 %v566, %v605
  %v607 = vpop.f32.mrf.mxu0
  %v608 = vpop.f32.mrf.mxu0
  %v609 = vpop.f32.mrf.mxu0
  %610 = vdwg.mxu0
  %v611 = vpack.c.bf16 %v606, %v606
  %v612 = vld [vmem:[%s4] sm:$0xf]
  %v613 = vld [vmem:[%s4 + $0x4] sm:$0xf]
  %s614 = scalar_lea.vmem %s5, 256
  %v615 = vld [vmem:[%s614] sm:$0xf]
  %v616 = vld [vmem:[%s614 + $0x4] sm:$0xf]
  %v617 = vld [vmem:[%s614 + $0x8] sm:$0xf]
  %v618 = vld [vmem:[%s614 + $0xc] sm:$0xf]
  %v619 = vld [vmem:[%s614 + $0x10] sm:$0xf]
  %v620 = vld [vmem:[%s614 + $0x14] sm:$0xf]
  %v621 = vld [vmem:[%s614 + $0x18] sm:$0xf]
  %v622 = vld [vmem:[%s614 + $0x1c] sm:$0xf]
  %v623 = vld [vmem:[%s614 + $0x20] sm:$0xf]
  %v624 = vld [vmem:[%s614 + $0x24] sm:$0xf]
  %v625 = vld [vmem:[%s614 + $0x28] sm:$0xf]
  %v626 = vld [vmem:[%s614 + $0x2c] sm:$0xf]
  %v627 = vld [vmem:[%s614 + $0x30] sm:$0xf]
  %v628 = vld [vmem:[%s614 + $0x34] sm:$0xf]
  %v629 = vld [vmem:[%s614 + $0x38] sm:$0xf]
  %v630 = vld [vmem:[%s614 + $0x3c] sm:$0xf]
  %v631 = vld [vmem:[%s614 + $0x40] sm:$0xf]
  %v632 = vld [vmem:[%s614 + $0x44] sm:$0xf]
  %v633 = vld [vmem:[%s614 + $0x48] sm:$0xf]
  %v634 = vld [vmem:[%s614 + $0x4c] sm:$0xf]
  %v635 = vld [vmem:[%s614 + $0x50] sm:$0xf]
  %v636 = vld [vmem:[%s614 + $0x54] sm:$0xf]
  %v637 = vld [vmem:[%s614 + $0x58] sm:$0xf]
  %v638 = vld [vmem:[%s614 + $0x5c] sm:$0xf]
  %v639 = vld [vmem:[%s614 + $0x60] sm:$0xf]
  %v640 = vld [vmem:[%s614 + $0x64] sm:$0xf]
  %v641 = vld [vmem:[%s614 + $0x68] sm:$0xf]
  %v642 = vld [vmem:[%s614 + $0x6c] sm:$0xf]
  %v643 = vld [vmem:[%s614 + $0x70] sm:$0xf]
  %v644 = vld [vmem:[%s614 + $0x74] sm:$0xf]
  %v645 = vld [vmem:[%s614 + $0x78] sm:$0xf]
  %v646 = vld [vmem:[%s614 + $0x7c] sm:$0xf]
  %v647 = vld [vmem:[%s614 + $0x80] sm:$0xf]
  %v648 = vld [vmem:[%s614 + $0x84] sm:$0xf]
  %v649 = vld [vmem:[%s614 + $0x88] sm:$0xf]
  %v650 = vld [vmem:[%s614 + $0x8c] sm:$0xf]
  %v651 = vld [vmem:[%s614 + $0x90] sm:$0xf]
  %v652 = vld [vmem:[%s614 + $0x94] sm:$0xf]
  %v653 = vld [vmem:[%s614 + $0x98] sm:$0xf]
  %v654 = vld [vmem:[%s614 + $0x9c] sm:$0xf]
  %v655 = vld [vmem:[%s614 + $0xa0] sm:$0xf]
  %v656 = vld [vmem:[%s614 + $0xa4] sm:$0xf]
  %v657 = vld [vmem:[%s614 + $0xa8] sm:$0xf]
  %v658 = vld [vmem:[%s614 + $0xac] sm:$0xf]
  %v659 = vld [vmem:[%s614 + $0xb0] sm:$0xf]
  %v660 = vld [vmem:[%s614 + $0xb4] sm:$0xf]
  %v661 = vld [vmem:[%s614 + $0xb8] sm:$0xf]
  %v662 = vld [vmem:[%s614 + $0xbc] sm:$0xf]
  %v663 = vld [vmem:[%s614 + $0xc0] sm:$0xf]
  %v664 = vld [vmem:[%s614 + $0xc4] sm:$0xf]
  %v665 = vld [vmem:[%s614 + $0xc8] sm:$0xf]
  %v666 = vld [vmem:[%s614 + $0xcc] sm:$0xf]
  %v667 = vld [vmem:[%s614 + $0xd0] sm:$0xf]
  %v668 = vld [vmem:[%s614 + $0xd4] sm:$0xf]
  %v669 = vld [vmem:[%s614 + $0xd8] sm:$0xf]
  %v670 = vld [vmem:[%s614 + $0xdc] sm:$0xf]
  %v671 = vld [vmem:[%s614 + $0xe0] sm:$0xf]
  %v672 = vld [vmem:[%s614 + $0xe4] sm:$0xf]
  %v673 = vld [vmem:[%s614 + $0xe8] sm:$0xf]
  %v674 = vld [vmem:[%s614 + $0xec] sm:$0xf]
  %v675 = vld [vmem:[%s614 + $0xf0] sm:$0xf]
  %v676 = vld [vmem:[%s614 + $0xf4] sm:$0xf]
  %v677 = vld [vmem:[%s614 + $0xf8] sm:$0xf]
  %v678 = vld [vmem:[%s614 + $0xfc] sm:$0xf]
  %v743 = vunpack.c.l.b16 %v615
  %v744 = vunpack.c.l.b16 %v616
  %v745 = vunpack.c.l.b16 %v617
  %v746 = vunpack.c.l.b16 %v618
  %v747 = vunpack.c.l.b16 %v619
  %v748 = vunpack.c.l.b16 %v620
  %v749 = vunpack.c.l.b16 %v621
  %v750 = vunpack.c.l.b16 %v622
  %v751 = vunpack.c.l.b16 %v623
  %v752 = vunpack.c.l.b16 %v624
  %v753 = vunpack.c.l.b16 %v625
  %v754 = vunpack.c.l.b16 %v626
  %v755 = vunpack.c.l.b16 %v627
  %v756 = vunpack.c.l.b16 %v628
  %v757 = vunpack.c.l.b16 %v629
  %v758 = vunpack.c.l.b16 %v630
  %v759 = vunpack.c.l.b16 %v631
  %v760 = vunpack.c.l.b16 %v632
  %v761 = vunpack.c.l.b16 %v633
  %v762 = vunpack.c.l.b16 %v634
  %v763 = vunpack.c.l.b16 %v635
  %v764 = vunpack.c.l.b16 %v636
  %v765 = vunpack.c.l.b16 %v637
  %v766 = vunpack.c.l.b16 %v638
  %v767 = vunpack.c.l.b16 %v639
  %v768 = vunpack.c.l.b16 %v640
  %v769 = vunpack.c.l.b16 %v641
  %v770 = vunpack.c.l.b16 %v642
  %v771 = vunpack.c.l.b16 %v643
  %v772 = vunpack.c.l.b16 %v644
  %v773 = vunpack.c.l.b16 %v645
  %v774 = vunpack.c.l.b16 %v646
  %v775 = vunpack.c.l.b16 %v647
  %v776 = vunpack.c.l.b16 %v648
  %v777 = vunpack.c.l.b16 %v649
  %v778 = vunpack.c.l.b16 %v650
  %v779 = vunpack.c.l.b16 %v651
  %v780 = vunpack.c.l.b16 %v652
  %v781 = vunpack.c.l.b16 %v653
  %v782 = vunpack.c.l.b16 %v654
  %v783 = vunpack.c.l.b16 %v655
  %v784 = vunpack.c.l.b16 %v656
  %v785 = vunpack.c.l.b16 %v657
  %v786 = vunpack.c.l.b16 %v658
  %v787 = vunpack.c.l.b16 %v659
  %v788 = vunpack.c.l.b16 %v660
  %v789 = vunpack.c.l.b16 %v661
  %v790 = vunpack.c.l.b16 %v662
  %v791 = vunpack.c.l.b16 %v663
  %v792 = vunpack.c.l.b16 %v664
  %v793 = vunpack.c.l.b16 %v665
  %v794 = vunpack.c.l.b16 %v666
  %v795 = vunpack.c.l.b16 %v667
  %v796 = vunpack.c.l.b16 %v668
  %v797 = vunpack.c.l.b16 %v669
  %v798 = vunpack.c.l.b16 %v670
  %v799 = vunpack.c.l.b16 %v671
  %v800 = vunpack.c.l.b16 %v672
  %v801 = vunpack.c.l.b16 %v673
  %v802 = vunpack.c.l.b16 %v674
  %v803 = vunpack.c.l.b16 %v675
  %v804 = vunpack.c.l.b16 %v676
  %v805 = vunpack.c.l.b16 %v677
  %v806 = vunpack.c.l.b16 %v678
  %v807 = vpack.c.b16 %v744, %v743
  %v808 = vpack.c.b16 %v746, %v745
  %v809 = vpack.c.b16 %v748, %v747
  %v810 = vpack.c.b16 %v750, %v749
  %v811 = vpack.c.b16 %v752, %v751
  %v812 = vpack.c.b16 %v754, %v753
  %v813 = vpack.c.b16 %v756, %v755
  %v814 = vpack.c.b16 %v758, %v757
  %v815 = vpack.c.b16 %v760, %v759
  %v816 = vpack.c.b16 %v762, %v761
  %v817 = vpack.c.b16 %v764, %v763
  %v818 = vpack.c.b16 %v766, %v765
  %v819 = vpack.c.b16 %v768, %v767
  %v820 = vpack.c.b16 %v770, %v769
  %v821 = vpack.c.b16 %v772, %v771
  %v822 = vpack.c.b16 %v774, %v773
  %v823 = vpack.c.b16 %v776, %v775
  %v824 = vpack.c.b16 %v778, %v777
  %v825 = vpack.c.b16 %v780, %v779
  %v826 = vpack.c.b16 %v782, %v781
  %v827 = vpack.c.b16 %v784, %v783
  %v828 = vpack.c.b16 %v786, %v785
  %v829 = vpack.c.b16 %v788, %v787
  %v830 = vpack.c.b16 %v790, %v789
  %v831 = vpack.c.b16 %v792, %v791
  %v832 = vpack.c.b16 %v794, %v793
  %v833 = vpack.c.b16 %v796, %v795
  %v834 = vpack.c.b16 %v798, %v797
  %v835 = vpack.c.b16 %v800, %v799
  %v836 = vpack.c.b16 %v802, %v801
  %v837 = vpack.c.b16 %v804, %v803
  %v838 = vpack.c.b16 %v806, %v805
  %871 = vmatprep.subr.bf16.mxu0 0
  %872 = vmatpush1.bf16.msra.mxu0 %v814
  %873 = vmatprep.subr.bf16.mxu0 0
  %874 = vmatpush1.bf16.msra.mxu0 %v813
  %875 = vmatprep.subr.bf16.mxu0 0
  %876 = vmatpush1.bf16.msra.mxu0 %v812
  %877 = vmatprep.subr.bf16.mxu0 0
  %878 = vmatpush1.bf16.msra.mxu0 %v811
  %879 = vmatprep.subr.bf16.mxu0 0
  %880 = vmatpush1.bf16.msra.mxu0 %v810
  %881 = vmatprep.subr.bf16.mxu0 0
  %882 = vmatpush1.bf16.msra.mxu0 %v809
  %883 = vmatprep.subr.bf16.mxu0 0
  %884 = vmatpush1.bf16.msra.mxu0 %v808
  %885 = vmatprep.subr.bf16.mxu0 0
  %886 = vmatpush1.bf16.msra.mxu0 %v807
  %887 = vmatprep.subr.bf16.mxu0 0
  %888 = vmatpush2.bf16.msra.mxu0 %v822
  %889 = vmatprep.subr.bf16.mxu0 0
  %890 = vmatpush2.bf16.msra.mxu0 %v821
  %891 = vmatprep.subr.bf16.mxu0 0
  %892 = vmatpush2.bf16.msra.mxu0 %v820
  %893 = vmatprep.subr.bf16.mxu0 0
  %894 = vmatpush2.bf16.msra.mxu0 %v819
  %895 = vmatprep.subr.bf16.mxu0 0
  %896 = vmatpush2.bf16.msra.mxu0 %v818
  %897 = vmatprep.subr.bf16.mxu0 0
  %898 = vmatpush2.bf16.msra.mxu0 %v817
  %899 = vmatprep.subr.bf16.mxu0 0
  %900 = vmatpush2.bf16.msra.mxu0 %v816
  %901 = vmatprep.subr.bf16.mxu0 0
  %902 = vmatpush2.bf16.msra.mxu0 %v815
  %903 = vmatprep.mubr.bf16.mxu0 %v272
  %904 = vmatmul.mubr.bf16.gmra.mxu0 %v271
  %v905 = vpop.f32.mrf.mxu0
  %v906 = vadd.f32 0.0, %v905
  %v907 = vpop.f32.mrf.mxu0
  %v908 = vpop.f32.mrf.mxu0
  %v909 = vpop.f32.mrf.mxu0
  %910 = vdwg.mxu0
  %911 = vmatprep.subr.bf16.mxu0 0
  %912 = vmatpush1.bf16.msra.mxu0 %v830
  %913 = vmatprep.subr.bf16.mxu0 0
  %914 = vmatpush1.bf16.msra.mxu0 %v829
  %915 = vmatprep.subr.bf16.mxu0 0
  %916 = vmatpush1.bf16.msra.mxu0 %v828
  %917 = vmatprep.subr.bf16.mxu0 0
  %918 = vmatpush1.bf16.msra.mxu0 %v827
  %919 = vmatprep.subr.bf16.mxu0 0
  %920 = vmatpush1.bf16.msra.mxu0 %v826
  %921 = vmatprep.subr.bf16.mxu0 0
  %922 = vmatpush1.bf16.msra.mxu0 %v825
  %923 = vmatprep.subr.bf16.mxu0 0
  %924 = vmatpush1.bf16.msra.mxu0 %v824
  %925 = vmatprep.subr.bf16.mxu0 0
  %926 = vmatpush1.bf16.msra.mxu0 %v823
  %927 = vmatprep.subr.bf16.mxu0 0
  %928 = vmatpush2.bf16.msra.mxu0 %v838
  %929 = vmatprep.subr.bf16.mxu0 0
  %930 = vmatpush2.bf16.msra.mxu0 %v837
  %931 = vmatprep.subr.bf16.mxu0 0
  %932 = vmatpush2.bf16.msra.mxu0 %v836
  %933 = vmatprep.subr.bf16.mxu0 0
  %934 = vmatpush2.bf16.msra.mxu0 %v835
  %935 = vmatprep.subr.bf16.mxu0 0
  %936 = vmatpush2.bf16.msra.mxu0 %v834
  %937 = vmatprep.subr.bf16.mxu0 0
  %938 = vmatpush2.bf16.msra.mxu0 %v833
  %939 = vmatprep.subr.bf16.mxu0 0
  %940 = vmatpush2.bf16.msra.mxu0 %v832
  %941 = vmatprep.subr.bf16.mxu0 0
  %942 = vmatpush2.bf16.msra.mxu0 %v831
  %943 = vmatprep.mubr.bf16.mxu0 %v274
  %944 = vmatmul.mubr.bf16.gmra.mxu0 %v273
  %v945 = vpop.f32.mrf.mxu0
  %v946 = vadd.f32 %v906, %v945
  %v947 = vpop.f32.mrf.mxu0
  %v948 = vpop.f32.mrf.mxu0
  %v949 = vpop.f32.mrf.mxu0
  %950 = vdwg.mxu0
  %v951 = vpack.c.bf16 %v946, %v946
  %s952 = scalar_lea.vmem %s4, 8
  %v953 = vld [vmem:[%s952] sm:$0xf]
  %v954 = vld [vmem:[%s952 + $0x4] sm:$0xf]
  %v957 = vunpack.c.l.b16 %v953
  %v958 = vunpack.c.l.b16 %v954
  %v959 = vpack.c.b16 %v958, %v957
  %vm960 = vcmask 64512
  %v962 = vsel %vm960, %v959, 0
  %vm964 = vcmask 1043456
  %v966 = vsel %vm964, %v951, 0
  %968 = vmatprep.subr.bf16.mxu0 0
  %969 = vmatpush1.bf16.msra.mxu0 0
  %970 = vmatprep.subr.bf16.mxu0 0
  %971 = vmatpush1.bf16.msra.mxu0 0
  %972 = vmatprep.subr.bf16.mxu0 0
  %973 = vmatpush1.bf16.msra.mxu0 0
  %974 = vmatprep.subr.bf16.mxu0 0
  %975 = vmatpush1.bf16.msra.mxu0 0
  %976 = vmatprep.subr.bf16.mxu0 0
  %977 = vmatpush1.bf16.msra.mxu0 0
  %978 = vmatprep.subr.bf16.mxu0 0
  %979 = vmatpush1.bf16.msra.mxu0 0
  %980 = vmatprep.subr.bf16.mxu0 0
  %981 = vmatpush1.bf16.msra.mxu0 0
  %982 = vmatprep.subr.bf16.mxu0 0
  %983 = vmatpush1.bf16.msra.mxu0 %v966
  %984 = vmatprep.subr.bf16.mxu0 0
  %985 = vmatpush2.bf16.msra.mxu0 0
  %986 = vmatprep.subr.bf16.mxu0 0
  %987 = vmatpush2.bf16.msra.mxu0 0
  %988 = vmatprep.subr.bf16.mxu0 0
  %989 = vmatpush2.bf16.msra.mxu0 0
  %990 = vmatprep.subr.bf16.mxu0 0
  %991 = vmatpush2.bf16.msra.mxu0 0
  %992 = vmatprep.subr.bf16.mxu0 0
  %993 = vmatpush2.bf16.msra.mxu0 0
  %994 = vmatprep.subr.bf16.mxu0 0
  %995 = vmatpush2.bf16.msra.mxu0 0
  %996 = vmatprep.subr.bf16.mxu0 0
  %997 = vmatpush2.bf16.msra.mxu0 0
  %998 = vmatprep.subr.bf16.mxu0 0
  %999 = vmatpush2.bf16.msra.mxu0 0
  %1000 = vmatprep.mubr.bf16.mxu0 0
  %1001 = vmatmul.mubr.bf16.gmra.mxu0 %v962
  %v1002 = vpop.f32.mrf.mxu0
  %v1003 = vadd.f32 0.0, %v1002
  %v1004 = vpop.f32.mrf.mxu0
  %v1005 = vpop.f32.mrf.mxu0
  %v1006 = vadd.f32 0.0, %v1005
  %v1007 = vpop.f32.mrf.mxu0
  %1008 = vdwg.mxu0
  %v1011 = vunpack.c.l.b16 %v612
  %v1012 = vunpack.c.l.b16 %v613
  %v1013 = vpack.c.b16 %v1012, %v1011
  %v1015 = vsel %vm960, %v1013, 0
  %v1018 = vsel %vm964, %v611, 0
  %1020 = vmatprep.subr.bf16.mxu0 0
  %1021 = vmatpush1.bf16.msra.mxu0 0
  %1022 = vmatprep.subr.bf16.mxu0 0
  %1023 = vmatpush1.bf16.msra.mxu0 0
  %1024 = vmatprep.subr.bf16.mxu0 0
  %1025 = vmatpush1.bf16.msra.mxu0 0
  %1026 = vmatprep.subr.bf16.mxu0 0
  %1027 = vmatpush1.bf16.msra.mxu0 0
  %1028 = vmatprep.subr.bf16.mxu0 0
  %1029 = vmatpush1.bf16.msra.mxu0 0
  %1030 = vmatprep.subr.bf16.mxu0 0
  %1031 = vmatpush1.bf16.msra.mxu0 0
  %1032 = vmatprep.subr.bf16.mxu0 0
  %1033 = vmatpush1.bf16.msra.mxu0 0
  %1034 = vmatprep.subr.bf16.mxu0 0
  %1035 = vmatpush1.bf16.msra.mxu0 %v1018
  %1036 = vmatprep.subr.bf16.mxu0 0
  %1037 = vmatpush2.bf16.msra.mxu0 0
  %1038 = vmatprep.subr.bf16.mxu0 0
  %1039 = vmatpush2.bf16.msra.mxu0 0
  %1040 = vmatprep.subr.bf16.mxu0 0
  %1041 = vmatpush2.bf16.msra.mxu0 0
  %1042 = vmatprep.subr.bf16.mxu0 0
  %1043 = vmatpush2.bf16.msra.mxu0 0
  %1044 = vmatprep.subr.bf16.mxu0 0
  %1045 = vmatpush2.bf16.msra.mxu0 0
  %1046 = vmatprep.subr.bf16.mxu0 0
  %1047 = vmatpush2.bf16.msra.mxu0 0
  %1048 = vmatprep.subr.bf16.mxu0 0
  %1049 = vmatpush2.bf16.msra.mxu0 0
  %1050 = vmatprep.subr.bf16.mxu0 0
  %1051 = vmatpush2.bf16.msra.mxu0 0
  %1052 = vmatprep.mubr.bf16.mxu0 0
  %1053 = vmatmul.mubr.bf16.gmra.mxu0 %v1015
  %v1054 = vpop.f32.mrf.mxu0
  %v1055 = vadd.f32 %v1003, %v1054
  %v1056 = vpop.f32.mrf.mxu0
  %v1057 = vpop.f32.mrf.mxu0
  %v1058 = vadd.f32 %v1006, %v1057
  %v1059 = vpop.f32.mrf.mxu0
  %1060 = vdwg.mxu0
  %s1061 = scalar_lea.vmem %s5, 512
  %v1062 = vld [vmem:[%s1061] sm:$0xf]
  %v1063 = vld [vmem:[%s1061 + $0x4] sm:$0xf]
  %v1064 = vld [vmem:[%s1061 + $0x8] sm:$0xf]
  %v1065 = vld [vmem:[%s1061 + $0xc] sm:$0xf]
  %v1066 = vld [vmem:[%s1061 + $0x10] sm:$0xf]
  %v1067 = vld [vmem:[%s1061 + $0x14] sm:$0xf]
  %v1068 = vld [vmem:[%s1061 + $0x18] sm:$0xf]
  %v1069 = vld [vmem:[%s1061 + $0x1c] sm:$0xf]
  %v1070 = vld [vmem:[%s1061 + $0x20] sm:$0xf]
  %v1071 = vld [vmem:[%s1061 + $0x24] sm:$0xf]
  %v1072 = vld [vmem:[%s1061 + $0x28] sm:$0xf]
  %v1073 = vld [vmem:[%s1061 + $0x2c] sm:$0xf]
  %v1074 = vld [vmem:[%s1061 + $0x30] sm:$0xf]
  %v1075 = vld [vmem:[%s1061 + $0x34] sm:$0xf]
  %v1076 = vld [vmem:[%s1061 + $0x38] sm:$0xf]
  %v1077 = vld [vmem:[%s1061 + $0x3c] sm:$0xf]
  %v1078 = vld [vmem:[%s1061 + $0x40] sm:$0xf]
  %v1079 = vld [vmem:[%s1061 + $0x44] sm:$0xf]
  %v1080 = vld [vmem:[%s1061 + $0x48] sm:$0xf]
  %v1081 = vld [vmem:[%s1061 + $0x4c] sm:$0xf]
  %v1082 = vld [vmem:[%s1061 + $0x50] sm:$0xf]
  %v1083 = vld [vmem:[%s1061 + $0x54] sm:$0xf]
  %v1084 = vld [vmem:[%s1061 + $0x58] sm:$0xf]
  %v1085 = vld [vmem:[%s1061 + $0x5c] sm:$0xf]
  %v1086 = vld [vmem:[%s1061 + $0x60] sm:$0xf]
  %v1087 = vld [vmem:[%s1061 + $0x64] sm:$0xf]
  %v1088 = vld [vmem:[%s1061 + $0x68] sm:$0xf]
  %v1089 = vld [vmem:[%s1061 + $0x6c] sm:$0xf]
  %v1090 = vld [vmem:[%s1061 + $0x70] sm:$0xf]
  %v1091 = vld [vmem:[%s1061 + $0x74] sm:$0xf]
  %v1092 = vld [vmem:[%s1061 + $0x78] sm:$0xf]
  %v1093 = vld [vmem:[%s1061 + $0x7c] sm:$0xf]
  %v1094 = vld [vmem:[%s1061 + $0x80] sm:$0xf]
  %v1095 = vld [vmem:[%s1061 + $0x84] sm:$0xf]
  %v1096 = vld [vmem:[%s1061 + $0x88] sm:$0xf]
  %v1097 = vld [vmem:[%s1061 + $0x8c] sm:$0xf]
  %v1098 = vld [vmem:[%s1061 + $0x90] sm:$0xf]
  %v1099 = vld [vmem:[%s1061 + $0x94] sm:$0xf]
  %v1100 = vld [vmem:[%s1061 + $0x98] sm:$0xf]
  %v1101 = vld [vmem:[%s1061 + $0x9c] sm:$0xf]
  %v1102 = vld [vmem:[%s1061 + $0xa0] sm:$0xf]
  %v1103 = vld [vmem:[%s1061 + $0xa4] sm:$0xf]
  %v1104 = vld [vmem:[%s1061 + $0xa8] sm:$0xf]
  %v1105 = vld [vmem:[%s1061 + $0xac] sm:$0xf]
  %v1106 = vld [vmem:[%s1061 + $0xb0] sm:$0xf]
  %v1107 = vld [vmem:[%s1061 + $0xb4] sm:$0xf]
  %v1108 = vld [vmem:[%s1061 + $0xb8] sm:$0xf]
  %v1109 = vld [vmem:[%s1061 + $0xbc] sm:$0xf]
  %v1110 = vld [vmem:[%s1061 + $0xc0] sm:$0xf]
  %v1111 = vld [vmem:[%s1061 + $0xc4] sm:$0xf]
  %v1112 = vld [vmem:[%s1061 + $0xc8] sm:$0xf]
  %v1113 = vld [vmem:[%s1061 + $0xcc] sm:$0xf]
  %v1114 = vld [vmem:[%s1061 + $0xd0] sm:$0xf]
  %v1115 = vld [vmem:[%s1061 + $0xd4] sm:$0xf]
  %v1116 = vld [vmem:[%s1061 + $0xd8] sm:$0xf]
  %v1117 = vld [vmem:[%s1061 + $0xdc] sm:$0xf]
  %v1118 = vld [vmem:[%s1061 + $0xe0] sm:$0xf]
  %v1119 = vld [vmem:[%s1061 + $0xe4] sm:$0xf]
  %v1120 = vld [vmem:[%s1061 + $0xe8] sm:$0xf]
  %v1121 = vld [vmem:[%s1061 + $0xec] sm:$0xf]
  %v1122 = vld [vmem:[%s1061 + $0xf0] sm:$0xf]
  %v1123 = vld [vmem:[%s1061 + $0xf4] sm:$0xf]
  %v1124 = vld [vmem:[%s1061 + $0xf8] sm:$0xf]
  %v1125 = vld [vmem:[%s1061 + $0xfc] sm:$0xf]
  %v1190 = vunpack.c.l.b16 %v1062
  %v1191 = vunpack.c.l.b16 %v1063
  %v1192 = vunpack.c.l.b16 %v1064
  %v1193 = vunpack.c.l.b16 %v1065
  %v1194 = vunpack.c.l.b16 %v1066
  %v1195 = vunpack.c.l.b16 %v1067
  %v1196 = vunpack.c.l.b16 %v1068
  %v1197 = vunpack.c.l.b16 %v1069
  %v1198 = vunpack.c.l.b16 %v1070
  %v1199 = vunpack.c.l.b16 %v1071
  %v1200 = vunpack.c.l.b16 %v1072
  %v1201 = vunpack.c.l.b16 %v1073
  %v1202 = vunpack.c.l.b16 %v1074
  %v1203 = vunpack.c.l.b16 %v1075
  %v1204 = vunpack.c.l.b16 %v1076
  %v1205 = vunpack.c.l.b16 %v1077
  %v1206 = vunpack.c.l.b16 %v1078
  %v1207 = vunpack.c.l.b16 %v1079
  %v1208 = vunpack.c.l.b16 %v1080
  %v1209 = vunpack.c.l.b16 %v1081
  %v1210 = vunpack.c.l.b16 %v1082
  %v1211 = vunpack.c.l.b16 %v1083
  %v1212 = vunpack.c.l.b16 %v1084
  %v1213 = vunpack.c.l.b16 %v1085
  %v1214 = vunpack.c.l.b16 %v1086
  %v1215 = vunpack.c.l.b16 %v1087
  %v1216 = vunpack.c.l.b16 %v1088
  %v1217 = vunpack.c.l.b16 %v1089
  %v1218 = vunpack.c.l.b16 %v1090
  %v1219 = vunpack.c.l.b16 %v1091
  %v1220 = vunpack.c.l.b16 %v1092
  %v1221 = vunpack.c.l.b16 %v1093
  %v1222 = vunpack.c.l.b16 %v1094
  %v1223 = vunpack.c.l.b16 %v1095
  %v1224 = vunpack.c.l.b16 %v1096
  %v1225 = vunpack.c.l.b16 %v1097
  %v1226 = vunpack.c.l.b16 %v1098
  %v1227 = vunpack.c.l.b16 %v1099
  %v1228 = vunpack.c.l.b16 %v1100
  %v1229 = vunpack.c.l.b16 %v1101
  %v1230 = vunpack.c.l.b16 %v1102
  %v1231 = vunpack.c.l.b16 %v1103
  %v1232 = vunpack.c.l.b16 %v1104
  %v1233 = vunpack.c.l.b16 %v1105
  %v1234 = vunpack.c.l.b16 %v1106
  %v1235 = vunpack.c.l.b16 %v1107
  %v1236 = vunpack.c.l.b16 %v1108
  %v1237 = vunpack.c.l.b16 %v1109
  %v1238 = vunpack.c.l.b16 %v1110
  %v1239 = vunpack.c.l.b16 %v1111
  %v1240 = vunpack.c.l.b16 %v1112
  %v1241 = vunpack.c.l.b16 %v1113
  %v1242 = vunpack.c.l.b16 %v1114
  %v1243 = vunpack.c.l.b16 %v1115
  %v1244 = vunpack.c.l.b16 %v1116
  %v1245 = vunpack.c.l.b16 %v1117
  %v1246 = vunpack.c.l.b16 %v1118
  %v1247 = vunpack.c.l.b16 %v1119
  %v1248 = vunpack.c.l.b16 %v1120
  %v1249 = vunpack.c.l.b16 %v1121
  %v1250 = vunpack.c.l.b16 %v1122
  %v1251 = vunpack.c.l.b16 %v1123
  %v1252 = vunpack.c.l.b16 %v1124
  %v1253 = vunpack.c.l.b16 %v1125
  %v1254 = vpack.c.b16 %v1191, %v1190
  %v1255 = vpack.c.b16 %v1193, %v1192
  %v1256 = vpack.c.b16 %v1195, %v1194
  %v1257 = vpack.c.b16 %v1197, %v1196
  %v1258 = vpack.c.b16 %v1199, %v1198
  %v1259 = vpack.c.b16 %v1201, %v1200
  %v1260 = vpack.c.b16 %v1203, %v1202
  %v1261 = vpack.c.b16 %v1205, %v1204
  %v1262 = vpack.c.b16 %v1207, %v1206
  %v1263 = vpack.c.b16 %v1209, %v1208
  %v1264 = vpack.c.b16 %v1211, %v1210
  %v1265 = vpack.c.b16 %v1213, %v1212
  %v1266 = vpack.c.b16 %v1215, %v1214
  %v1267 = vpack.c.b16 %v1217, %v1216
  %v1268 = vpack.c.b16 %v1219, %v1218
  %v1269 = vpack.c.b16 %v1221, %v1220
  %v1270 = vpack.c.b16 %v1223, %v1222
  %v1271 = vpack.c.b16 %v1225, %v1224
  %v1272 = vpack.c.b16 %v1227, %v1226
  %v1273 = vpack.c.b16 %v1229, %v1228
  %v1274 = vpack.c.b16 %v1231, %v1230
  %v1275 = vpack.c.b16 %v1233, %v1232
  %v1276 = vpack.c.b16 %v1235, %v1234
  %v1277 = vpack.c.b16 %v1237, %v1236
  %v1278 = vpack.c.b16 %v1239, %v1238
  %v1279 = vpack.c.b16 %v1241, %v1240
  %v1280 = vpack.c.b16 %v1243, %v1242
  %v1281 = vpack.c.b16 %v1245, %v1244
  %v1282 = vpack.c.b16 %v1247, %v1246
  %v1283 = vpack.c.b16 %v1249, %v1248
  %v1284 = vpack.c.b16 %v1251, %v1250
  %v1285 = vpack.c.b16 %v1253, %v1252
  %1318 = vmatprep.subr.bf16.mxu0 0
  %1319 = vmatpush1.bf16.msra.mxu0 %v1261
  %1320 = vmatprep.subr.bf16.mxu0 0
  %1321 = vmatpush1.bf16.msra.mxu0 %v1260
  %1322 = vmatprep.subr.bf16.mxu0 0
  %1323 = vmatpush1.bf16.msra.mxu0 %v1259
  %1324 = vmatprep.subr.bf16.mxu0 0
  %1325 = vmatpush1.bf16.msra.mxu0 %v1258
  %1326 = vmatprep.subr.bf16.mxu0 0
  %1327 = vmatpush1.bf16.msra.mxu0 %v1257
  %1328 = vmatprep.subr.bf16.mxu0 0
  %1329 = vmatpush1.bf16.msra.mxu0 %v1256
  %1330 = vmatprep.subr.bf16.mxu0 0
  %1331 = vmatpush1.bf16.msra.mxu0 %v1255
  %1332 = vmatprep.subr.bf16.mxu0 0
  %1333 = vmatpush1.bf16.msra.mxu0 %v1254
  %1334 = vmatprep.subr.bf16.mxu0 0
  %1335 = vmatpush2.bf16.msra.mxu0 %v1269
  %1336 = vmatprep.subr.bf16.mxu0 0
  %1337 = vmatpush2.bf16.msra.mxu0 %v1268
  %1338 = vmatprep.subr.bf16.mxu0 0
  %1339 = vmatpush2.bf16.msra.mxu0 %v1267
  %1340 = vmatprep.subr.bf16.mxu0 0
  %1341 = vmatpush2.bf16.msra.mxu0 %v1266
  %1342 = vmatprep.subr.bf16.mxu0 0
  %1343 = vmatpush2.bf16.msra.mxu0 %v1265
  %1344 = vmatprep.subr.bf16.mxu0 0
  %1345 = vmatpush2.bf16.msra.mxu0 %v1264
  %1346 = vmatprep.subr.bf16.mxu0 0
  %1347 = vmatpush2.bf16.msra.mxu0 %v1263
  %1348 = vmatprep.subr.bf16.mxu0 0
  %1349 = vmatpush2.bf16.msra.mxu0 %v1262
  %1350 = vmatprep.mubr.bf16.mxu0 %v272
  %1351 = vmatmul.mubr.bf16.gmra.mxu0 %v271
  %v1352 = vpop.f32.mrf.mxu0
  %v1353 = vadd.f32 0.0, %v1352
  %v1354 = vpop.f32.mrf.mxu0
  %v1355 = vpop.f32.mrf.mxu0
  %v1356 = vpop.f32.mrf.mxu0
  %1357 = vdwg.mxu0
  %1358 = vmatprep.subr.bf16.mxu0 0
  %1359 = vmatpush1.bf16.msra.mxu0 %v1277
  %1360 = vmatprep.subr.bf16.mxu0 0
  %1361 = vmatpush1.bf16.msra.mxu0 %v1276
  %1362 = vmatprep.subr.bf16.mxu0 0
  %1363 = vmatpush1.bf16.msra.mxu0 %v1275
  %1364 = vmatprep.subr.bf16.mxu0 0
  %1365 = vmatpush1.bf16.msra.mxu0 %v1274
  %1366 = vmatprep.subr.bf16.mxu0 0
  %1367 = vmatpush1.bf16.msra.mxu0 %v1273
  %1368 = vmatprep.subr.bf16.mxu0 0
  %1369 = vmatpush1.bf16.msra.mxu0 %v1272
  %1370 = vmatprep.subr.bf16.mxu0 0
  %1371 = vmatpush1.bf16.msra.mxu0 %v1271
  %1372 = vmatprep.subr.bf16.mxu0 0
  %1373 = vmatpush1.bf16.msra.mxu0 %v1270
  %1374 = vmatprep.subr.bf16.mxu0 0
  %1375 = vmatpush2.bf16.msra.mxu0 %v1285
  %1376 = vmatprep.subr.bf16.mxu0 0
  %1377 = vmatpush2.bf16.msra.mxu0 %v1284
  %1378 = vmatprep.subr.bf16.mxu0 0
  %1379 = vmatpush2.bf16.msra.mxu0 %v1283
  %1380 = vmatprep.subr.bf16.mxu0 0
  %1381 = vmatpush2.bf16.msra.mxu0 %v1282
  %1382 = vmatprep.subr.bf16.mxu0 0
  %1383 = vmatpush2.bf16.msra.mxu0 %v1281
  %1384 = vmatprep.subr.bf16.mxu0 0
  %1385 = vmatpush2.bf16.msra.mxu0 %v1280
  %1386 = vmatprep.subr.bf16.mxu0 0
  %1387 = vmatpush2.bf16.msra.mxu0 %v1279
  %1388 = vmatprep.subr.bf16.mxu0 0
  %1389 = vmatpush2.bf16.msra.mxu0 %v1278
  %1390 = vmatprep.mubr.bf16.mxu0 %v274
  %1391 = vmatmul.mubr.bf16.gmra.mxu0 %v273
  %v1392 = vpop.f32.mrf.mxu0
  %v1393 = vadd.f32 %v1353, %v1392
  %v1394 = vpop.f32.mrf.mxu0
  %v1395 = vpop.f32.mrf.mxu0
  %v1396 = vpop.f32.mrf.mxu0
  %1397 = vdwg.mxu0
  %v1398 = vpack.c.bf16 %v1393, %v1393
  %s1399 = scalar_lea.vmem %s4, 16
  %v1400 = vld [vmem:[%s1399] sm:$0xf]
  %v1401 = vld [vmem:[%s1399 + $0x4] sm:$0xf]
  %v1404 = vunpack.c.l.b16 %v1400
  %v1405 = vunpack.c.l.b16 %v1401
  %v1406 = vpack.c.b16 %v1405, %v1404
  %v1408 = vsel %vm960, %v1406, 0
  %v1411 = vsel %vm964, %v1398, 0
  %1413 = vmatprep.subr.bf16.mxu0 0
  %1414 = vmatpush1.bf16.msra.mxu0 0
  %1415 = vmatprep.subr.bf16.mxu0 0
  %1416 = vmatpush1.bf16.msra.mxu0 0
  %1417 = vmatprep.subr.bf16.mxu0 0
  %1418 = vmatpush1.bf16.msra.mxu0 0
  %1419 = vmatprep.subr.bf16.mxu0 0
  %1420 = vmatpush1.bf16.msra.mxu0 0
  %1421 = vmatprep.subr.bf16.mxu0 0
  %1422 = vmatpush1.bf16.msra.mxu0 0
  %1423 = vmatprep.subr.bf16.mxu0 0
  %1424 = vmatpush1.bf16.msra.mxu0 0
  %1425 = vmatprep.subr.bf16.mxu0 0
  %1426 = vmatpush1.bf16.msra.mxu0 0
  %1427 = vmatprep.subr.bf16.mxu0 0
  %1428 = vmatpush1.bf16.msra.mxu0 %v1411
  %1429 = vmatprep.subr.bf16.mxu0 0
  %1430 = vmatpush2.bf16.msra.mxu0 0
  %1431 = vmatprep.subr.bf16.mxu0 0
  %1432 = vmatpush2.bf16.msra.mxu0 0
  %1433 = vmatprep.subr.bf16.mxu0 0
  %1434 = vmatpush2.bf16.msra.mxu0 0
  %1435 = vmatprep.subr.bf16.mxu0 0
  %1436 = vmatpush2.bf16.msra.mxu0 0
  %1437 = vmatprep.subr.bf16.mxu0 0
  %1438 = vmatpush2.bf16.msra.mxu0 0
  %1439 = vmatprep.subr.bf16.mxu0 0
  %1440 = vmatpush2.bf16.msra.mxu0 0
  %1441 = vmatprep.subr.bf16.mxu0 0
  %1442 = vmatpush2.bf16.msra.mxu0 0
  %1443 = vmatprep.subr.bf16.mxu0 0
  %1444 = vmatpush2.bf16.msra.mxu0 0
  %1445 = vmatprep.mubr.bf16.mxu0 0
  %1446 = vmatmul.mubr.bf16.gmra.mxu0 %v1408
  %v1447 = vpop.f32.mrf.mxu0
  %v1448 = vadd.f32 0.0, %v1447
  %v1449 = vpop.f32.mrf.mxu0
  %v1450 = vpop.f32.mrf.mxu0
  %v1451 = vadd.f32 0.0, %v1450
  %v1452 = vpop.f32.mrf.mxu0
  %1453 = vdwg.mxu0
  %v1454 = vadd.f32 %v1055, %v1448
  %v1455 = vadd.f32 %v1058, %v1451
  %s1456 = scalar_lea.vmem %s5, 768
  %v1457 = vld [vmem:[%s1456] sm:$0xf]
  %v1458 = vld [vmem:[%s1456 + $0x4] sm:$0xf]
  %v1459 = vld [vmem:[%s1456 + $0x8] sm:$0xf]
  %v1460 = vld [vmem:[%s1456 + $0xc] sm:$0xf]
  %v1461 = vld [vmem:[%s1456 + $0x10] sm:$0xf]
  %v1462 = vld [vmem:[%s1456 + $0x14] sm:$0xf]
  %v1463 = vld [vmem:[%s1456 + $0x18] sm:$0xf]
  %v1464 = vld [vmem:[%s1456 + $0x1c] sm:$0xf]
  %v1465 = vld [vmem:[%s1456 + $0x20] sm:$0xf]
  %v1466 = vld [vmem:[%s1456 + $0x24] sm:$0xf]
  %v1467 = vld [vmem:[%s1456 + $0x28] sm:$0xf]
  %v1468 = vld [vmem:[%s1456 + $0x2c] sm:$0xf]
  %v1469 = vld [vmem:[%s1456 + $0x30] sm:$0xf]
  %v1470 = vld [vmem:[%s1456 + $0x34] sm:$0xf]
  %v1471 = vld [vmem:[%s1456 + $0x38] sm:$0xf]
  %v1472 = vld [vmem:[%s1456 + $0x3c] sm:$0xf]
  %v1473 = vld [vmem:[%s1456 + $0x40] sm:$0xf]
  %v1474 = vld [vmem:[%s1456 + $0x44] sm:$0xf]
  %v1475 = vld [vmem:[%s1456 + $0x48] sm:$0xf]
  %v1476 = vld [vmem:[%s1456 + $0x4c] sm:$0xf]
  %v1477 = vld [vmem:[%s1456 + $0x50] sm:$0xf]
  %v1478 = vld [vmem:[%s1456 + $0x54] sm:$0xf]
  %v1479 = vld [vmem:[%s1456 + $0x58] sm:$0xf]
  %v1480 = vld [vmem:[%s1456 + $0x5c] sm:$0xf]
  %v1481 = vld [vmem:[%s1456 + $0x60] sm:$0xf]
  %v1482 = vld [vmem:[%s1456 + $0x64] sm:$0xf]
  %v1483 = vld [vmem:[%s1456 + $0x68] sm:$0xf]
  %v1484 = vld [vmem:[%s1456 + $0x6c] sm:$0xf]
  %v1485 = vld [vmem:[%s1456 + $0x70] sm:$0xf]
  %v1486 = vld [vmem:[%s1456 + $0x74] sm:$0xf]
  %v1487 = vld [vmem:[%s1456 + $0x78] sm:$0xf]
  %v1488 = vld [vmem:[%s1456 + $0x7c] sm:$0xf]
  %v1489 = vld [vmem:[%s1456 + $0x80] sm:$0xf]
  %v1490 = vld [vmem:[%s1456 + $0x84] sm:$0xf]
  %v1491 = vld [vmem:[%s1456 + $0x88] sm:$0xf]
  %v1492 = vld [vmem:[%s1456 + $0x8c] sm:$0xf]
  %v1493 = vld [vmem:[%s1456 + $0x90] sm:$0xf]
  %v1494 = vld [vmem:[%s1456 + $0x94] sm:$0xf]
  %v1495 = vld [vmem:[%s1456 + $0x98] sm:$0xf]
  %v1496 = vld [vmem:[%s1456 + $0x9c] sm:$0xf]
  %v1497 = vld [vmem:[%s1456 + $0xa0] sm:$0xf]
  %v1498 = vld [vmem:[%s1456 + $0xa4] sm:$0xf]
  %v1499 = vld [vmem:[%s1456 + $0xa8] sm:$0xf]
  %v1500 = vld [vmem:[%s1456 + $0xac] sm:$0xf]
  %v1501 = vld [vmem:[%s1456 + $0xb0] sm:$0xf]
  %v1502 = vld [vmem:[%s1456 + $0xb4] sm:$0xf]
  %v1503 = vld [vmem:[%s1456 + $0xb8] sm:$0xf]
  %v1504 = vld [vmem:[%s1456 + $0xbc] sm:$0xf]
  %v1505 = vld [vmem:[%s1456 + $0xc0] sm:$0xf]
  %v1506 = vld [vmem:[%s1456 + $0xc4] sm:$0xf]
  %v1507 = vld [vmem:[%s1456 + $0xc8] sm:$0xf]
  %v1508 = vld [vmem:[%s1456 + $0xcc] sm:$0xf]
  %v1509 = vld [vmem:[%s1456 + $0xd0] sm:$0xf]
  %v1510 = vld [vmem:[%s1456 + $0xd4] sm:$0xf]
  %v1511 = vld [vmem:[%s1456 + $0xd8] sm:$0xf]
  %v1512 = vld [vmem:[%s1456 + $0xdc] sm:$0xf]
  %v1513 = vld [vmem:[%s1456 + $0xe0] sm:$0xf]
  %v1514 = vld [vmem:[%s1456 + $0xe4] sm:$0xf]
  %v1515 = vld [vmem:[%s1456 + $0xe8] sm:$0xf]
  %v1516 = vld [vmem:[%s1456 + $0xec] sm:$0xf]
  %v1517 = vld [vmem:[%s1456 + $0xf0] sm:$0xf]
  %v1518 = vld [vmem:[%s1456 + $0xf4] sm:$0xf]
  %v1519 = vld [vmem:[%s1456 + $0xf8] sm:$0xf]
  %v1520 = vld [vmem:[%s1456 + $0xfc] sm:$0xf]
  %v1585 = vunpack.c.l.b16 %v1457
  %v1586 = vunpack.c.l.b16 %v1458
  %v1587 = vunpack.c.l.b16 %v1459
  %v1588 = vunpack.c.l.b16 %v1460
  %v1589 = vunpack.c.l.b16 %v1461
  %v1590 = vunpack.c.l.b16 %v1462
  %v1591 = vunpack.c.l.b16 %v1463
  %v1592 = vunpack.c.l.b16 %v1464
  %v1593 = vunpack.c.l.b16 %v1465
  %v1594 = vunpack.c.l.b16 %v1466
  %v1595 = vunpack.c.l.b16 %v1467
  %v1596 = vunpack.c.l.b16 %v1468
  %v1597 = vunpack.c.l.b16 %v1469
  %v1598 = vunpack.c.l.b16 %v1470
  %v1599 = vunpack.c.l.b16 %v1471
  %v1600 = vunpack.c.l.b16 %v1472
  %v1601 = vunpack.c.l.b16 %v1473
  %v1602 = vunpack.c.l.b16 %v1474
  %v1603 = vunpack.c.l.b16 %v1475
  %v1604 = vunpack.c.l.b16 %v1476
  %v1605 = vunpack.c.l.b16 %v1477
  %v1606 = vunpack.c.l.b16 %v1478
  %v1607 = vunpack.c.l.b16 %v1479
  %v1608 = vunpack.c.l.b16 %v1480
  %v1609 = vunpack.c.l.b16 %v1481
  %v1610 = vunpack.c.l.b16 %v1482
  %v1611 = vunpack.c.l.b16 %v1483
  %v1612 = vunpack.c.l.b16 %v1484
  %v1613 = vunpack.c.l.b16 %v1485
  %v1614 = vunpack.c.l.b16 %v1486
  %v1615 = vunpack.c.l.b16 %v1487
  %v1616 = vunpack.c.l.b16 %v1488
  %v1617 = vunpack.c.l.b16 %v1489
  %v1618 = vunpack.c.l.b16 %v1490
  %v1619 = vunpack.c.l.b16 %v1491
  %v1620 = vunpack.c.l.b16 %v1492
  %v1621 = vunpack.c.l.b16 %v1493
  %v1622 = vunpack.c.l.b16 %v1494
  %v1623 = vunpack.c.l.b16 %v1495
  %v1624 = vunpack.c.l.b16 %v1496
  %v1625 = vunpack.c.l.b16 %v1497
  %v1626 = vunpack.c.l.b16 %v1498
  %v1627 = vunpack.c.l.b16 %v1499
  %v1628 = vunpack.c.l.b16 %v1500
  %v1629 = vunpack.c.l.b16 %v1501
  %v1630 = vunpack.c.l.b16 %v1502
  %v1631 = vunpack.c.l.b16 %v1503
  %v1632 = vunpack.c.l.b16 %v1504
  %v1633 = vunpack.c.l.b16 %v1505
  %v1634 = vunpack.c.l.b16 %v1506
  %v1635 = vunpack.c.l.b16 %v1507
  %v1636 = vunpack.c.l.b16 %v1508
  %v1637 = vunpack.c.l.b16 %v1509
  %v1638 = vunpack.c.l.b16 %v1510
  %v1639 = vunpack.c.l.b16 %v1511
  %v1640 = vunpack.c.l.b16 %v1512
  %v1641 = vunpack.c.l.b16 %v1513
  %v1642 = vunpack.c.l.b16 %v1514
  %v1643 = vunpack.c.l.b16 %v1515
  %v1644 = vunpack.c.l.b16 %v1516
  %v1645 = vunpack.c.l.b16 %v1517
  %v1646 = vunpack.c.l.b16 %v1518
  %v1647 = vunpack.c.l.b16 %v1519
  %v1648 = vunpack.c.l.b16 %v1520
  %v1649 = vpack.c.b16 %v1586, %v1585
  %v1650 = vpack.c.b16 %v1588, %v1587
  %v1651 = vpack.c.b16 %v1590, %v1589
  %v1652 = vpack.c.b16 %v1592, %v1591
  %v1653 = vpack.c.b16 %v1594, %v1593
  %v1654 = vpack.c.b16 %v1596, %v1595
  %v1655 = vpack.c.b16 %v1598, %v1597
  %v1656 = vpack.c.b16 %v1600, %v1599
  %v1657 = vpack.c.b16 %v1602, %v1601
  %v1658 = vpack.c.b16 %v1604, %v1603
  %v1659 = vpack.c.b16 %v1606, %v1605
  %v1660 = vpack.c.b16 %v1608, %v1607
  %v1661 = vpack.c.b16 %v1610, %v1609
  %v1662 = vpack.c.b16 %v1612, %v1611
  %v1663 = vpack.c.b16 %v1614, %v1613
  %v1664 = vpack.c.b16 %v1616, %v1615
  %v1665 = vpack.c.b16 %v1618, %v1617
  %v1666 = vpack.c.b16 %v1620, %v1619
  %v1667 = vpack.c.b16 %v1622, %v1621
  %v1668 = vpack.c.b16 %v1624, %v1623
  %v1669 = vpack.c.b16 %v1626, %v1625
  %v1670 = vpack.c.b16 %v1628, %v1627
  %v1671 = vpack.c.b16 %v1630, %v1629
  %v1672 = vpack.c.b16 %v1632, %v1631
  %v1673 = vpack.c.b16 %v1634, %v1633
  %v1674 = vpack.c.b16 %v1636, %v1635
  %v1675 = vpack.c.b16 %v1638, %v1637
  %v1676 = vpack.c.b16 %v1640, %v1639
  %v1677 = vpack.c.b16 %v1642, %v1641
  %v1678 = vpack.c.b16 %v1644, %v1643
  %v1679 = vpack.c.b16 %v1646, %v1645
  %v1680 = vpack.c.b16 %v1648, %v1647
  %1713 = vmatprep.subr.bf16.mxu0 0
  %1714 = vmatpush1.bf16.msra.mxu0 %v1656
  %1715 = vmatprep.subr.bf16.mxu0 0
  %1716 = vmatpush1.bf16.msra.mxu0 %v1655
  %1717 = vmatprep.subr.bf16.mxu0 0
  %1718 = vmatpush1.bf16.msra.mxu0 %v1654
  %1719 = vmatprep.subr.bf16.mxu0 0
  %1720 = vmatpush1.bf16.msra.mxu0 %v1653
  %1721 = vmatprep.subr.bf16.mxu0 0
  %1722 = vmatpush1.bf16.msra.mxu0 %v1652
  %1723 = vmatprep.subr.bf16.mxu0 0
  %1724 = vmatpush1.bf16.msra.mxu0 %v1651
  %1725 = vmatprep.subr.bf16.mxu0 0
  %1726 = vmatpush1.bf16.msra.mxu0 %v1650
  %1727 = vmatprep.subr.bf16.mxu0 0
  %1728 = vmatpush1.bf16.msra.mxu0 %v1649
  %1729 = vmatprep.subr.bf16.mxu0 0
  %1730 = vmatpush2.bf16.msra.mxu0 %v1664
  %1731 = vmatprep.subr.bf16.mxu0 0
  %1732 = vmatpush2.bf16.msra.mxu0 %v1663
  %1733 = vmatprep.subr.bf16.mxu0 0
  %1734 = vmatpush2.bf16.msra.mxu0 %v1662
  %1735 = vmatprep.subr.bf16.mxu0 0
  %1736 = vmatpush2.bf16.msra.mxu0 %v1661
  %1737 = vmatprep.subr.bf16.mxu0 0
  %1738 = vmatpush2.bf16.msra.mxu0 %v1660
  %1739 = vmatprep.subr.bf16.mxu0 0
  %1740 = vmatpush2.bf16.msra.mxu0 %v1659
  %1741 = vmatprep.subr.bf16.mxu0 0
  %1742 = vmatpush2.bf16.msra.mxu0 %v1658
  %1743 = vmatprep.subr.bf16.mxu0 0
  %1744 = vmatpush2.bf16.msra.mxu0 %v1657
  %1745 = vmatprep.mubr.bf16.mxu0 %v272
  %1746 = vmatmul.mubr.bf16.gmra.mxu0 %v271
  %v1747 = vpop.f32.mrf.mxu0
  %v1748 = vadd.f32 0.0, %v1747
  %v1749 = vpop.f32.mrf.mxu0
  %v1750 = vpop.f32.mrf.mxu0
  %v1751 = vpop.f32.mrf.mxu0
  %1752 = vdwg.mxu0
  %1753 = vmatprep.subr.bf16.mxu0 0
  %1754 = vmatpush1.bf16.msra.mxu0 %v1672
  %1755 = vmatprep.subr.bf16.mxu0 0
  %1756 = vmatpush1.bf16.msra.mxu0 %v1671
  %1757 = vmatprep.subr.bf16.mxu0 0
  %1758 = vmatpush1.bf16.msra.mxu0 %v1670
  %1759 = vmatprep.subr.bf16.mxu0 0
  %1760 = vmatpush1.bf16.msra.mxu0 %v1669
  %1761 = vmatprep.subr.bf16.mxu0 0
  %1762 = vmatpush1.bf16.msra.mxu0 %v1668
  %1763 = vmatprep.subr.bf16.mxu0 0
  %1764 = vmatpush1.bf16.msra.mxu0 %v1667
  %1765 = vmatprep.subr.bf16.mxu0 0
  %1766 = vmatpush1.bf16.msra.mxu0 %v1666
  %1767 = vmatprep.subr.bf16.mxu0 0
  %1768 = vmatpush1.bf16.msra.mxu0 %v1665
  %1769 = vmatprep.subr.bf16.mxu0 0
  %1770 = vmatpush2.bf16.msra.mxu0 %v1680
  %1771 = vmatprep.subr.bf16.mxu0 0
  %1772 = vmatpush2.bf16.msra.mxu0 %v1679
  %1773 = vmatprep.subr.bf16.mxu0 0
  %1774 = vmatpush2.bf16.msra.mxu0 %v1678
  %1775 = vmatprep.subr.bf16.mxu0 0
  %1776 = vmatpush2.bf16.msra.mxu0 %v1677
  %1777 = vmatprep.subr.bf16.mxu0 0
  %1778 = vmatpush2.bf16.msra.mxu0 %v1676
  %1779 = vmatprep.subr.bf16.mxu0 0
  %1780 = vmatpush2.bf16.msra.mxu0 %v1675
  %1781 = vmatprep.subr.bf16.mxu0 0
  %1782 = vmatpush2.bf16.msra.mxu0 %v1674
  %1783 = vmatprep.subr.bf16.mxu0 0
  %1784 = vmatpush2.bf16.msra.mxu0 %v1673
  %1785 = vmatprep.mubr.bf16.mxu0 %v274
  %1786 = vmatmul.mubr.bf16.gmra.mxu0 %v273
  %v1787 = vpop.f32.mrf.mxu0
  %v1788 = vadd.f32 %v1748, %v1787
  %v1789 = vpop.f32.mrf.mxu0
  %v1790 = vpop.f32.mrf.mxu0
  %v1791 = vpop.f32.mrf.mxu0
  %1792 = vdwg.mxu0
  %v1793 = vpack.c.bf16 %v1788, %v1788
  %s1794 = scalar_lea.vmem %s4, 24
  %v1795 = vld [vmem:[%s1794] sm:$0xf]
  %v1796 = vld [vmem:[%s1794 + $0x4] sm:$0xf]
  %v1799 = vunpack.c.l.b16 %v1795
  %v1800 = vunpack.c.l.b16 %v1796
  %v1801 = vpack.c.b16 %v1800, %v1799
  %v1803 = vsel %vm960, %v1801, 0
  %v1806 = vsel %vm964, %v1793, 0
  %1808 = vmatprep.subr.bf16.mxu0 0
  %1809 = vmatpush1.bf16.msra.mxu0 0
  %1810 = vmatprep.subr.bf16.mxu0 0
  %1811 = vmatpush1.bf16.msra.mxu0 0
  %1812 = vmatprep.subr.bf16.mxu0 0
  %1813 = vmatpush1.bf16.msra.mxu0 0
  %1814 = vmatprep.subr.bf16.mxu0 0
  %1815 = vmatpush1.bf16.msra.mxu0 0
  %1816 = vmatprep.subr.bf16.mxu0 0
  %1817 = vmatpush1.bf16.msra.mxu0 0
  %1818 = vmatprep.subr.bf16.mxu0 0
  %1819 = vmatpush1.bf16.msra.mxu0 0
  %1820 = vmatprep.subr.bf16.mxu0 0
  %1821 = vmatpush1.bf16.msra.mxu0 0
  %1822 = vmatprep.subr.bf16.mxu0 0
  %1823 = vmatpush1.bf16.msra.mxu0 %v1806
  %1824 = vmatprep.subr.bf16.mxu0 0
  %1825 = vmatpush2.bf16.msra.mxu0 0
  %1826 = vmatprep.subr.bf16.mxu0 0
  %1827 = vmatpush2.bf16.msra.mxu0 0
  %1828 = vmatprep.subr.bf16.mxu0 0
  %1829 = vmatpush2.bf16.msra.mxu0 0
  %1830 = vmatprep.subr.bf16.mxu0 0
  %1831 = vmatpush2.bf16.msra.mxu0 0
  %1832 = vmatprep.subr.bf16.mxu0 0
  %1833 = vmatpush2.bf16.msra.mxu0 0
  %1834 = vmatprep.subr.bf16.mxu0 0
  %1835 = vmatpush2.bf16.msra.mxu0 0
  %1836 = vmatprep.subr.bf16.mxu0 0
  %1837 = vmatpush2.bf16.msra.mxu0 0
  %1838 = vmatprep.subr.bf16.mxu0 0
  %1839 = vmatpush2.bf16.msra.mxu0 0
  %1840 = vmatprep.mubr.bf16.mxu0 0
  %1841 = vmatmul.mubr.bf16.gmra.mxu0 %v1803
  %v1842 = vpop.f32.mrf.mxu0
  %v1843 = vadd.f32 0.0, %v1842
  %v1844 = vpop.f32.mrf.mxu0
  %v1845 = vpop.f32.mrf.mxu0
  %v1846 = vadd.f32 0.0, %v1845
  %v1847 = vpop.f32.mrf.mxu0
  %1848 = vdwg.mxu0
  %v1849 = vadd.f32 %v1454, %v1843
  %v1850 = vadd.f32 %v1455, %v1846
  %s1851 = scalar_lea.vmem %s5, 1024
  %v1852 = vld [vmem:[%s1851] sm:$0xf]
  %v1853 = vld [vmem:[%s1851 + $0x4] sm:$0xf]
  %v1854 = vld [vmem:[%s1851 + $0x8] sm:$0xf]
  %v1855 = vld [vmem:[%s1851 + $0xc] sm:$0xf]
  %v1856 = vld [vmem:[%s1851 + $0x10] sm:$0xf]
  %v1857 = vld [vmem:[%s1851 + $0x14] sm:$0xf]
  %v1858 = vld [vmem:[%s1851 + $0x18] sm:$0xf]
  %v1859 = vld [vmem:[%s1851 + $0x1c] sm:$0xf]
  %v1860 = vld [vmem:[%s1851 + $0x20] sm:$0xf]
  %v1861 = vld [vmem:[%s1851 + $0x24] sm:$0xf]
  %v1862 = vld [vmem:[%s1851 + $0x28] sm:$0xf]
  %v1863 = vld [vmem:[%s1851 + $0x2c] sm:$0xf]
  %v1864 = vld [vmem:[%s1851 + $0x30] sm:$0xf]
  %v1865 = vld [vmem:[%s1851 + $0x34] sm:$0xf]
  %v1866 = vld [vmem:[%s1851 + $0x38] sm:$0xf]
  %v1867 = vld [vmem:[%s1851 + $0x3c] sm:$0xf]
  %v1868 = vld [vmem:[%s1851 + $0x40] sm:$0xf]
  %v1869 = vld [vmem:[%s1851 + $0x44] sm:$0xf]
  %v1870 = vld [vmem:[%s1851 + $0x48] sm:$0xf]
  %v1871 = vld [vmem:[%s1851 + $0x4c] sm:$0xf]
  %v1872 = vld [vmem:[%s1851 + $0x50] sm:$0xf]
  %v1873 = vld [vmem:[%s1851 + $0x54] sm:$0xf]
  %v1874 = vld [vmem:[%s1851 + $0x58] sm:$0xf]
  %v1875 = vld [vmem:[%s1851 + $0x5c] sm:$0xf]
  %v1876 = vld [vmem:[%s1851 + $0x60] sm:$0xf]
  %v1877 = vld [vmem:[%s1851 + $0x64] sm:$0xf]
  %v1878 = vld [vmem:[%s1851 + $0x68] sm:$0xf]
  %v1879 = vld [vmem:[%s1851 + $0x6c] sm:$0xf]
  %v1880 = vld [vmem:[%s1851 + $0x70] sm:$0xf]
  %v1881 = vld [vmem:[%s1851 + $0x74] sm:$0xf]
  %v1882 = vld [vmem:[%s1851 + $0x78] sm:$0xf]
  %v1883 = vld [vmem:[%s1851 + $0x7c] sm:$0xf]
  %v1884 = vld [vmem:[%s1851 + $0x80] sm:$0xf]
  %v1885 = vld [vmem:[%s1851 + $0x84] sm:$0xf]
  %v1886 = vld [vmem:[%s1851 + $0x88] sm:$0xf]
  %v1887 = vld [vmem:[%s1851 + $0x8c] sm:$0xf]
  %v1888 = vld [vmem:[%s1851 + $0x90] sm:$0xf]
  %v1889 = vld [vmem:[%s1851 + $0x94] sm:$0xf]
  %v1890 = vld [vmem:[%s1851 + $0x98] sm:$0xf]
  %v1891 = vld [vmem:[%s1851 + $0x9c] sm:$0xf]
  %v1892 = vld [vmem:[%s1851 + $0xa0] sm:$0xf]
  %v1893 = vld [vmem:[%s1851 + $0xa4] sm:$0xf]
  %v1894 = vld [vmem:[%s1851 + $0xa8] sm:$0xf]
  %v1895 = vld [vmem:[%s1851 + $0xac] sm:$0xf]
  %v1896 = vld [vmem:[%s1851 + $0xb0] sm:$0xf]
  %v1897 = vld [vmem:[%s1851 + $0xb4] sm:$0xf]
  %v1898 = vld [vmem:[%s1851 + $0xb8] sm:$0xf]
  %v1899 = vld [vmem:[%s1851 + $0xbc] sm:$0xf]
  %v1900 = vld [vmem:[%s1851 + $0xc0] sm:$0xf]
  %v1901 = vld [vmem:[%s1851 + $0xc4] sm:$0xf]
  %v1902 = vld [vmem:[%s1851 + $0xc8] sm:$0xf]
  %v1903 = vld [vmem:[%s1851 + $0xcc] sm:$0xf]
  %v1904 = vld [vmem:[%s1851 + $0xd0] sm:$0xf]
  %v1905 = vld [vmem:[%s1851 + $0xd4] sm:$0xf]
  %v1906 = vld [vmem:[%s1851 + $0xd8] sm:$0xf]
  %v1907 = vld [vmem:[%s1851 + $0xdc] sm:$0xf]
  %v1908 = vld [vmem:[%s1851 + $0xe0] sm:$0xf]
  %v1909 = vld [vmem:[%s1851 + $0xe4] sm:$0xf]
  %v1910 = vld [vmem:[%s1851 + $0xe8] sm:$0xf]
  %v1911 = vld [vmem:[%s1851 + $0xec] sm:$0xf]
  %v1912 = vld [vmem:[%s1851 + $0xf0] sm:$0xf]
  %v1913 = vld [vmem:[%s1851 + $0xf4] sm:$0xf]
  %v1914 = vld [vmem:[%s1851 + $0xf8] sm:$0xf]
  %v1915 = vld [vmem:[%s1851 + $0xfc] sm:$0xf]
  %v1980 = vunpack.c.l.b16 %v1852
  %v1981 = vunpack.c.l.b16 %v1853
  %v1982 = vunpack.c.l.b16 %v1854
  %v1983 = vunpack.c.l.b16 %v1855
  %v1984 = vunpack.c.l.b16 %v1856
  %v1985 = vunpack.c.l.b16 %v1857
  %v1986 = vunpack.c.l.b16 %v1858
  %v1987 = vunpack.c.l.b16 %v1859
  %v1988 = vunpack.c.l.b16 %v1860
  %v1989 = vunpack.c.l.b16 %v1861
  %v1990 = vunpack.c.l.b16 %v1862
  %v1991 = vunpack.c.l.b16 %v1863
  %v1992 = vunpack.c.l.b16 %v1864
  %v1993 = vunpack.c.l.b16 %v1865
  %v1994 = vunpack.c.l.b16 %v1866
  %v1995 = vunpack.c.l.b16 %v1867
  %v1996 = vunpack.c.l.b16 %v1868
  %v1997 = vunpack.c.l.b16 %v1869
  %v1998 = vunpack.c.l.b16 %v1870
  %v1999 = vunpack.c.l.b16 %v1871
  %v2000 = vunpack.c.l.b16 %v1872
  %v2001 = vunpack.c.l.b16 %v1873
  %v2002 = vunpack.c.l.b16 %v1874
  %v2003 = vunpack.c.l.b16 %v1875
  %v2004 = vunpack.c.l.b16 %v1876
  %v2005 = vunpack.c.l.b16 %v1877
  %v2006 = vunpack.c.l.b16 %v1878
  %v2007 = vunpack.c.l.b16 %v1879
  %v2008 = vunpack.c.l.b16 %v1880
  %v2009 = vunpack.c.l.b16 %v1881
  %v2010 = vunpack.c.l.b16 %v1882
  %v2011 = vunpack.c.l.b16 %v1883
  %v2012 = vunpack.c.l.b16 %v1884
  %v2013 = vunpack.c.l.b16 %v1885
  %v2014 = vunpack.c.l.b16 %v1886
  %v2015 = vunpack.c.l.b16 %v1887
  %v2016 = vunpack.c.l.b16 %v1888
  %v2017 = vunpack.c.l.b16 %v1889
  %v2018 = vunpack.c.l.b16 %v1890
  %v2019 = vunpack.c.l.b16 %v1891
  %v2020 = vunpack.c.l.b16 %v1892
  %v2021 = vunpack.c.l.b16 %v1893
  %v2022 = vunpack.c.l.b16 %v1894
  %v2023 = vunpack.c.l.b16 %v1895
  %v2024 = vunpack.c.l.b16 %v1896
  %v2025 = vunpack.c.l.b16 %v1897
  %v2026 = vunpack.c.l.b16 %v1898
  %v2027 = vunpack.c.l.b16 %v1899
  %v2028 = vunpack.c.l.b16 %v1900
  %v2029 = vunpack.c.l.b16 %v1901
  %v2030 = vunpack.c.l.b16 %v1902
  %v2031 = vunpack.c.l.b16 %v1903
  %v2032 = vunpack.c.l.b16 %v1904
  %v2033 = vunpack.c.l.b16 %v1905
  %v2034 = vunpack.c.l.b16 %v1906
  %v2035 = vunpack.c.l.b16 %v1907
  %v2036 = vunpack.c.l.b16 %v1908
  %v2037 = vunpack.c.l.b16 %v1909
  %v2038 = vunpack.c.l.b16 %v1910
  %v2039 = vunpack.c.l.b16 %v1911
  %v2040 = vunpack.c.l.b16 %v1912
  %v2041 = vunpack.c.l.b16 %v1913
  %v2042 = vunpack.c.l.b16 %v1914
  %v2043 = vunpack.c.l.b16 %v1915
  %v2044 = vpack.c.b16 %v1981, %v1980
  %v2045 = vpack.c.b16 %v1983, %v1982
  %v2046 = vpack.c.b16 %v1985, %v1984
  %v2047 = vpack.c.b16 %v1987, %v1986
  %v2048 = vpack.c.b16 %v1989, %v1988
  %v2049 = vpack.c.b16 %v1991, %v1990
  %v2050 = vpack.c.b16 %v1993, %v1992
  %v2051 = vpack.c.b16 %v1995, %v1994
  %v2052 = vpack.c.b16 %v1997, %v1996
  %v2053 = vpack.c.b16 %v1999, %v1998
  %v2054 = vpack.c.b16 %v2001, %v2000
  %v2055 = vpack.c.b16 %v2003, %v2002
  %v2056 = vpack.c.b16 %v2005, %v2004
  %v2057 = vpack.c.b16 %v2007, %v2006
  %v2058 = vpack.c.b16 %v2009, %v2008
  %v2059 = vpack.c.b16 %v2011, %v2010
  %v2060 = vpack.c.b16 %v2013, %v2012
  %v2061 = vpack.c.b16 %v2015, %v2014
  %v2062 = vpack.c.b16 %v2017, %v2016
  %v2063 = vpack.c.b16 %v2019, %v2018
  %v2064 = vpack.c.b16 %v2021, %v2020
  %v2065 = vpack.c.b16 %v2023, %v2022
  %v2066 = vpack.c.b16 %v2025, %v2024
  %v2067 = vpack.c.b16 %v2027, %v2026
  %v2068 = vpack.c.b16 %v2029, %v2028
  %v2069 = vpack.c.b16 %v2031, %v2030
  %v2070 = vpack.c.b16 %v2033, %v2032
  %v2071 = vpack.c.b16 %v2035, %v2034
  %v2072 = vpack.c.b16 %v2037, %v2036
  %v2073 = vpack.c.b16 %v2039, %v2038
  %v2074 = vpack.c.b16 %v2041, %v2040
  %v2075 = vpack.c.b16 %v2043, %v2042
  %2108 = vmatprep.subr.bf16.mxu0 0
  %2109 = vmatpush1.bf16.msra.mxu0 %v2051
  %2110 = vmatprep.subr.bf16.mxu0 0
  %2111 = vmatpush1.bf16.msra.mxu0 %v2050
  %2112 = vmatprep.subr.bf16.mxu0 0
  %2113 = vmatpush1.bf16.msra.mxu0 %v2049
  %2114 = vmatprep.subr.bf16.mxu0 0
  %2115 = vmatpush1.bf16.msra.mxu0 %v2048
  %2116 = vmatprep.subr.bf16.mxu0 0
  %2117 = vmatpush1.bf16.msra.mxu0 %v2047
  %2118 = vmatprep.subr.bf16.mxu0 0
  %2119 = vmatpush1.bf16.msra.mxu0 %v2046
  %2120 = vmatprep.subr.bf16.mxu0 0
  %2121 = vmatpush1.bf16.msra.mxu0 %v2045
  %2122 = vmatprep.subr.bf16.mxu0 0
  %2123 = vmatpush1.bf16.msra.mxu0 %v2044
  %2124 = vmatprep.subr.bf16.mxu0 0
  %2125 = vmatpush2.bf16.msra.mxu0 %v2059
  %2126 = vmatprep.subr.bf16.mxu0 0
  %2127 = vmatpush2.bf16.msra.mxu0 %v2058
  %2128 = vmatprep.subr.bf16.mxu0 0
  %2129 = vmatpush2.bf16.msra.mxu0 %v2057
  %2130 = vmatprep.subr.bf16.mxu0 0
  %2131 = vmatpush2.bf16.msra.mxu0 %v2056
  %2132 = vmatprep.subr.bf16.mxu0 0
  %2133 = vmatpush2.bf16.msra.mxu0 %v2055
  %2134 = vmatprep.subr.bf16.mxu0 0
  %2135 = vmatpush2.bf16.msra.mxu0 %v2054
  %2136 = vmatprep.subr.bf16.mxu0 0
  %2137 = vmatpush2.bf16.msra.mxu0 %v2053
  %2138 = vmatprep.subr.bf16.mxu0 0
  %2139 = vmatpush2.bf16.msra.mxu0 %v2052
  %2140 = vmatprep.mubr.bf16.mxu0 %v272
  %2141 = vmatmul.mubr.bf16.gmra.mxu0 %v271
  %v2142 = vpop.f32.mrf.mxu0
  %v2143 = vadd.f32 0.0, %v2142
  %v2144 = vpop.f32.mrf.mxu0
  %v2145 = vpop.f32.mrf.mxu0
  %v2146 = vpop.f32.mrf.mxu0
  %2147 = vdwg.mxu0
  %2148 = vmatprep.subr.bf16.mxu0 0
  %2149 = vmatpush1.bf16.msra.mxu0 %v2067
  %2150 = vmatprep.subr.bf16.mxu0 0
  %2151 = vmatpush1.bf16.msra.mxu0 %v2066
  %2152 = vmatprep.subr.bf16.mxu0 0
  %2153 = vmatpush1.bf16.msra.mxu0 %v2065
  %2154 = vmatprep.subr.bf16.mxu0 0
  %2155 = vmatpush1.bf16.msra.mxu0 %v2064
  %2156 = vmatprep.subr.bf16.mxu0 0
  %2157 = vmatpush1.bf16.msra.mxu0 %v2063
  %2158 = vmatprep.subr.bf16.mxu0 0
  %2159 = vmatpush1.bf16.msra.mxu0 %v2062
  %2160 = vmatprep.subr.bf16.mxu0 0
  %2161 = vmatpush1.bf16.msra.mxu0 %v2061
  %2162 = vmatprep.subr.bf16.mxu0 0
  %2163 = vmatpush1.bf16.msra.mxu0 %v2060
  %2164 = vmatprep.subr.bf16.mxu0 0
  %2165 = vmatpush2.bf16.msra.mxu0 %v2075
  %2166 = vmatprep.subr.bf16.mxu0 0
  %2167 = vmatpush2.bf16.msra.mxu0 %v2074
  %2168 = vmatprep.subr.bf16.mxu0 0
  %2169 = vmatpush2.bf16.msra.mxu0 %v2073
  %2170 = vmatprep.subr.bf16.mxu0 0
  %2171 = vmatpush2.bf16.msra.mxu0 %v2072
  %2172 = vmatprep.subr.bf16.mxu0 0
  %2173 = vmatpush2.bf16.msra.mxu0 %v2071
  %2174 = vmatprep.subr.bf16.mxu0 0
  %2175 = vmatpush2.bf16.msra.mxu0 %v2070
  %2176 = vmatprep.subr.bf16.mxu0 0
  %2177 = vmatpush2.bf16.msra.mxu0 %v2069
  %2178 = vmatprep.subr.bf16.mxu0 0
  %2179 = vmatpush2.bf16.msra.mxu0 %v2068
  %2180 = vmatprep.mubr.bf16.mxu0 %v274
  %2181 = vmatmul.mubr.bf16.gmra.mxu0 %v273
  %v2182 = vpop.f32.mrf.mxu0
  %v2183 = vadd.f32 %v2143, %v2182
  %v2184 = vpop.f32.mrf.mxu0
  %v2185 = vpop.f32.mrf.mxu0
  %v2186 = vpop.f32.mrf.mxu0
  %2187 = vdwg.mxu0
  %v2188 = vpack.c.bf16 %v2183, %v2183
  %s2189 = scalar_lea.vmem %s4, 32
  %v2190 = vld [vmem:[%s2189] sm:$0xf]
  %v2191 = vld [vmem:[%s2189 + $0x4] sm:$0xf]
  %v2194 = vunpack.c.l.b16 %v2190
  %v2195 = vunpack.c.l.b16 %v2191
  %v2196 = vpack.c.b16 %v2195, %v2194
  %v2198 = vsel %vm960, %v2196, 0
  %v2201 = vsel %vm964, %v2188, 0
  %2203 = vmatprep.subr.bf16.mxu0 0
  %2204 = vmatpush1.bf16.msra.mxu0 0
  %2205 = vmatprep.subr.bf16.mxu0 0
  %2206 = vmatpush1.bf16.msra.mxu0 0
  %2207 = vmatprep.subr.bf16.mxu0 0
  %2208 = vmatpush1.bf16.msra.mxu0 0
  %2209 = vmatprep.subr.bf16.mxu0 0
  %2210 = vmatpush1.bf16.msra.mxu0 0
  %2211 = vmatprep.subr.bf16.mxu0 0
  %2212 = vmatpush1.bf16.msra.mxu0 0
  %2213 = vmatprep.subr.bf16.mxu0 0
  %2214 = vmatpush1.bf16.msra.mxu0 0
  %2215 = vmatprep.subr.bf16.mxu0 0
  %2216 = vmatpush1.bf16.msra.mxu0 0
  %2217 = vmatprep.subr.bf16.mxu0 0
  %2218 = vmatpush1.bf16.msra.mxu0 %v2201
  %2219 = vmatprep.subr.bf16.mxu0 0
  %2220 = vmatpush2.bf16.msra.mxu0 0
  %2221 = vmatprep.subr.bf16.mxu0 0
  %2222 = vmatpush2.bf16.msra.mxu0 0
  %2223 = vmatprep.subr.bf16.mxu0 0
  %2224 = vmatpush2.bf16.msra.mxu0 0
  %2225 = vmatprep.subr.bf16.mxu0 0
  %2226 = vmatpush2.bf16.msra.mxu0 0
  %2227 = vmatprep.subr.bf16.mxu0 0
  %2228 = vmatpush2.bf16.msra.mxu0 0
  %2229 = vmatprep.subr.bf16.mxu0 0
  %2230 = vmatpush2.bf16.msra.mxu0 0
  %2231 = vmatprep.subr.bf16.mxu0 0
  %2232 = vmatpush2.bf16.msra.mxu0 0
  %2233 = vmatprep.subr.bf16.mxu0 0
  %2234 = vmatpush2.bf16.msra.mxu0 0
  %2235 = vmatprep.mubr.bf16.mxu0 0
  %2236 = vmatmul.mubr.bf16.gmra.mxu0 %v2198
  %v2237 = vpop.f32.mrf.mxu0
  %v2238 = vadd.f32 0.0, %v2237
  %v2239 = vpop.f32.mrf.mxu0
  %v2240 = vpop.f32.mrf.mxu0
  %v2241 = vadd.f32 0.0, %v2240
  %v2242 = vpop.f32.mrf.mxu0
  %2243 = vdwg.mxu0
  %v2244 = vadd.f32 %v1849, %v2238
  %v2245 = vadd.f32 %v1850, %v2241
  %s2246 = scalar_lea.vmem %s5, 1280
  %v2247 = vld [vmem:[%s2246] sm:$0xf]
  %v2248 = vld [vmem:[%s2246 + $0x4] sm:$0xf]
  %v2249 = vld [vmem:[%s2246 + $0x8] sm:$0xf]
  %v2250 = vld [vmem:[%s2246 + $0xc] sm:$0xf]
  %v2251 = vld [vmem:[%s2246 + $0x10] sm:$0xf]
  %v2252 = vld [vmem:[%s2246 + $0x14] sm:$0xf]
  %v2253 = vld [vmem:[%s2246 + $0x18] sm:$0xf]
  %v2254 = vld [vmem:[%s2246 + $0x1c] sm:$0xf]
  %v2255 = vld [vmem:[%s2246 + $0x20] sm:$0xf]
  %v2256 = vld [vmem:[%s2246 + $0x24] sm:$0xf]
  %v2257 = vld [vmem:[%s2246 + $0x28] sm:$0xf]
  %v2258 = vld [vmem:[%s2246 + $0x2c] sm:$0xf]
  %v2259 = vld [vmem:[%s2246 + $0x30] sm:$0xf]
  %v2260 = vld [vmem:[%s2246 + $0x34] sm:$0xf]
  %v2261 = vld [vmem:[%s2246 + $0x38] sm:$0xf]
  %v2262 = vld [vmem:[%s2246 + $0x3c] sm:$0xf]
  %v2263 = vld [vmem:[%s2246 + $0x40] sm:$0xf]
  %v2264 = vld [vmem:[%s2246 + $0x44] sm:$0xf]
  %v2265 = vld [vmem:[%s2246 + $0x48] sm:$0xf]
  %v2266 = vld [vmem:[%s2246 + $0x4c] sm:$0xf]
  %v2267 = vld [vmem:[%s2246 + $0x50] sm:$0xf]
  %v2268 = vld [vmem:[%s2246 + $0x54] sm:$0xf]
  %v2269 = vld [vmem:[%s2246 + $0x58] sm:$0xf]
  %v2270 = vld [vmem:[%s2246 + $0x5c] sm:$0xf]
  %v2271 = vld [vmem:[%s2246 + $0x60] sm:$0xf]
  %v2272 = vld [vmem:[%s2246 + $0x64] sm:$0xf]
  %v2273 = vld [vmem:[%s2246 + $0x68] sm:$0xf]
  %v2274 = vld [vmem:[%s2246 + $0x6c] sm:$0xf]
  %v2275 = vld [vmem:[%s2246 + $0x70] sm:$0xf]
  %v2276 = vld [vmem:[%s2246 + $0x74] sm:$0xf]
  %v2277 = vld [vmem:[%s2246 + $0x78] sm:$0xf]
  %v2278 = vld [vmem:[%s2246 + $0x7c] sm:$0xf]
  %v2279 = vld [vmem:[%s2246 + $0x80] sm:$0xf]
  %v2280 = vld [vmem:[%s2246 + $0x84] sm:$0xf]
  %v2281 = vld [vmem:[%s2246 + $0x88] sm:$0xf]
  %v2282 = vld [vmem:[%s2246 + $0x8c] sm:$0xf]
  %v2283 = vld [vmem:[%s2246 + $0x90] sm:$0xf]
  %v2284 = vld [vmem:[%s2246 + $0x94] sm:$0xf]
  %v2285 = vld [vmem:[%s2246 + $0x98] sm:$0xf]
  %v2286 = vld [vmem:[%s2246 + $0x9c] sm:$0xf]
  %v2287 = vld [vmem:[%s2246 + $0xa0] sm:$0xf]
  %v2288 = vld [vmem:[%s2246 + $0xa4] sm:$0xf]
  %v2289 = vld [vmem:[%s2246 + $0xa8] sm:$0xf]
  %v2290 = vld [vmem:[%s2246 + $0xac] sm:$0xf]
  %v2291 = vld [vmem:[%s2246 + $0xb0] sm:$0xf]
  %v2292 = vld [vmem:[%s2246 + $0xb4] sm:$0xf]
  %v2293 = vld [vmem:[%s2246 + $0xb8] sm:$0xf]
  %v2294 = vld [vmem:[%s2246 + $0xbc] sm:$0xf]
  %v2295 = vld [vmem:[%s2246 + $0xc0] sm:$0xf]
  %v2296 = vld [vmem:[%s2246 + $0xc4] sm:$0xf]
  %v2297 = vld [vmem:[%s2246 + $0xc8] sm:$0xf]
  %v2298 = vld [vmem:[%s2246 + $0xcc] sm:$0xf]
  %v2299 = vld [vmem:[%s2246 + $0xd0] sm:$0xf]
  %v2300 = vld [vmem:[%s2246 + $0xd4] sm:$0xf]
  %v2301 = vld [vmem:[%s2246 + $0xd8] sm:$0xf]
  %v2302 = vld [vmem:[%s2246 + $0xdc] sm:$0xf]
  %v2303 = vld [vmem:[%s2246 + $0xe0] sm:$0xf]
  %v2304 = vld [vmem:[%s2246 + $0xe4] sm:$0xf]
  %v2305 = vld [vmem:[%s2246 + $0xe8] sm:$0xf]
  %v2306 = vld [vmem:[%s2246 + $0xec] sm:$0xf]
  %v2307 = vld [vmem:[%s2246 + $0xf0] sm:$0xf]
  %v2308 = vld [vmem:[%s2246 + $0xf4] sm:$0xf]
  %v2309 = vld [vmem:[%s2246 + $0xf8] sm:$0xf]
  %v2310 = vld [vmem:[%s2246 + $0xfc] sm:$0xf]
  %v2375 = vunpack.c.l.b16 %v2247
  %v2376 = vunpack.c.l.b16 %v2248
  %v2377 = vunpack.c.l.b16 %v2249
  %v2378 = vunpack.c.l.b16 %v2250
  %v2379 = vunpack.c.l.b16 %v2251
  %v2380 = vunpack.c.l.b16 %v2252
  %v2381 = vunpack.c.l.b16 %v2253
  %v2382 = vunpack.c.l.b16 %v2254
  %v2383 = vunpack.c.l.b16 %v2255
  %v2384 = vunpack.c.l.b16 %v2256
  %v2385 = vunpack.c.l.b16 %v2257
  %v2386 = vunpack.c.l.b16 %v2258
  %v2387 = vunpack.c.l.b16 %v2259
  %v2388 = vunpack.c.l.b16 %v2260
  %v2389 = vunpack.c.l.b16 %v2261
  %v2390 = vunpack.c.l.b16 %v2262
  %v2391 = vunpack.c.l.b16 %v2263
  %v2392 = vunpack.c.l.b16 %v2264
  %v2393 = vunpack.c.l.b16 %v2265
  %v2394 = vunpack.c.l.b16 %v2266
  %v2395 = vunpack.c.l.b16 %v2267
  %v2396 = vunpack.c.l.b16 %v2268
  %v2397 = vunpack.c.l.b16 %v2269
  %v2398 = vunpack.c.l.b16 %v2270
  %v2399 = vunpack.c.l.b16 %v2271
  %v2400 = vunpack.c.l.b16 %v2272
  %v2401 = vunpack.c.l.b16 %v2273
  %v2402 = vunpack.c.l.b16 %v2274
  %v2403 = vunpack.c.l.b16 %v2275
  %v2404 = vunpack.c.l.b16 %v2276
  %v2405 = vunpack.c.l.b16 %v2277
  %v2406 = vunpack.c.l.b16 %v2278
  %v2407 = vunpack.c.l.b16 %v2279
  %v2408 = vunpack.c.l.b16 %v2280
  %v2409 = vunpack.c.l.b16 %v2281
  %v2410 = vunpack.c.l.b16 %v2282
  %v2411 = vunpack.c.l.b16 %v2283
  %v2412 = vunpack.c.l.b16 %v2284
  %v2413 = vunpack.c.l.b16 %v2285
  %v2414 = vunpack.c.l.b16 %v2286
  %v2415 = vunpack.c.l.b16 %v2287
  %v2416 = vunpack.c.l.b16 %v2288
  %v2417 = vunpack.c.l.b16 %v2289
  %v2418 = vunpack.c.l.b16 %v2290
  %v2419 = vunpack.c.l.b16 %v2291
  %v2420 = vunpack.c.l.b16 %v2292
  %v2421 = vunpack.c.l.b16 %v2293
  %v2422 = vunpack.c.l.b16 %v2294
  %v2423 = vunpack.c.l.b16 %v2295
  %v2424 = vunpack.c.l.b16 %v2296
  %v2425 = vunpack.c.l.b16 %v2297
  %v2426 = vunpack.c.l.b16 %v2298
  %v2427 = vunpack.c.l.b16 %v2299
  %v2428 = vunpack.c.l.b16 %v2300
  %v2429 = vunpack.c.l.b16 %v2301
  %v2430 = vunpack.c.l.b16 %v2302
  %v2431 = vunpack.c.l.b16 %v2303
  %v2432 = vunpack.c.l.b16 %v2304
  %v2433 = vunpack.c.l.b16 %v2305
  %v2434 = vunpack.c.l.b16 %v2306
  %v2435 = vunpack.c.l.b16 %v2307
  %v2436 = vunpack.c.l.b16 %v2308
  %v2437 = vunpack.c.l.b16 %v2309
  %v2438 = vunpack.c.l.b16 %v2310
  %v2439 = vpack.c.b16 %v2376, %v2375
  %v2440 = vpack.c.b16 %v2378, %v2377
  %v2441 = vpack.c.b16 %v2380, %v2379
  %v2442 = vpack.c.b16 %v2382, %v2381
  %v2443 = vpack.c.b16 %v2384, %v2383
  %v2444 = vpack.c.b16 %v2386, %v2385
  %v2445 = vpack.c.b16 %v2388, %v2387
  %v2446 = vpack.c.b16 %v2390, %v2389
  %v2447 = vpack.c.b16 %v2392, %v2391
  %v2448 = vpack.c.b16 %v2394, %v2393
  %v2449 = vpack.c.b16 %v2396, %v2395
  %v2450 = vpack.c.b16 %v2398, %v2397
  %v2451 = vpack.c.b16 %v2400, %v2399
  %v2452 = vpack.c.b16 %v2402, %v2401
  %v2453 = vpack.c.b16 %v2404, %v2403
  %v2454 = vpack.c.b16 %v2406, %v2405
  %v2455 = vpack.c.b16 %v2408, %v2407
  %v2456 = vpack.c.b16 %v2410, %v2409
  %v2457 = vpack.c.b16 %v2412, %v2411
  %v2458 = vpack.c.b16 %v2414, %v2413
  %v2459 = vpack.c.b16 %v2416, %v2415
  %v2460 = vpack.c.b16 %v2418, %v2417
  %v2461 = vpack.c.b16 %v2420, %v2419
  %v2462 = vpack.c.b16 %v2422, %v2421
  %v2463 = vpack.c.b16 %v2424, %v2423
  %v2464 = vpack.c.b16 %v2426, %v2425
  %v2465 = vpack.c.b16 %v2428, %v2427
  %v2466 = vpack.c.b16 %v2430, %v2429
  %v2467 = vpack.c.b16 %v2432, %v2431
  %v2468 = vpack.c.b16 %v2434, %v2433
  %v2469 = vpack.c.b16 %v2436, %v2435
  %v2470 = vpack.c.b16 %v2438, %v2437
  %2503 = vmatprep.subr.bf16.mxu0 0
  %2504 = vmatpush1.bf16.msra.mxu0 %v2446
  %2505 = vmatprep.subr.bf16.mxu0 0
  %2506 = vmatpush1.bf16.msra.mxu0 %v2445
  %2507 = vmatprep.subr.bf16.mxu0 0
  %2508 = vmatpush1.bf16.msra.mxu0 %v2444
  %2509 = vmatprep.subr.bf16.mxu0 0
  %2510 = vmatpush1.bf16.msra.mxu0 %v2443
  %2511 = vmatprep.subr.bf16.mxu0 0
  %2512 = vmatpush1.bf16.msra.mxu0 %v2442
  %2513 = vmatprep.subr.bf16.mxu0 0
  %2514 = vmatpush1.bf16.msra.mxu0 %v2441
  %2515 = vmatprep.subr.bf16.mxu0 0
  %2516 = vmatpush1.bf16.msra.mxu0 %v2440
  %2517 = vmatprep.subr.bf16.mxu0 0
  %2518 = vmatpush1.bf16.msra.mxu0 %v2439
  %2519 = vmatprep.subr.bf16.mxu0 0
  %2520 = vmatpush2.bf16.msra.mxu0 %v2454
  %2521 = vmatprep.subr.bf16.mxu0 0
  %2522 = vmatpush2.bf16.msra.mxu0 %v2453
  %2523 = vmatprep.subr.bf16.mxu0 0
  %2524 = vmatpush2.bf16.msra.mxu0 %v2452
  %2525 = vmatprep.subr.bf16.mxu0 0
  %2526 = vmatpush2.bf16.msra.mxu0 %v2451
  %2527 = vmatprep.subr.bf16.mxu0 0
  %2528 = vmatpush2.bf16.msra.mxu0 %v2450
  %2529 = vmatprep.subr.bf16.mxu0 0
  %2530 = vmatpush2.bf16.msra.mxu0 %v2449
  %2531 = vmatprep.subr.bf16.mxu0 0
  %2532 = vmatpush2.bf16.msra.mxu0 %v2448
  %2533 = vmatprep.subr.bf16.mxu0 0
  %2534 = vmatpush2.bf16.msra.mxu0 %v2447
  %2535 = vmatprep.mubr.bf16.mxu0 %v272
  %2536 = vmatmul.mubr.bf16.gmra.mxu0 %v271
  %v2537 = vpop.f32.mrf.mxu0
  %v2538 = vadd.f32 0.0, %v2537
  %v2539 = vpop.f32.mrf.mxu0
  %v2540 = vpop.f32.mrf.mxu0
  %v2541 = vpop.f32.mrf.mxu0
  %2542 = vdwg.mxu0
  %2543 = vmatprep.subr.bf16.mxu0 0
  %2544 = vmatpush1.bf16.msra.mxu0 %v2462
  %2545 = vmatprep.subr.bf16.mxu0 0
  %2546 = vmatpush1.bf16.msra.mxu0 %v2461
  %2547 = vmatprep.subr.bf16.mxu0 0
  %2548 = vmatpush1.bf16.msra.mxu0 %v2460
  %2549 = vmatprep.subr.bf16.mxu0 0
  %2550 = vmatpush1.bf16.msra.mxu0 %v2459
  %2551 = vmatprep.subr.bf16.mxu0 0
  %2552 = vmatpush1.bf16.msra.mxu0 %v2458
  %2553 = vmatprep.subr.bf16.mxu0 0
  %2554 = vmatpush1.bf16.msra.mxu0 %v2457
  %2555 = vmatprep.subr.bf16.mxu0 0
  %2556 = vmatpush1.bf16.msra.mxu0 %v2456
  %2557 = vmatprep.subr.bf16.mxu0 0
  %2558 = vmatpush1.bf16.msra.mxu0 %v2455
  %2559 = vmatprep.subr.bf16.mxu0 0
  %2560 = vmatpush2.bf16.msra.mxu0 %v2470
  %2561 = vmatprep.subr.bf16.mxu0 0
  %2562 = vmatpush2.bf16.msra.mxu0 %v2469
  %2563 = vmatprep.subr.bf16.mxu0 0
  %2564 = vmatpush2.bf16.msra.mxu0 %v2468
  %2565 = vmatprep.subr.bf16.mxu0 0
  %2566 = vmatpush2.bf16.msra.mxu0 %v2467
  %2567 = vmatprep.subr.bf16.mxu0 0
  %2568 = vmatpush2.bf16.msra.mxu0 %v2466
  %2569 = vmatprep.subr.bf16.mxu0 0
  %2570 = vmatpush2.bf16.msra.mxu0 %v2465
  %2571 = vmatprep.subr.bf16.mxu0 0
  %2572 = vmatpush2.bf16.msra.mxu0 %v2464
  %2573 = vmatprep.subr.bf16.mxu0 0
  %2574 = vmatpush2.bf16.msra.mxu0 %v2463
  %2575 = vmatprep.mubr.bf16.mxu0 %v274
  %2576 = vmatmul.mubr.bf16.gmra.mxu0 %v273
  %v2577 = vpop.f32.mrf.mxu0
  %v2578 = vadd.f32 %v2538, %v2577
  %v2579 = vpop.f32.mrf.mxu0
  %v2580 = vpop.f32.mrf.mxu0
  %v2581 = vpop.f32.mrf.mxu0
  %2582 = vdwg.mxu0
  %v2583 = vpack.c.bf16 %v2578, %v2578
  %s2584 = scalar_lea.vmem %s4, 40
  %v2585 = vld [vmem:[%s2584] sm:$0xf]
  %v2586 = vld [vmem:[%s2584 + $0x4] sm:$0xf]
  %v2589 = vunpack.c.l.b16 %v2585
  %v2590 = vunpack.c.l.b16 %v2586
  %v2591 = vpack.c.b16 %v2590, %v2589
  %v2593 = vsel %vm960, %v2591, 0
  %v2596 = vsel %vm964, %v2583, 0
  %2598 = vmatprep.subr.bf16.mxu0 0
  %2599 = vmatpush1.bf16.msra.mxu0 0
  %2600 = vmatprep.subr.bf16.mxu0 0
  %2601 = vmatpush1.bf16.msra.mxu0 0
  %2602 = vmatprep.subr.bf16.mxu0 0
  %2603 = vmatpush1.bf16.msra.mxu0 0
  %2604 = vmatprep.subr.bf16.mxu0 0
  %2605 = vmatpush1.bf16.msra.mxu0 0
  %2606 = vmatprep.subr.bf16.mxu0 0
  %2607 = vmatpush1.bf16.msra.mxu0 0
  %2608 = vmatprep.subr.bf16.mxu0 0
  %2609 = vmatpush1.bf16.msra.mxu0 0
  %2610 = vmatprep.subr.bf16.mxu0 0
  %2611 = vmatpush1.bf16.msra.mxu0 0
  %2612 = vmatprep.subr.bf16.mxu0 0
  %2613 = vmatpush1.bf16.msra.mxu0 %v2596
  %2614 = vmatprep.subr.bf16.mxu0 0
  %2615 = vmatpush2.bf16.msra.mxu0 0
  %2616 = vmatprep.subr.bf16.mxu0 0
  %2617 = vmatpush2.bf16.msra.mxu0 0
  %2618 = vmatprep.subr.bf16.mxu0 0
  %2619 = vmatpush2.bf16.msra.mxu0 0
  %2620 = vmatprep.subr.bf16.mxu0 0
  %2621 = vmatpush2.bf16.msra.mxu0 0
  %2622 = vmatprep.subr.bf16.mxu0 0
  %2623 = vmatpush2.bf16.msra.mxu0 0
  %2624 = vmatprep.subr.bf16.mxu0 0
  %2625 = vmatpush2.bf16.msra.mxu0 0
  %2626 = vmatprep.subr.bf16.mxu0 0
  %2627 = vmatpush2.bf16.msra.mxu0 0
  %2628 = vmatprep.subr.bf16.mxu0 0
  %2629 = vmatpush2.bf16.msra.mxu0 0
  %2630 = vmatprep.mubr.bf16.mxu0 0
  %2631 = vmatmul.mubr.bf16.gmra.mxu0 %v2593
  %v2632 = vpop.f32.mrf.mxu0
  %v2633 = vadd.f32 0.0, %v2632
  %v2634 = vpop.f32.mrf.mxu0
  %v2635 = vpop.f32.mrf.mxu0
  %v2636 = vadd.f32 0.0, %v2635
  %v2637 = vpop.f32.mrf.mxu0
  %2638 = vdwg.mxu0
  %v2639 = vadd.f32 %v2244, %v2633
  %v2640 = vadd.f32 %v2245, %v2636
  %s2641 = scalar_lea.vmem %s5, 1536
  %v2642 = vld [vmem:[%s2641] sm:$0xf]
  %v2643 = vld [vmem:[%s2641 + $0x4] sm:$0xf]
  %v2644 = vld [vmem:[%s2641 + $0x8] sm:$0xf]
  %v2645 = vld [vmem:[%s2641 + $0xc] sm:$0xf]
  %v2646 = vld [vmem:[%s2641 + $0x10] sm:$0xf]
  %v2647 = vld [vmem:[%s2641 + $0x14] sm:$0xf]
  %v2648 = vld [vmem:[%s2641 + $0x18] sm:$0xf]
  %v2649 = vld [vmem:[%s2641 + $0x1c] sm:$0xf]
  %v2650 = vld [vmem:[%s2641 + $0x20] sm:$0xf]
  %v2651 = vld [vmem:[%s2641 + $0x24] sm:$0xf]
  %v2652 = vld [vmem:[%s2641 + $0x28] sm:$0xf]
  %v2653 = vld [vmem:[%s2641 + $0x2c] sm:$0xf]
  %v2654 = vld [vmem:[%s2641 + $0x30] sm:$0xf]
  %v2655 = vld [vmem:[%s2641 + $0x34] sm:$0xf]
  %v2656 = vld [vmem:[%s2641 + $0x38] sm:$0xf]
  %v2657 = vld [vmem:[%s2641 + $0x3c] sm:$0xf]
  %v2658 = vld [vmem:[%s2641 + $0x40] sm:$0xf]
  %v2659 = vld [vmem:[%s2641 + $0x44] sm:$0xf]
  %v2660 = vld [vmem:[%s2641 + $0x48] sm:$0xf]
  %v2661 = vld [vmem:[%s2641 + $0x4c] sm:$0xf]
  %v2662 = vld [vmem:[%s2641 + $0x50] sm:$0xf]
  %v2663 = vld [vmem:[%s2641 + $0x54] sm:$0xf]
  %v2664 = vld [vmem:[%s2641 + $0x58] sm:$0xf]
  %v2665 = vld [vmem:[%s2641 + $0x5c] sm:$0xf]
  %v2666 = vld [vmem:[%s2641 + $0x60] sm:$0xf]
  %v2667 = vld [vmem:[%s2641 + $0x64] sm:$0xf]
  %v2668 = vld [vmem:[%s2641 + $0x68] sm:$0xf]
  %v2669 = vld [vmem:[%s2641 + $0x6c] sm:$0xf]
  %v2670 = vld [vmem:[%s2641 + $0x70] sm:$0xf]
  %v2671 = vld [vmem:[%s2641 + $0x74] sm:$0xf]
  %v2672 = vld [vmem:[%s2641 + $0x78] sm:$0xf]
  %v2673 = vld [vmem:[%s2641 + $0x7c] sm:$0xf]
  %v2674 = vld [vmem:[%s2641 + $0x80] sm:$0xf]
  %v2675 = vld [vmem:[%s2641 + $0x84] sm:$0xf]
  %v2676 = vld [vmem:[%s2641 + $0x88] sm:$0xf]
  %v2677 = vld [vmem:[%s2641 + $0x8c] sm:$0xf]
  %v2678 = vld [vmem:[%s2641 + $0x90] sm:$0xf]
  %v2679 = vld [vmem:[%s2641 + $0x94] sm:$0xf]
  %v2680 = vld [vmem:[%s2641 + $0x98] sm:$0xf]
  %v2681 = vld [vmem:[%s2641 + $0x9c] sm:$0xf]
  %v2682 = vld [vmem:[%s2641 + $0xa0] sm:$0xf]
  %v2683 = vld [vmem:[%s2641 + $0xa4] sm:$0xf]
  %v2684 = vld [vmem:[%s2641 + $0xa8] sm:$0xf]
  %v2685 = vld [vmem:[%s2641 + $0xac] sm:$0xf]
  %v2686 = vld [vmem:[%s2641 + $0xb0] sm:$0xf]
  %v2687 = vld [vmem:[%s2641 + $0xb4] sm:$0xf]
  %v2688 = vld [vmem:[%s2641 + $0xb8] sm:$0xf]
  %v2689 = vld [vmem:[%s2641 + $0xbc] sm:$0xf]
  %v2690 = vld [vmem:[%s2641 + $0xc0] sm:$0xf]
  %v2691 = vld [vmem:[%s2641 + $0xc4] sm:$0xf]
  %v2692 = vld [vmem:[%s2641 + $0xc8] sm:$0xf]
  %v2693 = vld [vmem:[%s2641 + $0xcc] sm:$0xf]
  %v2694 = vld [vmem:[%s2641 + $0xd0] sm:$0xf]
  %v2695 = vld [vmem:[%s2641 + $0xd4] sm:$0xf]
  %v2696 = vld [vmem:[%s2641 + $0xd8] sm:$0xf]
  %v2697 = vld [vmem:[%s2641 + $0xdc] sm:$0xf]
  %v2698 = vld [vmem:[%s2641 + $0xe0] sm:$0xf]
  %v2699 = vld [vmem:[%s2641 + $0xe4] sm:$0xf]
  %v2700 = vld [vmem:[%s2641 + $0xe8] sm:$0xf]
  %v2701 = vld [vmem:[%s2641 + $0xec] sm:$0xf]
  %v2702 = vld [vmem:[%s2641 + $0xf0] sm:$0xf]
  %v2703 = vld [vmem:[%s2641 + $0xf4] sm:$0xf]
  %v2704 = vld [vmem:[%s2641 + $0xf8] sm:$0xf]
  %v2705 = vld [vmem:[%s2641 + $0xfc] sm:$0xf]
  %v2770 = vunpack.c.l.b16 %v2642
  %v2771 = vunpack.c.l.b16 %v2643
  %v2772 = vunpack.c.l.b16 %v2644
  %v2773 = vunpack.c.l.b16 %v2645
  %v2774 = vunpack.c.l.b16 %v2646
  %v2775 = vunpack.c.l.b16 %v2647
  %v2776 = vunpack.c.l.b16 %v2648
  %v2777 = vunpack.c.l.b16 %v2649
  %v2778 = vunpack.c.l.b16 %v2650
  %v2779 = vunpack.c.l.b16 %v2651
  %v2780 = vunpack.c.l.b16 %v2652
  %v2781 = vunpack.c.l.b16 %v2653
  %v2782 = vunpack.c.l.b16 %v2654
  %v2783 = vunpack.c.l.b16 %v2655
  %v2784 = vunpack.c.l.b16 %v2656
  %v2785 = vunpack.c.l.b16 %v2657
  %v2786 = vunpack.c.l.b16 %v2658
  %v2787 = vunpack.c.l.b16 %v2659
  %v2788 = vunpack.c.l.b16 %v2660
  %v2789 = vunpack.c.l.b16 %v2661
  %v2790 = vunpack.c.l.b16 %v2662
  %v2791 = vunpack.c.l.b16 %v2663
  %v2792 = vunpack.c.l.b16 %v2664
  %v2793 = vunpack.c.l.b16 %v2665
  %v2794 = vunpack.c.l.b16 %v2666
  %v2795 = vunpack.c.l.b16 %v2667
  %v2796 = vunpack.c.l.b16 %v2668
  %v2797 = vunpack.c.l.b16 %v2669
  %v2798 = vunpack.c.l.b16 %v2670
  %v2799 = vunpack.c.l.b16 %v2671
  %v2800 = vunpack.c.l.b16 %v2672
  %v2801 = vunpack.c.l.b16 %v2673
  %v2802 = vunpack.c.l.b16 %v2674
  %v2803 = vunpack.c.l.b16 %v2675
  %v2804 = vunpack.c.l.b16 %v2676
  %v2805 = vunpack.c.l.b16 %v2677
  %v2806 = vunpack.c.l.b16 %v2678
  %v2807 = vunpack.c.l.b16 %v2679
  %v2808 = vunpack.c.l.b16 %v2680
  %v2809 = vunpack.c.l.b16 %v2681
  %v2810 = vunpack.c.l.b16 %v2682
  %v2811 = vunpack.c.l.b16 %v2683
  %v2812 = vunpack.c.l.b16 %v2684
  %v2813 = vunpack.c.l.b16 %v2685
  %v2814 = vunpack.c.l.b16 %v2686
  %v2815 = vunpack.c.l.b16 %v2687
  %v2816 = vunpack.c.l.b16 %v2688
  %v2817 = vunpack.c.l.b16 %v2689
  %v2818 = vunpack.c.l.b16 %v2690
  %v2819 = vunpack.c.l.b16 %v2691
  %v2820 = vunpack.c.l.b16 %v2692
  %v2821 = vunpack.c.l.b16 %v2693
  %v2822 = vunpack.c.l.b16 %v2694
  %v2823 = vunpack.c.l.b16 %v2695
  %v2824 = vunpack.c.l.b16 %v2696
  %v2825 = vunpack.c.l.b16 %v2697
  %v2826 = vunpack.c.l.b16 %v2698
  %v2827 = vunpack.c.l.b16 %v2699
  %v2828 = vunpack.c.l.b16 %v2700
  %v2829 = vunpack.c.l.b16 %v2701
  %v2830 = vunpack.c.l.b16 %v2702
  %v2831 = vunpack.c.l.b16 %v2703
  %v2832 = vunpack.c.l.b16 %v2704
  %v2833 = vunpack.c.l.b16 %v2705
  %v2834 = vpack.c.b16 %v2771, %v2770
  %v2835 = vpack.c.b16 %v2773, %v2772
  %v2836 = vpack.c.b16 %v2775, %v2774
  %v2837 = vpack.c.b16 %v2777, %v2776
  %v2838 = vpack.c.b16 %v2779, %v2778
  %v2839 = vpack.c.b16 %v2781, %v2780
  %v2840 = vpack.c.b16 %v2783, %v2782
  %v2841 = vpack.c.b16 %v2785, %v2784
  %v2842 = vpack.c.b16 %v2787, %v2786
  %v2843 = vpack.c.b16 %v2789, %v2788
  %v2844 = vpack.c.b16 %v2791, %v2790
  %v2845 = vpack.c.b16 %v2793, %v2792
  %v2846 = vpack.c.b16 %v2795, %v2794
  %v2847 = vpack.c.b16 %v2797, %v2796
  %v2848 = vpack.c.b16 %v2799, %v2798
  %v2849 = vpack.c.b16 %v2801, %v2800
  %v2850 = vpack.c.b16 %v2803, %v2802
  %v2851 = vpack.c.b16 %v2805, %v2804
  %v2852 = vpack.c.b16 %v2807, %v2806
  %v2853 = vpack.c.b16 %v2809, %v2808
  %v2854 = vpack.c.b16 %v2811, %v2810
  %v2855 = vpack.c.b16 %v2813, %v2812
  %v2856 = vpack.c.b16 %v2815, %v2814
  %v2857 = vpack.c.b16 %v2817, %v2816
  %v2858 = vpack.c.b16 %v2819, %v2818
  %v2859 = vpack.c.b16 %v2821, %v2820
  %v2860 = vpack.c.b16 %v2823, %v2822
  %v2861 = vpack.c.b16 %v2825, %v2824
  %v2862 = vpack.c.b16 %v2827, %v2826
  %v2863 = vpack.c.b16 %v2829, %v2828
  %v2864 = vpack.c.b16 %v2831, %v2830
  %v2865 = vpack.c.b16 %v2833, %v2832
  %2898 = vmatprep.subr.bf16.mxu0 0
  %2899 = vmatpush1.bf16.msra.mxu0 %v2841
  %2900 = vmatprep.subr.bf16.mxu0 0
  %2901 = vmatpush1.bf16.msra.mxu0 %v2840
  %2902 = vmatprep.subr.bf16.mxu0 0
  %2903 = vmatpush1.bf16.msra.mxu0 %v2839
  %2904 = vmatprep.subr.bf16.mxu0 0
  %2905 = vmatpush1.bf16.msra.mxu0 %v2838
  %2906 = vmatprep.subr.bf16.mxu0 0
  %2907 = vmatpush1.bf16.msra.mxu0 %v2837
  %2908 = vmatprep.subr.bf16.mxu0 0
  %2909 = vmatpush1.bf16.msra.mxu0 %v2836
  %2910 = vmatprep.subr.bf16.mxu0 0
  %2911 = vmatpush1.bf16.msra.mxu0 %v2835
  %2912 = vmatprep.subr.bf16.mxu0 0
  %2913 = vmatpush1.bf16.msra.mxu0 %v2834
  %2914 = vmatprep.subr.bf16.mxu0 0
  %2915 = vmatpush2.bf16.msra.mxu0 %v2849
  %2916 = vmatprep.subr.bf16.mxu0 0
  %2917 = vmatpush2.bf16.msra.mxu0 %v2848
  %2918 = vmatprep.subr.bf16.mxu0 0
  %2919 = vmatpush2.bf16.msra.mxu0 %v2847
  %2920 = vmatprep.subr.bf16.mxu0 0
  %2921 = vmatpush2.bf16.msra.mxu0 %v2846
  %2922 = vmatprep.subr.bf16.mxu0 0
  %2923 = vmatpush2.bf16.msra.mxu0 %v2845
  %2924 = vmatprep.subr.bf16.mxu0 0
  %2925 = vmatpush2.bf16.msra.mxu0 %v2844
  %2926 = vmatprep.subr.bf16.mxu0 0
  %2927 = vmatpush2.bf16.msra.mxu0 %v2843
  %2928 = vmatprep.subr.bf16.mxu0 0
  %2929 = vmatpush2.bf16.msra.mxu0 %v2842
  %2930 = vmatprep.mubr.bf16.mxu0 %v272
  %2931 = vmatmul.mubr.bf16.gmra.mxu0 %v271
  %v2932 = vpop.f32.mrf.mxu0
  %v2933 = vadd.f32 0.0, %v2932
  %v2934 = vpop.f32.mrf.mxu0
  %v2935 = vpop.f32.mrf.mxu0
  %v2936 = vpop.f32.mrf.mxu0
  %2937 = vdwg.mxu0
  %2938 = vmatprep.subr.bf16.mxu0 0
  %2939 = vmatpush1.bf16.msra.mxu0 %v2857
  %2940 = vmatprep.subr.bf16.mxu0 0
  %2941 = vmatpush1.bf16.msra.mxu0 %v2856
  %2942 = vmatprep.subr.bf16.mxu0 0
  %2943 = vmatpush1.bf16.msra.mxu0 %v2855
  %2944 = vmatprep.subr.bf16.mxu0 0
  %2945 = vmatpush1.bf16.msra.mxu0 %v2854
  %2946 = vmatprep.subr.bf16.mxu0 0
  %2947 = vmatpush1.bf16.msra.mxu0 %v2853
  %2948 = vmatprep.subr.bf16.mxu0 0
  %2949 = vmatpush1.bf16.msra.mxu0 %v2852
  %2950 = vmatprep.subr.bf16.mxu0 0
  %2951 = vmatpush1.bf16.msra.mxu0 %v2851
  %2952 = vmatprep.subr.bf16.mxu0 0
  %2953 = vmatpush1.bf16.msra.mxu0 %v2850
  %2954 = vmatprep.subr.bf16.mxu0 0
  %2955 = vmatpush2.bf16.msra.mxu0 %v2865
  %2956 = vmatprep.subr.bf16.mxu0 0
  %2957 = vmatpush2.bf16.msra.mxu0 %v2864
  %2958 = vmatprep.subr.bf16.mxu0 0
  %2959 = vmatpush2.bf16.msra.mxu0 %v2863
  %2960 = vmatprep.subr.bf16.mxu0 0
  %2961 = vmatpush2.bf16.msra.mxu0 %v2862
  %2962 = vmatprep.subr.bf16.mxu0 0
  %2963 = vmatpush2.bf16.msra.mxu0 %v2861
  %2964 = vmatprep.subr.bf16.mxu0 0
  %2965 = vmatpush2.bf16.msra.mxu0 %v2860
  %2966 = vmatprep.subr.bf16.mxu0 0
  %2967 = vmatpush2.bf16.msra.mxu0 %v2859
  %2968 = vmatprep.subr.bf16.mxu0 0
  %2969 = vmatpush2.bf16.msra.mxu0 %v2858
  %2970 = vmatprep.mubr.bf16.mxu0 %v274
  %2971 = vmatmul.mubr.bf16.gmra.mxu0 %v273
  %v2972 = vpop.f32.mrf.mxu0
  %v2973 = vadd.f32 %v2933, %v2972
  %v2974 = vpop.f32.mrf.mxu0
  %v2975 = vpop.f32.mrf.mxu0
  %v2976 = vpop.f32.mrf.mxu0
  %2977 = vdwg.mxu0
  %v2978 = vpack.c.bf16 %v2973, %v2973
  %s2979 = scalar_lea.vmem %s4, 48
  %v2980 = vld [vmem:[%s2979] sm:$0xf]
  %v2981 = vld [vmem:[%s2979 + $0x4] sm:$0xf]
  %v2984 = vunpack.c.l.b16 %v2980
  %v2985 = vunpack.c.l.b16 %v2981
  %v2986 = vpack.c.b16 %v2985, %v2984
  %v2988 = vsel %vm960, %v2986, 0
  %v2991 = vsel %vm964, %v2978, 0
  %2993 = vmatprep.subr.bf16.mxu0 0
  %2994 = vmatpush1.bf16.msra.mxu0 0
  %2995 = vmatprep.subr.bf16.mxu0 0
  %2996 = vmatpush1.bf16.msra.mxu0 0
  %2997 = vmatprep.subr.bf16.mxu0 0
  %2998 = vmatpush1.bf16.msra.mxu0 0
  %2999 = vmatprep.subr.bf16.mxu0 0
  %3000 = vmatpush1.bf16.msra.mxu0 0
  %3001 = vmatprep.subr.bf16.mxu0 0
  %3002 = vmatpush1.bf16.msra.mxu0 0
  %3003 = vmatprep.subr.bf16.mxu0 0
  %3004 = vmatpush1.bf16.msra.mxu0 0
  %3005 = vmatprep.subr.bf16.mxu0 0
  %3006 = vmatpush1.bf16.msra.mxu0 0
  %3007 = vmatprep.subr.bf16.mxu0 0
  %3008 = vmatpush1.bf16.msra.mxu0 %v2991
  %3009 = vmatprep.subr.bf16.mxu0 0
  %3010 = vmatpush2.bf16.msra.mxu0 0
  %3011 = vmatprep.subr.bf16.mxu0 0
  %3012 = vmatpush2.bf16.msra.mxu0 0
  %3013 = vmatprep.subr.bf16.mxu0 0
  %3014 = vmatpush2.bf16.msra.mxu0 0
  %3015 = vmatprep.subr.bf16.mxu0 0
  %3016 = vmatpush2.bf16.msra.mxu0 0
  %3017 = vmatprep.subr.bf16.mxu0 0
  %3018 = vmatpush2.bf16.msra.mxu0 0
  %3019 = vmatprep.subr.bf16.mxu0 0
  %3020 = vmatpush2.bf16.msra.mxu0 0
  %3021 = vmatprep.subr.bf16.mxu0 0
  %3022 = vmatpush2.bf16.msra.mxu0 0
  %3023 = vmatprep.subr.bf16.mxu0 0
  %3024 = vmatpush2.bf16.msra.mxu0 0
  %3025 = vmatprep.mubr.bf16.mxu0 0
  %3026 = vmatmul.mubr.bf16.gmra.mxu0 %v2988
  %v3027 = vpop.f32.mrf.mxu0
  %v3028 = vadd.f32 0.0, %v3027
  %v3029 = vpop.f32.mrf.mxu0
  %v3030 = vpop.f32.mrf.mxu0
  %v3031 = vadd.f32 0.0, %v3030
  %v3032 = vpop.f32.mrf.mxu0
  %3033 = vdwg.mxu0
  %v3034 = vadd.f32 %v2639, %v3028
  %v3035 = vadd.f32 %v2640, %v3031
  %s3036 = scalar_lea.vmem %s5, 1792
  %v3037 = vld [vmem:[%s3036] sm:$0xf]
  %v3038 = vld [vmem:[%s3036 + $0x4] sm:$0xf]
  %v3039 = vld [vmem:[%s3036 + $0x8] sm:$0xf]
  %v3040 = vld [vmem:[%s3036 + $0xc] sm:$0xf]
  %v3041 = vld [vmem:[%s3036 + $0x10] sm:$0xf]
  %v3042 = vld [vmem:[%s3036 + $0x14] sm:$0xf]
  %v3043 = vld [vmem:[%s3036 + $0x18] sm:$0xf]
  %v3044 = vld [vmem:[%s3036 + $0x1c] sm:$0xf]
  %v3045 = vld [vmem:[%s3036 + $0x20] sm:$0xf]
  %v3046 = vld [vmem:[%s3036 + $0x24] sm:$0xf]
  %v3047 = vld [vmem:[%s3036 + $0x28] sm:$0xf]
  %v3048 = vld [vmem:[%s3036 + $0x2c] sm:$0xf]
  %v3049 = vld [vmem:[%s3036 + $0x30] sm:$0xf]
  %v3050 = vld [vmem:[%s3036 + $0x34] sm:$0xf]
  %v3051 = vld [vmem:[%s3036 + $0x38] sm:$0xf]
  %v3052 = vld [vmem:[%s3036 + $0x3c] sm:$0xf]
  %v3053 = vld [vmem:[%s3036 + $0x40] sm:$0xf]
  %v3054 = vld [vmem:[%s3036 + $0x44] sm:$0xf]
  %v3055 = vld [vmem:[%s3036 + $0x48] sm:$0xf]
  %v3056 = vld [vmem:[%s3036 + $0x4c] sm:$0xf]
  %v3057 = vld [vmem:[%s3036 + $0x50] sm:$0xf]
  %v3058 = vld [vmem:[%s3036 + $0x54] sm:$0xf]
  %v3059 = vld [vmem:[%s3036 + $0x58] sm:$0xf]
  %v3060 = vld [vmem:[%s3036 + $0x5c] sm:$0xf]
  %v3061 = vld [vmem:[%s3036 + $0x60] sm:$0xf]
  %v3062 = vld [vmem:[%s3036 + $0x64] sm:$0xf]
  %v3063 = vld [vmem:[%s3036 + $0x68] sm:$0xf]
  %v3064 = vld [vmem:[%s3036 + $0x6c] sm:$0xf]
  %v3065 = vld [vmem:[%s3036 + $0x70] sm:$0xf]
  %v3066 = vld [vmem:[%s3036 + $0x74] sm:$0xf]
  %v3067 = vld [vmem:[%s3036 + $0x78] sm:$0xf]
  %v3068 = vld [vmem:[%s3036 + $0x7c] sm:$0xf]
  %v3069 = vld [vmem:[%s3036 + $0x80] sm:$0xf]
  %v3070 = vld [vmem:[%s3036 + $0x84] sm:$0xf]
  %v3071 = vld [vmem:[%s3036 + $0x88] sm:$0xf]
  %v3072 = vld [vmem:[%s3036 + $0x8c] sm:$0xf]
  %v3073 = vld [vmem:[%s3036 + $0x90] sm:$0xf]
  %v3074 = vld [vmem:[%s3036 + $0x94] sm:$0xf]
  %v3075 = vld [vmem:[%s3036 + $0x98] sm:$0xf]
  %v3076 = vld [vmem:[%s3036 + $0x9c] sm:$0xf]
  %v3077 = vld [vmem:[%s3036 + $0xa0] sm:$0xf]
  %v3078 = vld [vmem:[%s3036 + $0xa4] sm:$0xf]
  %v3079 = vld [vmem:[%s3036 + $0xa8] sm:$0xf]
  %v3080 = vld [vmem:[%s3036 + $0xac] sm:$0xf]
  %v3081 = vld [vmem:[%s3036 + $0xb0] sm:$0xf]
  %v3082 = vld [vmem:[%s3036 + $0xb4] sm:$0xf]
  %v3083 = vld [vmem:[%s3036 + $0xb8] sm:$0xf]
  %v3084 = vld [vmem:[%s3036 + $0xbc] sm:$0xf]
  %v3085 = vld [vmem:[%s3036 + $0xc0] sm:$0xf]
  %v3086 = vld [vmem:[%s3036 + $0xc4] sm:$0xf]
  %v3087 = vld [vmem:[%s3036 + $0xc8] sm:$0xf]
  %v3088 = vld [vmem:[%s3036 + $0xcc] sm:$0xf]
  %v3089 = vld [vmem:[%s3036 + $0xd0] sm:$0xf]
  %v3090 = vld [vmem:[%s3036 + $0xd4] sm:$0xf]
  %v3091 = vld [vmem:[%s3036 + $0xd8] sm:$0xf]
  %v3092 = vld [vmem:[%s3036 + $0xdc] sm:$0xf]
  %v3093 = vld [vmem:[%s3036 + $0xe0] sm:$0xf]
  %v3094 = vld [vmem:[%s3036 + $0xe4] sm:$0xf]
  %v3095 = vld [vmem:[%s3036 + $0xe8] sm:$0xf]
  %v3096 = vld [vmem:[%s3036 + $0xec] sm:$0xf]
  %v3097 = vld [vmem:[%s3036 + $0xf0] sm:$0xf]
  %v3098 = vld [vmem:[%s3036 + $0xf4] sm:$0xf]
  %v3099 = vld [vmem:[%s3036 + $0xf8] sm:$0xf]
  %v3100 = vld [vmem:[%s3036 + $0xfc] sm:$0xf]
  %v3165 = vunpack.c.l.b16 %v3037
  %v3166 = vunpack.c.l.b16 %v3038
  %v3167 = vunpack.c.l.b16 %v3039
  %v3168 = vunpack.c.l.b16 %v3040
  %v3169 = vunpack.c.l.b16 %v3041
  %v3170 = vunpack.c.l.b16 %v3042
  %v3171 = vunpack.c.l.b16 %v3043
  %v3172 = vunpack.c.l.b16 %v3044
  %v3173 = vunpack.c.l.b16 %v3045
  %v3174 = vunpack.c.l.b16 %v3046
  %v3175 = vunpack.c.l.b16 %v3047
  %v3176 = vunpack.c.l.b16 %v3048
  %v3177 = vunpack.c.l.b16 %v3049
  %v3178 = vunpack.c.l.b16 %v3050
  %v3179 = vunpack.c.l.b16 %v3051
  %v3180 = vunpack.c.l.b16 %v3052
  %v3181 = vunpack.c.l.b16 %v3053
  %v3182 = vunpack.c.l.b16 %v3054
  %v3183 = vunpack.c.l.b16 %v3055
  %v3184 = vunpack.c.l.b16 %v3056
  %v3185 = vunpack.c.l.b16 %v3057
  %v3186 = vunpack.c.l.b16 %v3058
  %v3187 = vunpack.c.l.b16 %v3059
  %v3188 = vunpack.c.l.b16 %v3060
  %v3189 = vunpack.c.l.b16 %v3061
  %v3190 = vunpack.c.l.b16 %v3062
  %v3191 = vunpack.c.l.b16 %v3063
  %v3192 = vunpack.c.l.b16 %v3064
  %v3193 = vunpack.c.l.b16 %v3065
  %v3194 = vunpack.c.l.b16 %v3066
  %v3195 = vunpack.c.l.b16 %v3067
  %v3196 = vunpack.c.l.b16 %v3068
  %v3197 = vunpack.c.l.b16 %v3069
  %v3198 = vunpack.c.l.b16 %v3070
  %v3199 = vunpack.c.l.b16 %v3071
  %v3200 = vunpack.c.l.b16 %v3072
  %v3201 = vunpack.c.l.b16 %v3073
  %v3202 = vunpack.c.l.b16 %v3074
  %v3203 = vunpack.c.l.b16 %v3075
  %v3204 = vunpack.c.l.b16 %v3076
  %v3205 = vunpack.c.l.b16 %v3077
  %v3206 = vunpack.c.l.b16 %v3078
  %v3207 = vunpack.c.l.b16 %v3079
  %v3208 = vunpack.c.l.b16 %v3080
  %v3209 = vunpack.c.l.b16 %v3081
  %v3210 = vunpack.c.l.b16 %v3082
  %v3211 = vunpack.c.l.b16 %v3083
  %v3212 = vunpack.c.l.b16 %v3084
  %v3213 = vunpack.c.l.b16 %v3085
  %v3214 = vunpack.c.l.b16 %v3086
  %v3215 = vunpack.c.l.b16 %v3087
  %v3216 = vunpack.c.l.b16 %v3088
  %v3217 = vunpack.c.l.b16 %v3089
  %v3218 = vunpack.c.l.b16 %v3090
  %v3219 = vunpack.c.l.b16 %v3091
  %v3220 = vunpack.c.l.b16 %v3092
  %v3221 = vunpack.c.l.b16 %v3093
  %v3222 = vunpack.c.l.b16 %v3094
  %v3223 = vunpack.c.l.b16 %v3095
  %v3224 = vunpack.c.l.b16 %v3096
  %v3225 = vunpack.c.l.b16 %v3097
  %v3226 = vunpack.c.l.b16 %v3098
  %v3227 = vunpack.c.l.b16 %v3099
  %v3228 = vunpack.c.l.b16 %v3100
  %v3229 = vpack.c.b16 %v3166, %v3165
  %v3230 = vpack.c.b16 %v3168, %v3167
  %v3231 = vpack.c.b16 %v3170, %v3169
  %v3232 = vpack.c.b16 %v3172, %v3171
  %v3233 = vpack.c.b16 %v3174, %v3173
  %v3234 = vpack.c.b16 %v3176, %v3175
  %v3235 = vpack.c.b16 %v3178, %v3177
  %v3236 = vpack.c.b16 %v3180, %v3179
  %v3237 = vpack.c.b16 %v3182, %v3181
  %v3238 = vpack.c.b16 %v3184, %v3183
  %v3239 = vpack.c.b16 %v3186, %v3185
  %v3240 = vpack.c.b16 %v3188, %v3187
  %v3241 = vpack.c.b16 %v3190, %v3189
  %v3242 = vpack.c.b16 %v3192, %v3191
  %v3243 = vpack.c.b16 %v3194, %v3193
  %v3244 = vpack.c.b16 %v3196, %v3195
  %v3245 = vpack.c.b16 %v3198, %v3197
  %v3246 = vpack.c.b16 %v3200, %v3199
  %v3247 = vpack.c.b16 %v3202, %v3201
  %v3248 = vpack.c.b16 %v3204, %v3203
  %v3249 = vpack.c.b16 %v3206, %v3205
  %v3250 = vpack.c.b16 %v3208, %v3207
  %v3251 = vpack.c.b16 %v3210, %v3209
  %v3252 = vpack.c.b16 %v3212, %v3211
  %v3253 = vpack.c.b16 %v3214, %v3213
  %v3254 = vpack.c.b16 %v3216, %v3215
  %v3255 = vpack.c.b16 %v3218, %v3217
  %v3256 = vpack.c.b16 %v3220, %v3219
  %v3257 = vpack.c.b16 %v3222, %v3221
  %v3258 = vpack.c.b16 %v3224, %v3223
  %v3259 = vpack.c.b16 %v3226, %v3225
  %v3260 = vpack.c.b16 %v3228, %v3227
  %3293 = vmatprep.subr.bf16.mxu0 0
  %3294 = vmatpush1.bf16.msra.mxu0 %v3236
  %3295 = vmatprep.subr.bf16.mxu0 0
  %3296 = vmatpush1.bf16.msra.mxu0 %v3235
  %3297 = vmatprep.subr.bf16.mxu0 0
  %3298 = vmatpush1.bf16.msra.mxu0 %v3234
  %3299 = vmatprep.subr.bf16.mxu0 0
  %3300 = vmatpush1.bf16.msra.mxu0 %v3233
  %3301 = vmatprep.subr.bf16.mxu0 0
  %3302 = vmatpush1.bf16.msra.mxu0 %v3232
  %3303 = vmatprep.subr.bf16.mxu0 0
  %3304 = vmatpush1.bf16.msra.mxu0 %v3231
  %3305 = vmatprep.subr.bf16.mxu0 0
  %3306 = vmatpush1.bf16.msra.mxu0 %v3230
  %3307 = vmatprep.subr.bf16.mxu0 0
  %3308 = vmatpush1.bf16.msra.mxu0 %v3229
  %3309 = vmatprep.subr.bf16.mxu0 0
  %3310 = vmatpush2.bf16.msra.mxu0 %v3244
  %3311 = vmatprep.subr.bf16.mxu0 0
  %3312 = vmatpush2.bf16.msra.mxu0 %v3243
  %3313 = vmatprep.subr.bf16.mxu0 0
  %3314 = vmatpush2.bf16.msra.mxu0 %v3242
  %3315 = vmatprep.subr.bf16.mxu0 0
  %3316 = vmatpush2.bf16.msra.mxu0 %v3241
  %3317 = vmatprep.subr.bf16.mxu0 0
  %3318 = vmatpush2.bf16.msra.mxu0 %v3240
  %3319 = vmatprep.subr.bf16.mxu0 0
  %3320 = vmatpush2.bf16.msra.mxu0 %v3239
  %3321 = vmatprep.subr.bf16.mxu0 0
  %3322 = vmatpush2.bf16.msra.mxu0 %v3238
  %3323 = vmatprep.subr.bf16.mxu0 0
  %3324 = vmatpush2.bf16.msra.mxu0 %v3237
  %3325 = vmatprep.mubr.bf16.mxu0 %v272
  %3326 = vmatmul.mubr.bf16.gmra.mxu0 %v271
  %v3327 = vpop.f32.mrf.mxu0
  %v3328 = vadd.f32 0.0, %v3327
  %v3329 = vpop.f32.mrf.mxu0
  %v3330 = vpop.f32.mrf.mxu0
  %v3331 = vpop.f32.mrf.mxu0
  %3332 = vdwg.mxu0
  %3333 = vmatprep.subr.bf16.mxu0 0
  %3334 = vmatpush1.bf16.msra.mxu0 %v3252
  %3335 = vmatprep.subr.bf16.mxu0 0
  %3336 = vmatpush1.bf16.msra.mxu0 %v3251
  %3337 = vmatprep.subr.bf16.mxu0 0
  %3338 = vmatpush1.bf16.msra.mxu0 %v3250
  %3339 = vmatprep.subr.bf16.mxu0 0
  %3340 = vmatpush1.bf16.msra.mxu0 %v3249
  %3341 = vmatprep.subr.bf16.mxu0 0
  %3342 = vmatpush1.bf16.msra.mxu0 %v3248
  %3343 = vmatprep.subr.bf16.mxu0 0
  %3344 = vmatpush1.bf16.msra.mxu0 %v3247
  %3345 = vmatprep.subr.bf16.mxu0 0
  %3346 = vmatpush1.bf16.msra.mxu0 %v3246
  %3347 = vmatprep.subr.bf16.mxu0 0
  %3348 = vmatpush1.bf16.msra.mxu0 %v3245
  %3349 = vmatprep.subr.bf16.mxu0 0
  %3350 = vmatpush2.bf16.msra.mxu0 %v3260
  %3351 = vmatprep.subr.bf16.mxu0 0
  %3352 = vmatpush2.bf16.msra.mxu0 %v3259
  %3353 = vmatprep.subr.bf16.mxu0 0
  %3354 = vmatpush2.bf16.msra.mxu0 %v3258
  %3355 = vmatprep.subr.bf16.mxu0 0
  %3356 = vmatpush2.bf16.msra.mxu0 %v3257
  %3357 = vmatprep.subr.bf16.mxu0 0
  %3358 = vmatpush2.bf16.msra.mxu0 %v3256
  %3359 = vmatprep.subr.bf16.mxu0 0
  %3360 = vmatpush2.bf16.msra.mxu0 %v3255
  %3361 = vmatprep.subr.bf16.mxu0 0
  %3362 = vmatpush2.bf16.msra.mxu0 %v3254
  %3363 = vmatprep.subr.bf16.mxu0 0
  %3364 = vmatpush2.bf16.msra.mxu0 %v3253
  %3365 = vmatprep.mubr.bf16.mxu0 %v274
  %3366 = vmatmul.mubr.bf16.gmra.mxu0 %v273
  %v3367 = vpop.f32.mrf.mxu0
  %v3368 = vadd.f32 %v3328, %v3367
  %v3369 = vpop.f32.mrf.mxu0
  %v3370 = vpop.f32.mrf.mxu0
  %v3371 = vpop.f32.mrf.mxu0
  %3372 = vdwg.mxu0
  %v3373 = vpack.c.bf16 %v3368, %v3368
  %s3374 = scalar_lea.vmem %s4, 56
  %v3375 = vld [vmem:[%s3374] sm:$0xf]
  %v3376 = vld [vmem:[%s3374 + $0x4] sm:$0xf]
  %v3379 = vunpack.c.l.b16 %v3375
  %v3380 = vunpack.c.l.b16 %v3376
  %v3381 = vpack.c.b16 %v3380, %v3379
  %v3383 = vsel %vm960, %v3381, 0
  %v3386 = vsel %vm964, %v3373, 0
  %3388 = vmatprep.subr.bf16.mxu0 0
  %3389 = vmatpush1.bf16.msra.mxu0 0
  %3390 = vmatprep.subr.bf16.mxu0 0
  %3391 = vmatpush1.bf16.msra.mxu0 0
  %3392 = vmatprep.subr.bf16.mxu0 0
  %3393 = vmatpush1.bf16.msra.mxu0 0
  %3394 = vmatprep.subr.bf16.mxu0 0
  %3395 = vmatpush1.bf16.msra.mxu0 0
  %3396 = vmatprep.subr.bf16.mxu0 0
  %3397 = vmatpush1.bf16.msra.mxu0 0
  %3398 = vmatprep.subr.bf16.mxu0 0
  %3399 = vmatpush1.bf16.msra.mxu0 0
  %3400 = vmatprep.subr.bf16.mxu0 0
  %3401 = vmatpush1.bf16.msra.mxu0 0
  %3402 = vmatprep.subr.bf16.mxu0 0
  %3403 = vmatpush1.bf16.msra.mxu0 %v3386
  %3404 = vmatprep.subr.bf16.mxu0 0
  %3405 = vmatpush2.bf16.msra.mxu0 0
  %3406 = vmatprep.subr.bf16.mxu0 0
  %3407 = vmatpush2.bf16.msra.mxu0 0
  %3408 = vmatprep.subr.bf16.mxu0 0
  %3409 = vmatpush2.bf16.msra.mxu0 0
  %3410 = vmatprep.subr.bf16.mxu0 0
  %3411 = vmatpush2.bf16.msra.mxu0 0
  %3412 = vmatprep.subr.bf16.mxu0 0
  %3413 = vmatpush2.bf16.msra.mxu0 0
  %3414 = vmatprep.subr.bf16.mxu0 0
  %3415 = vmatpush2.bf16.msra.mxu0 0
  %3416 = vmatprep.subr.bf16.mxu0 0
  %3417 = vmatpush2.bf16.msra.mxu0 0
  %3418 = vmatprep.subr.bf16.mxu0 0
  %3419 = vmatpush2.bf16.msra.mxu0 0
  %3420 = vmatprep.mubr.bf16.mxu0 0
  %3421 = vmatmul.mubr.bf16.gmra.mxu0 %v3383
  %v3422 = vpop.f32.mrf.mxu0
  %v3423 = vadd.f32 0.0, %v3422
  %v3424 = vpop.f32.mrf.mxu0
  %v3425 = vpop.f32.mrf.mxu0
  %v3426 = vadd.f32 0.0, %v3425
  %v3427 = vpop.f32.mrf.mxu0
  %3428 = vdwg.mxu0
  %v3429 = vadd.f32 %v3034, %v3423
  %v3430 = vadd.f32 %v3035, %v3426
  %s3431 = scalar_lea.vmem %s5, 2048
  %v3432 = vld [vmem:[%s3431] sm:$0xf]
  %v3433 = vld [vmem:[%s3431 + $0x4] sm:$0xf]
  %v3434 = vld [vmem:[%s3431 + $0x8] sm:$0xf]
  %v3435 = vld [vmem:[%s3431 + $0xc] sm:$0xf]
  %v3436 = vld [vmem:[%s3431 + $0x10] sm:$0xf]
  %v3437 = vld [vmem:[%s3431 + $0x14] sm:$0xf]
  %v3438 = vld [vmem:[%s3431 + $0x18] sm:$0xf]
  %v3439 = vld [vmem:[%s3431 + $0x1c] sm:$0xf]
  %v3440 = vld [vmem:[%s3431 + $0x20] sm:$0xf]
  %v3441 = vld [vmem:[%s3431 + $0x24] sm:$0xf]
  %v3442 = vld [vmem:[%s3431 + $0x28] sm:$0xf]
  %v3443 = vld [vmem:[%s3431 + $0x2c] sm:$0xf]
  %v3444 = vld [vmem:[%s3431 + $0x30] sm:$0xf]
  %v3445 = vld [vmem:[%s3431 + $0x34] sm:$0xf]
  %v3446 = vld [vmem:[%s3431 + $0x38] sm:$0xf]
  %v3447 = vld [vmem:[%s3431 + $0x3c] sm:$0xf]
  %v3448 = vld [vmem:[%s3431 + $0x40] sm:$0xf]
  %v3449 = vld [vmem:[%s3431 + $0x44] sm:$0xf]
  %v3450 = vld [vmem:[%s3431 + $0x48] sm:$0xf]
  %v3451 = vld [vmem:[%s3431 + $0x4c] sm:$0xf]
  %v3452 = vld [vmem:[%s3431 + $0x50] sm:$0xf]
  %v3453 = vld [vmem:[%s3431 + $0x54] sm:$0xf]
  %v3454 = vld [vmem:[%s3431 + $0x58] sm:$0xf]
  %v3455 = vld [vmem:[%s3431 + $0x5c] sm:$0xf]
  %v3456 = vld [vmem:[%s3431 + $0x60] sm:$0xf]
  %v3457 = vld [vmem:[%s3431 + $0x64] sm:$0xf]
  %v3458 = vld [vmem:[%s3431 + $0x68] sm:$0xf]
  %v3459 = vld [vmem:[%s3431 + $0x6c] sm:$0xf]
  %v3460 = vld [vmem:[%s3431 + $0x70] sm:$0xf]
  %v3461 = vld [vmem:[%s3431 + $0x74] sm:$0xf]
  %v3462 = vld [vmem:[%s3431 + $0x78] sm:$0xf]
  %v3463 = vld [vmem:[%s3431 + $0x7c] sm:$0xf]
  %v3464 = vld [vmem:[%s3431 + $0x80] sm:$0xf]
  %v3465 = vld [vmem:[%s3431 + $0x84] sm:$0xf]
  %v3466 = vld [vmem:[%s3431 + $0x88] sm:$0xf]
  %v3467 = vld [vmem:[%s3431 + $0x8c] sm:$0xf]
  %v3468 = vld [vmem:[%s3431 + $0x90] sm:$0xf]
  %v3469 = vld [vmem:[%s3431 + $0x94] sm:$0xf]
  %v3470 = vld [vmem:[%s3431 + $0x98] sm:$0xf]
  %v3471 = vld [vmem:[%s3431 + $0x9c] sm:$0xf]
  %v3472 = vld [vmem:[%s3431 + $0xa0] sm:$0xf]
  %v3473 = vld [vmem:[%s3431 + $0xa4] sm:$0xf]
  %v3474 = vld [vmem:[%s3431 + $0xa8] sm:$0xf]
  %v3475 = vld [vmem:[%s3431 + $0xac] sm:$0xf]
  %v3476 = vld [vmem:[%s3431 + $0xb0] sm:$0xf]
  %v3477 = vld [vmem:[%s3431 + $0xb4] sm:$0xf]
  %v3478 = vld [vmem:[%s3431 + $0xb8] sm:$0xf]
  %v3479 = vld [vmem:[%s3431 + $0xbc] sm:$0xf]
  %v3480 = vld [vmem:[%s3431 + $0xc0] sm:$0xf]
  %v3481 = vld [vmem:[%s3431 + $0xc4] sm:$0xf]
  %v3482 = vld [vmem:[%s3431 + $0xc8] sm:$0xf]
  %v3483 = vld [vmem:[%s3431 + $0xcc] sm:$0xf]
  %v3484 = vld [vmem:[%s3431 + $0xd0] sm:$0xf]
  %v3485 = vld [vmem:[%s3431 + $0xd4] sm:$0xf]
  %v3486 = vld [vmem:[%s3431 + $0xd8] sm:$0xf]
  %v3487 = vld [vmem:[%s3431 + $0xdc] sm:$0xf]
  %v3488 = vld [vmem:[%s3431 + $0xe0] sm:$0xf]
  %v3489 = vld [vmem:[%s3431 + $0xe4] sm:$0xf]
  %v3490 = vld [vmem:[%s3431 + $0xe8] sm:$0xf]
  %v3491 = vld [vmem:[%s3431 + $0xec] sm:$0xf]
  %v3492 = vld [vmem:[%s3431 + $0xf0] sm:$0xf]
  %v3493 = vld [vmem:[%s3431 + $0xf4] sm:$0xf]
  %v3494 = vld [vmem:[%s3431 + $0xf8] sm:$0xf]
  %v3495 = vld [vmem:[%s3431 + $0xfc] sm:$0xf]
  %v3560 = vunpack.c.l.b16 %v3432
  %v3561 = vunpack.c.l.b16 %v3433
  %v3562 = vunpack.c.l.b16 %v3434
  %v3563 = vunpack.c.l.b16 %v3435
  %v3564 = vunpack.c.l.b16 %v3436
  %v3565 = vunpack.c.l.b16 %v3437
  %v3566 = vunpack.c.l.b16 %v3438
  %v3567 = vunpack.c.l.b16 %v3439
  %v3568 = vunpack.c.l.b16 %v3440
  %v3569 = vunpack.c.l.b16 %v3441
  %v3570 = vunpack.c.l.b16 %v3442
  %v3571 = vunpack.c.l.b16 %v3443
  %v3572 = vunpack.c.l.b16 %v3444
  %v3573 = vunpack.c.l.b16 %v3445
  %v3574 = vunpack.c.l.b16 %v3446
  %v3575 = vunpack.c.l.b16 %v3447
  %v3576 = vunpack.c.l.b16 %v3448
  %v3577 = vunpack.c.l.b16 %v3449
  %v3578 = vunpack.c.l.b16 %v3450
  %v3579 = vunpack.c.l.b16 %v3451
  %v3580 = vunpack.c.l.b16 %v3452
  %v3581 = vunpack.c.l.b16 %v3453
  %v3582 = vunpack.c.l.b16 %v3454
  %v3583 = vunpack.c.l.b16 %v3455
  %v3584 = vunpack.c.l.b16 %v3456
  %v3585 = vunpack.c.l.b16 %v3457
  %v3586 = vunpack.c.l.b16 %v3458
  %v3587 = vunpack.c.l.b16 %v3459
  %v3588 = vunpack.c.l.b16 %v3460
  %v3589 = vunpack.c.l.b16 %v3461
  %v3590 = vunpack.c.l.b16 %v3462
  %v3591 = vunpack.c.l.b16 %v3463
  %v3592 = vunpack.c.l.b16 %v3464
  %v3593 = vunpack.c.l.b16 %v3465
  %v3594 = vunpack.c.l.b16 %v3466
  %v3595 = vunpack.c.l.b16 %v3467
  %v3596 = vunpack.c.l.b16 %v3468
  %v3597 = vunpack.c.l.b16 %v3469
  %v3598 = vunpack.c.l.b16 %v3470
  %v3599 = vunpack.c.l.b16 %v3471
  %v3600 = vunpack.c.l.b16 %v3472
  %v3601 = vunpack.c.l.b16 %v3473
  %v3602 = vunpack.c.l.b16 %v3474
  %v3603 = vunpack.c.l.b16 %v3475
  %v3604 = vunpack.c.l.b16 %v3476
  %v3605 = vunpack.c.l.b16 %v3477
  %v3606 = vunpack.c.l.b16 %v3478
  %v3607 = vunpack.c.l.b16 %v3479
  %v3608 = vunpack.c.l.b16 %v3480
  %v3609 = vunpack.c.l.b16 %v3481
  %v3610 = vunpack.c.l.b16 %v3482
  %v3611 = vunpack.c.l.b16 %v3483
  %v3612 = vunpack.c.l.b16 %v3484
  %v3613 = vunpack.c.l.b16 %v3485
  %v3614 = vunpack.c.l.b16 %v3486
  %v3615 = vunpack.c.l.b16 %v3487
  %v3616 = vunpack.c.l.b16 %v3488
  %v3617 = vunpack.c.l.b16 %v3489
  %v3618 = vunpack.c.l.b16 %v3490
  %v3619 = vunpack.c.l.b16 %v3491
  %v3620 = vunpack.c.l.b16 %v3492
  %v3621 = vunpack.c.l.b16 %v3493
  %v3622 = vunpack.c.l.b16 %v3494
  %v3623 = vunpack.c.l.b16 %v3495
  %v3624 = vpack.c.b16 %v3561, %v3560
  %v3625 = vpack.c.b16 %v3563, %v3562
  %v3626 = vpack.c.b16 %v3565, %v3564
  %v3627 = vpack.c.b16 %v3567, %v3566
  %v3628 = vpack.c.b16 %v3569, %v3568
  %v3629 = vpack.c.b16 %v3571, %v3570
  %v3630 = vpack.c.b16 %v3573, %v3572
  %v3631 = vpack.c.b16 %v3575, %v3574
  %v3632 = vpack.c.b16 %v3577, %v3576
  %v3633 = vpack.c.b16 %v3579, %v3578
  %v3634 = vpack.c.b16 %v3581, %v3580
  %v3635 = vpack.c.b16 %v3583, %v3582
  %v3636 = vpack.c.b16 %v3585, %v3584
  %v3637 = vpack.c.b16 %v3587, %v3586
  %v3638 = vpack.c.b16 %v3589, %v3588
  %v3639 = vpack.c.b16 %v3591, %v3590
  %v3640 = vpack.c.b16 %v3593, %v3592
  %v3641 = vpack.c.b16 %v3595, %v3594
  %v3642 = vpack.c.b16 %v3597, %v3596
  %v3643 = vpack.c.b16 %v3599, %v3598
  %v3644 = vpack.c.b16 %v3601, %v3600
  %v3645 = vpack.c.b16 %v3603, %v3602
  %v3646 = vpack.c.b16 %v3605, %v3604
  %v3647 = vpack.c.b16 %v3607, %v3606
  %v3648 = vpack.c.b16 %v3609, %v3608
  %v3649 = vpack.c.b16 %v3611, %v3610
  %v3650 = vpack.c.b16 %v3613, %v3612
  %v3651 = vpack.c.b16 %v3615, %v3614
  %v3652 = vpack.c.b16 %v3617, %v3616
  %v3653 = vpack.c.b16 %v3619, %v3618
  %v3654 = vpack.c.b16 %v3621, %v3620
  %v3655 = vpack.c.b16 %v3623, %v3622
  %3688 = vmatprep.subr.bf16.mxu0 0
  %3689 = vmatpush1.bf16.msra.mxu0 %v3631
  %3690 = vmatprep.subr.bf16.mxu0 0
  %3691 = vmatpush1.bf16.msra.mxu0 %v3630
  %3692 = vmatprep.subr.bf16.mxu0 0
  %3693 = vmatpush1.bf16.msra.mxu0 %v3629
  %3694 = vmatprep.subr.bf16.mxu0 0
  %3695 = vmatpush1.bf16.msra.mxu0 %v3628
  %3696 = vmatprep.subr.bf16.mxu0 0
  %3697 = vmatpush1.bf16.msra.mxu0 %v3627
  %3698 = vmatprep.subr.bf16.mxu0 0
  %3699 = vmatpush1.bf16.msra.mxu0 %v3626
  %3700 = vmatprep.subr.bf16.mxu0 0
  %3701 = vmatpush1.bf16.msra.mxu0 %v3625
  %3702 = vmatprep.subr.bf16.mxu0 0
  %3703 = vmatpush1.bf16.msra.mxu0 %v3624
  %3704 = vmatprep.subr.bf16.mxu0 0
  %3705 = vmatpush2.bf16.msra.mxu0 %v3639
  %3706 = vmatprep.subr.bf16.mxu0 0
  %3707 = vmatpush2.bf16.msra.mxu0 %v3638
  %3708 = vmatprep.subr.bf16.mxu0 0
  %3709 = vmatpush2.bf16.msra.mxu0 %v3637
  %3710 = vmatprep.subr.bf16.mxu0 0
  %3711 = vmatpush2.bf16.msra.mxu0 %v3636
  %3712 = vmatprep.subr.bf16.mxu0 0
  %3713 = vmatpush2.bf16.msra.mxu0 %v3635
  %3714 = vmatprep.subr.bf16.mxu0 0
  %3715 = vmatpush2.bf16.msra.mxu0 %v3634
  %3716 = vmatprep.subr.bf16.mxu0 0
  %3717 = vmatpush2.bf16.msra.mxu0 %v3633
  %3718 = vmatprep.subr.bf16.mxu0 0
  %3719 = vmatpush2.bf16.msra.mxu0 %v3632
  %3720 = vmatprep.mubr.bf16.mxu0 %v272
  %3721 = vmatmul.mubr.bf16.gmra.mxu0 %v271
  %v3722 = vpop.f32.mrf.mxu0
  %v3723 = vadd.f32 0.0, %v3722
  %v3724 = vpop.f32.mrf.mxu0
  %v3725 = vpop.f32.mrf.mxu0
  %v3726 = vpop.f32.mrf.mxu0
  %3727 = vdwg.mxu0
  %3728 = vmatprep.subr.bf16.mxu0 0
  %3729 = vmatpush1.bf16.msra.mxu0 %v3647
  %3730 = vmatprep.subr.bf16.mxu0 0
  %3731 = vmatpush1.bf16.msra.mxu0 %v3646
  %3732 = vmatprep.subr.bf16.mxu0 0
  %3733 = vmatpush1.bf16.msra.mxu0 %v3645
  %3734 = vmatprep.subr.bf16.mxu0 0
  %3735 = vmatpush1.bf16.msra.mxu0 %v3644
  %3736 = vmatprep.subr.bf16.mxu0 0
  %3737 = vmatpush1.bf16.msra.mxu0 %v3643
  %3738 = vmatprep.subr.bf16.mxu0 0
  %3739 = vmatpush1.bf16.msra.mxu0 %v3642
  %3740 = vmatprep.subr.bf16.mxu0 0
  %3741 = vmatpush1.bf16.msra.mxu0 %v3641
  %3742 = vmatprep.subr.bf16.mxu0 0
  %3743 = vmatpush1.bf16.msra.mxu0 %v3640
  %3744 = vmatprep.subr.bf16.mxu0 0
  %3745 = vmatpush2.bf16.msra.mxu0 %v3655
  %3746 = vmatprep.subr.bf16.mxu0 0
  %3747 = vmatpush2.bf16.msra.mxu0 %v3654
  %3748 = vmatprep.subr.bf16.mxu0 0
  %3749 = vmatpush2.bf16.msra.mxu0 %v3653
  %3750 = vmatprep.subr.bf16.mxu0 0
  %3751 = vmatpush2.bf16.msra.mxu0 %v3652
  %3752 = vmatprep.subr.bf16.mxu0 0
  %3753 = vmatpush2.bf16.msra.mxu0 %v3651
  %3754 = vmatprep.subr.bf16.mxu0 0
  %3755 = vmatpush2.bf16.msra.mxu0 %v3650
  %3756 = vmatprep.subr.bf16.mxu0 0
  %3757 = vmatpush2.bf16.msra.mxu0 %v3649
  %3758 = vmatprep.subr.bf16.mxu0 0
  %3759 = vmatpush2.bf16.msra.mxu0 %v3648
  %3760 = vmatprep.mubr.bf16.mxu0 %v274
  %3761 = vmatmul.mubr.bf16.gmra.mxu0 %v273
  %v3762 = vpop.f32.mrf.mxu0
  %v3763 = vadd.f32 %v3723, %v3762
  %v3764 = vpop.f32.mrf.mxu0
  %v3765 = vpop.f32.mrf.mxu0
  %v3766 = vpop.f32.mrf.mxu0
  %3767 = vdwg.mxu0
  %v3768 = vpack.c.bf16 %v3763, %v3763
  %s3769 = scalar_lea.vmem %s4, 64
  %v3770 = vld [vmem:[%s3769] sm:$0xf]
  %v3771 = vld [vmem:[%s3769 + $0x4] sm:$0xf]
  %v3774 = vunpack.c.l.b16 %v3770
  %v3775 = vunpack.c.l.b16 %v3771
  %v3776 = vpack.c.b16 %v3775, %v3774
  %v3778 = vsel %vm960, %v3776, 0
  %v3781 = vsel %vm964, %v3768, 0
  %3783 = vmatprep.subr.bf16.mxu0 0
  %3784 = vmatpush1.bf16.msra.mxu0 0
  %3785 = vmatprep.subr.bf16.mxu0 0
  %3786 = vmatpush1.bf16.msra.mxu0 0
  %3787 = vmatprep.subr.bf16.mxu0 0
  %3788 = vmatpush1.bf16.msra.mxu0 0
  %3789 = vmatprep.subr.bf16.mxu0 0
  %3790 = vmatpush1.bf16.msra.mxu0 0
  %3791 = vmatprep.subr.bf16.mxu0 0
  %3792 = vmatpush1.bf16.msra.mxu0 0
  %3793 = vmatprep.subr.bf16.mxu0 0
  %3794 = vmatpush1.bf16.msra.mxu0 0
  %3795 = vmatprep.subr.bf16.mxu0 0
  %3796 = vmatpush1.bf16.msra.mxu0 0
  %3797 = vmatprep.subr.bf16.mxu0 0
  %3798 = vmatpush1.bf16.msra.mxu0 %v3781
  %3799 = vmatprep.subr.bf16.mxu0 0
  %3800 = vmatpush2.bf16.msra.mxu0 0
  %3801 = vmatprep.subr.bf16.mxu0 0
  %3802 = vmatpush2.bf16.msra.mxu0 0
  %3803 = vmatprep.subr.bf16.mxu0 0
  %3804 = vmatpush2.bf16.msra.mxu0 0
  %3805 = vmatprep.subr.bf16.mxu0 0
  %3806 = vmatpush2.bf16.msra.mxu0 0
  %3807 = vmatprep.subr.bf16.mxu0 0
  %3808 = vmatpush2.bf16.msra.mxu0 0
  %3809 = vmatprep.subr.bf16.mxu0 0
  %3810 = vmatpush2.bf16.msra.mxu0 0
  %3811 = vmatprep.subr.bf16.mxu0 0
  %3812 = vmatpush2.bf16.msra.mxu0 0
  %3813 = vmatprep.subr.bf16.mxu0 0
  %3814 = vmatpush2.bf16.msra.mxu0 0
  %3815 = vmatprep.mubr.bf16.mxu0 0
  %3816 = vmatmul.mubr.bf16.gmra.mxu0 %v3778
  %v3817 = vpop.f32.mrf.mxu0
  %v3818 = vadd.f32 0.0, %v3817
  %v3819 = vpop.f32.mrf.mxu0
  %v3820 = vpop.f32.mrf.mxu0
  %v3821 = vadd.f32 0.0, %v3820
  %v3822 = vpop.f32.mrf.mxu0
  %3823 = vdwg.mxu0
  %v3824 = vadd.f32 %v3429, %v3818
  %v3825 = vadd.f32 %v3430, %v3821
  %s3826 = scalar_lea.vmem %s5, 2304
  %v3827 = vld [vmem:[%s3826] sm:$0xf]
  %v3828 = vld [vmem:[%s3826 + $0x4] sm:$0xf]
  %v3829 = vld [vmem:[%s3826 + $0x8] sm:$0xf]
  %v3830 = vld [vmem:[%s3826 + $0xc] sm:$0xf]
  %v3831 = vld [vmem:[%s3826 + $0x10] sm:$0xf]
  %v3832 = vld [vmem:[%s3826 + $0x14] sm:$0xf]
  %v3833 = vld [vmem:[%s3826 + $0x18] sm:$0xf]
  %v3834 = vld [vmem:[%s3826 + $0x1c] sm:$0xf]
  %v3835 = vld [vmem:[%s3826 + $0x20] sm:$0xf]
  %v3836 = vld [vmem:[%s3826 + $0x24] sm:$0xf]
  %v3837 = vld [vmem:[%s3826 + $0x28] sm:$0xf]
  %v3838 = vld [vmem:[%s3826 + $0x2c] sm:$0xf]
  %v3839 = vld [vmem:[%s3826 + $0x30] sm:$0xf]
  %v3840 = vld [vmem:[%s3826 + $0x34] sm:$0xf]
  %v3841 = vld [vmem:[%s3826 + $0x38] sm:$0xf]
  %v3842 = vld [vmem:[%s3826 + $0x3c] sm:$0xf]
  %v3843 = vld [vmem:[%s3826 + $0x40] sm:$0xf]
  %v3844 = vld [vmem:[%s3826 + $0x44] sm:$0xf]
  %v3845 = vld [vmem:[%s3826 + $0x48] sm:$0xf]
  %v3846 = vld [vmem:[%s3826 + $0x4c] sm:$0xf]
  %v3847 = vld [vmem:[%s3826 + $0x50] sm:$0xf]
  %v3848 = vld [vmem:[%s3826 + $0x54] sm:$0xf]
  %v3849 = vld [vmem:[%s3826 + $0x58] sm:$0xf]
  %v3850 = vld [vmem:[%s3826 + $0x5c] sm:$0xf]
  %v3851 = vld [vmem:[%s3826 + $0x60] sm:$0xf]
  %v3852 = vld [vmem:[%s3826 + $0x64] sm:$0xf]
  %v3853 = vld [vmem:[%s3826 + $0x68] sm:$0xf]
  %v3854 = vld [vmem:[%s3826 + $0x6c] sm:$0xf]
  %v3855 = vld [vmem:[%s3826 + $0x70] sm:$0xf]
  %v3856 = vld [vmem:[%s3826 + $0x74] sm:$0xf]
  %v3857 = vld [vmem:[%s3826 + $0x78] sm:$0xf]
  %v3858 = vld [vmem:[%s3826 + $0x7c] sm:$0xf]
  %v3859 = vld [vmem:[%s3826 + $0x80] sm:$0xf]
  %v3860 = vld [vmem:[%s3826 + $0x84] sm:$0xf]
  %v3861 = vld [vmem:[%s3826 + $0x88] sm:$0xf]
  %v3862 = vld [vmem:[%s3826 + $0x8c] sm:$0xf]
  %v3863 = vld [vmem:[%s3826 + $0x90] sm:$0xf]
  %v3864 = vld [vmem:[%s3826 + $0x94] sm:$0xf]
  %v3865 = vld [vmem:[%s3826 + $0x98] sm:$0xf]
  %v3866 = vld [vmem:[%s3826 + $0x9c] sm:$0xf]
  %v3867 = vld [vmem:[%s3826 + $0xa0] sm:$0xf]
  %v3868 = vld [vmem:[%s3826 + $0xa4] sm:$0xf]
  %v3869 = vld [vmem:[%s3826 + $0xa8] sm:$0xf]
  %v3870 = vld [vmem:[%s3826 + $0xac] sm:$0xf]
  %v3871 = vld [vmem:[%s3826 + $0xb0] sm:$0xf]
  %v3872 = vld [vmem:[%s3826 + $0xb4] sm:$0xf]
  %v3873 = vld [vmem:[%s3826 + $0xb8] sm:$0xf]
  %v3874 = vld [vmem:[%s3826 + $0xbc] sm:$0xf]
  %v3875 = vld [vmem:[%s3826 + $0xc0] sm:$0xf]
  %v3876 = vld [vmem:[%s3826 + $0xc4] sm:$0xf]
  %v3877 = vld [vmem:[%s3826 + $0xc8] sm:$0xf]
  %v3878 = vld [vmem:[%s3826 + $0xcc] sm:$0xf]
  %v3879 = vld [vmem:[%s3826 + $0xd0] sm:$0xf]
  %v3880 = vld [vmem:[%s3826 + $0xd4] sm:$0xf]
  %v3881 = vld [vmem:[%s3826 + $0xd8] sm:$0xf]
  %v3882 = vld [vmem:[%s3826 + $0xdc] sm:$0xf]
  %v3883 = vld [vmem:[%s3826 + $0xe0] sm:$0xf]
  %v3884 = vld [vmem:[%s3826 + $0xe4] sm:$0xf]
  %v3885 = vld [vmem:[%s3826 + $0xe8] sm:$0xf]
  %v3886 = vld [vmem:[%s3826 + $0xec] sm:$0xf]
  %v3887 = vld [vmem:[%s3826 + $0xf0] sm:$0xf]
  %v3888 = vld [vmem:[%s3826 + $0xf4] sm:$0xf]
  %v3889 = vld [vmem:[%s3826 + $0xf8] sm:$0xf]
  %v3890 = vld [vmem:[%s3826 + $0xfc] sm:$0xf]
  %v3955 = vunpack.c.l.b16 %v3827
  %v3956 = vunpack.c.l.b16 %v3828
  %v3957 = vunpack.c.l.b16 %v3829
  %v3958 = vunpack.c.l.b16 %v3830
  %v3959 = vunpack.c.l.b16 %v3831
  %v3960 = vunpack.c.l.b16 %v3832
  %v3961 = vunpack.c.l.b16 %v3833
  %v3962 = vunpack.c.l.b16 %v3834
  %v3963 = vunpack.c.l.b16 %v3835
  %v3964 = vunpack.c.l.b16 %v3836
  %v3965 = vunpack.c.l.b16 %v3837
  %v3966 = vunpack.c.l.b16 %v3838
  %v3967 = vunpack.c.l.b16 %v3839
  %v3968 = vunpack.c.l.b16 %v3840
  %v3969 = vunpack.c.l.b16 %v3841
  %v3970 = vunpack.c.l.b16 %v3842
  %v3971 = vunpack.c.l.b16 %v3843
  %v3972 = vunpack.c.l.b16 %v3844
  %v3973 = vunpack.c.l.b16 %v3845
  %v3974 = vunpack.c.l.b16 %v3846
  %v3975 = vunpack.c.l.b16 %v3847
  %v3976 = vunpack.c.l.b16 %v3848
  %v3977 = vunpack.c.l.b16 %v3849
  %v3978 = vunpack.c.l.b16 %v3850
  %v3979 = vunpack.c.l.b16 %v3851
  %v3980 = vunpack.c.l.b16 %v3852
  %v3981 = vunpack.c.l.b16 %v3853
  %v3982 = vunpack.c.l.b16 %v3854
  %v3983 = vunpack.c.l.b16 %v3855
  %v3984 = vunpack.c.l.b16 %v3856
  %v3985 = vunpack.c.l.b16 %v3857
  %v3986 = vunpack.c.l.b16 %v3858
  %v3987 = vunpack.c.l.b16 %v3859
  %v3988 = vunpack.c.l.b16 %v3860
  %v3989 = vunpack.c.l.b16 %v3861
  %v3990 = vunpack.c.l.b16 %v3862
  %v3991 = vunpack.c.l.b16 %v3863
  %v3992 = vunpack.c.l.b16 %v3864
  %v3993 = vunpack.c.l.b16 %v3865
  %v3994 = vunpack.c.l.b16 %v3866
  %v3995 = vunpack.c.l.b16 %v3867
  %v3996 = vunpack.c.l.b16 %v3868
  %v3997 = vunpack.c.l.b16 %v3869
  %v3998 = vunpack.c.l.b16 %v3870
  %v3999 = vunpack.c.l.b16 %v3871
  %v4000 = vunpack.c.l.b16 %v3872
  %v4001 = vunpack.c.l.b16 %v3873
  %v4002 = vunpack.c.l.b16 %v3874
  %v4003 = vunpack.c.l.b16 %v3875
  %v4004 = vunpack.c.l.b16 %v3876
  %v4005 = vunpack.c.l.b16 %v3877
  %v4006 = vunpack.c.l.b16 %v3878
  %v4007 = vunpack.c.l.b16 %v3879
  %v4008 = vunpack.c.l.b16 %v3880
  %v4009 = vunpack.c.l.b16 %v3881
  %v4010 = vunpack.c.l.b16 %v3882
  %v4011 = vunpack.c.l.b16 %v3883
  %v4012 = vunpack.c.l.b16 %v3884
  %v4013 = vunpack.c.l.b16 %v3885
  %v4014 = vunpack.c.l.b16 %v3886
  %v4015 = vunpack.c.l.b16 %v3887
  %v4016 = vunpack.c.l.b16 %v3888
  %v4017 = vunpack.c.l.b16 %v3889
  %v4018 = vunpack.c.l.b16 %v3890
  %v4019 = vpack.c.b16 %v3956, %v3955
  %v4020 = vpack.c.b16 %v3958, %v3957
  %v4021 = vpack.c.b16 %v3960, %v3959
  %v4022 = vpack.c.b16 %v3962, %v3961
  %v4023 = vpack.c.b16 %v3964, %v3963
  %v4024 = vpack.c.b16 %v3966, %v3965
  %v4025 = vpack.c.b16 %v3968, %v3967
  %v4026 = vpack.c.b16 %v3970, %v3969
  %v4027 = vpack.c.b16 %v3972, %v3971
  %v4028 = vpack.c.b16 %v3974, %v3973
  %v4029 = vpack.c.b16 %v3976, %v3975
  %v4030 = vpack.c.b16 %v3978, %v3977
  %v4031 = vpack.c.b16 %v3980, %v3979
  %v4032 = vpack.c.b16 %v3982, %v3981
  %v4033 = vpack.c.b16 %v3984, %v3983
  %v4034 = vpack.c.b16 %v3986, %v3985
  %v4035 = vpack.c.b16 %v3988, %v3987
  %v4036 = vpack.c.b16 %v3990, %v3989
  %v4037 = vpack.c.b16 %v3992, %v3991
  %v4038 = vpack.c.b16 %v3994, %v3993
  %v4039 = vpack.c.b16 %v3996, %v3995
  %v4040 = vpack.c.b16 %v3998, %v3997
  %v4041 = vpack.c.b16 %v4000, %v3999
  %v4042 = vpack.c.b16 %v4002, %v4001
  %v4043 = vpack.c.b16 %v4004, %v4003
  %v4044 = vpack.c.b16 %v4006, %v4005
  %v4045 = vpack.c.b16 %v4008, %v4007
  %v4046 = vpack.c.b16 %v4010, %v4009
  %v4047 = vpack.c.b16 %v4012, %v4011
  %v4048 = vpack.c.b16 %v4014, %v4013
  %v4049 = vpack.c.b16 %v4016, %v4015
  %v4050 = vpack.c.b16 %v4018, %v4017
  %4083 = vmatprep.subr.bf16.mxu0 0
  %4084 = vmatpush1.bf16.msra.mxu0 %v4026
  %4085 = vmatprep.subr.bf16.mxu0 0
  %4086 = vmatpush1.bf16.msra.mxu0 %v4025
  %4087 = vmatprep.subr.bf16.mxu0 0
  %4088 = vmatpush1.bf16.msra.mxu0 %v4024
  %4089 = vmatprep.subr.bf16.mxu0 0
  %4090 = vmatpush1.bf16.msra.mxu0 %v4023
  %4091 = vmatprep.subr.bf16.mxu0 0
  %4092 = vmatpush1.bf16.msra.mxu0 %v4022
  %4093 = vmatprep.subr.bf16.mxu0 0
  %4094 = vmatpush1.bf16.msra.mxu0 %v4021
  %4095 = vmatprep.subr.bf16.mxu0 0
  %4096 = vmatpush1.bf16.msra.mxu0 %v4020
  %4097 = vmatprep.subr.bf16.mxu0 0
  %4098 = vmatpush1.bf16.msra.mxu0 %v4019
  %4099 = vmatprep.subr.bf16.mxu0 0
  %4100 = vmatpush2.bf16.msra.mxu0 %v4034
  %4101 = vmatprep.subr.bf16.mxu0 0
  %4102 = vmatpush2.bf16.msra.mxu0 %v4033
  %4103 = vmatprep.subr.bf16.mxu0 0
  %4104 = vmatpush2.bf16.msra.mxu0 %v4032
  %4105 = vmatprep.subr.bf16.mxu0 0
  %4106 = vmatpush2.bf16.msra.mxu0 %v4031
  %4107 = vmatprep.subr.bf16.mxu0 0
  %4108 = vmatpush2.bf16.msra.mxu0 %v4030
  %4109 = vmatprep.subr.bf16.mxu0 0
  %4110 = vmatpush2.bf16.msra.mxu0 %v4029
  %4111 = vmatprep.subr.bf16.mxu0 0
  %4112 = vmatpush2.bf16.msra.mxu0 %v4028
  %4113 = vmatprep.subr.bf16.mxu0 0
  %4114 = vmatpush2.bf16.msra.mxu0 %v4027
  %4115 = vmatprep.mubr.bf16.mxu0 %v272
  %4116 = vmatmul.mubr.bf16.gmra.mxu0 %v271
  %v4117 = vpop.f32.mrf.mxu0
  %v4118 = vadd.f32 0.0, %v4117
  %v4119 = vpop.f32.mrf.mxu0
  %v4120 = vpop.f32.mrf.mxu0
  %v4121 = vpop.f32.mrf.mxu0
  %4122 = vdwg.mxu0
  %4123 = vmatprep.subr.bf16.mxu0 0
  %4124 = vmatpush1.bf16.msra.mxu0 %v4042
  %4125 = vmatprep.subr.bf16.mxu0 0
  %4126 = vmatpush1.bf16.msra.mxu0 %v4041
  %4127 = vmatprep.subr.bf16.mxu0 0
  %4128 = vmatpush1.bf16.msra.mxu0 %v4040
  %4129 = vmatprep.subr.bf16.mxu0 0
  %4130 = vmatpush1.bf16.msra.mxu0 %v4039
  %4131 = vmatprep.subr.bf16.mxu0 0
  %4132 = vmatpush1.bf16.msra.mxu0 %v4038
  %4133 = vmatprep.subr.bf16.mxu0 0
  %4134 = vmatpush1.bf16.msra.mxu0 %v4037
  %4135 = vmatprep.subr.bf16.mxu0 0
  %4136 = vmatpush1.bf16.msra.mxu0 %v4036
  %4137 = vmatprep.subr.bf16.mxu0 0
  %4138 = vmatpush1.bf16.msra.mxu0 %v4035
  %4139 = vmatprep.subr.bf16.mxu0 0
  %4140 = vmatpush2.bf16.msra.mxu0 %v4050
  %4141 = vmatprep.subr.bf16.mxu0 0
  %4142 = vmatpush2.bf16.msra.mxu0 %v4049
  %4143 = vmatprep.subr.bf16.mxu0 0
  %4144 = vmatpush2.bf16.msra.mxu0 %v4048
  %4145 = vmatprep.subr.bf16.mxu0 0
  %4146 = vmatpush2.bf16.msra.mxu0 %v4047
  %4147 = vmatprep.subr.bf16.mxu0 0
  %4148 = vmatpush2.bf16.msra.mxu0 %v4046
  %4149 = vmatprep.subr.bf16.mxu0 0
  %4150 = vmatpush2.bf16.msra.mxu0 %v4045
  %4151 = vmatprep.subr.bf16.mxu0 0
  %4152 = vmatpush2.bf16.msra.mxu0 %v4044
  %4153 = vmatprep.subr.bf16.mxu0 0
  %4154 = vmatpush2.bf16.msra.mxu0 %v4043
  %4155 = vmatprep.mubr.bf16.mxu0 %v274
  %4156 = vmatmul.mubr.bf16.gmra.mxu0 %v273
  %v4157 = vpop.f32.mrf.mxu0
  %v4158 = vadd.f32 %v4118, %v4157
  %v4159 = vpop.f32.mrf.mxu0
  %v4160 = vpop.f32.mrf.mxu0
  %v4161 = vpop.f32.mrf.mxu0
  %4162 = vdwg.mxu0
  %v4163 = vpack.c.bf16 %v4158, %v4158
  %s4164 = scalar_lea.vmem %s4, 72
  %v4165 = vld [vmem:[%s4164] sm:$0xf]
  %v4166 = vld [vmem:[%s4164 + $0x4] sm:$0xf]
  %v4169 = vunpack.c.l.b16 %v4165
  %v4170 = vunpack.c.l.b16 %v4166
  %v4171 = vpack.c.b16 %v4170, %v4169
  %v4173 = vsel %vm960, %v4171, 0
  %v4176 = vsel %vm964, %v4163, 0
  %4178 = vmatprep.subr.bf16.mxu0 0
  %4179 = vmatpush1.bf16.msra.mxu0 0
  %4180 = vmatprep.subr.bf16.mxu0 0
  %4181 = vmatpush1.bf16.msra.mxu0 0
  %4182 = vmatprep.subr.bf16.mxu0 0
  %4183 = vmatpush1.bf16.msra.mxu0 0
  %4184 = vmatprep.subr.bf16.mxu0 0
  %4185 = vmatpush1.bf16.msra.mxu0 0
  %4186 = vmatprep.subr.bf16.mxu0 0
  %4187 = vmatpush1.bf16.msra.mxu0 0
  %4188 = vmatprep.subr.bf16.mxu0 0
  %4189 = vmatpush1.bf16.msra.mxu0 0
  %4190 = vmatprep.subr.bf16.mxu0 0
  %4191 = vmatpush1.bf16.msra.mxu0 0
  %4192 = vmatprep.subr.bf16.mxu0 0
  %4193 = vmatpush1.bf16.msra.mxu0 %v4176
  %4194 = vmatprep.subr.bf16.mxu0 0
  %4195 = vmatpush2.bf16.msra.mxu0 0
  %4196 = vmatprep.subr.bf16.mxu0 0
  %4197 = vmatpush2.bf16.msra.mxu0 0
  %4198 = vmatprep.subr.bf16.mxu0 0
  %4199 = vmatpush2.bf16.msra.mxu0 0
  %4200 = vmatprep.subr.bf16.mxu0 0
  %4201 = vmatpush2.bf16.msra.mxu0 0
  %4202 = vmatprep.subr.bf16.mxu0 0
  %4203 = vmatpush2.bf16.msra.mxu0 0
  %4204 = vmatprep.subr.bf16.mxu0 0
  %4205 = vmatpush2.bf16.msra.mxu0 0
  %4206 = vmatprep.subr.bf16.mxu0 0
  %4207 = vmatpush2.bf16.msra.mxu0 0
  %4208 = vmatprep.subr.bf16.mxu0 0
  %4209 = vmatpush2.bf16.msra.mxu0 0
  %4210 = vmatprep.mubr.bf16.mxu0 0
  %4211 = vmatmul.mubr.bf16.gmra.mxu0 %v4173
  %v4212 = vpop.f32.mrf.mxu0
  %v4213 = vadd.f32 0.0, %v4212
  %v4214 = vpop.f32.mrf.mxu0
  %v4215 = vpop.f32.mrf.mxu0
  %v4216 = vadd.f32 0.0, %v4215
  %v4217 = vpop.f32.mrf.mxu0
  %4218 = vdwg.mxu0
  %v4219 = vadd.f32 %v3824, %v4213
  %v4220 = vadd.f32 %v3825, %v4216
  %s4221 = scalar_lea.vmem %s5, 2560
  %v4222 = vld [vmem:[%s4221] sm:$0xf]
  %v4223 = vld [vmem:[%s4221 + $0x4] sm:$0xf]
  %v4224 = vld [vmem:[%s4221 + $0x8] sm:$0xf]
  %v4225 = vld [vmem:[%s4221 + $0xc] sm:$0xf]
  %v4226 = vld [vmem:[%s4221 + $0x10] sm:$0xf]
  %v4227 = vld [vmem:[%s4221 + $0x14] sm:$0xf]
  %v4228 = vld [vmem:[%s4221 + $0x18] sm:$0xf]
  %v4229 = vld [vmem:[%s4221 + $0x1c] sm:$0xf]
  %v4230 = vld [vmem:[%s4221 + $0x20] sm:$0xf]
  %v4231 = vld [vmem:[%s4221 + $0x24] sm:$0xf]
  %v4232 = vld [vmem:[%s4221 + $0x28] sm:$0xf]
  %v4233 = vld [vmem:[%s4221 + $0x2c] sm:$0xf]
  %v4234 = vld [vmem:[%s4221 + $0x30] sm:$0xf]
  %v4235 = vld [vmem:[%s4221 + $0x34] sm:$0xf]
  %v4236 = vld [vmem:[%s4221 + $0x38] sm:$0xf]
  %v4237 = vld [vmem:[%s4221 + $0x3c] sm:$0xf]
  %v4238 = vld [vmem:[%s4221 + $0x40] sm:$0xf]
  %v4239 = vld [vmem:[%s4221 + $0x44] sm:$0xf]
  %v4240 = vld [vmem:[%s4221 + $0x48] sm:$0xf]
  %v4241 = vld [vmem:[%s4221 + $0x4c] sm:$0xf]
  %v4242 = vld [vmem:[%s4221 + $0x50] sm:$0xf]
  %v4243 = vld [vmem:[%s4221 + $0x54] sm:$0xf]
  %v4244 = vld [vmem:[%s4221 + $0x58] sm:$0xf]
  %v4245 = vld [vmem:[%s4221 + $0x5c] sm:$0xf]
  %v4246 = vld [vmem:[%s4221 + $0x60] sm:$0xf]
  %v4247 = vld [vmem:[%s4221 + $0x64] sm:$0xf]
  %v4248 = vld [vmem:[%s4221 + $0x68] sm:$0xf]
  %v4249 = vld [vmem:[%s4221 + $0x6c] sm:$0xf]
  %v4250 = vld [vmem:[%s4221 + $0x70] sm:$0xf]
  %v4251 = vld [vmem:[%s4221 + $0x74] sm:$0xf]
  %v4252 = vld [vmem:[%s4221 + $0x78] sm:$0xf]
  %v4253 = vld [vmem:[%s4221 + $0x7c] sm:$0xf]
  %v4254 = vld [vmem:[%s4221 + $0x80] sm:$0xf]
  %v4255 = vld [vmem:[%s4221 + $0x84] sm:$0xf]
  %v4256 = vld [vmem:[%s4221 + $0x88] sm:$0xf]
  %v4257 = vld [vmem:[%s4221 + $0x8c] sm:$0xf]
  %v4258 = vld [vmem:[%s4221 + $0x90] sm:$0xf]
  %v4259 = vld [vmem:[%s4221 + $0x94] sm:$0xf]
  %v4260 = vld [vmem:[%s4221 + $0x98] sm:$0xf]
  %v4261 = vld [vmem:[%s4221 + $0x9c] sm:$0xf]
  %v4262 = vld [vmem:[%s4221 + $0xa0] sm:$0xf]
  %v4263 = vld [vmem:[%s4221 + $0xa4] sm:$0xf]
  %v4264 = vld [vmem:[%s4221 + $0xa8] sm:$0xf]
  %v4265 = vld [vmem:[%s4221 + $0xac] sm:$0xf]
  %v4266 = vld [vmem:[%s4221 + $0xb0] sm:$0xf]
  %v4267 = vld [vmem:[%s4221 + $0xb4] sm:$0xf]
  %v4268 = vld [vmem:[%s4221 + $0xb8] sm:$0xf]
  %v4269 = vld [vmem:[%s4221 + $0xbc] sm:$0xf]
  %v4270 = vld [vmem:[%s4221 + $0xc0] sm:$0xf]
  %v4271 = vld [vmem:[%s4221 + $0xc4] sm:$0xf]
  %v4272 = vld [vmem:[%s4221 + $0xc8] sm:$0xf]
  %v4273 = vld [vmem:[%s4221 + $0xcc] sm:$0xf]
  %v4274 = vld [vmem:[%s4221 + $0xd0] sm:$0xf]
  %v4275 = vld [vmem:[%s4221 + $0xd4] sm:$0xf]
  %v4276 = vld [vmem:[%s4221 + $0xd8] sm:$0xf]
  %v4277 = vld [vmem:[%s4221 + $0xdc] sm:$0xf]
  %v4278 = vld [vmem:[%s4221 + $0xe0] sm:$0xf]
  %v4279 = vld [vmem:[%s4221 + $0xe4] sm:$0xf]
  %v4280 = vld [vmem:[%s4221 + $0xe8] sm:$0xf]
  %v4281 = vld [vmem:[%s4221 + $0xec] sm:$0xf]
  %v4282 = vld [vmem:[%s4221 + $0xf0] sm:$0xf]
  %v4283 = vld [vmem:[%s4221 + $0xf4] sm:$0xf]
  %v4284 = vld [vmem:[%s4221 + $0xf8] sm:$0xf]
  %v4285 = vld [vmem:[%s4221 + $0xfc] sm:$0xf]
  %v4350 = vunpack.c.l.b16 %v4222
  %v4351 = vunpack.c.l.b16 %v4223
  %v4352 = vunpack.c.l.b16 %v4224
  %v4353 = vunpack.c.l.b16 %v4225
  %v4354 = vunpack.c.l.b16 %v4226
  %v4355 = vunpack.c.l.b16 %v4227
  %v4356 = vunpack.c.l.b16 %v4228
  %v4357 = vunpack.c.l.b16 %v4229
  %v4358 = vunpack.c.l.b16 %v4230
  %v4359 = vunpack.c.l.b16 %v4231
  %v4360 = vunpack.c.l.b16 %v4232
  %v4361 = vunpack.c.l.b16 %v4233
  %v4362 = vunpack.c.l.b16 %v4234
  %v4363 = vunpack.c.l.b16 %v4235
  %v4364 = vunpack.c.l.b16 %v4236
  %v4365 = vunpack.c.l.b16 %v4237
  %v4366 = vunpack.c.l.b16 %v4238
  %v4367 = vunpack.c.l.b16 %v4239
  %v4368 = vunpack.c.l.b16 %v4240
  %v4369 = vunpack.c.l.b16 %v4241
  %v4370 = vunpack.c.l.b16 %v4242
  %v4371 = vunpack.c.l.b16 %v4243
  %v4372 = vunpack.c.l.b16 %v4244
  %v4373 = vunpack.c.l.b16 %v4245
  %v4374 = vunpack.c.l.b16 %v4246
  %v4375 = vunpack.c.l.b16 %v4247
  %v4376 = vunpack.c.l.b16 %v4248
  %v4377 = vunpack.c.l.b16 %v4249
  %v4378 = vunpack.c.l.b16 %v4250
  %v4379 = vunpack.c.l.b16 %v4251
  %v4380 = vunpack.c.l.b16 %v4252
  %v4381 = vunpack.c.l.b16 %v4253
  %v4382 = vunpack.c.l.b16 %v4254
  %v4383 = vunpack.c.l.b16 %v4255
  %v4384 = vunpack.c.l.b16 %v4256
  %v4385 = vunpack.c.l.b16 %v4257
  %v4386 = vunpack.c.l.b16 %v4258
  %v4387 = vunpack.c.l.b16 %v4259
  %v4388 = vunpack.c.l.b16 %v4260
  %v4389 = vunpack.c.l.b16 %v4261
  %v4390 = vunpack.c.l.b16 %v4262
  %v4391 = vunpack.c.l.b16 %v4263
  %v4392 = vunpack.c.l.b16 %v4264
  %v4393 = vunpack.c.l.b16 %v4265
  %v4394 = vunpack.c.l.b16 %v4266
  %v4395 = vunpack.c.l.b16 %v4267
  %v4396 = vunpack.c.l.b16 %v4268
  %v4397 = vunpack.c.l.b16 %v4269
  %v4398 = vunpack.c.l.b16 %v4270
  %v4399 = vunpack.c.l.b16 %v4271
  %v4400 = vunpack.c.l.b16 %v4272
  %v4401 = vunpack.c.l.b16 %v4273
  %v4402 = vunpack.c.l.b16 %v4274
  %v4403 = vunpack.c.l.b16 %v4275
  %v4404 = vunpack.c.l.b16 %v4276
  %v4405 = vunpack.c.l.b16 %v4277
  %v4406 = vunpack.c.l.b16 %v4278
  %v4407 = vunpack.c.l.b16 %v4279
  %v4408 = vunpack.c.l.b16 %v4280
  %v4409 = vunpack.c.l.b16 %v4281
  %v4410 = vunpack.c.l.b16 %v4282
  %v4411 = vunpack.c.l.b16 %v4283
  %v4412 = vunpack.c.l.b16 %v4284
  %v4413 = vunpack.c.l.b16 %v4285
  %v4414 = vpack.c.b16 %v4351, %v4350
  %v4415 = vpack.c.b16 %v4353, %v4352
  %v4416 = vpack.c.b16 %v4355, %v4354
  %v4417 = vpack.c.b16 %v4357, %v4356
  %v4418 = vpack.c.b16 %v4359, %v4358
  %v4419 = vpack.c.b16 %v4361, %v4360
  %v4420 = vpack.c.b16 %v4363, %v4362
  %v4421 = vpack.c.b16 %v4365, %v4364
  %v4422 = vpack.c.b16 %v4367, %v4366
  %v4423 = vpack.c.b16 %v4369, %v4368
  %v4424 = vpack.c.b16 %v4371, %v4370
  %v4425 = vpack.c.b16 %v4373, %v4372
  %v4426 = vpack.c.b16 %v4375, %v4374
  %v4427 = vpack.c.b16 %v4377, %v4376
  %v4428 = vpack.c.b16 %v4379, %v4378
  %v4429 = vpack.c.b16 %v4381, %v4380
  %v4430 = vpack.c.b16 %v4383, %v4382
  %v4431 = vpack.c.b16 %v4385, %v4384
  %v4432 = vpack.c.b16 %v4387, %v4386
  %v4433 = vpack.c.b16 %v4389, %v4388
  %v4434 = vpack.c.b16 %v4391, %v4390
  %v4435 = vpack.c.b16 %v4393, %v4392
  %v4436 = vpack.c.b16 %v4395, %v4394
  %v4437 = vpack.c.b16 %v4397, %v4396
  %v4438 = vpack.c.b16 %v4399, %v4398
  %v4439 = vpack.c.b16 %v4401, %v4400
  %v4440 = vpack.c.b16 %v4403, %v4402
  %v4441 = vpack.c.b16 %v4405, %v4404
  %v4442 = vpack.c.b16 %v4407, %v4406
  %v4443 = vpack.c.b16 %v4409, %v4408
  %v4444 = vpack.c.b16 %v4411, %v4410
  %v4445 = vpack.c.b16 %v4413, %v4412
  %4478 = vmatprep.subr.bf16.mxu0 0
  %4479 = vmatpush1.bf16.msra.mxu0 %v4421
  %4480 = vmatprep.subr.bf16.mxu0 0
  %4481 = vmatpush1.bf16.msra.mxu0 %v4420
  %4482 = vmatprep.subr.bf16.mxu0 0
  %4483 = vmatpush1.bf16.msra.mxu0 %v4419
  %4484 = vmatprep.subr.bf16.mxu0 0
  %4485 = vmatpush1.bf16.msra.mxu0 %v4418
  %4486 = vmatprep.subr.bf16.mxu0 0
  %4487 = vmatpush1.bf16.msra.mxu0 %v4417
  %4488 = vmatprep.subr.bf16.mxu0 0
  %4489 = vmatpush1.bf16.msra.mxu0 %v4416
  %4490 = vmatprep.subr.bf16.mxu0 0
  %4491 = vmatpush1.bf16.msra.mxu0 %v4415
  %4492 = vmatprep.subr.bf16.mxu0 0
  %4493 = vmatpush1.bf16.msra.mxu0 %v4414
  %4494 = vmatprep.subr.bf16.mxu0 0
  %4495 = vmatpush2.bf16.msra.mxu0 %v4429
  %4496 = vmatprep.subr.bf16.mxu0 0
  %4497 = vmatpush2.bf16.msra.mxu0 %v4428
  %4498 = vmatprep.subr.bf16.mxu0 0
  %4499 = vmatpush2.bf16.msra.mxu0 %v4427
  %4500 = vmatprep.subr.bf16.mxu0 0
  %4501 = vmatpush2.bf16.msra.mxu0 %v4426
  %4502 = vmatprep.subr.bf16.mxu0 0
  %4503 = vmatpush2.bf16.msra.mxu0 %v4425
  %4504 = vmatprep.subr.bf16.mxu0 0
  %4505 = vmatpush2.bf16.msra.mxu0 %v4424
  %4506 = vmatprep.subr.bf16.mxu0 0
  %4507 = vmatpush2.bf16.msra.mxu0 %v4423
  %4508 = vmatprep.subr.bf16.mxu0 0
  %4509 = vmatpush2.bf16.msra.mxu0 %v4422
  %4510 = vmatprep.mubr.bf16.mxu0 %v272
  %4511 = vmatmul.mubr.bf16.gmra.mxu0 %v271
  %v4512 = vpop.f32.mrf.mxu0
  %v4513 = vadd.f32 0.0, %v4512
  %v4514 = vpop.f32.mrf.mxu0
  %v4515 = vpop.f32.mrf.mxu0
  %v4516 = vpop.f32.mrf.mxu0
  %4517 = vdwg.mxu0
  %4518 = vmatprep.subr.bf16.mxu0 0
  %4519 = vmatpush1.bf16.msra.mxu0 %v4437
  %4520 = vmatprep.subr.bf16.mxu0 0
  %4521 = vmatpush1.bf16.msra.mxu0 %v4436
  %4522 = vmatprep.subr.bf16.mxu0 0
  %4523 = vmatpush1.bf16.msra.mxu0 %v4435
  %4524 = vmatprep.subr.bf16.mxu0 0
  %4525 = vmatpush1.bf16.msra.mxu0 %v4434
  %4526 = vmatprep.subr.bf16.mxu0 0
  %4527 = vmatpush1.bf16.msra.mxu0 %v4433
  %4528 = vmatprep.subr.bf16.mxu0 0
  %4529 = vmatpush1.bf16.msra.mxu0 %v4432
  %4530 = vmatprep.subr.bf16.mxu0 0
  %4531 = vmatpush1.bf16.msra.mxu0 %v4431
  %4532 = vmatprep.subr.bf16.mxu0 0
  %4533 = vmatpush1.bf16.msra.mxu0 %v4430
  %4534 = vmatprep.subr.bf16.mxu0 0
  %4535 = vmatpush2.bf16.msra.mxu0 %v4445
  %4536 = vmatprep.subr.bf16.mxu0 0
  %4537 = vmatpush2.bf16.msra.mxu0 %v4444
  %4538 = vmatprep.subr.bf16.mxu0 0
  %4539 = vmatpush2.bf16.msra.mxu0 %v4443
  %4540 = vmatprep.subr.bf16.mxu0 0
  %4541 = vmatpush2.bf16.msra.mxu0 %v4442
  %4542 = vmatprep.subr.bf16.mxu0 0
  %4543 = vmatpush2.bf16.msra.mxu0 %v4441
  %4544 = vmatprep.subr.bf16.mxu0 0
  %4545 = vmatpush2.bf16.msra.mxu0 %v4440
  %4546 = vmatprep.subr.bf16.mxu0 0
  %4547 = vmatpush2.bf16.msra.mxu0 %v4439
  %4548 = vmatprep.subr.bf16.mxu0 0
  %4549 = vmatpush2.bf16.msra.mxu0 %v4438
  %4550 = vmatprep.mubr.bf16.mxu0 %v274
  %4551 = vmatmul.mubr.bf16.gmra.mxu0 %v273
  %v4552 = vpop.f32.mrf.mxu0
  %v4553 = vadd.f32 %v4513, %v4552
  %v4554 = vpop.f32.mrf.mxu0
  %v4555 = vpop.f32.mrf.mxu0
  %v4556 = vpop.f32.mrf.mxu0
  %4557 = vdwg.mxu0
  %v4558 = vpack.c.bf16 %v4553, %v4553
  %s4559 = scalar_lea.vmem %s4, 80
  %v4560 = vld [vmem:[%s4559] sm:$0xf]
  %v4561 = vld [vmem:[%s4559 + $0x4] sm:$0xf]
  %v4564 = vunpack.c.l.b16 %v4560
  %v4565 = vunpack.c.l.b16 %v4561
  %v4566 = vpack.c.b16 %v4565, %v4564
  %v4568 = vsel %vm960, %v4566, 0
  %v4571 = vsel %vm964, %v4558, 0
  %4573 = vmatprep.subr.bf16.mxu0 0
  %4574 = vmatpush1.bf16.msra.mxu0 0
  %4575 = vmatprep.subr.bf16.mxu0 0
  %4576 = vmatpush1.bf16.msra.mxu0 0
  %4577 = vmatprep.subr.bf16.mxu0 0
  %4578 = vmatpush1.bf16.msra.mxu0 0
  %4579 = vmatprep.subr.bf16.mxu0 0
  %4580 = vmatpush1.bf16.msra.mxu0 0
  %4581 = vmatprep.subr.bf16.mxu0 0
  %4582 = vmatpush1.bf16.msra.mxu0 0
  %4583 = vmatprep.subr.bf16.mxu0 0
  %4584 = vmatpush1.bf16.msra.mxu0 0
  %4585 = vmatprep.subr.bf16.mxu0 0
  %4586 = vmatpush1.bf16.msra.mxu0 0
  %4587 = vmatprep.subr.bf16.mxu0 0
  %4588 = vmatpush1.bf16.msra.mxu0 %v4571
  %4589 = vmatprep.subr.bf16.mxu0 0
  %4590 = vmatpush2.bf16.msra.mxu0 0
  %4591 = vmatprep.subr.bf16.mxu0 0
  %4592 = vmatpush2.bf16.msra.mxu0 0
  %4593 = vmatprep.subr.bf16.mxu0 0
  %4594 = vmatpush2.bf16.msra.mxu0 0
  %4595 = vmatprep.subr.bf16.mxu0 0
  %4596 = vmatpush2.bf16.msra.mxu0 0
  %4597 = vmatprep.subr.bf16.mxu0 0
  %4598 = vmatpush2.bf16.msra.mxu0 0
  %4599 = vmatprep.subr.bf16.mxu0 0
  %4600 = vmatpush2.bf16.msra.mxu0 0
  %4601 = vmatprep.subr.bf16.mxu0 0
  %4602 = vmatpush2.bf16.msra.mxu0 0
  %4603 = vmatprep.subr.bf16.mxu0 0
  %4604 = vmatpush2.bf16.msra.mxu0 0
  %4605 = vmatprep.mubr.bf16.mxu0 0
  %4606 = vmatmul.mubr.bf16.gmra.mxu0 %v4568
  %v4607 = vpop.f32.mrf.mxu0
  %v4608 = vadd.f32 0.0, %v4607
  %v4609 = vpop.f32.mrf.mxu0
  %v4610 = vpop.f32.mrf.mxu0
  %v4611 = vadd.f32 0.0, %v4610
  %v4612 = vpop.f32.mrf.mxu0
  %4613 = vdwg.mxu0
  %v4614 = vadd.f32 %v4219, %v4608
  %v4615 = vadd.f32 %v4220, %v4611
  %s4616 = scalar_lea.vmem %s5, 2816
  %v4617 = vld [vmem:[%s4616] sm:$0xf]
  %v4618 = vld [vmem:[%s4616 + $0x4] sm:$0xf]
  %v4619 = vld [vmem:[%s4616 + $0x8] sm:$0xf]
  %v4620 = vld [vmem:[%s4616 + $0xc] sm:$0xf]
  %v4621 = vld [vmem:[%s4616 + $0x10] sm:$0xf]
  %v4622 = vld [vmem:[%s4616 + $0x14] sm:$0xf]
  %v4623 = vld [vmem:[%s4616 + $0x18] sm:$0xf]
  %v4624 = vld [vmem:[%s4616 + $0x1c] sm:$0xf]
  %v4625 = vld [vmem:[%s4616 + $0x20] sm:$0xf]
  %v4626 = vld [vmem:[%s4616 + $0x24] sm:$0xf]
  %v4627 = vld [vmem:[%s4616 + $0x28] sm:$0xf]
  %v4628 = vld [vmem:[%s4616 + $0x2c] sm:$0xf]
  %v4629 = vld [vmem:[%s4616 + $0x30] sm:$0xf]
  %v4630 = vld [vmem:[%s4616 + $0x34] sm:$0xf]
  %v4631 = vld [vmem:[%s4616 + $0x38] sm:$0xf]
  %v4632 = vld [vmem:[%s4616 + $0x3c] sm:$0xf]
  %v4633 = vld [vmem:[%s4616 + $0x40] sm:$0xf]
  %v4634 = vld [vmem:[%s4616 + $0x44] sm:$0xf]
  %v4635 = vld [vmem:[%s4616 + $0x48] sm:$0xf]
  %v4636 = vld [vmem:[%s4616 + $0x4c] sm:$0xf]
  %v4637 = vld [vmem:[%s4616 + $0x50] sm:$0xf]
  %v4638 = vld [vmem:[%s4616 + $0x54] sm:$0xf]
  %v4639 = vld [vmem:[%s4616 + $0x58] sm:$0xf]
  %v4640 = vld [vmem:[%s4616 + $0x5c] sm:$0xf]
  %v4641 = vld [vmem:[%s4616 + $0x60] sm:$0xf]
  %v4642 = vld [vmem:[%s4616 + $0x64] sm:$0xf]
  %v4643 = vld [vmem:[%s4616 + $0x68] sm:$0xf]
  %v4644 = vld [vmem:[%s4616 + $0x6c] sm:$0xf]
  %v4645 = vld [vmem:[%s4616 + $0x70] sm:$0xf]
  %v4646 = vld [vmem:[%s4616 + $0x74] sm:$0xf]
  %v4647 = vld [vmem:[%s4616 + $0x78] sm:$0xf]
  %v4648 = vld [vmem:[%s4616 + $0x7c] sm:$0xf]
  %v4649 = vld [vmem:[%s4616 + $0x80] sm:$0xf]
  %v4650 = vld [vmem:[%s4616 + $0x84] sm:$0xf]
  %v4651 = vld [vmem:[%s4616 + $0x88] sm:$0xf]
  %v4652 = vld [vmem:[%s4616 + $0x8c] sm:$0xf]
  %v4653 = vld [vmem:[%s4616 + $0x90] sm:$0xf]
  %v4654 = vld [vmem:[%s4616 + $0x94] sm:$0xf]
  %v4655 = vld [vmem:[%s4616 + $0x98] sm:$0xf]
  %v4656 = vld [vmem:[%s4616 + $0x9c] sm:$0xf]
  %v4657 = vld [vmem:[%s4616 + $0xa0] sm:$0xf]
  %v4658 = vld [vmem:[%s4616 + $0xa4] sm:$0xf]
  %v4659 = vld [vmem:[%s4616 + $0xa8] sm:$0xf]
  %v4660 = vld [vmem:[%s4616 + $0xac] sm:$0xf]
  %v4661 = vld [vmem:[%s4616 + $0xb0] sm:$0xf]
  %v4662 = vld [vmem:[%s4616 + $0xb4] sm:$0xf]
  %v4663 = vld [vmem:[%s4616 + $0xb8] sm:$0xf]
  %v4664 = vld [vmem:[%s4616 + $0xbc] sm:$0xf]
  %v4665 = vld [vmem:[%s4616 + $0xc0] sm:$0xf]
  %v4666 = vld [vmem:[%s4616 + $0xc4] sm:$0xf]
  %v4667 = vld [vmem:[%s4616 + $0xc8] sm:$0xf]
  %v4668 = vld [vmem:[%s4616 + $0xcc] sm:$0xf]
  %v4669 = vld [vmem:[%s4616 + $0xd0] sm:$0xf]
  %v4670 = vld [vmem:[%s4616 + $0xd4] sm:$0xf]
  %v4671 = vld [vmem:[%s4616 + $0xd8] sm:$0xf]
  %v4672 = vld [vmem:[%s4616 + $0xdc] sm:$0xf]
  %v4673 = vld [vmem:[%s4616 + $0xe0] sm:$0xf]
  %v4674 = vld [vmem:[%s4616 + $0xe4] sm:$0xf]
  %v4675 = vld [vmem:[%s4616 + $0xe8] sm:$0xf]
  %v4676 = vld [vmem:[%s4616 + $0xec] sm:$0xf]
  %v4677 = vld [vmem:[%s4616 + $0xf0] sm:$0xf]
  %v4678 = vld [vmem:[%s4616 + $0xf4] sm:$0xf]
  %v4679 = vld [vmem:[%s4616 + $0xf8] sm:$0xf]
  %v4680 = vld [vmem:[%s4616 + $0xfc] sm:$0xf]
  %v4745 = vunpack.c.l.b16 %v4617
  %v4746 = vunpack.c.l.b16 %v4618
  %v4747 = vunpack.c.l.b16 %v4619
  %v4748 = vunpack.c.l.b16 %v4620
  %v4749 = vunpack.c.l.b16 %v4621
  %v4750 = vunpack.c.l.b16 %v4622
  %v4751 = vunpack.c.l.b16 %v4623
  %v4752 = vunpack.c.l.b16 %v4624
  %v4753 = vunpack.c.l.b16 %v4625
  %v4754 = vunpack.c.l.b16 %v4626
  %v4755 = vunpack.c.l.b16 %v4627
  %v4756 = vunpack.c.l.b16 %v4628
  %v4757 = vunpack.c.l.b16 %v4629
  %v4758 = vunpack.c.l.b16 %v4630
  %v4759 = vunpack.c.l.b16 %v4631
  %v4760 = vunpack.c.l.b16 %v4632
  %v4761 = vunpack.c.l.b16 %v4633
  %v4762 = vunpack.c.l.b16 %v4634
  %v4763 = vunpack.c.l.b16 %v4635
  %v4764 = vunpack.c.l.b16 %v4636
  %v4765 = vunpack.c.l.b16 %v4637
  %v4766 = vunpack.c.l.b16 %v4638
  %v4767 = vunpack.c.l.b16 %v4639
  %v4768 = vunpack.c.l.b16 %v4640
  %v4769 = vunpack.c.l.b16 %v4641
  %v4770 = vunpack.c.l.b16 %v4642
  %v4771 = vunpack.c.l.b16 %v4643
  %v4772 = vunpack.c.l.b16 %v4644
  %v4773 = vunpack.c.l.b16 %v4645
  %v4774 = vunpack.c.l.b16 %v4646
  %v4775 = vunpack.c.l.b16 %v4647
  %v4776 = vunpack.c.l.b16 %v4648
  %v4777 = vunpack.c.l.b16 %v4649
  %v4778 = vunpack.c.l.b16 %v4650
  %v4779 = vunpack.c.l.b16 %v4651
  %v4780 = vunpack.c.l.b16 %v4652
  %v4781 = vunpack.c.l.b16 %v4653
  %v4782 = vunpack.c.l.b16 %v4654
  %v4783 = vunpack.c.l.b16 %v4655
  %v4784 = vunpack.c.l.b16 %v4656
  %v4785 = vunpack.c.l.b16 %v4657
  %v4786 = vunpack.c.l.b16 %v4658
  %v4787 = vunpack.c.l.b16 %v4659
  %v4788 = vunpack.c.l.b16 %v4660
  %v4789 = vunpack.c.l.b16 %v4661
  %v4790 = vunpack.c.l.b16 %v4662
  %v4791 = vunpack.c.l.b16 %v4663
  %v4792 = vunpack.c.l.b16 %v4664
  %v4793 = vunpack.c.l.b16 %v4665
  %v4794 = vunpack.c.l.b16 %v4666
  %v4795 = vunpack.c.l.b16 %v4667
  %v4796 = vunpack.c.l.b16 %v4668
  %v4797 = vunpack.c.l.b16 %v4669
  %v4798 = vunpack.c.l.b16 %v4670
  %v4799 = vunpack.c.l.b16 %v4671
  %v4800 = vunpack.c.l.b16 %v4672
  %v4801 = vunpack.c.l.b16 %v4673
  %v4802 = vunpack.c.l.b16 %v4674
  %v4803 = vunpack.c.l.b16 %v4675
  %v4804 = vunpack.c.l.b16 %v4676
  %v4805 = vunpack.c.l.b16 %v4677
  %v4806 = vunpack.c.l.b16 %v4678
  %v4807 = vunpack.c.l.b16 %v4679
  %v4808 = vunpack.c.l.b16 %v4680
  %v4809 = vpack.c.b16 %v4746, %v4745
  %v4810 = vpack.c.b16 %v4748, %v4747
  %v4811 = vpack.c.b16 %v4750, %v4749
  %v4812 = vpack.c.b16 %v4752, %v4751
  %v4813 = vpack.c.b16 %v4754, %v4753
  %v4814 = vpack.c.b16 %v4756, %v4755
  %v4815 = vpack.c.b16 %v4758, %v4757
  %v4816 = vpack.c.b16 %v4760, %v4759
  %v4817 = vpack.c.b16 %v4762, %v4761
  %v4818 = vpack.c.b16 %v4764, %v4763
  %v4819 = vpack.c.b16 %v4766, %v4765
  %v4820 = vpack.c.b16 %v4768, %v4767
  %v4821 = vpack.c.b16 %v4770, %v4769
  %v4822 = vpack.c.b16 %v4772, %v4771
  %v4823 = vpack.c.b16 %v4774, %v4773
  %v4824 = vpack.c.b16 %v4776, %v4775
  %v4825 = vpack.c.b16 %v4778, %v4777
  %v4826 = vpack.c.b16 %v4780, %v4779
  %v4827 = vpack.c.b16 %v4782, %v4781
  %v4828 = vpack.c.b16 %v4784, %v4783
  %v4829 = vpack.c.b16 %v4786, %v4785
  %v4830 = vpack.c.b16 %v4788, %v4787
  %v4831 = vpack.c.b16 %v4790, %v4789
  %v4832 = vpack.c.b16 %v4792, %v4791
  %v4833 = vpack.c.b16 %v4794, %v4793
  %v4834 = vpack.c.b16 %v4796, %v4795
  %v4835 = vpack.c.b16 %v4798, %v4797
  %v4836 = vpack.c.b16 %v4800, %v4799
  %v4837 = vpack.c.b16 %v4802, %v4801
  %v4838 = vpack.c.b16 %v4804, %v4803
  %v4839 = vpack.c.b16 %v4806, %v4805
  %v4840 = vpack.c.b16 %v4808, %v4807
  %4873 = vmatprep.subr.bf16.mxu0 0
  %4874 = vmatpush1.bf16.msra.mxu0 %v4816
  %4875 = vmatprep.subr.bf16.mxu0 0
  %4876 = vmatpush1.bf16.msra.mxu0 %v4815
  %4877 = vmatprep.subr.bf16.mxu0 0
  %4878 = vmatpush1.bf16.msra.mxu0 %v4814
  %4879 = vmatprep.subr.bf16.mxu0 0
  %4880 = vmatpush1.bf16.msra.mxu0 %v4813
  %4881 = vmatprep.subr.bf16.mxu0 0
  %4882 = vmatpush1.bf16.msra.mxu0 %v4812
  %4883 = vmatprep.subr.bf16.mxu0 0
  %4884 = vmatpush1.bf16.msra.mxu0 %v4811
  %4885 = vmatprep.subr.bf16.mxu0 0
  %4886 = vmatpush1.bf16.msra.mxu0 %v4810
  %4887 = vmatprep.subr.bf16.mxu0 0
  %4888 = vmatpush1.bf16.msra.mxu0 %v4809
  %4889 = vmatprep.subr.bf16.mxu0 0
  %4890 = vmatpush2.bf16.msra.mxu0 %v4824
  %4891 = vmatprep.subr.bf16.mxu0 0
  %4892 = vmatpush2.bf16.msra.mxu0 %v4823
  %4893 = vmatprep.subr.bf16.mxu0 0
  %4894 = vmatpush2.bf16.msra.mxu0 %v4822
  %4895 = vmatprep.subr.bf16.mxu0 0
  %4896 = vmatpush2.bf16.msra.mxu0 %v4821
  %4897 = vmatprep.subr.bf16.mxu0 0
  %4898 = vmatpush2.bf16.msra.mxu0 %v4820
  %4899 = vmatprep.subr.bf16.mxu0 0
  %4900 = vmatpush2.bf16.msra.mxu0 %v4819
  %4901 = vmatprep.subr.bf16.mxu0 0
  %4902 = vmatpush2.bf16.msra.mxu0 %v4818
  %4903 = vmatprep.subr.bf16.mxu0 0
  %4904 = vmatpush2.bf16.msra.mxu0 %v4817
  %4905 = vmatprep.mubr.bf16.mxu0 %v272
  %4906 = vmatmul.mubr.bf16.gmra.mxu0 %v271
  %v4907 = vpop.f32.mrf.mxu0
  %v4908 = vadd.f32 0.0, %v4907
  %v4909 = vpop.f32.mrf.mxu0
  %v4910 = vpop.f32.mrf.mxu0
  %v4911 = vpop.f32.mrf.mxu0
  %4912 = vdwg.mxu0
  %4913 = vmatprep.subr.bf16.mxu0 0
  %4914 = vmatpush1.bf16.msra.mxu0 %v4832
  %4915 = vmatprep.subr.bf16.mxu0 0
  %4916 = vmatpush1.bf16.msra.mxu0 %v4831
  %4917 = vmatprep.subr.bf16.mxu0 0
  %4918 = vmatpush1.bf16.msra.mxu0 %v4830
  %4919 = vmatprep.subr.bf16.mxu0 0
  %4920 = vmatpush1.bf16.msra.mxu0 %v4829
  %4921 = vmatprep.subr.bf16.mxu0 0
  %4922 = vmatpush1.bf16.msra.mxu0 %v4828
  %4923 = vmatprep.subr.bf16.mxu0 0
  %4924 = vmatpush1.bf16.msra.mxu0 %v4827
  %4925 = vmatprep.subr.bf16.mxu0 0
  %4926 = vmatpush1.bf16.msra.mxu0 %v4826
  %4927 = vmatprep.subr.bf16.mxu0 0
  %4928 = vmatpush1.bf16.msra.mxu0 %v4825
  %4929 = vmatprep.subr.bf16.mxu0 0
  %4930 = vmatpush2.bf16.msra.mxu0 %v4840
  %4931 = vmatprep.subr.bf16.mxu0 0
  %4932 = vmatpush2.bf16.msra.mxu0 %v4839
  %4933 = vmatprep.subr.bf16.mxu0 0
  %4934 = vmatpush2.bf16.msra.mxu0 %v4838
  %4935 = vmatprep.subr.bf16.mxu0 0
  %4936 = vmatpush2.bf16.msra.mxu0 %v4837
  %4937 = vmatprep.subr.bf16.mxu0 0
  %4938 = vmatpush2.bf16.msra.mxu0 %v4836
  %4939 = vmatprep.subr.bf16.mxu0 0
  %4940 = vmatpush2.bf16.msra.mxu0 %v4835
  %4941 = vmatprep.subr.bf16.mxu0 0
  %4942 = vmatpush2.bf16.msra.mxu0 %v4834
  %4943 = vmatprep.subr.bf16.mxu0 0
  %4944 = vmatpush2.bf16.msra.mxu0 %v4833
  %4945 = vmatprep.mubr.bf16.mxu0 %v274
  %4946 = vmatmul.mubr.bf16.gmra.mxu0 %v273
  %v4947 = vpop.f32.mrf.mxu0
  %v4948 = vadd.f32 %v4908, %v4947
  %v4949 = vpop.f32.mrf.mxu0
  %v4950 = vpop.f32.mrf.mxu0
  %v4951 = vpop.f32.mrf.mxu0
  %4952 = vdwg.mxu0
  %v4953 = vpack.c.bf16 %v4948, %v4948
  %s4954 = scalar_lea.vmem %s4, 88
  %v4955 = vld [vmem:[%s4954] sm:$0xf]
  %v4956 = vld [vmem:[%s4954 + $0x4] sm:$0xf]
  %v4959 = vunpack.c.l.b16 %v4955
  %v4960 = vunpack.c.l.b16 %v4956
  %v4961 = vpack.c.b16 %v4960, %v4959
  %v4963 = vsel %vm960, %v4961, 0
  %v4966 = vsel %vm964, %v4953, 0
  %4968 = vmatprep.subr.bf16.mxu0 0
  %4969 = vmatpush1.bf16.msra.mxu0 0
  %4970 = vmatprep.subr.bf16.mxu0 0
  %4971 = vmatpush1.bf16.msra.mxu0 0
  %4972 = vmatprep.subr.bf16.mxu0 0
  %4973 = vmatpush1.bf16.msra.mxu0 0
  %4974 = vmatprep.subr.bf16.mxu0 0
  %4975 = vmatpush1.bf16.msra.mxu0 0
  %4976 = vmatprep.subr.bf16.mxu0 0
  %4977 = vmatpush1.bf16.msra.mxu0 0
  %4978 = vmatprep.subr.bf16.mxu0 0
  %4979 = vmatpush1.bf16.msra.mxu0 0
  %4980 = vmatprep.subr.bf16.mxu0 0
  %4981 = vmatpush1.bf16.msra.mxu0 0
  %4982 = vmatprep.subr.bf16.mxu0 0
  %4983 = vmatpush1.bf16.msra.mxu0 %v4966
  %4984 = vmatprep.subr.bf16.mxu0 0
  %4985 = vmatpush2.bf16.msra.mxu0 0
  %4986 = vmatprep.subr.bf16.mxu0 0
  %4987 = vmatpush2.bf16.msra.mxu0 0
  %4988 = vmatprep.subr.bf16.mxu0 0
  %4989 = vmatpush2.bf16.msra.mxu0 0
  %4990 = vmatprep.subr.bf16.mxu0 0
  %4991 = vmatpush2.bf16.msra.mxu0 0
  %4992 = vmatprep.subr.bf16.mxu0 0
  %4993 = vmatpush2.bf16.msra.mxu0 0
  %4994 = vmatprep.subr.bf16.mxu0 0
  %4995 = vmatpush2.bf16.msra.mxu0 0
  %4996 = vmatprep.subr.bf16.mxu0 0
  %4997 = vmatpush2.bf16.msra.mxu0 0
  %4998 = vmatprep.subr.bf16.mxu0 0
  %4999 = vmatpush2.bf16.msra.mxu0 0
  %5000 = vmatprep.mubr.bf16.mxu0 0
  %5001 = vmatmul.mubr.bf16.gmra.mxu0 %v4963
  %v5002 = vpop.f32.mrf.mxu0
  %v5003 = vadd.f32 0.0, %v5002
  %v5004 = vpop.f32.mrf.mxu0
  %v5005 = vpop.f32.mrf.mxu0
  %v5006 = vadd.f32 0.0, %v5005
  %v5007 = vpop.f32.mrf.mxu0
  %5008 = vdwg.mxu0
  %v5009 = vadd.f32 %v4614, %v5003
  %v5010 = vadd.f32 %v4615, %v5006
  %s5011 = scalar_lea.vmem %s5, 3072
  %v5012 = vld [vmem:[%s5011] sm:$0xf]
  %v5013 = vld [vmem:[%s5011 + $0x4] sm:$0xf]
  %v5014 = vld [vmem:[%s5011 + $0x8] sm:$0xf]
  %v5015 = vld [vmem:[%s5011 + $0xc] sm:$0xf]
  %v5016 = vld [vmem:[%s5011 + $0x10] sm:$0xf]
  %v5017 = vld [vmem:[%s5011 + $0x14] sm:$0xf]
  %v5018 = vld [vmem:[%s5011 + $0x18] sm:$0xf]
  %v5019 = vld [vmem:[%s5011 + $0x1c] sm:$0xf]
  %v5020 = vld [vmem:[%s5011 + $0x20] sm:$0xf]
  %v5021 = vld [vmem:[%s5011 + $0x24] sm:$0xf]
  %v5022 = vld [vmem:[%s5011 + $0x28] sm:$0xf]
  %v5023 = vld [vmem:[%s5011 + $0x2c] sm:$0xf]
  %v5024 = vld [vmem:[%s5011 + $0x30] sm:$0xf]
  %v5025 = vld [vmem:[%s5011 + $0x34] sm:$0xf]
  %v5026 = vld [vmem:[%s5011 + $0x38] sm:$0xf]
  %v5027 = vld [vmem:[%s5011 + $0x3c] sm:$0xf]
  %v5028 = vld [vmem:[%s5011 + $0x40] sm:$0xf]
  %v5029 = vld [vmem:[%s5011 + $0x44] sm:$0xf]
  %v5030 = vld [vmem:[%s5011 + $0x48] sm:$0xf]
  %v5031 = vld [vmem:[%s5011 + $0x4c] sm:$0xf]
  %v5032 = vld [vmem:[%s5011 + $0x50] sm:$0xf]
  %v5033 = vld [vmem:[%s5011 + $0x54] sm:$0xf]
  %v5034 = vld [vmem:[%s5011 + $0x58] sm:$0xf]
  %v5035 = vld [vmem:[%s5011 + $0x5c] sm:$0xf]
  %v5036 = vld [vmem:[%s5011 + $0x60] sm:$0xf]
  %v5037 = vld [vmem:[%s5011 + $0x64] sm:$0xf]
  %v5038 = vld [vmem:[%s5011 + $0x68] sm:$0xf]
  %v5039 = vld [vmem:[%s5011 + $0x6c] sm:$0xf]
  %v5040 = vld [vmem:[%s5011 + $0x70] sm:$0xf]
  %v5041 = vld [vmem:[%s5011 + $0x74] sm:$0xf]
  %v5042 = vld [vmem:[%s5011 + $0x78] sm:$0xf]
  %v5043 = vld [vmem:[%s5011 + $0x7c] sm:$0xf]
  %v5044 = vld [vmem:[%s5011 + $0x80] sm:$0xf]
  %v5045 = vld [vmem:[%s5011 + $0x84] sm:$0xf]
  %v5046 = vld [vmem:[%s5011 + $0x88] sm:$0xf]
  %v5047 = vld [vmem:[%s5011 + $0x8c] sm:$0xf]
  %v5048 = vld [vmem:[%s5011 + $0x90] sm:$0xf]
  %v5049 = vld [vmem:[%s5011 + $0x94] sm:$0xf]
  %v5050 = vld [vmem:[%s5011 + $0x98] sm:$0xf]
  %v5051 = vld [vmem:[%s5011 + $0x9c] sm:$0xf]
  %v5052 = vld [vmem:[%s5011 + $0xa0] sm:$0xf]
  %v5053 = vld [vmem:[%s5011 + $0xa4] sm:$0xf]
  %v5054 = vld [vmem:[%s5011 + $0xa8] sm:$0xf]
  %v5055 = vld [vmem:[%s5011 + $0xac] sm:$0xf]
  %v5056 = vld [vmem:[%s5011 + $0xb0] sm:$0xf]
  %v5057 = vld [vmem:[%s5011 + $0xb4] sm:$0xf]
  %v5058 = vld [vmem:[%s5011 + $0xb8] sm:$0xf]
  %v5059 = vld [vmem:[%s5011 + $0xbc] sm:$0xf]
  %v5060 = vld [vmem:[%s5011 + $0xc0] sm:$0xf]
  %v5061 = vld [vmem:[%s5011 + $0xc4] sm:$0xf]
  %v5062 = vld [vmem:[%s5011 + $0xc8] sm:$0xf]
  %v5063 = vld [vmem:[%s5011 + $0xcc] sm:$0xf]
  %v5064 = vld [vmem:[%s5011 + $0xd0] sm:$0xf]
  %v5065 = vld [vmem:[%s5011 + $0xd4] sm:$0xf]
  %v5066 = vld [vmem:[%s5011 + $0xd8] sm:$0xf]
  %v5067 = vld [vmem:[%s5011 + $0xdc] sm:$0xf]
  %v5068 = vld [vmem:[%s5011 + $0xe0] sm:$0xf]
  %v5069 = vld [vmem:[%s5011 + $0xe4] sm:$0xf]
  %v5070 = vld [vmem:[%s5011 + $0xe8] sm:$0xf]
  %v5071 = vld [vmem:[%s5011 + $0xec] sm:$0xf]
  %v5072 = vld [vmem:[%s5011 + $0xf0] sm:$0xf]
  %v5073 = vld [vmem:[%s5011 + $0xf4] sm:$0xf]
  %v5074 = vld [vmem:[%s5011 + $0xf8] sm:$0xf]
  %v5075 = vld [vmem:[%s5011 + $0xfc] sm:$0xf]
  %v5140 = vunpack.c.l.b16 %v5012
  %v5141 = vunpack.c.l.b16 %v5013
  %v5142 = vunpack.c.l.b16 %v5014
  %v5143 = vunpack.c.l.b16 %v5015
  %v5144 = vunpack.c.l.b16 %v5016
  %v5145 = vunpack.c.l.b16 %v5017
  %v5146 = vunpack.c.l.b16 %v5018
  %v5147 = vunpack.c.l.b16 %v5019
  %v5148 = vunpack.c.l.b16 %v5020
  %v5149 = vunpack.c.l.b16 %v5021
  %v5150 = vunpack.c.l.b16 %v5022
  %v5151 = vunpack.c.l.b16 %v5023
  %v5152 = vunpack.c.l.b16 %v5024
  %v5153 = vunpack.c.l.b16 %v5025
  %v5154 = vunpack.c.l.b16 %v5026
  %v5155 = vunpack.c.l.b16 %v5027
  %v5156 = vunpack.c.l.b16 %v5028
  %v5157 = vunpack.c.l.b16 %v5029
  %v5158 = vunpack.c.l.b16 %v5030
  %v5159 = vunpack.c.l.b16 %v5031
  %v5160 = vunpack.c.l.b16 %v5032
  %v5161 = vunpack.c.l.b16 %v5033
  %v5162 = vunpack.c.l.b16 %v5034
  %v5163 = vunpack.c.l.b16 %v5035
  %v5164 = vunpack.c.l.b16 %v5036
  %v5165 = vunpack.c.l.b16 %v5037
  %v5166 = vunpack.c.l.b16 %v5038
  %v5167 = vunpack.c.l.b16 %v5039
  %v5168 = vunpack.c.l.b16 %v5040
  %v5169 = vunpack.c.l.b16 %v5041
  %v5170 = vunpack.c.l.b16 %v5042
  %v5171 = vunpack.c.l.b16 %v5043
  %v5172 = vunpack.c.l.b16 %v5044
  %v5173 = vunpack.c.l.b16 %v5045
  %v5174 = vunpack.c.l.b16 %v5046
  %v5175 = vunpack.c.l.b16 %v5047
  %v5176 = vunpack.c.l.b16 %v5048
  %v5177 = vunpack.c.l.b16 %v5049
  %v5178 = vunpack.c.l.b16 %v5050
  %v5179 = vunpack.c.l.b16 %v5051
  %v5180 = vunpack.c.l.b16 %v5052
  %v5181 = vunpack.c.l.b16 %v5053
  %v5182 = vunpack.c.l.b16 %v5054
  %v5183 = vunpack.c.l.b16 %v5055
  %v5184 = vunpack.c.l.b16 %v5056
  %v5185 = vunpack.c.l.b16 %v5057
  %v5186 = vunpack.c.l.b16 %v5058
  %v5187 = vunpack.c.l.b16 %v5059
  %v5188 = vunpack.c.l.b16 %v5060
  %v5189 = vunpack.c.l.b16 %v5061
  %v5190 = vunpack.c.l.b16 %v5062
  %v5191 = vunpack.c.l.b16 %v5063
  %v5192 = vunpack.c.l.b16 %v5064
  %v5193 = vunpack.c.l.b16 %v5065
  %v5194 = vunpack.c.l.b16 %v5066
  %v5195 = vunpack.c.l.b16 %v5067
  %v5196 = vunpack.c.l.b16 %v5068
  %v5197 = vunpack.c.l.b16 %v5069
  %v5198 = vunpack.c.l.b16 %v5070
  %v5199 = vunpack.c.l.b16 %v5071
  %v5200 = vunpack.c.l.b16 %v5072
  %v5201 = vunpack.c.l.b16 %v5073
  %v5202 = vunpack.c.l.b16 %v5074
  %v5203 = vunpack.c.l.b16 %v5075
  %v5204 = vpack.c.b16 %v5141, %v5140
  %v5205 = vpack.c.b16 %v5143, %v5142
  %v5206 = vpack.c.b16 %v5145, %v5144
  %v5207 = vpack.c.b16 %v5147, %v5146
  %v5208 = vpack.c.b16 %v5149, %v5148
  %v5209 = vpack.c.b16 %v5151, %v5150
  %v5210 = vpack.c.b16 %v5153, %v5152
  %v5211 = vpack.c.b16 %v5155, %v5154
  %v5212 = vpack.c.b16 %v5157, %v5156
  %v5213 = vpack.c.b16 %v5159, %v5158
  %v5214 = vpack.c.b16 %v5161, %v5160
  %v5215 = vpack.c.b16 %v5163, %v5162
  %v5216 = vpack.c.b16 %v5165, %v5164
  %v5217 = vpack.c.b16 %v5167, %v5166
  %v5218 = vpack.c.b16 %v5169, %v5168
  %v5219 = vpack.c.b16 %v5171, %v5170
  %v5220 = vpack.c.b16 %v5173, %v5172
  %v5221 = vpack.c.b16 %v5175, %v5174
  %v5222 = vpack.c.b16 %v5177, %v5176
  %v5223 = vpack.c.b16 %v5179, %v5178
  %v5224 = vpack.c.b16 %v5181, %v5180
  %v5225 = vpack.c.b16 %v5183, %v5182
  %v5226 = vpack.c.b16 %v5185, %v5184
  %v5227 = vpack.c.b16 %v5187, %v5186
  %v5228 = vpack.c.b16 %v5189, %v5188
  %v5229 = vpack.c.b16 %v5191, %v5190
  %v5230 = vpack.c.b16 %v5193, %v5192
  %v5231 = vpack.c.b16 %v5195, %v5194
  %v5232 = vpack.c.b16 %v5197, %v5196
  %v5233 = vpack.c.b16 %v5199, %v5198
  %v5234 = vpack.c.b16 %v5201, %v5200
  %v5235 = vpack.c.b16 %v5203, %v5202
  %5268 = vmatprep.subr.bf16.mxu0 0
  %5269 = vmatpush1.bf16.msra.mxu0 %v5211
  %5270 = vmatprep.subr.bf16.mxu0 0
  %5271 = vmatpush1.bf16.msra.mxu0 %v5210
  %5272 = vmatprep.subr.bf16.mxu0 0
  %5273 = vmatpush1.bf16.msra.mxu0 %v5209
  %5274 = vmatprep.subr.bf16.mxu0 0
  %5275 = vmatpush1.bf16.msra.mxu0 %v5208
  %5276 = vmatprep.subr.bf16.mxu0 0
  %5277 = vmatpush1.bf16.msra.mxu0 %v5207
  %5278 = vmatprep.subr.bf16.mxu0 0
  %5279 = vmatpush1.bf16.msra.mxu0 %v5206
  %5280 = vmatprep.subr.bf16.mxu0 0
  %5281 = vmatpush1.bf16.msra.mxu0 %v5205
  %5282 = vmatprep.subr.bf16.mxu0 0
  %5283 = vmatpush1.bf16.msra.mxu0 %v5204
  %5284 = vmatprep.subr.bf16.mxu0 0
  %5285 = vmatpush2.bf16.msra.mxu0 %v5219
  %5286 = vmatprep.subr.bf16.mxu0 0
  %5287 = vmatpush2.bf16.msra.mxu0 %v5218
  %5288 = vmatprep.subr.bf16.mxu0 0
  %5289 = vmatpush2.bf16.msra.mxu0 %v5217
  %5290 = vmatprep.subr.bf16.mxu0 0
  %5291 = vmatpush2.bf16.msra.mxu0 %v5216
  %5292 = vmatprep.subr.bf16.mxu0 0
  %5293 = vmatpush2.bf16.msra.mxu0 %v5215
  %5294 = vmatprep.subr.bf16.mxu0 0
  %5295 = vmatpush2.bf16.msra.mxu0 %v5214
  %5296 = vmatprep.subr.bf16.mxu0 0
  %5297 = vmatpush2.bf16.msra.mxu0 %v5213
  %5298 = vmatprep.subr.bf16.mxu0 0
  %5299 = vmatpush2.bf16.msra.mxu0 %v5212
  %5300 = vmatprep.mubr.bf16.mxu0 %v272
  %5301 = vmatmul.mubr.bf16.gmra.mxu0 %v271
  %v5302 = vpop.f32.mrf.mxu0
  %v5303 = vadd.f32 0.0, %v5302
  %v5304 = vpop.f32.mrf.mxu0
  %v5305 = vpop.f32.mrf.mxu0
  %v5306 = vpop.f32.mrf.mxu0
  %5307 = vdwg.mxu0
  %5308 = vmatprep.subr.bf16.mxu0 0
  %5309 = vmatpush1.bf16.msra.mxu0 %v5227
  %5310 = vmatprep.subr.bf16.mxu0 0
  %5311 = vmatpush1.bf16.msra.mxu0 %v5226
  %5312 = vmatprep.subr.bf16.mxu0 0
  %5313 = vmatpush1.bf16.msra.mxu0 %v5225
  %5314 = vmatprep.subr.bf16.mxu0 0
  %5315 = vmatpush1.bf16.msra.mxu0 %v5224
  %5316 = vmatprep.subr.bf16.mxu0 0
  %5317 = vmatpush1.bf16.msra.mxu0 %v5223
  %5318 = vmatprep.subr.bf16.mxu0 0
  %5319 = vmatpush1.bf16.msra.mxu0 %v5222
  %5320 = vmatprep.subr.bf16.mxu0 0
  %5321 = vmatpush1.bf16.msra.mxu0 %v5221
  %5322 = vmatprep.subr.bf16.mxu0 0
  %5323 = vmatpush1.bf16.msra.mxu0 %v5220
  %5324 = vmatprep.subr.bf16.mxu0 0
  %5325 = vmatpush2.bf16.msra.mxu0 %v5235
  %5326 = vmatprep.subr.bf16.mxu0 0
  %5327 = vmatpush2.bf16.msra.mxu0 %v5234
  %5328 = vmatprep.subr.bf16.mxu0 0
  %5329 = vmatpush2.bf16.msra.mxu0 %v5233
  %5330 = vmatprep.subr.bf16.mxu0 0
  %5331 = vmatpush2.bf16.msra.mxu0 %v5232
  %5332 = vmatprep.subr.bf16.mxu0 0
  %5333 = vmatpush2.bf16.msra.mxu0 %v5231
  %5334 = vmatprep.subr.bf16.mxu0 0
  %5335 = vmatpush2.bf16.msra.mxu0 %v5230
  %5336 = vmatprep.subr.bf16.mxu0 0
  %5337 = vmatpush2.bf16.msra.mxu0 %v5229
  %5338 = vmatprep.subr.bf16.mxu0 0
  %5339 = vmatpush2.bf16.msra.mxu0 %v5228
  %5340 = vmatprep.mubr.bf16.mxu0 %v274
  %5341 = vmatmul.mubr.bf16.gmra.mxu0 %v273
  %v5342 = vpop.f32.mrf.mxu0
  %v5343 = vadd.f32 %v5303, %v5342
  %v5344 = vpop.f32.mrf.mxu0
  %v5345 = vpop.f32.mrf.mxu0
  %v5346 = vpop.f32.mrf.mxu0
  %5347 = vdwg.mxu0
  %v5348 = vpack.c.bf16 %v5343, %v5343
  %s5349 = scalar_lea.vmem %s4, 96
  %v5350 = vld [vmem:[%s5349] sm:$0xf]
  %v5351 = vld [vmem:[%s5349 + $0x4] sm:$0xf]
  %v5354 = vunpack.c.l.b16 %v5350
  %v5355 = vunpack.c.l.b16 %v5351
  %v5356 = vpack.c.b16 %v5355, %v5354
  %v5358 = vsel %vm960, %v5356, 0
  %v5361 = vsel %vm964, %v5348, 0
  %5363 = vmatprep.subr.bf16.mxu0 0
  %5364 = vmatpush1.bf16.msra.mxu0 0
  %5365 = vmatprep.subr.bf16.mxu0 0
  %5366 = vmatpush1.bf16.msra.mxu0 0
  %5367 = vmatprep.subr.bf16.mxu0 0
  %5368 = vmatpush1.bf16.msra.mxu0 0
  %5369 = vmatprep.subr.bf16.mxu0 0
  %5370 = vmatpush1.bf16.msra.mxu0 0
  %5371 = vmatprep.subr.bf16.mxu0 0
  %5372 = vmatpush1.bf16.msra.mxu0 0
  %5373 = vmatprep.subr.bf16.mxu0 0
  %5374 = vmatpush1.bf16.msra.mxu0 0
  %5375 = vmatprep.subr.bf16.mxu0 0
  %5376 = vmatpush1.bf16.msra.mxu0 0
  %5377 = vmatprep.subr.bf16.mxu0 0
  %5378 = vmatpush1.bf16.msra.mxu0 %v5361
  %5379 = vmatprep.subr.bf16.mxu0 0
  %5380 = vmatpush2.bf16.msra.mxu0 0
  %5381 = vmatprep.subr.bf16.mxu0 0
  %5382 = vmatpush2.bf16.msra.mxu0 0
  %5383 = vmatprep.subr.bf16.mxu0 0
  %5384 = vmatpush2.bf16.msra.mxu0 0
  %5385 = vmatprep.subr.bf16.mxu0 0
  %5386 = vmatpush2.bf16.msra.mxu0 0
  %5387 = vmatprep.subr.bf16.mxu0 0
  %5388 = vmatpush2.bf16.msra.mxu0 0
  %5389 = vmatprep.subr.bf16.mxu0 0
  %5390 = vmatpush2.bf16.msra.mxu0 0
  %5391 = vmatprep.subr.bf16.mxu0 0
  %5392 = vmatpush2.bf16.msra.mxu0 0
  %5393 = vmatprep.subr.bf16.mxu0 0
  %5394 = vmatpush2.bf16.msra.mxu0 0
  %5395 = vmatprep.mubr.bf16.mxu0 0
  %5396 = vmatmul.mubr.bf16.gmra.mxu0 %v5358
  %v5397 = vpop.f32.mrf.mxu0
  %v5398 = vadd.f32 0.0, %v5397
  %v5399 = vpop.f32.mrf.mxu0
  %v5400 = vpop.f32.mrf.mxu0
  %v5401 = vadd.f32 0.0, %v5400
  %v5402 = vpop.f32.mrf.mxu0
  %5403 = vdwg.mxu0
  %v5404 = vadd.f32 %v5009, %v5398
  %v5405 = vadd.f32 %v5010, %v5401
  %s5406 = scalar_lea.vmem %s5, 3328
  %v5407 = vld [vmem:[%s5406] sm:$0xf]
  %v5408 = vld [vmem:[%s5406 + $0x4] sm:$0xf]
  %v5409 = vld [vmem:[%s5406 + $0x8] sm:$0xf]
  %v5410 = vld [vmem:[%s5406 + $0xc] sm:$0xf]
  %v5411 = vld [vmem:[%s5406 + $0x10] sm:$0xf]
  %v5412 = vld [vmem:[%s5406 + $0x14] sm:$0xf]
  %v5413 = vld [vmem:[%s5406 + $0x18] sm:$0xf]
  %v5414 = vld [vmem:[%s5406 + $0x1c] sm:$0xf]
  %v5415 = vld [vmem:[%s5406 + $0x20] sm:$0xf]
  %v5416 = vld [vmem:[%s5406 + $0x24] sm:$0xf]
  %v5417 = vld [vmem:[%s5406 + $0x28] sm:$0xf]
  %v5418 = vld [vmem:[%s5406 + $0x2c] sm:$0xf]
  %v5419 = vld [vmem:[%s5406 + $0x30] sm:$0xf]
  %v5420 = vld [vmem:[%s5406 + $0x34] sm:$0xf]
  %v5421 = vld [vmem:[%s5406 + $0x38] sm:$0xf]
  %v5422 = vld [vmem:[%s5406 + $0x3c] sm:$0xf]
  %v5423 = vld [vmem:[%s5406 + $0x40] sm:$0xf]
  %v5424 = vld [vmem:[%s5406 + $0x44] sm:$0xf]
  %v5425 = vld [vmem:[%s5406 + $0x48] sm:$0xf]
  %v5426 = vld [vmem:[%s5406 + $0x4c] sm:$0xf]
  %v5427 = vld [vmem:[%s5406 + $0x50] sm:$0xf]
  %v5428 = vld [vmem:[%s5406 + $0x54] sm:$0xf]
  %v5429 = vld [vmem:[%s5406 + $0x58] sm:$0xf]
  %v5430 = vld [vmem:[%s5406 + $0x5c] sm:$0xf]
  %v5431 = vld [vmem:[%s5406 + $0x60] sm:$0xf]
  %v5432 = vld [vmem:[%s5406 + $0x64] sm:$0xf]
  %v5433 = vld [vmem:[%s5406 + $0x68] sm:$0xf]
  %v5434 = vld [vmem:[%s5406 + $0x6c] sm:$0xf]
  %v5435 = vld [vmem:[%s5406 + $0x70] sm:$0xf]
  %v5436 = vld [vmem:[%s5406 + $0x74] sm:$0xf]
  %v5437 = vld [vmem:[%s5406 + $0x78] sm:$0xf]
  %v5438 = vld [vmem:[%s5406 + $0x7c] sm:$0xf]
  %v5439 = vld [vmem:[%s5406 + $0x80] sm:$0xf]
  %v5440 = vld [vmem:[%s5406 + $0x84] sm:$0xf]
  %v5441 = vld [vmem:[%s5406 + $0x88] sm:$0xf]
  %v5442 = vld [vmem:[%s5406 + $0x8c] sm:$0xf]
  %v5443 = vld [vmem:[%s5406 + $0x90] sm:$0xf]
  %v5444 = vld [vmem:[%s5406 + $0x94] sm:$0xf]
  %v5445 = vld [vmem:[%s5406 + $0x98] sm:$0xf]
  %v5446 = vld [vmem:[%s5406 + $0x9c] sm:$0xf]
  %v5447 = vld [vmem:[%s5406 + $0xa0] sm:$0xf]
  %v5448 = vld [vmem:[%s5406 + $0xa4] sm:$0xf]
  %v5449 = vld [vmem:[%s5406 + $0xa8] sm:$0xf]
  %v5450 = vld [vmem:[%s5406 + $0xac] sm:$0xf]
  %v5451 = vld [vmem:[%s5406 + $0xb0] sm:$0xf]
  %v5452 = vld [vmem:[%s5406 + $0xb4] sm:$0xf]
  %v5453 = vld [vmem:[%s5406 + $0xb8] sm:$0xf]
  %v5454 = vld [vmem:[%s5406 + $0xbc] sm:$0xf]
  %v5455 = vld [vmem:[%s5406 + $0xc0] sm:$0xf]
  %v5456 = vld [vmem:[%s5406 + $0xc4] sm:$0xf]
  %v5457 = vld [vmem:[%s5406 + $0xc8] sm:$0xf]
  %v5458 = vld [vmem:[%s5406 + $0xcc] sm:$0xf]
  %v5459 = vld [vmem:[%s5406 + $0xd0] sm:$0xf]
  %v5460 = vld [vmem:[%s5406 + $0xd4] sm:$0xf]
  %v5461 = vld [vmem:[%s5406 + $0xd8] sm:$0xf]
  %v5462 = vld [vmem:[%s5406 + $0xdc] sm:$0xf]
  %v5463 = vld [vmem:[%s5406 + $0xe0] sm:$0xf]
  %v5464 = vld [vmem:[%s5406 + $0xe4] sm:$0xf]
  %v5465 = vld [vmem:[%s5406 + $0xe8] sm:$0xf]
  %v5466 = vld [vmem:[%s5406 + $0xec] sm:$0xf]
  %v5467 = vld [vmem:[%s5406 + $0xf0] sm:$0xf]
  %v5468 = vld [vmem:[%s5406 + $0xf4] sm:$0xf]
  %v5469 = vld [vmem:[%s5406 + $0xf8] sm:$0xf]
  %v5470 = vld [vmem:[%s5406 + $0xfc] sm:$0xf]
  %v5535 = vunpack.c.l.b16 %v5407
  %v5536 = vunpack.c.l.b16 %v5408
  %v5537 = vunpack.c.l.b16 %v5409
  %v5538 = vunpack.c.l.b16 %v5410
  %v5539 = vunpack.c.l.b16 %v5411
  %v5540 = vunpack.c.l.b16 %v5412
  %v5541 = vunpack.c.l.b16 %v5413
  %v5542 = vunpack.c.l.b16 %v5414
  %v5543 = vunpack.c.l.b16 %v5415
  %v5544 = vunpack.c.l.b16 %v5416
  %v5545 = vunpack.c.l.b16 %v5417
  %v5546 = vunpack.c.l.b16 %v5418
  %v5547 = vunpack.c.l.b16 %v5419
  %v5548 = vunpack.c.l.b16 %v5420
  %v5549 = vunpack.c.l.b16 %v5421
  %v5550 = vunpack.c.l.b16 %v5422
  %v5551 = vunpack.c.l.b16 %v5423
  %v5552 = vunpack.c.l.b16 %v5424
  %v5553 = vunpack.c.l.b16 %v5425
  %v5554 = vunpack.c.l.b16 %v5426
  %v5555 = vunpack.c.l.b16 %v5427
  %v5556 = vunpack.c.l.b16 %v5428
  %v5557 = vunpack.c.l.b16 %v5429
  %v5558 = vunpack.c.l.b16 %v5430
  %v5559 = vunpack.c.l.b16 %v5431
  %v5560 = vunpack.c.l.b16 %v5432
  %v5561 = vunpack.c.l.b16 %v5433
  %v5562 = vunpack.c.l.b16 %v5434
  %v5563 = vunpack.c.l.b16 %v5435
  %v5564 = vunpack.c.l.b16 %v5436
  %v5565 = vunpack.c.l.b16 %v5437
  %v5566 = vunpack.c.l.b16 %v5438
  %v5567 = vunpack.c.l.b16 %v5439
  %v5568 = vunpack.c.l.b16 %v5440
  %v5569 = vunpack.c.l.b16 %v5441
  %v5570 = vunpack.c.l.b16 %v5442
  %v5571 = vunpack.c.l.b16 %v5443
  %v5572 = vunpack.c.l.b16 %v5444
  %v5573 = vunpack.c.l.b16 %v5445
  %v5574 = vunpack.c.l.b16 %v5446
  %v5575 = vunpack.c.l.b16 %v5447
  %v5576 = vunpack.c.l.b16 %v5448
  %v5577 = vunpack.c.l.b16 %v5449
  %v5578 = vunpack.c.l.b16 %v5450
  %v5579 = vunpack.c.l.b16 %v5451
  %v5580 = vunpack.c.l.b16 %v5452
  %v5581 = vunpack.c.l.b16 %v5453
  %v5582 = vunpack.c.l.b16 %v5454
  %v5583 = vunpack.c.l.b16 %v5455
  %v5584 = vunpack.c.l.b16 %v5456
  %v5585 = vunpack.c.l.b16 %v5457
  %v5586 = vunpack.c.l.b16 %v5458
  %v5587 = vunpack.c.l.b16 %v5459
  %v5588 = vunpack.c.l.b16 %v5460
  %v5589 = vunpack.c.l.b16 %v5461
  %v5590 = vunpack.c.l.b16 %v5462
  %v5591 = vunpack.c.l.b16 %v5463
  %v5592 = vunpack.c.l.b16 %v5464
  %v5593 = vunpack.c.l.b16 %v5465
  %v5594 = vunpack.c.l.b16 %v5466
  %v5595 = vunpack.c.l.b16 %v5467
  %v5596 = vunpack.c.l.b16 %v5468
  %v5597 = vunpack.c.l.b16 %v5469
  %v5598 = vunpack.c.l.b16 %v5470
  %v5599 = vpack.c.b16 %v5536, %v5535
  %v5600 = vpack.c.b16 %v5538, %v5537
  %v5601 = vpack.c.b16 %v5540, %v5539
  %v5602 = vpack.c.b16 %v5542, %v5541
  %v5603 = vpack.c.b16 %v5544, %v5543
  %v5604 = vpack.c.b16 %v5546, %v5545
  %v5605 = vpack.c.b16 %v5548, %v5547
  %v5606 = vpack.c.b16 %v5550, %v5549
  %v5607 = vpack.c.b16 %v5552, %v5551
  %v5608 = vpack.c.b16 %v5554, %v5553
  %v5609 = vpack.c.b16 %v5556, %v5555
  %v5610 = vpack.c.b16 %v5558, %v5557
  %v5611 = vpack.c.b16 %v5560, %v5559
  %v5612 = vpack.c.b16 %v5562, %v5561
  %v5613 = vpack.c.b16 %v5564, %v5563
  %v5614 = vpack.c.b16 %v5566, %v5565
  %v5615 = vpack.c.b16 %v5568, %v5567
  %v5616 = vpack.c.b16 %v5570, %v5569
  %v5617 = vpack.c.b16 %v5572, %v5571
  %v5618 = vpack.c.b16 %v5574, %v5573
  %v5619 = vpack.c.b16 %v5576, %v5575
  %v5620 = vpack.c.b16 %v5578, %v5577
  %v5621 = vpack.c.b16 %v5580, %v5579
  %v5622 = vpack.c.b16 %v5582, %v5581
  %v5623 = vpack.c.b16 %v5584, %v5583
  %v5624 = vpack.c.b16 %v5586, %v5585
  %v5625 = vpack.c.b16 %v5588, %v5587
  %v5626 = vpack.c.b16 %v5590, %v5589
  %v5627 = vpack.c.b16 %v5592, %v5591
  %v5628 = vpack.c.b16 %v5594, %v5593
  %v5629 = vpack.c.b16 %v5596, %v5595
  %v5630 = vpack.c.b16 %v5598, %v5597
  %5663 = vmatprep.subr.bf16.mxu0 0
  %5664 = vmatpush1.bf16.msra.mxu0 %v5606
  %5665 = vmatprep.subr.bf16.mxu0 0
  %5666 = vmatpush1.bf16.msra.mxu0 %v5605
  %5667 = vmatprep.subr.bf16.mxu0 0
  %5668 = vmatpush1.bf16.msra.mxu0 %v5604
  %5669 = vmatprep.subr.bf16.mxu0 0
  %5670 = vmatpush1.bf16.msra.mxu0 %v5603
  %5671 = vmatprep.subr.bf16.mxu0 0
  %5672 = vmatpush1.bf16.msra.mxu0 %v5602
  %5673 = vmatprep.subr.bf16.mxu0 0
  %5674 = vmatpush1.bf16.msra.mxu0 %v5601
  %5675 = vmatprep.subr.bf16.mxu0 0
  %5676 = vmatpush1.bf16.msra.mxu0 %v5600
  %5677 = vmatprep.subr.bf16.mxu0 0
  %5678 = vmatpush1.bf16.msra.mxu0 %v5599
  %5679 = vmatprep.subr.bf16.mxu0 0
  %5680 = vmatpush2.bf16.msra.mxu0 %v5614
  %5681 = vmatprep.subr.bf16.mxu0 0
  %5682 = vmatpush2.bf16.msra.mxu0 %v5613
  %5683 = vmatprep.subr.bf16.mxu0 0
  %5684 = vmatpush2.bf16.msra.mxu0 %v5612
  %5685 = vmatprep.subr.bf16.mxu0 0
  %5686 = vmatpush2.bf16.msra.mxu0 %v5611
  %5687 = vmatprep.subr.bf16.mxu0 0
  %5688 = vmatpush2.bf16.msra.mxu0 %v5610
  %5689 = vmatprep.subr.bf16.mxu0 0
  %5690 = vmatpush2.bf16.msra.mxu0 %v5609
  %5691 = vmatprep.subr.bf16.mxu0 0
  %5692 = vmatpush2.bf16.msra.mxu0 %v5608
  %5693 = vmatprep.subr.bf16.mxu0 0
  %5694 = vmatpush2.bf16.msra.mxu0 %v5607
  %5695 = vmatprep.mubr.bf16.mxu0 %v272
  %5696 = vmatmul.mubr.bf16.gmra.mxu0 %v271
  %v5697 = vpop.f32.mrf.mxu0
  %v5698 = vadd.f32 0.0, %v5697
  %v5699 = vpop.f32.mrf.mxu0
  %v5700 = vpop.f32.mrf.mxu0
  %v5701 = vpop.f32.mrf.mxu0
  %5702 = vdwg.mxu0
  %5703 = vmatprep.subr.bf16.mxu0 0
  %5704 = vmatpush1.bf16.msra.mxu0 %v5622
  %5705 = vmatprep.subr.bf16.mxu0 0
  %5706 = vmatpush1.bf16.msra.mxu0 %v5621
  %5707 = vmatprep.subr.bf16.mxu0 0
  %5708 = vmatpush1.bf16.msra.mxu0 %v5620
  %5709 = vmatprep.subr.bf16.mxu0 0
  %5710 = vmatpush1.bf16.msra.mxu0 %v5619
  %5711 = vmatprep.subr.bf16.mxu0 0
  %5712 = vmatpush1.bf16.msra.mxu0 %v5618
  %5713 = vmatprep.subr.bf16.mxu0 0
  %5714 = vmatpush1.bf16.msra.mxu0 %v5617
  %5715 = vmatprep.subr.bf16.mxu0 0
  %5716 = vmatpush1.bf16.msra.mxu0 %v5616
  %5717 = vmatprep.subr.bf16.mxu0 0
  %5718 = vmatpush1.bf16.msra.mxu0 %v5615
  %5719 = vmatprep.subr.bf16.mxu0 0
  %5720 = vmatpush2.bf16.msra.mxu0 %v5630
  %5721 = vmatprep.subr.bf16.mxu0 0
  %5722 = vmatpush2.bf16.msra.mxu0 %v5629
  %5723 = vmatprep.subr.bf16.mxu0 0
  %5724 = vmatpush2.bf16.msra.mxu0 %v5628
  %5725 = vmatprep.subr.bf16.mxu0 0
  %5726 = vmatpush2.bf16.msra.mxu0 %v5627
  %5727 = vmatprep.subr.bf16.mxu0 0
  %5728 = vmatpush2.bf16.msra.mxu0 %v5626
  %5729 = vmatprep.subr.bf16.mxu0 0
  %5730 = vmatpush2.bf16.msra.mxu0 %v5625
  %5731 = vmatprep.subr.bf16.mxu0 0
  %5732 = vmatpush2.bf16.msra.mxu0 %v5624
  %5733 = vmatprep.subr.bf16.mxu0 0
  %5734 = vmatpush2.bf16.msra.mxu0 %v5623
  %5735 = vmatprep.mubr.bf16.mxu0 %v274
  %5736 = vmatmul.mubr.bf16.gmra.mxu0 %v273
  %v5737 = vpop.f32.mrf.mxu0
  %v5738 = vadd.f32 %v5698, %v5737
  %v5739 = vpop.f32.mrf.mxu0
  %v5740 = vpop.f32.mrf.mxu0
  %v5741 = vpop.f32.mrf.mxu0
  %5742 = vdwg.mxu0
  %v5743 = vpack.c.bf16 %v5738, %v5738
  %s5744 = scalar_lea.vmem %s4, 104
  %v5745 = vld [vmem:[%s5744] sm:$0xf]
  %v5746 = vld [vmem:[%s5744 + $0x4] sm:$0xf]
  %v5749 = vunpack.c.l.b16 %v5745
  %v5750 = vunpack.c.l.b16 %v5746
  %v5751 = vpack.c.b16 %v5750, %v5749
  %v5753 = vsel %vm960, %v5751, 0
  %v5756 = vsel %vm964, %v5743, 0
  %5758 = vmatprep.subr.bf16.mxu0 0
  %5759 = vmatpush1.bf16.msra.mxu0 0
  %5760 = vmatprep.subr.bf16.mxu0 0
  %5761 = vmatpush1.bf16.msra.mxu0 0
  %5762 = vmatprep.subr.bf16.mxu0 0
  %5763 = vmatpush1.bf16.msra.mxu0 0
  %5764 = vmatprep.subr.bf16.mxu0 0
  %5765 = vmatpush1.bf16.msra.mxu0 0
  %5766 = vmatprep.subr.bf16.mxu0 0
  %5767 = vmatpush1.bf16.msra.mxu0 0
  %5768 = vmatprep.subr.bf16.mxu0 0
  %5769 = vmatpush1.bf16.msra.mxu0 0
  %5770 = vmatprep.subr.bf16.mxu0 0
  %5771 = vmatpush1.bf16.msra.mxu0 0
  %5772 = vmatprep.subr.bf16.mxu0 0
  %5773 = vmatpush1.bf16.msra.mxu0 %v5756
  %5774 = vmatprep.subr.bf16.mxu0 0
  %5775 = vmatpush2.bf16.msra.mxu0 0
  %5776 = vmatprep.subr.bf16.mxu0 0
  %5777 = vmatpush2.bf16.msra.mxu0 0
  %5778 = vmatprep.subr.bf16.mxu0 0
  %5779 = vmatpush2.bf16.msra.mxu0 0
  %5780 = vmatprep.subr.bf16.mxu0 0
  %5781 = vmatpush2.bf16.msra.mxu0 0
  %5782 = vmatprep.subr.bf16.mxu0 0
  %5783 = vmatpush2.bf16.msra.mxu0 0
  %5784 = vmatprep.subr.bf16.mxu0 0
  %5785 = vmatpush2.bf16.msra.mxu0 0
  %5786 = vmatprep.subr.bf16.mxu0 0
  %5787 = vmatpush2.bf16.msra.mxu0 0
  %5788 = vmatprep.subr.bf16.mxu0 0
  %5789 = vmatpush2.bf16.msra.mxu0 0
  %5790 = vmatprep.mubr.bf16.mxu0 0
  %5791 = vmatmul.mubr.bf16.gmra.mxu0 %v5753
  %v5792 = vpop.f32.mrf.mxu0
  %v5793 = vadd.f32 0.0, %v5792
  %v5794 = vpop.f32.mrf.mxu0
  %v5795 = vpop.f32.mrf.mxu0
  %v5796 = vadd.f32 0.0, %v5795
  %v5797 = vpop.f32.mrf.mxu0
  %5798 = vdwg.mxu0
  %v5799 = vadd.f32 %v5404, %v5793
  %v5800 = vadd.f32 %v5405, %v5796
  %s5801 = scalar_lea.vmem %s5, 3584
  %v5802 = vld [vmem:[%s5801] sm:$0xf]
  %v5803 = vld [vmem:[%s5801 + $0x4] sm:$0xf]
  %v5804 = vld [vmem:[%s5801 + $0x8] sm:$0xf]
  %v5805 = vld [vmem:[%s5801 + $0xc] sm:$0xf]
  %v5806 = vld [vmem:[%s5801 + $0x10] sm:$0xf]
  %v5807 = vld [vmem:[%s5801 + $0x14] sm:$0xf]
  %v5808 = vld [vmem:[%s5801 + $0x18] sm:$0xf]
  %v5809 = vld [vmem:[%s5801 + $0x1c] sm:$0xf]
  %v5810 = vld [vmem:[%s5801 + $0x20] sm:$0xf]
  %v5811 = vld [vmem:[%s5801 + $0x24] sm:$0xf]
  %v5812 = vld [vmem:[%s5801 + $0x28] sm:$0xf]
  %v5813 = vld [vmem:[%s5801 + $0x2c] sm:$0xf]
  %v5814 = vld [vmem:[%s5801 + $0x30] sm:$0xf]
  %v5815 = vld [vmem:[%s5801 + $0x34] sm:$0xf]
  %v5816 = vld [vmem:[%s5801 + $0x38] sm:$0xf]
  %v5817 = vld [vmem:[%s5801 + $0x3c] sm:$0xf]
  %v5818 = vld [vmem:[%s5801 + $0x40] sm:$0xf]
  %v5819 = vld [vmem:[%s5801 + $0x44] sm:$0xf]
  %v5820 = vld [vmem:[%s5801 + $0x48] sm:$0xf]
  %v5821 = vld [vmem:[%s5801 + $0x4c] sm:$0xf]
  %v5822 = vld [vmem:[%s5801 + $0x50] sm:$0xf]
  %v5823 = vld [vmem:[%s5801 + $0x54] sm:$0xf]
  %v5824 = vld [vmem:[%s5801 + $0x58] sm:$0xf]
  %v5825 = vld [vmem:[%s5801 + $0x5c] sm:$0xf]
  %v5826 = vld [vmem:[%s5801 + $0x60] sm:$0xf]
  %v5827 = vld [vmem:[%s5801 + $0x64] sm:$0xf]
  %v5828 = vld [vmem:[%s5801 + $0x68] sm:$0xf]
  %v5829 = vld [vmem:[%s5801 + $0x6c] sm:$0xf]
  %v5830 = vld [vmem:[%s5801 + $0x70] sm:$0xf]
  %v5831 = vld [vmem:[%s5801 + $0x74] sm:$0xf]
  %v5832 = vld [vmem:[%s5801 + $0x78] sm:$0xf]
  %v5833 = vld [vmem:[%s5801 + $0x7c] sm:$0xf]
  %v5834 = vld [vmem:[%s5801 + $0x80] sm:$0xf]
  %v5835 = vld [vmem:[%s5801 + $0x84] sm:$0xf]
  %v5836 = vld [vmem:[%s5801 + $0x88] sm:$0xf]
  %v5837 = vld [vmem:[%s5801 + $0x8c] sm:$0xf]
  %v5838 = vld [vmem:[%s5801 + $0x90] sm:$0xf]
  %v5839 = vld [vmem:[%s5801 + $0x94] sm:$0xf]
  %v5840 = vld [vmem:[%s5801 + $0x98] sm:$0xf]
  %v5841 = vld [vmem:[%s5801 + $0x9c] sm:$0xf]
  %v5842 = vld [vmem:[%s5801 + $0xa0] sm:$0xf]
  %v5843 = vld [vmem:[%s5801 + $0xa4] sm:$0xf]
  %v5844 = vld [vmem:[%s5801 + $0xa8] sm:$0xf]
  %v5845 = vld [vmem:[%s5801 + $0xac] sm:$0xf]
  %v5846 = vld [vmem:[%s5801 + $0xb0] sm:$0xf]
  %v5847 = vld [vmem:[%s5801 + $0xb4] sm:$0xf]
  %v5848 = vld [vmem:[%s5801 + $0xb8] sm:$0xf]
  %v5849 = vld [vmem:[%s5801 + $0xbc] sm:$0xf]
  %v5850 = vld [vmem:[%s5801 + $0xc0] sm:$0xf]
  %v5851 = vld [vmem:[%s5801 + $0xc4] sm:$0xf]
  %v5852 = vld [vmem:[%s5801 + $0xc8] sm:$0xf]
  %v5853 = vld [vmem:[%s5801 + $0xcc] sm:$0xf]
  %v5854 = vld [vmem:[%s5801 + $0xd0] sm:$0xf]
  %v5855 = vld [vmem:[%s5801 + $0xd4] sm:$0xf]
  %v5856 = vld [vmem:[%s5801 + $0xd8] sm:$0xf]
  %v5857 = vld [vmem:[%s5801 + $0xdc] sm:$0xf]
  %v5858 = vld [vmem:[%s5801 + $0xe0] sm:$0xf]
  %v5859 = vld [vmem:[%s5801 + $0xe4] sm:$0xf]
  %v5860 = vld [vmem:[%s5801 + $0xe8] sm:$0xf]
  %v5861 = vld [vmem:[%s5801 + $0xec] sm:$0xf]
  %v5862 = vld [vmem:[%s5801 + $0xf0] sm:$0xf]
  %v5863 = vld [vmem:[%s5801 + $0xf4] sm:$0xf]
  %v5864 = vld [vmem:[%s5801 + $0xf8] sm:$0xf]
  %v5865 = vld [vmem:[%s5801 + $0xfc] sm:$0xf]
  %v5930 = vunpack.c.l.b16 %v5802
  %v5931 = vunpack.c.l.b16 %v5803
  %v5932 = vunpack.c.l.b16 %v5804
  %v5933 = vunpack.c.l.b16 %v5805
  %v5934 = vunpack.c.l.b16 %v5806
  %v5935 = vunpack.c.l.b16 %v5807
  %v5936 = vunpack.c.l.b16 %v5808
  %v5937 = vunpack.c.l.b16 %v5809
  %v5938 = vunpack.c.l.b16 %v5810
  %v5939 = vunpack.c.l.b16 %v5811
  %v5940 = vunpack.c.l.b16 %v5812
  %v5941 = vunpack.c.l.b16 %v5813
  %v5942 = vunpack.c.l.b16 %v5814
  %v5943 = vunpack.c.l.b16 %v5815
  %v5944 = vunpack.c.l.b16 %v5816
  %v5945 = vunpack.c.l.b16 %v5817
  %v5946 = vunpack.c.l.b16 %v5818
  %v5947 = vunpack.c.l.b16 %v5819
  %v5948 = vunpack.c.l.b16 %v5820
  %v5949 = vunpack.c.l.b16 %v5821
  %v5950 = vunpack.c.l.b16 %v5822
  %v5951 = vunpack.c.l.b16 %v5823
  %v5952 = vunpack.c.l.b16 %v5824
  %v5953 = vunpack.c.l.b16 %v5825
  %v5954 = vunpack.c.l.b16 %v5826
  %v5955 = vunpack.c.l.b16 %v5827
  %v5956 = vunpack.c.l.b16 %v5828
  %v5957 = vunpack.c.l.b16 %v5829
  %v5958 = vunpack.c.l.b16 %v5830
  %v5959 = vunpack.c.l.b16 %v5831
  %v5960 = vunpack.c.l.b16 %v5832
  %v5961 = vunpack.c.l.b16 %v5833
  %v5962 = vunpack.c.l.b16 %v5834
  %v5963 = vunpack.c.l.b16 %v5835
  %v5964 = vunpack.c.l.b16 %v5836
  %v5965 = vunpack.c.l.b16 %v5837
  %v5966 = vunpack.c.l.b16 %v5838
  %v5967 = vunpack.c.l.b16 %v5839
  %v5968 = vunpack.c.l.b16 %v5840
  %v5969 = vunpack.c.l.b16 %v5841
  %v5970 = vunpack.c.l.b16 %v5842
  %v5971 = vunpack.c.l.b16 %v5843
  %v5972 = vunpack.c.l.b16 %v5844
  %v5973 = vunpack.c.l.b16 %v5845
  %v5974 = vunpack.c.l.b16 %v5846
  %v5975 = vunpack.c.l.b16 %v5847
  %v5976 = vunpack.c.l.b16 %v5848
  %v5977 = vunpack.c.l.b16 %v5849
  %v5978 = vunpack.c.l.b16 %v5850
  %v5979 = vunpack.c.l.b16 %v5851
  %v5980 = vunpack.c.l.b16 %v5852
  %v5981 = vunpack.c.l.b16 %v5853
  %v5982 = vunpack.c.l.b16 %v5854
  %v5983 = vunpack.c.l.b16 %v5855
  %v5984 = vunpack.c.l.b16 %v5856
  %v5985 = vunpack.c.l.b16 %v5857
  %v5986 = vunpack.c.l.b16 %v5858
  %v5987 = vunpack.c.l.b16 %v5859
  %v5988 = vunpack.c.l.b16 %v5860
  %v5989 = vunpack.c.l.b16 %v5861
  %v5990 = vunpack.c.l.b16 %v5862
  %v5991 = vunpack.c.l.b16 %v5863
  %v5992 = vunpack.c.l.b16 %v5864
  %v5993 = vunpack.c.l.b16 %v5865
  %v5994 = vpack.c.b16 %v5931, %v5930
  %v5995 = vpack.c.b16 %v5933, %v5932
  %v5996 = vpack.c.b16 %v5935, %v5934
  %v5997 = vpack.c.b16 %v5937, %v5936
  %v5998 = vpack.c.b16 %v5939, %v5938
  %v5999 = vpack.c.b16 %v5941, %v5940
  %v6000 = vpack.c.b16 %v5943, %v5942
  %v6001 = vpack.c.b16 %v5945, %v5944
  %v6002 = vpack.c.b16 %v5947, %v5946
  %v6003 = vpack.c.b16 %v5949, %v5948
  %v6004 = vpack.c.b16 %v5951, %v5950
  %v6005 = vpack.c.b16 %v5953, %v5952
  %v6006 = vpack.c.b16 %v5955, %v5954
  %v6007 = vpack.c.b16 %v5957, %v5956
  %v6008 = vpack.c.b16 %v5959, %v5958
  %v6009 = vpack.c.b16 %v5961, %v5960
  %v6010 = vpack.c.b16 %v5963, %v5962
  %v6011 = vpack.c.b16 %v5965, %v5964
  %v6012 = vpack.c.b16 %v5967, %v5966
  %v6013 = vpack.c.b16 %v5969, %v5968
  %v6014 = vpack.c.b16 %v5971, %v5970
  %v6015 = vpack.c.b16 %v5973, %v5972
  %v6016 = vpack.c.b16 %v5975, %v5974
  %v6017 = vpack.c.b16 %v5977, %v5976
  %v6018 = vpack.c.b16 %v5979, %v5978
  %v6019 = vpack.c.b16 %v5981, %v5980
  %v6020 = vpack.c.b16 %v5983, %v5982
  %v6021 = vpack.c.b16 %v5985, %v5984
  %v6022 = vpack.c.b16 %v5987, %v5986
  %v6023 = vpack.c.b16 %v5989, %v5988
  %v6024 = vpack.c.b16 %v5991, %v5990
  %v6025 = vpack.c.b16 %v5993, %v5992
  %6058 = vmatprep.subr.bf16.mxu0 0
  %6059 = vmatpush1.bf16.msra.mxu0 %v6001
  %6060 = vmatprep.subr.bf16.mxu0 0
  %6061 = vmatpush1.bf16.msra.mxu0 %v6000
  %6062 = vmatprep.subr.bf16.mxu0 0
  %6063 = vmatpush1.bf16.msra.mxu0 %v5999
  %6064 = vmatprep.subr.bf16.mxu0 0
  %6065 = vmatpush1.bf16.msra.mxu0 %v5998
  %6066 = vmatprep.subr.bf16.mxu0 0
  %6067 = vmatpush1.bf16.msra.mxu0 %v5997
  %6068 = vmatprep.subr.bf16.mxu0 0
  %6069 = vmatpush1.bf16.msra.mxu0 %v5996
  %6070 = vmatprep.subr.bf16.mxu0 0
  %6071 = vmatpush1.bf16.msra.mxu0 %v5995
  %6072 = vmatprep.subr.bf16.mxu0 0
  %6073 = vmatpush1.bf16.msra.mxu0 %v5994
  %6074 = vmatprep.subr.bf16.mxu0 0
  %6075 = vmatpush2.bf16.msra.mxu0 %v6009
  %6076 = vmatprep.subr.bf16.mxu0 0
  %6077 = vmatpush2.bf16.msra.mxu0 %v6008
  %6078 = vmatprep.subr.bf16.mxu0 0
  %6079 = vmatpush2.bf16.msra.mxu0 %v6007
  %6080 = vmatprep.subr.bf16.mxu0 0
  %6081 = vmatpush2.bf16.msra.mxu0 %v6006
  %6082 = vmatprep.subr.bf16.mxu0 0
  %6083 = vmatpush2.bf16.msra.mxu0 %v6005
  %6084 = vmatprep.subr.bf16.mxu0 0
  %6085 = vmatpush2.bf16.msra.mxu0 %v6004
  %6086 = vmatprep.subr.bf16.mxu0 0
  %6087 = vmatpush2.bf16.msra.mxu0 %v6003
  %6088 = vmatprep.subr.bf16.mxu0 0
  %6089 = vmatpush2.bf16.msra.mxu0 %v6002
  %6090 = vmatprep.mubr.bf16.mxu0 %v272
  %6091 = vmatmul.mubr.bf16.gmra.mxu0 %v271
  %v6092 = vpop.f32.mrf.mxu0
  %v6093 = vadd.f32 0.0, %v6092
  %v6094 = vpop.f32.mrf.mxu0
  %v6095 = vpop.f32.mrf.mxu0
  %v6096 = vpop.f32.mrf.mxu0
  %6097 = vdwg.mxu0
  %6098 = vmatprep.subr.bf16.mxu0 0
  %6099 = vmatpush1.bf16.msra.mxu0 %v6017
  %6100 = vmatprep.subr.bf16.mxu0 0
  %6101 = vmatpush1.bf16.msra.mxu0 %v6016
  %6102 = vmatprep.subr.bf16.mxu0 0
  %6103 = vmatpush1.bf16.msra.mxu0 %v6015
  %6104 = vmatprep.subr.bf16.mxu0 0
  %6105 = vmatpush1.bf16.msra.mxu0 %v6014
  %6106 = vmatprep.subr.bf16.mxu0 0
  %6107 = vmatpush1.bf16.msra.mxu0 %v6013
  %6108 = vmatprep.subr.bf16.mxu0 0
  %6109 = vmatpush1.bf16.msra.mxu0 %v6012
  %6110 = vmatprep.subr.bf16.mxu0 0
  %6111 = vmatpush1.bf16.msra.mxu0 %v6011
  %6112 = vmatprep.subr.bf16.mxu0 0
  %6113 = vmatpush1.bf16.msra.mxu0 %v6010
  %6114 = vmatprep.subr.bf16.mxu0 0
  %6115 = vmatpush2.bf16.msra.mxu0 %v6025
  %6116 = vmatprep.subr.bf16.mxu0 0
  %6117 = vmatpush2.bf16.msra.mxu0 %v6024
  %6118 = vmatprep.subr.bf16.mxu0 0
  %6119 = vmatpush2.bf16.msra.mxu0 %v6023
  %6120 = vmatprep.subr.bf16.mxu0 0
  %6121 = vmatpush2.bf16.msra.mxu0 %v6022
  %6122 = vmatprep.subr.bf16.mxu0 0
  %6123 = vmatpush2.bf16.msra.mxu0 %v6021
  %6124 = vmatprep.subr.bf16.mxu0 0
  %6125 = vmatpush2.bf16.msra.mxu0 %v6020
  %6126 = vmatprep.subr.bf16.mxu0 0
  %6127 = vmatpush2.bf16.msra.mxu0 %v6019
  %6128 = vmatprep.subr.bf16.mxu0 0
  %6129 = vmatpush2.bf16.msra.mxu0 %v6018
  %6130 = vmatprep.mubr.bf16.mxu0 %v274
  %6131 = vmatmul.mubr.bf16.gmra.mxu0 %v273
  %v6132 = vpop.f32.mrf.mxu0
  %v6133 = vadd.f32 %v6093, %v6132
  %v6134 = vpop.f32.mrf.mxu0
  %v6135 = vpop.f32.mrf.mxu0
  %v6136 = vpop.f32.mrf.mxu0
  %6137 = vdwg.mxu0
  %v6138 = vpack.c.bf16 %v6133, %v6133
  %s6139 = scalar_lea.vmem %s4, 112
  %v6140 = vld [vmem:[%s6139] sm:$0xf]
  %v6141 = vld [vmem:[%s6139 + $0x4] sm:$0xf]
  %v6144 = vunpack.c.l.b16 %v6140
  %v6145 = vunpack.c.l.b16 %v6141
  %v6146 = vpack.c.b16 %v6145, %v6144
  %v6148 = vsel %vm960, %v6146, 0
  %v6151 = vsel %vm964, %v6138, 0
  %6153 = vmatprep.subr.bf16.mxu0 0
  %6154 = vmatpush1.bf16.msra.mxu0 0
  %6155 = vmatprep.subr.bf16.mxu0 0
  %6156 = vmatpush1.bf16.msra.mxu0 0
  %6157 = vmatprep.subr.bf16.mxu0 0
  %6158 = vmatpush1.bf16.msra.mxu0 0
  %6159 = vmatprep.subr.bf16.mxu0 0
  %6160 = vmatpush1.bf16.msra.mxu0 0
  %6161 = vmatprep.subr.bf16.mxu0 0
  %6162 = vmatpush1.bf16.msra.mxu0 0
  %6163 = vmatprep.subr.bf16.mxu0 0
  %6164 = vmatpush1.bf16.msra.mxu0 0
  %6165 = vmatprep.subr.bf16.mxu0 0
  %6166 = vmatpush1.bf16.msra.mxu0 0
  %6167 = vmatprep.subr.bf16.mxu0 0
  %6168 = vmatpush1.bf16.msra.mxu0 %v6151
  %6169 = vmatprep.subr.bf16.mxu0 0
  %6170 = vmatpush2.bf16.msra.mxu0 0
  %6171 = vmatprep.subr.bf16.mxu0 0
  %6172 = vmatpush2.bf16.msra.mxu0 0
  %6173 = vmatprep.subr.bf16.mxu0 0
  %6174 = vmatpush2.bf16.msra.mxu0 0
  %6175 = vmatprep.subr.bf16.mxu0 0
  %6176 = vmatpush2.bf16.msra.mxu0 0
  %6177 = vmatprep.subr.bf16.mxu0 0
  %6178 = vmatpush2.bf16.msra.mxu0 0
  %6179 = vmatprep.subr.bf16.mxu0 0
  %6180 = vmatpush2.bf16.msra.mxu0 0
  %6181 = vmatprep.subr.bf16.mxu0 0
  %6182 = vmatpush2.bf16.msra.mxu0 0
  %6183 = vmatprep.subr.bf16.mxu0 0
  %6184 = vmatpush2.bf16.msra.mxu0 0
  %6185 = vmatprep.mubr.bf16.mxu0 0
  %6186 = vmatmul.mubr.bf16.gmra.mxu0 %v6148
  %v6187 = vpop.f32.mrf.mxu0
  %v6188 = vadd.f32 0.0, %v6187
  %v6189 = vpop.f32.mrf.mxu0
  %v6190 = vpop.f32.mrf.mxu0
  %v6191 = vadd.f32 0.0, %v6190
  %v6192 = vpop.f32.mrf.mxu0
  %6193 = vdwg.mxu0
  %v6194 = vadd.f32 %v5799, %v6188
  %v6195 = vadd.f32 %v5800, %v6191
  %s6196 = scalar_lea.vmem %s5, 3840
  %v6197 = vld [vmem:[%s6196] sm:$0xf]
  %v6198 = vld [vmem:[%s6196 + $0x4] sm:$0xf]
  %v6199 = vld [vmem:[%s6196 + $0x8] sm:$0xf]
  %v6200 = vld [vmem:[%s6196 + $0xc] sm:$0xf]
  %v6201 = vld [vmem:[%s6196 + $0x10] sm:$0xf]
  %v6202 = vld [vmem:[%s6196 + $0x14] sm:$0xf]
  %v6203 = vld [vmem:[%s6196 + $0x18] sm:$0xf]
  %v6204 = vld [vmem:[%s6196 + $0x1c] sm:$0xf]
  %v6205 = vld [vmem:[%s6196 + $0x20] sm:$0xf]
  %v6206 = vld [vmem:[%s6196 + $0x24] sm:$0xf]
  %v6207 = vld [vmem:[%s6196 + $0x28] sm:$0xf]
  %v6208 = vld [vmem:[%s6196 + $0x2c] sm:$0xf]
  %v6209 = vld [vmem:[%s6196 + $0x30] sm:$0xf]
  %v6210 = vld [vmem:[%s6196 + $0x34] sm:$0xf]
  %v6211 = vld [vmem:[%s6196 + $0x38] sm:$0xf]
  %v6212 = vld [vmem:[%s6196 + $0x3c] sm:$0xf]
  %v6213 = vld [vmem:[%s6196 + $0x40] sm:$0xf]
  %v6214 = vld [vmem:[%s6196 + $0x44] sm:$0xf]
  %v6215 = vld [vmem:[%s6196 + $0x48] sm:$0xf]
  %v6216 = vld [vmem:[%s6196 + $0x4c] sm:$0xf]
  %v6217 = vld [vmem:[%s6196 + $0x50] sm:$0xf]
  %v6218 = vld [vmem:[%s6196 + $0x54] sm:$0xf]
  %v6219 = vld [vmem:[%s6196 + $0x58] sm:$0xf]
  %v6220 = vld [vmem:[%s6196 + $0x5c] sm:$0xf]
  %v6221 = vld [vmem:[%s6196 + $0x60] sm:$0xf]
  %v6222 = vld [vmem:[%s6196 + $0x64] sm:$0xf]
  %v6223 = vld [vmem:[%s6196 + $0x68] sm:$0xf]
  %v6224 = vld [vmem:[%s6196 + $0x6c] sm:$0xf]
  %v6225 = vld [vmem:[%s6196 + $0x70] sm:$0xf]
  %v6226 = vld [vmem:[%s6196 + $0x74] sm:$0xf]
  %v6227 = vld [vmem:[%s6196 + $0x78] sm:$0xf]
  %v6228 = vld [vmem:[%s6196 + $0x7c] sm:$0xf]
  %v6229 = vld [vmem:[%s6196 + $0x80] sm:$0xf]
  %v6230 = vld [vmem:[%s6196 + $0x84] sm:$0xf]
  %v6231 = vld [vmem:[%s6196 + $0x88] sm:$0xf]
  %v6232 = vld [vmem:[%s6196 + $0x8c] sm:$0xf]
  %v6233 = vld [vmem:[%s6196 + $0x90] sm:$0xf]
  %v6234 = vld [vmem:[%s6196 + $0x94] sm:$0xf]
  %v6235 = vld [vmem:[%s6196 + $0x98] sm:$0xf]
  %v6236 = vld [vmem:[%s6196 + $0x9c] sm:$0xf]
  %v6237 = vld [vmem:[%s6196 + $0xa0] sm:$0xf]
  %v6238 = vld [vmem:[%s6196 + $0xa4] sm:$0xf]
  %v6239 = vld [vmem:[%s6196 + $0xa8] sm:$0xf]
  %v6240 = vld [vmem:[%s6196 + $0xac] sm:$0xf]
  %v6241 = vld [vmem:[%s6196 + $0xb0] sm:$0xf]
  %v6242 = vld [vmem:[%s6196 + $0xb4] sm:$0xf]
  %v6243 = vld [vmem:[%s6196 + $0xb8] sm:$0xf]
  %v6244 = vld [vmem:[%s6196 + $0xbc] sm:$0xf]
  %v6245 = vld [vmem:[%s6196 + $0xc0] sm:$0xf]
  %v6246 = vld [vmem:[%s6196 + $0xc4] sm:$0xf]
  %v6247 = vld [vmem:[%s6196 + $0xc8] sm:$0xf]
  %v6248 = vld [vmem:[%s6196 + $0xcc] sm:$0xf]
  %v6249 = vld [vmem:[%s6196 + $0xd0] sm:$0xf]
  %v6250 = vld [vmem:[%s6196 + $0xd4] sm:$0xf]
  %v6251 = vld [vmem:[%s6196 + $0xd8] sm:$0xf]
  %v6252 = vld [vmem:[%s6196 + $0xdc] sm:$0xf]
  %v6253 = vld [vmem:[%s6196 + $0xe0] sm:$0xf]
  %v6254 = vld [vmem:[%s6196 + $0xe4] sm:$0xf]
  %v6255 = vld [vmem:[%s6196 + $0xe8] sm:$0xf]
  %v6256 = vld [vmem:[%s6196 + $0xec] sm:$0xf]
  %v6257 = vld [vmem:[%s6196 + $0xf0] sm:$0xf]
  %v6258 = vld [vmem:[%s6196 + $0xf4] sm:$0xf]
  %v6259 = vld [vmem:[%s6196 + $0xf8] sm:$0xf]
  %v6260 = vld [vmem:[%s6196 + $0xfc] sm:$0xf]
  %v6325 = vunpack.c.l.b16 %v6197
  %v6326 = vunpack.c.l.b16 %v6198
  %v6327 = vunpack.c.l.b16 %v6199
  %v6328 = vunpack.c.l.b16 %v6200
  %v6329 = vunpack.c.l.b16 %v6201
  %v6330 = vunpack.c.l.b16 %v6202
  %v6331 = vunpack.c.l.b16 %v6203
  %v6332 = vunpack.c.l.b16 %v6204
  %v6333 = vunpack.c.l.b16 %v6205
  %v6334 = vunpack.c.l.b16 %v6206
  %v6335 = vunpack.c.l.b16 %v6207
  %v6336 = vunpack.c.l.b16 %v6208
  %v6337 = vunpack.c.l.b16 %v6209
  %v6338 = vunpack.c.l.b16 %v6210
  %v6339 = vunpack.c.l.b16 %v6211
  %v6340 = vunpack.c.l.b16 %v6212
  %v6341 = vunpack.c.l.b16 %v6213
  %v6342 = vunpack.c.l.b16 %v6214
  %v6343 = vunpack.c.l.b16 %v6215
  %v6344 = vunpack.c.l.b16 %v6216
  %v6345 = vunpack.c.l.b16 %v6217
  %v6346 = vunpack.c.l.b16 %v6218
  %v6347 = vunpack.c.l.b16 %v6219
  %v6348 = vunpack.c.l.b16 %v6220
  %v6349 = vunpack.c.l.b16 %v6221
  %v6350 = vunpack.c.l.b16 %v6222
  %v6351 = vunpack.c.l.b16 %v6223
  %v6352 = vunpack.c.l.b16 %v6224
  %v6353 = vunpack.c.l.b16 %v6225
  %v6354 = vunpack.c.l.b16 %v6226
  %v6355 = vunpack.c.l.b16 %v6227
  %v6356 = vunpack.c.l.b16 %v6228
  %v6357 = vunpack.c.l.b16 %v6229
  %v6358 = vunpack.c.l.b16 %v6230
  %v6359 = vunpack.c.l.b16 %v6231
  %v6360 = vunpack.c.l.b16 %v6232
  %v6361 = vunpack.c.l.b16 %v6233
  %v6362 = vunpack.c.l.b16 %v6234
  %v6363 = vunpack.c.l.b16 %v6235
  %v6364 = vunpack.c.l.b16 %v6236
  %v6365 = vunpack.c.l.b16 %v6237
  %v6366 = vunpack.c.l.b16 %v6238
  %v6367 = vunpack.c.l.b16 %v6239
  %v6368 = vunpack.c.l.b16 %v6240
  %v6369 = vunpack.c.l.b16 %v6241
  %v6370 = vunpack.c.l.b16 %v6242
  %v6371 = vunpack.c.l.b16 %v6243
  %v6372 = vunpack.c.l.b16 %v6244
  %v6373 = vunpack.c.l.b16 %v6245
  %v6374 = vunpack.c.l.b16 %v6246
  %v6375 = vunpack.c.l.b16 %v6247
  %v6376 = vunpack.c.l.b16 %v6248
  %v6377 = vunpack.c.l.b16 %v6249
  %v6378 = vunpack.c.l.b16 %v6250
  %v6379 = vunpack.c.l.b16 %v6251
  %v6380 = vunpack.c.l.b16 %v6252
  %v6381 = vunpack.c.l.b16 %v6253
  %v6382 = vunpack.c.l.b16 %v6254
  %v6383 = vunpack.c.l.b16 %v6255
  %v6384 = vunpack.c.l.b16 %v6256
  %v6385 = vunpack.c.l.b16 %v6257
  %v6386 = vunpack.c.l.b16 %v6258
  %v6387 = vunpack.c.l.b16 %v6259
  %v6388 = vunpack.c.l.b16 %v6260
  %v6389 = vpack.c.b16 %v6326, %v6325
  %v6390 = vpack.c.b16 %v6328, %v6327
  %v6391 = vpack.c.b16 %v6330, %v6329
  %v6392 = vpack.c.b16 %v6332, %v6331
  %v6393 = vpack.c.b16 %v6334, %v6333
  %v6394 = vpack.c.b16 %v6336, %v6335
  %v6395 = vpack.c.b16 %v6338, %v6337
  %v6396 = vpack.c.b16 %v6340, %v6339
  %v6397 = vpack.c.b16 %v6342, %v6341
  %v6398 = vpack.c.b16 %v6344, %v6343
  %v6399 = vpack.c.b16 %v6346, %v6345
  %v6400 = vpack.c.b16 %v6348, %v6347
  %v6401 = vpack.c.b16 %v6350, %v6349
  %v6402 = vpack.c.b16 %v6352, %v6351
  %v6403 = vpack.c.b16 %v6354, %v6353
  %v6404 = vpack.c.b16 %v6356, %v6355
  %v6405 = vpack.c.b16 %v6358, %v6357
  %v6406 = vpack.c.b16 %v6360, %v6359
  %v6407 = vpack.c.b16 %v6362, %v6361
  %v6408 = vpack.c.b16 %v6364, %v6363
  %v6409 = vpack.c.b16 %v6366, %v6365
  %v6410 = vpack.c.b16 %v6368, %v6367
  %v6411 = vpack.c.b16 %v6370, %v6369
  %v6412 = vpack.c.b16 %v6372, %v6371
  %v6413 = vpack.c.b16 %v6374, %v6373
  %v6414 = vpack.c.b16 %v6376, %v6375
  %v6415 = vpack.c.b16 %v6378, %v6377
  %v6416 = vpack.c.b16 %v6380, %v6379
  %v6417 = vpack.c.b16 %v6382, %v6381
  %v6418 = vpack.c.b16 %v6384, %v6383
  %v6419 = vpack.c.b16 %v6386, %v6385
  %v6420 = vpack.c.b16 %v6388, %v6387
  %6453 = vmatprep.subr.bf16.mxu0 0
  %6454 = vmatpush1.bf16.msra.mxu0 %v6396
  %6455 = vmatprep.subr.bf16.mxu0 0
  %6456 = vmatpush1.bf16.msra.mxu0 %v6395
  %6457 = vmatprep.subr.bf16.mxu0 0
  %6458 = vmatpush1.bf16.msra.mxu0 %v6394
  %6459 = vmatprep.subr.bf16.mxu0 0
  %6460 = vmatpush1.bf16.msra.mxu0 %v6393
  %6461 = vmatprep.subr.bf16.mxu0 0
  %6462 = vmatpush1.bf16.msra.mxu0 %v6392
  %6463 = vmatprep.subr.bf16.mxu0 0
  %6464 = vmatpush1.bf16.msra.mxu0 %v6391
  %6465 = vmatprep.subr.bf16.mxu0 0
  %6466 = vmatpush1.bf16.msra.mxu0 %v6390
  %6467 = vmatprep.subr.bf16.mxu0 0
  %6468 = vmatpush1.bf16.msra.mxu0 %v6389
  %6469 = vmatprep.subr.bf16.mxu0 0
  %6470 = vmatpush2.bf16.msra.mxu0 %v6404
  %6471 = vmatprep.subr.bf16.mxu0 0
  %6472 = vmatpush2.bf16.msra.mxu0 %v6403
  %6473 = vmatprep.subr.bf16.mxu0 0
  %6474 = vmatpush2.bf16.msra.mxu0 %v6402
  %6475 = vmatprep.subr.bf16.mxu0 0
  %6476 = vmatpush2.bf16.msra.mxu0 %v6401
  %6477 = vmatprep.subr.bf16.mxu0 0
  %6478 = vmatpush2.bf16.msra.mxu0 %v6400
  %6479 = vmatprep.subr.bf16.mxu0 0
  %6480 = vmatpush2.bf16.msra.mxu0 %v6399
  %6481 = vmatprep.subr.bf16.mxu0 0
  %6482 = vmatpush2.bf16.msra.mxu0 %v6398
  %6483 = vmatprep.subr.bf16.mxu0 0
  %6484 = vmatpush2.bf16.msra.mxu0 %v6397
  %6485 = vmatprep.mubr.bf16.mxu0 %v272
  %6486 = vmatmul.mubr.bf16.gmra.mxu0 %v271
  %v6487 = vpop.f32.mrf.mxu0
  %v6488 = vadd.f32 0.0, %v6487
  %v6489 = vpop.f32.mrf.mxu0
  %v6490 = vpop.f32.mrf.mxu0
  %v6491 = vpop.f32.mrf.mxu0
  %6492 = vdwg.mxu0
  %6493 = vmatprep.subr.bf16.mxu0 0
  %6494 = vmatpush1.bf16.msra.mxu0 %v6412
  %6495 = vmatprep.subr.bf16.mxu0 0
  %6496 = vmatpush1.bf16.msra.mxu0 %v6411
  %6497 = vmatprep.subr.bf16.mxu0 0
  %6498 = vmatpush1.bf16.msra.mxu0 %v6410
  %6499 = vmatprep.subr.bf16.mxu0 0
  %6500 = vmatpush1.bf16.msra.mxu0 %v6409
  %6501 = vmatprep.subr.bf16.mxu0 0
  %6502 = vmatpush1.bf16.msra.mxu0 %v6408
  %6503 = vmatprep.subr.bf16.mxu0 0
  %6504 = vmatpush1.bf16.msra.mxu0 %v6407
  %6505 = vmatprep.subr.bf16.mxu0 0
  %6506 = vmatpush1.bf16.msra.mxu0 %v6406
  %6507 = vmatprep.subr.bf16.mxu0 0
  %6508 = vmatpush1.bf16.msra.mxu0 %v6405
  %6509 = vmatprep.subr.bf16.mxu0 0
  %6510 = vmatpush2.bf16.msra.mxu0 %v6420
  %6511 = vmatprep.subr.bf16.mxu0 0
  %6512 = vmatpush2.bf16.msra.mxu0 %v6419
  %6513 = vmatprep.subr.bf16.mxu0 0
  %6514 = vmatpush2.bf16.msra.mxu0 %v6418
  %6515 = vmatprep.subr.bf16.mxu0 0
  %6516 = vmatpush2.bf16.msra.mxu0 %v6417
  %6517 = vmatprep.subr.bf16.mxu0 0
  %6518 = vmatpush2.bf16.msra.mxu0 %v6416
  %6519 = vmatprep.subr.bf16.mxu0 0
  %6520 = vmatpush2.bf16.msra.mxu0 %v6415
  %6521 = vmatprep.subr.bf16.mxu0 0
  %6522 = vmatpush2.bf16.msra.mxu0 %v6414
  %6523 = vmatprep.subr.bf16.mxu0 0
  %6524 = vmatpush2.bf16.msra.mxu0 %v6413
  %6525 = vmatprep.mubr.bf16.mxu0 %v274
  %6526 = vmatmul.mubr.bf16.gmra.mxu0 %v273
  %v6527 = vpop.f32.mrf.mxu0
  %v6528 = vadd.f32 %v6488, %v6527
  %v6529 = vpop.f32.mrf.mxu0
  %v6530 = vpop.f32.mrf.mxu0
  %v6531 = vpop.f32.mrf.mxu0
  %6532 = vdwg.mxu0
  %v6533 = vpack.c.bf16 %v6528, %v6528
  %s6534 = scalar_lea.vmem %s4, 120
  %v6535 = vld [vmem:[%s6534] sm:$0xf]
  %v6536 = vld [vmem:[%s6534 + $0x4] sm:$0xf]
  %v6539 = vunpack.c.l.b16 %v6535
  %v6540 = vunpack.c.l.b16 %v6536
  %v6541 = vpack.c.b16 %v6540, %v6539
  %v6543 = vsel %vm960, %v6541, 0
  %v6546 = vsel %vm964, %v6533, 0
  %6548 = vmatprep.subr.bf16.mxu0 0
  %6549 = vmatpush1.bf16.msra.mxu0 0
  %6550 = vmatprep.subr.bf16.mxu0 0
  %6551 = vmatpush1.bf16.msra.mxu0 0
  %6552 = vmatprep.subr.bf16.mxu0 0
  %6553 = vmatpush1.bf16.msra.mxu0 0
  %6554 = vmatprep.subr.bf16.mxu0 0
  %6555 = vmatpush1.bf16.msra.mxu0 0
  %6556 = vmatprep.subr.bf16.mxu0 0
  %6557 = vmatpush1.bf16.msra.mxu0 0
  %6558 = vmatprep.subr.bf16.mxu0 0
  %6559 = vmatpush1.bf16.msra.mxu0 0
  %6560 = vmatprep.subr.bf16.mxu0 0
  %6561 = vmatpush1.bf16.msra.mxu0 0
  %6562 = vmatprep.subr.bf16.mxu0 0
  %6563 = vmatpush1.bf16.msra.mxu0 %v6546
  %6564 = vmatprep.subr.bf16.mxu0 0
  %6565 = vmatpush2.bf16.msra.mxu0 0
  %6566 = vmatprep.subr.bf16.mxu0 0
  %6567 = vmatpush2.bf16.msra.mxu0 0
  %6568 = vmatprep.subr.bf16.mxu0 0
  %6569 = vmatpush2.bf16.msra.mxu0 0
  %6570 = vmatprep.subr.bf16.mxu0 0
  %6571 = vmatpush2.bf16.msra.mxu0 0
  %6572 = vmatprep.subr.bf16.mxu0 0
  %6573 = vmatpush2.bf16.msra.mxu0 0
  %6574 = vmatprep.subr.bf16.mxu0 0
  %6575 = vmatpush2.bf16.msra.mxu0 0
  %6576 = vmatprep.subr.bf16.mxu0 0
  %6577 = vmatpush2.bf16.msra.mxu0 0
  %6578 = vmatprep.subr.bf16.mxu0 0
  %6579 = vmatpush2.bf16.msra.mxu0 0
  %6580 = vmatprep.mubr.bf16.mxu0 0
  %6581 = vmatmul.mubr.bf16.gmra.mxu0 %v6543
  %v6582 = vpop.f32.mrf.mxu0
  %v6583 = vadd.f32 0.0, %v6582
  %v6584 = vpop.f32.mrf.mxu0
  %v6585 = vpop.f32.mrf.mxu0
  %v6586 = vadd.f32 0.0, %v6585
  %v6587 = vpop.f32.mrf.mxu0
  %6588 = vdwg.mxu0
  %v6589 = vadd.f32 %v6194, %v6583
  %v6590 = vadd.f32 %v6195, %v6586
  %v6591 = vld [vmem:[%s6] sm:$0xff]
  %v6592 = vld [vmem:[%s6 + $0x8] sm:$0xff]
  %v6593 = vld [vmem:[%s7] sm:$0xff]
  %v6594 = vld [vmem:[%s7 + $0x8] sm:$0xff]
  %6595 = vadd.xlane.f32.xlu0 %v6589
  %v6596 = vpop.xlane.xlu0 %6595
  %6597 = vadd.xlane.f32.xlu0 %v6590
  %v6598 = vpop.xlane.xlu0 %6597
  %v6599 = vmul.f32 %v6596, 0.0078125
  %v6600 = vmul.f32 %v6598, 0.0078125
  %v6601 = vsub.f32 %v6589, %v6599
  %v6602 = vsub.f32 %v6590, %v6600
  %v6603 = vmul.f32 %v6601, %v6601
  %v6604 = vmul.f32 %v6602, %v6602
  %6605 = vadd.xlane.f32.xlu0 %v6603
  %v6606 = vpop.xlane.xlu0 %6605
  %6607 = vadd.xlane.f32.xlu0 %v6604
  %v6608 = vpop.xlane.xlu0 %6607
  %v6609 = vmul.f32 %v6606, 0.0078125
  %v6610 = vmul.f32 %v6608, 0.0078125
  %v6611 = vadd.f32 %v6609, 1e-05
  %v6612 = vadd.f32 %v6610, 1e-05
  %v6613 = vrsqrt.pop %v6611
  %v6614 = vrsqrt.pop %v6612
  %v6615 = vmul.f32 %v6591, %v6613
  %v6616 = vmul.f32 %v6592, %v6614
  %6618 = vset.pattern.permute.xlu0 0
  %6619 = vperm.xlu0 %6618, %v6615
  %v6620 = vpop.permute.xlu0 %6619
  %6623 = vset.pattern.permute.xlu0 0
  %6624 = vperm.xlu0 %6623, %v6616
  %v6625 = vpop.permute.xlu0 %6624
  %v6627 = vmul.f32 %v6620, %v6601
  %v6628 = vmul.f32 %v6625, %v6602
  %6630 = vset.pattern.permute.xlu0 0
  %6631 = vperm.xlu0 %6630, %v6593
  %v6632 = vpop.permute.xlu0 %6631
  %6635 = vset.pattern.permute.xlu0 0
  %6636 = vperm.xlu0 %6635, %v6594
  %v6637 = vpop.permute.xlu0 %6636
  %v6639 = vadd.f32 %v6627, %v6632
  %v6640 = vadd.f32 %v6628, %v6637
  %vm6641 = vcmp.ge.f32.partialorder %v6639, 0.0
  %vm6642 = vcmp.ge.f32.partialorder %v6640, 0.0
  %v6643 = vmul.f32 %v6639, 0.2
  %v6644 = vmul.f32 %v6640, 0.2
  %v6645 = vsel %vm6641, %v6639, %v6643
  %v6646 = vsel %vm6642, %v6640, %v6644
  %v6647 = vpack.c.bf16 %v6646, %v6645
  %v6648 = vld [vmem:[%s9] sm:$0xf]
  %v6649 = vld [vmem:[%s9 + $0x4] sm:$0xf]
  %v6650 = vld [vmem:[%s9 + $0x8] sm:$0xf]
  %v6651 = vld [vmem:[%s9 + $0xc] sm:$0xf]
  %v6652 = vld [vmem:[%s9 + $0x10] sm:$0xf]
  %v6653 = vld [vmem:[%s9 + $0x14] sm:$0xf]
  %v6654 = vld [vmem:[%s9 + $0x18] sm:$0xf]
  %v6655 = vld [vmem:[%s9 + $0x1c] sm:$0xf]
  %v6656 = vld [vmem:[%s9 + $0x20] sm:$0xf]
  %v6657 = vld [vmem:[%s9 + $0x24] sm:$0xf]
  %v6658 = vld [vmem:[%s9 + $0x28] sm:$0xf]
  %v6659 = vld [vmem:[%s9 + $0x2c] sm:$0xf]
  %v6660 = vld [vmem:[%s9 + $0x30] sm:$0xf]
  %v6661 = vld [vmem:[%s9 + $0x34] sm:$0xf]
  %v6662 = vld [vmem:[%s9 + $0x38] sm:$0xf]
  %v6663 = vld [vmem:[%s9 + $0x3c] sm:$0xf]
  %v6680 = vunpack.c.l.b16 %v6648
  %v6681 = vunpack.c.l.b16 %v6649
  %v6682 = vunpack.c.l.b16 %v6650
  %v6683 = vunpack.c.l.b16 %v6651
  %v6684 = vunpack.c.l.b16 %v6652
  %v6685 = vunpack.c.l.b16 %v6653
  %v6686 = vunpack.c.l.b16 %v6654
  %v6687 = vunpack.c.l.b16 %v6655
  %v6688 = vunpack.c.l.b16 %v6656
  %v6689 = vunpack.c.l.b16 %v6657
  %v6690 = vunpack.c.l.b16 %v6658
  %v6691 = vunpack.c.l.b16 %v6659
  %v6692 = vunpack.c.l.b16 %v6660
  %v6693 = vunpack.c.l.b16 %v6661
  %v6694 = vunpack.c.l.b16 %v6662
  %v6695 = vunpack.c.l.b16 %v6663
  %v6696 = vpack.c.b16 %v6681, %v6680
  %v6697 = vpack.c.b16 %v6683, %v6682
  %v6698 = vpack.c.b16 %v6685, %v6684
  %v6699 = vpack.c.b16 %v6687, %v6686
  %v6700 = vpack.c.b16 %v6689, %v6688
  %v6701 = vpack.c.b16 %v6691, %v6690
  %v6702 = vpack.c.b16 %v6693, %v6692
  %v6703 = vpack.c.b16 %v6695, %v6694
  %6712 = vmatprep.subr.bf16.mxu0 0
  %6713 = vmatpush1.bf16.msra.mxu0 %v6703
  %6714 = vmatprep.subr.bf16.mxu0 0
  %6715 = vmatpush1.bf16.msra.mxu0 %v6702
  %6716 = vmatprep.subr.bf16.mxu0 0
  %6717 = vmatpush1.bf16.msra.mxu0 %v6701
  %6718 = vmatprep.subr.bf16.mxu0 0
  %6719 = vmatpush1.bf16.msra.mxu0 %v6700
  %6720 = vmatprep.subr.bf16.mxu0 0
  %6721 = vmatpush1.bf16.msra.mxu0 %v6699
  %6722 = vmatprep.subr.bf16.mxu0 0
  %6723 = vmatpush1.bf16.msra.mxu0 %v6698
  %6724 = vmatprep.subr.bf16.mxu0 0
  %6725 = vmatpush1.bf16.msra.mxu0 %v6697
  %6726 = vmatprep.subr.bf16.mxu0 0
  %6727 = vmatpush1.bf16.msra.mxu0 %v6696
  %6728 = vmatprep.subr.bf16.mxu0 0
  %6729 = vmatpush2.bf16.msra.mxu0 0
  %6730 = vmatprep.subr.bf16.mxu0 0
  %6731 = vmatpush2.bf16.msra.mxu0 0
  %6732 = vmatprep.subr.bf16.mxu0 0
  %6733 = vmatpush2.bf16.msra.mxu0 0
  %6734 = vmatprep.subr.bf16.mxu0 0
  %6735 = vmatpush2.bf16.msra.mxu0 0
  %6736 = vmatprep.subr.bf16.mxu0 0
  %6737 = vmatpush2.bf16.msra.mxu0 0
  %6738 = vmatprep.subr.bf16.mxu0 0
  %6739 = vmatpush2.bf16.msra.mxu0 0
  %6740 = vmatprep.subr.bf16.mxu0 0
  %6741 = vmatpush2.bf16.msra.mxu0 0
  %6742 = vmatprep.subr.bf16.mxu0 0
  %6743 = vmatpush2.bf16.msra.mxu0 0
  %6744 = vmatprep.mubr.bf16.mxu0 0
  %6745 = vmatmul.mubr.bf16.gmra.mxu0 %v6647
  %v6746 = vpop.f32.mrf.mxu0
  %v6747 = vadd.f32 0.0, %v6746
  %v6748 = vpop.f32.mrf.mxu0
  %v6749 = vpop.f32.mrf.mxu0
  %v6750 = vadd.f32 0.0, %v6749
  %v6751 = vpop.f32.mrf.mxu0
  %6752 = vdwg.mxu0
  %v6753 = vpack.c.bf16 %v6750, %v6747
  %v6754 = vld [vmem:[%s8] sm:$0xf]
  %v6755 = vld [vmem:[%s8 + $0x4] sm:$0xf]
  %v6756 = vld [vmem:[%s8 + $0x8] sm:$0xf]
  %v6757 = vld [vmem:[%s8 + $0xc] sm:$0xf]
  %s6758 = scalar_lea.vmem %s9, 64
  %v6759 = vld [vmem:[%s6758] sm:$0xf]
  %v6760 = vld [vmem:[%s6758 + $0x4] sm:$0xf]
  %v6761 = vld [vmem:[%s6758 + $0x8] sm:$0xf]
  %v6762 = vld [vmem:[%s6758 + $0xc] sm:$0xf]
  %v6763 = vld [vmem:[%s6758 + $0x10] sm:$0xf]
  %v6764 = vld [vmem:[%s6758 + $0x14] sm:$0xf]
  %v6765 = vld [vmem:[%s6758 + $0x18] sm:$0xf]
  %v6766 = vld [vmem:[%s6758 + $0x1c] sm:$0xf]
  %v6767 = vld [vmem:[%s6758 + $0x20] sm:$0xf]
  %v6768 = vld [vmem:[%s6758 + $0x24] sm:$0xf]
  %v6769 = vld [vmem:[%s6758 + $0x28] sm:$0xf]
  %v6770 = vld [vmem:[%s6758 + $0x2c] sm:$0xf]
  %v6771 = vld [vmem:[%s6758 + $0x30] sm:$0xf]
  %v6772 = vld [vmem:[%s6758 + $0x34] sm:$0xf]
  %v6773 = vld [vmem:[%s6758 + $0x38] sm:$0xf]
  %v6774 = vld [vmem:[%s6758 + $0x3c] sm:$0xf]
  %v6791 = vunpack.c.l.b16 %v6759
  %v6792 = vunpack.c.l.b16 %v6760
  %v6793 = vunpack.c.l.b16 %v6761
  %v6794 = vunpack.c.l.b16 %v6762
  %v6795 = vunpack.c.l.b16 %v6763
  %v6796 = vunpack.c.l.b16 %v6764
  %v6797 = vunpack.c.l.b16 %v6765
  %v6798 = vunpack.c.l.b16 %v6766
  %v6799 = vunpack.c.l.b16 %v6767
  %v6800 = vunpack.c.l.b16 %v6768
  %v6801 = vunpack.c.l.b16 %v6769
  %v6802 = vunpack.c.l.b16 %v6770
  %v6803 = vunpack.c.l.b16 %v6771
  %v6804 = vunpack.c.l.b16 %v6772
  %v6805 = vunpack.c.l.b16 %v6773
  %v6806 = vunpack.c.l.b16 %v6774
  %v6807 = vpack.c.b16 %v6792, %v6791
  %v6808 = vpack.c.b16 %v6794, %v6793
  %v6809 = vpack.c.b16 %v6796, %v6795
  %v6810 = vpack.c.b16 %v6798, %v6797
  %v6811 = vpack.c.b16 %v6800, %v6799
  %v6812 = vpack.c.b16 %v6802, %v6801
  %v6813 = vpack.c.b16 %v6804, %v6803
  %v6814 = vpack.c.b16 %v6806, %v6805
  %6823 = vmatprep.subr.bf16.mxu0 0
  %6824 = vmatpush1.bf16.msra.mxu0 %v6814
  %6825 = vmatprep.subr.bf16.mxu0 0
  %6826 = vmatpush1.bf16.msra.mxu0 %v6813
  %6827 = vmatprep.subr.bf16.mxu0 0
  %6828 = vmatpush1.bf16.msra.mxu0 %v6812
  %6829 = vmatprep.subr.bf16.mxu0 0
  %6830 = vmatpush1.bf16.msra.mxu0 %v6811
  %6831 = vmatprep.subr.bf16.mxu0 0
  %6832 = vmatpush1.bf16.msra.mxu0 %v6810
  %6833 = vmatprep.subr.bf16.mxu0 0
  %6834 = vmatpush1.bf16.msra.mxu0 %v6809
  %6835 = vmatprep.subr.bf16.mxu0 0
  %6836 = vmatpush1.bf16.msra.mxu0 %v6808
  %6837 = vmatprep.subr.bf16.mxu0 0
  %6838 = vmatpush1.bf16.msra.mxu0 %v6807
  %6839 = vmatprep.subr.bf16.mxu0 0
  %6840 = vmatpush2.bf16.msra.mxu0 0
  %6841 = vmatprep.subr.bf16.mxu0 0
  %6842 = vmatpush2.bf16.msra.mxu0 0
  %6843 = vmatprep.subr.bf16.mxu0 0
  %6844 = vmatpush2.bf16.msra.mxu0 0
  %6845 = vmatprep.subr.bf16.mxu0 0
  %6846 = vmatpush2.bf16.msra.mxu0 0
  %6847 = vmatprep.subr.bf16.mxu0 0
  %6848 = vmatpush2.bf16.msra.mxu0 0
  %6849 = vmatprep.subr.bf16.mxu0 0
  %6850 = vmatpush2.bf16.msra.mxu0 0
  %6851 = vmatprep.subr.bf16.mxu0 0
  %6852 = vmatpush2.bf16.msra.mxu0 0
  %6853 = vmatprep.subr.bf16.mxu0 0
  %6854 = vmatpush2.bf16.msra.mxu0 0
  %6855 = vmatprep.mubr.bf16.mxu0 0
  %6856 = vmatmul.mubr.bf16.gmra.mxu0 %v6647
  %v6857 = vpop.f32.mrf.mxu0
  %v6858 = vadd.f32 0.0, %v6857
  %v6859 = vpop.f32.mrf.mxu0
  %v6860 = vpop.f32.mrf.mxu0
  %v6861 = vadd.f32 0.0, %v6860
  %v6862 = vpop.f32.mrf.mxu0
  %6863 = vdwg.mxu0
  %v6864 = vpack.c.bf16 %v6861, %v6858
  %s6865 = scalar_lea.vmem %s8, 16
  %v6866 = vld [vmem:[%s6865] sm:$0xf]
  %v6867 = vld [vmem:[%s6865 + $0x4] sm:$0xf]
  %v6868 = vld [vmem:[%s6865 + $0x8] sm:$0xf]
  %v6869 = vld [vmem:[%s6865 + $0xc] sm:$0xf]
  %v6874 = vunpack.c.l.b16 %v6866
  %v6875 = vunpack.c.l.b16 %v6867
  %v6876 = vunpack.c.l.b16 %v6868
  %v6877 = vunpack.c.l.b16 %v6869
  %v6878 = vpack.c.b16 %v6875, %v6874
  %v6879 = vpack.c.b16 %v6877, %v6876
  %vm6880 = vcmask 130048
  %v6882 = vsel %vm6880, %v6878, 0
  %v6885 = vsel %vm6880, %v6879, 0
  %6887 = vmatprep.subr.bf16.mxu0 0
  %6888 = vmatpush1.bf16.msra.mxu0 0
  %6889 = vmatprep.subr.bf16.mxu0 0
  %6890 = vmatpush1.bf16.msra.mxu0 0
  %6891 = vmatprep.subr.bf16.mxu0 0
  %6892 = vmatpush1.bf16.msra.mxu0 0
  %6893 = vmatprep.subr.bf16.mxu0 0
  %6894 = vmatpush1.bf16.msra.mxu0 0
  %6895 = vmatprep.subr.bf16.mxu0 0
  %6896 = vmatpush1.bf16.msra.mxu0 0
  %6897 = vmatprep.subr.bf16.mxu0 0
  %6898 = vmatpush1.bf16.msra.mxu0 0
  %6899 = vmatprep.subr.bf16.mxu0 0
  %6900 = vmatpush1.bf16.msra.mxu0 0
  %6901 = vmatprep.subr.bf16.mxu0 0
  %6902 = vmatpush1.bf16.msra.mxu0 %v6864
  %6903 = vmatprep.subr.bf16.mxu0 0
  %6904 = vmatpush2.bf16.msra.mxu0 0
  %6905 = vmatprep.subr.bf16.mxu0 0
  %6906 = vmatpush2.bf16.msra.mxu0 0
  %6907 = vmatprep.subr.bf16.mxu0 0
  %6908 = vmatpush2.bf16.msra.mxu0 0
  %6909 = vmatprep.subr.bf16.mxu0 0
  %6910 = vmatpush2.bf16.msra.mxu0 0
  %6911 = vmatprep.subr.bf16.mxu0 0
  %6912 = vmatpush2.bf16.msra.mxu0 0
  %6913 = vmatprep.subr.bf16.mxu0 0
  %6914 = vmatpush2.bf16.msra.mxu0 0
  %6915 = vmatprep.subr.bf16.mxu0 0
  %6916 = vmatpush2.bf16.msra.mxu0 0
  %6917 = vmatprep.subr.bf16.mxu0 0
  %6918 = vmatpush2.bf16.msra.mxu0 0
  %6919 = vmatprep.mubr.bf16.mxu0 0
  %6920 = vmatmul.mubr.bf16.gmra.mxu0 %v6882
  %v6921 = vpop.f32.mrf.mxu0
  %v6922 = vadd.f32 0.0, %v6921
  %v6923 = vpop.f32.mrf.mxu0
  %v6924 = vpop.f32.mrf.mxu0
  %v6925 = vadd.f32 0.0, %v6924
  %v6926 = vpop.f32.mrf.mxu0
  %6927 = vmatprep.mubr.bf16.mxu0 0
  %6928 = vmatmul.mubr.bf16.gmra.mxu0 %v6885
  %v6929 = vpop.f32.mrf.mxu0
  %v6930 = vadd.f32 0.0, %v6929
  %v6931 = vpop.f32.mrf.mxu0
  %v6932 = vpop.f32.mrf.mxu0
  %v6933 = vadd.f32 0.0, %v6932
  %v6934 = vpop.f32.mrf.mxu0
  %6935 = vdwg.mxu0
  %v6940 = vunpack.c.l.b16 %v6754
  %v6941 = vunpack.c.l.b16 %v6755
  %v6942 = vunpack.c.l.b16 %v6756
  %v6943 = vunpack.c.l.b16 %v6757
  %v6944 = vpack.c.b16 %v6941, %v6940
  %v6945 = vpack.c.b16 %v6943, %v6942
  %v6947 = vsel %vm6880, %v6944, 0
  %v6950 = vsel %vm6880, %v6945, 0
  %6952 = vmatprep.subr.bf16.mxu0 0
  %6953 = vmatpush1.bf16.msra.mxu0 0
  %6954 = vmatprep.subr.bf16.mxu0 0
  %6955 = vmatpush1.bf16.msra.mxu0 0
  %6956 = vmatprep.subr.bf16.mxu0 0
  %6957 = vmatpush1.bf16.msra.mxu0 0
  %6958 = vmatprep.subr.bf16.mxu0 0
  %6959 = vmatpush1.bf16.msra.mxu0 0
  %6960 = vmatprep.subr.bf16.mxu0 0
  %6961 = vmatpush1.bf16.msra.mxu0 0
  %6962 = vmatprep.subr.bf16.mxu0 0
  %6963 = vmatpush1.bf16.msra.mxu0 0
  %6964 = vmatprep.subr.bf16.mxu0 0
  %6965 = vmatpush1.bf16.msra.mxu0 0
  %6966 = vmatprep.subr.bf16.mxu0 0
  %6967 = vmatpush1.bf16.msra.mxu0 %v6753
  %6968 = vmatprep.subr.bf16.mxu0 0
  %6969 = vmatpush2.bf16.msra.mxu0 0
  %6970 = vmatprep.subr.bf16.mxu0 0
  %6971 = vmatpush2.bf16.msra.mxu0 0
  %6972 = vmatprep.subr.bf16.mxu0 0
  %6973 = vmatpush2.bf16.msra.mxu0 0
  %6974 = vmatprep.subr.bf16.mxu0 0
  %6975 = vmatpush2.bf16.msra.mxu0 0
  %6976 = vmatprep.subr.bf16.mxu0 0
  %6977 = vmatpush2.bf16.msra.mxu0 0
  %6978 = vmatprep.subr.bf16.mxu0 0
  %6979 = vmatpush2.bf16.msra.mxu0 0
  %6980 = vmatprep.subr.bf16.mxu0 0
  %6981 = vmatpush2.bf16.msra.mxu0 0
  %6982 = vmatprep.subr.bf16.mxu0 0
  %6983 = vmatpush2.bf16.msra.mxu0 0
  %6984 = vmatprep.mubr.bf16.mxu0 0
  %6985 = vmatmul.mubr.bf16.gmra.mxu0 %v6947
  %v6986 = vpop.f32.mrf.mxu0
  %v6987 = vadd.f32 %v6922, %v6986
  %v6988 = vpop.f32.mrf.mxu0
  %v6989 = vpop.f32.mrf.mxu0
  %v6990 = vadd.f32 %v6925, %v6989
  %v6991 = vpop.f32.mrf.mxu0
  %6992 = vmatprep.mubr.bf16.mxu0 0
  %6993 = vmatmul.mubr.bf16.gmra.mxu0 %v6950
  %v6994 = vpop.f32.mrf.mxu0
  %v6995 = vadd.f32 %v6930, %v6994
  %v6996 = vpop.f32.mrf.mxu0
  %v6997 = vpop.f32.mrf.mxu0
  %v6998 = vadd.f32 %v6933, %v6997
  %v6999 = vpop.f32.mrf.mxu0
  %7000 = vdwg.mxu0
  %s7001 = scalar_lea.vmem %s9, 128
  %v7002 = vld [vmem:[%s7001] sm:$0xf]
  %v7003 = vld [vmem:[%s7001 + $0x4] sm:$0xf]
  %v7004 = vld [vmem:[%s7001 + $0x8] sm:$0xf]
  %v7005 = vld [vmem:[%s7001 + $0xc] sm:$0xf]
  %v7006 = vld [vmem:[%s7001 + $0x10] sm:$0xf]
  %v7007 = vld [vmem:[%s7001 + $0x14] sm:$0xf]
  %v7008 = vld [vmem:[%s7001 + $0x18] sm:$0xf]
  %v7009 = vld [vmem:[%s7001 + $0x1c] sm:$0xf]
  %v7010 = vld [vmem:[%s7001 + $0x20] sm:$0xf]
  %v7011 = vld [vmem:[%s7001 + $0x24] sm:$0xf]
  %v7012 = vld [vmem:[%s7001 + $0x28] sm:$0xf]
  %v7013 = vld [vmem:[%s7001 + $0x2c] sm:$0xf]
  %v7014 = vld [vmem:[%s7001 + $0x30] sm:$0xf]
  %v7015 = vld [vmem:[%s7001 + $0x34] sm:$0xf]
  %v7016 = vld [vmem:[%s7001 + $0x38] sm:$0xf]
  %v7017 = vld [vmem:[%s7001 + $0x3c] sm:$0xf]
  %v7034 = vunpack.c.l.b16 %v7002
  %v7035 = vunpack.c.l.b16 %v7003
  %v7036 = vunpack.c.l.b16 %v7004
  %v7037 = vunpack.c.l.b16 %v7005
  %v7038 = vunpack.c.l.b16 %v7006
  %v7039 = vunpack.c.l.b16 %v7007
  %v7040 = vunpack.c.l.b16 %v7008
  %v7041 = vunpack.c.l.b16 %v7009
  %v7042 = vunpack.c.l.b16 %v7010
  %v7043 = vunpack.c.l.b16 %v7011
  %v7044 = vunpack.c.l.b16 %v7012
  %v7045 = vunpack.c.l.b16 %v7013
  %v7046 = vunpack.c.l.b16 %v7014
  %v7047 = vunpack.c.l.b16 %v7015
  %v7048 = vunpack.c.l.b16 %v7016
  %v7049 = vunpack.c.l.b16 %v7017
  %v7050 = vpack.c.b16 %v7035, %v7034
  %v7051 = vpack.c.b16 %v7037, %v7036
  %v7052 = vpack.c.b16 %v7039, %v7038
  %v7053 = vpack.c.b16 %v7041, %v7040
  %v7054 = vpack.c.b16 %v7043, %v7042
  %v7055 = vpack.c.b16 %v7045, %v7044
  %v7056 = vpack.c.b16 %v7047, %v7046
  %v7057 = vpack.c.b16 %v7049, %v7048
  %7066 = vmatprep.subr.bf16.mxu0 0
  %7067 = vmatpush1.bf16.msra.mxu0 %v7057
  %7068 = vmatprep.subr.bf16.mxu0 0
  %7069 = vmatpush1.bf16.msra.mxu0 %v7056
  %7070 = vmatprep.subr.bf16.mxu0 0
  %7071 = vmatpush1.bf16.msra.mxu0 %v7055
  %7072 = vmatprep.subr.bf16.mxu0 0
  %7073 = vmatpush1.bf16.msra.mxu0 %v7054
  %7074 = vmatprep.subr.bf16.mxu0 0
  %7075 = vmatpush1.bf16.msra.mxu0 %v7053
  %7076 = vmatprep.subr.bf16.mxu0 0
  %7077 = vmatpush1.bf16.msra.mxu0 %v7052
  %7078 = vmatprep.subr.bf16.mxu0 0
  %7079 = vmatpush1.bf16.msra.mxu0 %v7051
  %7080 = vmatprep.subr.bf16.mxu0 0
  %7081 = vmatpush1.bf16.msra.mxu0 %v7050
  %7082 = vmatprep.subr.bf16.mxu0 0
  %7083 = vmatpush2.bf16.msra.mxu0 0
  %7084 = vmatprep.subr.bf16.mxu0 0
  %7085 = vmatpush2.bf16.msra.mxu0 0
  %7086 = vmatprep.subr.bf16.mxu0 0
  %7087 = vmatpush2.bf16.msra.mxu0 0
  %7088 = vmatprep.subr.bf16.mxu0 0
  %7089 = vmatpush2.bf16.msra.mxu0 0
  %7090 = vmatprep.subr.bf16.mxu0 0
  %7091 = vmatpush2.bf16.msra.mxu0 0
  %7092 = vmatprep.subr.bf16.mxu0 0
  %7093 = vmatpush2.bf16.msra.mxu0 0
  %7094 = vmatprep.subr.bf16.mxu0 0
  %7095 = vmatpush2.bf16.msra.mxu0 0
  %7096 = vmatprep.subr.bf16.mxu0 0
  %7097 = vmatpush2.bf16.msra.mxu0 0
  %7098 = vmatprep.mubr.bf16.mxu0 0
  %7099 = vmatmul.mubr.bf16.gmra.mxu0 %v6647
  %v7100 = vpop.f32.mrf.mxu0
  %v7101 = vadd.f32 0.0, %v7100
  %v7102 = vpop.f32.mrf.mxu0
  %v7103 = vpop.f32.mrf.mxu0
  %v7104 = vadd.f32 0.0, %v7103
  %v7105 = vpop.f32.mrf.mxu0
  %7106 = vdwg.mxu0
  %v7107 = vpack.c.bf16 %v7104, %v7101
  %s7108 = scalar_lea.vmem %s8, 32
  %v7109 = vld [vmem:[%s7108] sm:$0xf]
  %v7110 = vld [vmem:[%s7108 + $0x4] sm:$0xf]
  %v7111 = vld [vmem:[%s7108 + $0x8] sm:$0xf]
  %v7112 = vld [vmem:[%s7108 + $0xc] sm:$0xf]
  %v7117 = vunpack.c.l.b16 %v7109
  %v7118 = vunpack.c.l.b16 %v7110
  %v7119 = vunpack.c.l.b16 %v7111
  %v7120 = vunpack.c.l.b16 %v7112
  %v7121 = vpack.c.b16 %v7118, %v7117
  %v7122 = vpack.c.b16 %v7120, %v7119
  %v7124 = vsel %vm6880, %v7121, 0
  %v7127 = vsel %vm6880, %v7122, 0
  %7129 = vmatprep.subr.bf16.mxu0 0
  %7130 = vmatpush1.bf16.msra.mxu0 0
  %7131 = vmatprep.subr.bf16.mxu0 0
  %7132 = vmatpush1.bf16.msra.mxu0 0
  %7133 = vmatprep.subr.bf16.mxu0 0
  %7134 = vmatpush1.bf16.msra.mxu0 0
  %7135 = vmatprep.subr.bf16.mxu0 0
  %7136 = vmatpush1.bf16.msra.mxu0 0
  %7137 = vmatprep.subr.bf16.mxu0 0
  %7138 = vmatpush1.bf16.msra.mxu0 0
  %7139 = vmatprep.subr.bf16.mxu0 0
  %7140 = vmatpush1.bf16.msra.mxu0 0
  %7141 = vmatprep.subr.bf16.mxu0 0
  %7142 = vmatpush1.bf16.msra.mxu0 0
  %7143 = vmatprep.subr.bf16.mxu0 0
  %7144 = vmatpush1.bf16.msra.mxu0 %v7107
  %7145 = vmatprep.subr.bf16.mxu0 0
  %7146 = vmatpush2.bf16.msra.mxu0 0
  %7147 = vmatprep.subr.bf16.mxu0 0
  %7148 = vmatpush2.bf16.msra.mxu0 0
  %7149 = vmatprep.subr.bf16.mxu0 0
  %7150 = vmatpush2.bf16.msra.mxu0 0
  %7151 = vmatprep.subr.bf16.mxu0 0
  %7152 = vmatpush2.bf16.msra.mxu0 0
  %7153 = vmatprep.subr.bf16.mxu0 0
  %7154 = vmatpush2.bf16.msra.mxu0 0
  %7155 = vmatprep.subr.bf16.mxu0 0
  %7156 = vmatpush2.bf16.msra.mxu0 0
  %7157 = vmatprep.subr.bf16.mxu0 0
  %7158 = vmatpush2.bf16.msra.mxu0 0
  %7159 = vmatprep.subr.bf16.mxu0 0
  %7160 = vmatpush2.bf16.msra.mxu0 0
  %7161 = vmatprep.mubr.bf16.mxu0 0
  %7162 = vmatmul.mubr.bf16.gmra.mxu0 %v7124
  %v7163 = vpop.f32.mrf.mxu0
  %v7164 = vadd.f32 0.0, %v7163
  %v7165 = vpop.f32.mrf.mxu0
  %v7166 = vpop.f32.mrf.mxu0
  %v7167 = vadd.f32 0.0, %v7166
  %v7168 = vpop.f32.mrf.mxu0
  %7169 = vmatprep.mubr.bf16.mxu0 0
  %7170 = vmatmul.mubr.bf16.gmra.mxu0 %v7127
  %v7171 = vpop.f32.mrf.mxu0
  %v7172 = vadd.f32 0.0, %v7171
  %v7173 = vpop.f32.mrf.mxu0
  %v7174 = vpop.f32.mrf.mxu0
  %v7175 = vadd.f32 0.0, %v7174
  %v7176 = vpop.f32.mrf.mxu0
  %7177 = vdwg.mxu0
  %v7178 = vadd.f32 %v6987, %v7164
  %v7179 = vadd.f32 %v6990, %v7167
  %v7180 = vadd.f32 %v6995, %v7172
  %v7181 = vadd.f32 %v6998, %v7175
  %s7182 = scalar_lea.vmem %s9, 192
  %v7183 = vld [vmem:[%s7182] sm:$0xf]
  %v7184 = vld [vmem:[%s7182 + $0x4] sm:$0xf]
  %v7185 = vld [vmem:[%s7182 + $0x8] sm:$0xf]
  %v7186 = vld [vmem:[%s7182 + $0xc] sm:$0xf]
  %v7187 = vld [vmem:[%s7182 + $0x10] sm:$0xf]
  %v7188 = vld [vmem:[%s7182 + $0x14] sm:$0xf]
  %v7189 = vld [vmem:[%s7182 + $0x18] sm:$0xf]
  %v7190 = vld [vmem:[%s7182 + $0x1c] sm:$0xf]
  %v7191 = vld [vmem:[%s7182 + $0x20] sm:$0xf]
  %v7192 = vld [vmem:[%s7182 + $0x24] sm:$0xf]
  %v7193 = vld [vmem:[%s7182 + $0x28] sm:$0xf]
  %v7194 = vld [vmem:[%s7182 + $0x2c] sm:$0xf]
  %v7195 = vld [vmem:[%s7182 + $0x30] sm:$0xf]
  %v7196 = vld [vmem:[%s7182 + $0x34] sm:$0xf]
  %v7197 = vld [vmem:[%s7182 + $0x38] sm:$0xf]
  %v7198 = vld [vmem:[%s7182 + $0x3c] sm:$0xf]
  %v7215 = vunpack.c.l.b16 %v7183
  %v7216 = vunpack.c.l.b16 %v7184
  %v7217 = vunpack.c.l.b16 %v7185
  %v7218 = vunpack.c.l.b16 %v7186
  %v7219 = vunpack.c.l.b16 %v7187
  %v7220 = vunpack.c.l.b16 %v7188
  %v7221 = vunpack.c.l.b16 %v7189
  %v7222 = vunpack.c.l.b16 %v7190
  %v7223 = vunpack.c.l.b16 %v7191
  %v7224 = vunpack.c.l.b16 %v7192
  %v7225 = vunpack.c.l.b16 %v7193
  %v7226 = vunpack.c.l.b16 %v7194
  %v7227 = vunpack.c.l.b16 %v7195
  %v7228 = vunpack.c.l.b16 %v7196
  %v7229 = vunpack.c.l.b16 %v7197
  %v7230 = vunpack.c.l.b16 %v7198
  %v7231 = vpack.c.b16 %v7216, %v7215
  %v7232 = vpack.c.b16 %v7218, %v7217
  %v7233 = vpack.c.b16 %v7220, %v7219
  %v7234 = vpack.c.b16 %v7222, %v7221
  %v7235 = vpack.c.b16 %v7224, %v7223
  %v7236 = vpack.c.b16 %v7226, %v7225
  %v7237 = vpack.c.b16 %v7228, %v7227
  %v7238 = vpack.c.b16 %v7230, %v7229
  %7247 = vmatprep.subr.bf16.mxu0 0
  %7248 = vmatpush1.bf16.msra.mxu0 %v7238
  %7249 = vmatprep.subr.bf16.mxu0 0
  %7250 = vmatpush1.bf16.msra.mxu0 %v7237
  %7251 = vmatprep.subr.bf16.mxu0 0
  %7252 = vmatpush1.bf16.msra.mxu0 %v7236
  %7253 = vmatprep.subr.bf16.mxu0 0
  %7254 = vmatpush1.bf16.msra.mxu0 %v7235
  %7255 = vmatprep.subr.bf16.mxu0 0
  %7256 = vmatpush1.bf16.msra.mxu0 %v7234
  %7257 = vmatprep.subr.bf16.mxu0 0
  %7258 = vmatpush1.bf16.msra.mxu0 %v7233
  %7259 = vmatprep.subr.bf16.mxu0 0
  %7260 = vmatpush1.bf16.msra.mxu0 %v7232
  %7261 = vmatprep.subr.bf16.mxu0 0
  %7262 = vmatpush1.bf16.msra.mxu0 %v7231
  %7263 = vmatprep.subr.bf16.mxu0 0
  %7264 = vmatpush2.bf16.msra.mxu0 0
  %7265 = vmatprep.subr.bf16.mxu0 0
  %7266 = vmatpush2.bf16.msra.mxu0 0
  %7267 = vmatprep.subr.bf16.mxu0 0
  %7268 = vmatpush2.bf16.msra.mxu0 0
  %7269 = vmatprep.subr.bf16.mxu0 0
  %7270 = vmatpush2.bf16.msra.mxu0 0
  %7271 = vmatprep.subr.bf16.mxu0 0
  %7272 = vmatpush2.bf16.msra.mxu0 0
  %7273 = vmatprep.subr.bf16.mxu0 0
  %7274 = vmatpush2.bf16.msra.mxu0 0
  %7275 = vmatprep.subr.bf16.mxu0 0
  %7276 = vmatpush2.bf16.msra.mxu0 0
  %7277 = vmatprep.subr.bf16.mxu0 0
  %7278 = vmatpush2.bf16.msra.mxu0 0
  %7279 = vmatprep.mubr.bf16.mxu0 0
  %7280 = vmatmul.mubr.bf16.gmra.mxu0 %v6647
  %v7281 = vpop.f32.mrf.mxu0
  %v7282 = vadd.f32 0.0, %v7281
  %v7283 = vpop.f32.mrf.mxu0
  %v7284 = vpop.f32.mrf.mxu0
  %v7285 = vadd.f32 0.0, %v7284
  %v7286 = vpop.f32.mrf.mxu0
  %7287 = vdwg.mxu0
  %v7288 = vpack.c.bf16 %v7285, %v7282
  %s7289 = scalar_lea.vmem %s8, 48
  %v7290 = vld [vmem:[%s7289] sm:$0xf]
  %v7291 = vld [vmem:[%s7289 + $0x4] sm:$0xf]
  %v7292 = vld [vmem:[%s7289 + $0x8] sm:$0xf]
  %v7293 = vld [vmem:[%s7289 + $0xc] sm:$0xf]
  %v7298 = vunpack.c.l.b16 %v7290
  %v7299 = vunpack.c.l.b16 %v7291
  %v7300 = vunpack.c.l.b16 %v7292
  %v7301 = vunpack.c.l.b16 %v7293
  %v7302 = vpack.c.b16 %v7299, %v7298
  %v7303 = vpack.c.b16 %v7301, %v7300
  %v7305 = vsel %vm6880, %v7302, 0
  %v7308 = vsel %vm6880, %v7303, 0
  %7310 = vmatprep.subr.bf16.mxu0 0
  %7311 = vmatpush1.bf16.msra.mxu0 0
  %7312 = vmatprep.subr.bf16.mxu0 0
  %7313 = vmatpush1.bf16.msra.mxu0 0
  %7314 = vmatprep.subr.bf16.mxu0 0
  %7315 = vmatpush1.bf16.msra.mxu0 0
  %7316 = vmatprep.subr.bf16.mxu0 0
  %7317 = vmatpush1.bf16.msra.mxu0 0
  %7318 = vmatprep.subr.bf16.mxu0 0
  %7319 = vmatpush1.bf16.msra.mxu0 0
  %7320 = vmatprep.subr.bf16.mxu0 0
  %7321 = vmatpush1.bf16.msra.mxu0 0
  %7322 = vmatprep.subr.bf16.mxu0 0
  %7323 = vmatpush1.bf16.msra.mxu0 0
  %7324 = vmatprep.subr.bf16.mxu0 0
  %7325 = vmatpush1.bf16.msra.mxu0 %v7288
  %7326 = vmatprep.subr.bf16.mxu0 0
  %7327 = vmatpush2.bf16.msra.mxu0 0
  %7328 = vmatprep.subr.bf16.mxu0 0
  %7329 = vmatpush2.bf16.msra.mxu0 0
  %7330 = vmatprep.subr.bf16.mxu0 0
  %7331 = vmatpush2.bf16.msra.mxu0 0
  %7332 = vmatprep.subr.bf16.mxu0 0
  %7333 = vmatpush2.bf16.msra.mxu0 0
  %7334 = vmatprep.subr.bf16.mxu0 0
  %7335 = vmatpush2.bf16.msra.mxu0 0
  %7336 = vmatprep.subr.bf16.mxu0 0
  %7337 = vmatpush2.bf16.msra.mxu0 0
  %7338 = vmatprep.subr.bf16.mxu0 0
  %7339 = vmatpush2.bf16.msra.mxu0 0
  %7340 = vmatprep.subr.bf16.mxu0 0
  %7341 = vmatpush2.bf16.msra.mxu0 0
  %7342 = vmatprep.mubr.bf16.mxu0 0
  %7343 = vmatmul.mubr.bf16.gmra.mxu0 %v7305
  %v7344 = vpop.f32.mrf.mxu0
  %v7345 = vadd.f32 0.0, %v7344
  %v7346 = vpop.f32.mrf.mxu0
  %v7347 = vpop.f32.mrf.mxu0
  %v7348 = vadd.f32 0.0, %v7347
  %v7349 = vpop.f32.mrf.mxu0
  %7350 = vmatprep.mubr.bf16.mxu0 0
  %7351 = vmatmul.mubr.bf16.gmra.mxu0 %v7308
  %v7352 = vpop.f32.mrf.mxu0
  %v7353 = vadd.f32 0.0, %v7352
  %v7354 = vpop.f32.mrf.mxu0
  %v7355 = vpop.f32.mrf.mxu0
  %v7356 = vadd.f32 0.0, %v7355
  %v7357 = vpop.f32.mrf.mxu0
  %7358 = vdwg.mxu0
  %v7359 = vadd.f32 %v7178, %v7345
  %v7360 = vadd.f32 %v7179, %v7348
  %v7361 = vadd.f32 %v7180, %v7353
  %v7362 = vadd.f32 %v7181, %v7356
  %s7363 = scalar_lea.vmem %s9, 256
  %v7364 = vld [vmem:[%s7363] sm:$0xf]
  %v7365 = vld [vmem:[%s7363 + $0x4] sm:$0xf]
  %v7366 = vld [vmem:[%s7363 + $0x8] sm:$0xf]
  %v7367 = vld [vmem:[%s7363 + $0xc] sm:$0xf]
  %v7368 = vld [vmem:[%s7363 + $0x10] sm:$0xf]
  %v7369 = vld [vmem:[%s7363 + $0x14] sm:$0xf]
  %v7370 = vld [vmem:[%s7363 + $0x18] sm:$0xf]
  %v7371 = vld [vmem:[%s7363 + $0x1c] sm:$0xf]
  %v7372 = vld [vmem:[%s7363 + $0x20] sm:$0xf]
  %v7373 = vld [vmem:[%s7363 + $0x24] sm:$0xf]
  %v7374 = vld [vmem:[%s7363 + $0x28] sm:$0xf]
  %v7375 = vld [vmem:[%s7363 + $0x2c] sm:$0xf]
  %v7376 = vld [vmem:[%s7363 + $0x30] sm:$0xf]
  %v7377 = vld [vmem:[%s7363 + $0x34] sm:$0xf]
  %v7378 = vld [vmem:[%s7363 + $0x38] sm:$0xf]
  %v7379 = vld [vmem:[%s7363 + $0x3c] sm:$0xf]
  %v7396 = vunpack.c.l.b16 %v7364
  %v7397 = vunpack.c.l.b16 %v7365
  %v7398 = vunpack.c.l.b16 %v7366
  %v7399 = vunpack.c.l.b16 %v7367
  %v7400 = vunpack.c.l.b16 %v7368
  %v7401 = vunpack.c.l.b16 %v7369
  %v7402 = vunpack.c.l.b16 %v7370
  %v7403 = vunpack.c.l.b16 %v7371
  %v7404 = vunpack.c.l.b16 %v7372
  %v7405 = vunpack.c.l.b16 %v7373
  %v7406 = vunpack.c.l.b16 %v7374
  %v7407 = vunpack.c.l.b16 %v7375
  %v7408 = vunpack.c.l.b16 %v7376
  %v7409 = vunpack.c.l.b16 %v7377
  %v7410 = vunpack.c.l.b16 %v7378
  %v7411 = vunpack.c.l.b16 %v7379
  %v7412 = vpack.c.b16 %v7397, %v7396
  %v7413 = vpack.c.b16 %v7399, %v7398
  %v7414 = vpack.c.b16 %v7401, %v7400
  %v7415 = vpack.c.b16 %v7403, %v7402
  %v7416 = vpack.c.b16 %v7405, %v7404
  %v7417 = vpack.c.b16 %v7407, %v7406
  %v7418 = vpack.c.b16 %v7409, %v7408
  %v7419 = vpack.c.b16 %v7411, %v7410
  %7428 = vmatprep.subr.bf16.mxu0 0
  %7429 = vmatpush1.bf16.msra.mxu0 %v7419
  %7430 = vmatprep.subr.bf16.mxu0 0
  %7431 = vmatpush1.bf16.msra.mxu0 %v7418
  %7432 = vmatprep.subr.bf16.mxu0 0
  %7433 = vmatpush1.bf16.msra.mxu0 %v7417
  %7434 = vmatprep.subr.bf16.mxu0 0
  %7435 = vmatpush1.bf16.msra.mxu0 %v7416
  %7436 = vmatprep.subr.bf16.mxu0 0
  %7437 = vmatpush1.bf16.msra.mxu0 %v7415
  %7438 = vmatprep.subr.bf16.mxu0 0
  %7439 = vmatpush1.bf16.msra.mxu0 %v7414
  %7440 = vmatprep.subr.bf16.mxu0 0
  %7441 = vmatpush1.bf16.msra.mxu0 %v7413
  %7442 = vmatprep.subr.bf16.mxu0 0
  %7443 = vmatpush1.bf16.msra.mxu0 %v7412
  %7444 = vmatprep.subr.bf16.mxu0 0
  %7445 = vmatpush2.bf16.msra.mxu0 0
  %7446 = vmatprep.subr.bf16.mxu0 0
  %7447 = vmatpush2.bf16.msra.mxu0 0
  %7448 = vmatprep.subr.bf16.mxu0 0
  %7449 = vmatpush2.bf16.msra.mxu0 0
  %7450 = vmatprep.subr.bf16.mxu0 0
  %7451 = vmatpush2.bf16.msra.mxu0 0
  %7452 = vmatprep.subr.bf16.mxu0 0
  %7453 = vmatpush2.bf16.msra.mxu0 0
  %7454 = vmatprep.subr.bf16.mxu0 0
  %7455 = vmatpush2.bf16.msra.mxu0 0
  %7456 = vmatprep.subr.bf16.mxu0 0
  %7457 = vmatpush2.bf16.msra.mxu0 0
  %7458 = vmatprep.subr.bf16.mxu0 0
  %7459 = vmatpush2.bf16.msra.mxu0 0
  %7460 = vmatprep.mubr.bf16.mxu0 0
  %7461 = vmatmul.mubr.bf16.gmra.mxu0 %v6647
  %v7462 = vpop.f32.mrf.mxu0
  %v7463 = vadd.f32 0.0, %v7462
  %v7464 = vpop.f32.mrf.mxu0
  %v7465 = vpop.f32.mrf.mxu0
  %v7466 = vadd.f32 0.0, %v7465
  %v7467 = vpop.f32.mrf.mxu0
  %7468 = vdwg.mxu0
  %v7469 = vpack.c.bf16 %v7466, %v7463
  %s7470 = scalar_lea.vmem %s8, 64
  %v7471 = vld [vmem:[%s7470] sm:$0xf]
  %v7472 = vld [vmem:[%s7470 + $0x4] sm:$0xf]
  %v7473 = vld [vmem:[%s7470 + $0x8] sm:$0xf]
  %v7474 = vld [vmem:[%s7470 + $0xc] sm:$0xf]
  %v7479 = vunpack.c.l.b16 %v7471
  %v7480 = vunpack.c.l.b16 %v7472
  %v7481 = vunpack.c.l.b16 %v7473
  %v7482 = vunpack.c.l.b16 %v7474
  %v7483 = vpack.c.b16 %v7480, %v7479
  %v7484 = vpack.c.b16 %v7482, %v7481
  %v7486 = vsel %vm6880, %v7483, 0
  %v7489 = vsel %vm6880, %v7484, 0
  %7491 = vmatprep.subr.bf16.mxu0 0
  %7492 = vmatpush1.bf16.msra.mxu0 0
  %7493 = vmatprep.subr.bf16.mxu0 0
  %7494 = vmatpush1.bf16.msra.mxu0 0
  %7495 = vmatprep.subr.bf16.mxu0 0
  %7496 = vmatpush1.bf16.msra.mxu0 0
  %7497 = vmatprep.subr.bf16.mxu0 0
  %7498 = vmatpush1.bf16.msra.mxu0 0
  %7499 = vmatprep.subr.bf16.mxu0 0
  %7500 = vmatpush1.bf16.msra.mxu0 0
  %7501 = vmatprep.subr.bf16.mxu0 0
  %7502 = vmatpush1.bf16.msra.mxu0 0
  %7503 = vmatprep.subr.bf16.mxu0 0
  %7504 = vmatpush1.bf16.msra.mxu0 0
  %7505 = vmatprep.subr.bf16.mxu0 0
  %7506 = vmatpush1.bf16.msra.mxu0 %v7469
  %7507 = vmatprep.subr.bf16.mxu0 0
  %7508 = vmatpush2.bf16.msra.mxu0 0
  %7509 = vmatprep.subr.bf16.mxu0 0
  %7510 = vmatpush2.bf16.msra.mxu0 0
  %7511 = vmatprep.subr.bf16.mxu0 0
  %7512 = vmatpush2.bf16.msra.mxu0 0
  %7513 = vmatprep.subr.bf16.mxu0 0
  %7514 = vmatpush2.bf16.msra.mxu0 0
  %7515 = vmatprep.subr.bf16.mxu0 0
  %7516 = vmatpush2.bf16.msra.mxu0 0
  %7517 = vmatprep.subr.bf16.mxu0 0
  %7518 = vmatpush2.bf16.msra.mxu0 0
  %7519 = vmatprep.subr.bf16.mxu0 0
  %7520 = vmatpush2.bf16.msra.mxu0 0
  %7521 = vmatprep.subr.bf16.mxu0 0
  %7522 = vmatpush2.bf16.msra.mxu0 0
  %7523 = vmatprep.mubr.bf16.mxu0 0
  %7524 = vmatmul.mubr.bf16.gmra.mxu0 %v7486
  %v7525 = vpop.f32.mrf.mxu0
  %v7526 = vadd.f32 0.0, %v7525
  %v7527 = vpop.f32.mrf.mxu0
  %v7528 = vpop.f32.mrf.mxu0
  %v7529 = vadd.f32 0.0, %v7528
  %v7530 = vpop.f32.mrf.mxu0
  %7531 = vmatprep.mubr.bf16.mxu0 0
  %7532 = vmatmul.mubr.bf16.gmra.mxu0 %v7489
  %v7533 = vpop.f32.mrf.mxu0
  %v7534 = vadd.f32 0.0, %v7533
  %v7535 = vpop.f32.mrf.mxu0
  %v7536 = vpop.f32.mrf.mxu0
  %v7537 = vadd.f32 0.0, %v7536
  %v7538 = vpop.f32.mrf.mxu0
  %7539 = vdwg.mxu0
  %v7540 = vadd.f32 %v7359, %v7526
  %v7541 = vadd.f32 %v7360, %v7529
  %v7542 = vadd.f32 %v7361, %v7534
  %v7543 = vadd.f32 %v7362, %v7537
  %s7544 = scalar_lea.vmem %s9, 320
  %v7545 = vld [vmem:[%s7544] sm:$0xf]
  %v7546 = vld [vmem:[%s7544 + $0x4] sm:$0xf]
  %v7547 = vld [vmem:[%s7544 + $0x8] sm:$0xf]
  %v7548 = vld [vmem:[%s7544 + $0xc] sm:$0xf]
  %v7549 = vld [vmem:[%s7544 + $0x10] sm:$0xf]
  %v7550 = vld [vmem:[%s7544 + $0x14] sm:$0xf]
  %v7551 = vld [vmem:[%s7544 + $0x18] sm:$0xf]
  %v7552 = vld [vmem:[%s7544 + $0x1c] sm:$0xf]
  %v7553 = vld [vmem:[%s7544 + $0x20] sm:$0xf]
  %v7554 = vld [vmem:[%s7544 + $0x24] sm:$0xf]
  %v7555 = vld [vmem:[%s7544 + $0x28] sm:$0xf]
  %v7556 = vld [vmem:[%s7544 + $0x2c] sm:$0xf]
  %v7557 = vld [vmem:[%s7544 + $0x30] sm:$0xf]
  %v7558 = vld [vmem:[%s7544 + $0x34] sm:$0xf]
  %v7559 = vld [vmem:[%s7544 + $0x38] sm:$0xf]
  %v7560 = vld [vmem:[%s7544 + $0x3c] sm:$0xf]
  %v7577 = vunpack.c.l.b16 %v7545
  %v7578 = vunpack.c.l.b16 %v7546
  %v7579 = vunpack.c.l.b16 %v7547
  %v7580 = vunpack.c.l.b16 %v7548
  %v7581 = vunpack.c.l.b16 %v7549
  %v7582 = vunpack.c.l.b16 %v7550
  %v7583 = vunpack.c.l.b16 %v7551
  %v7584 = vunpack.c.l.b16 %v7552
  %v7585 = vunpack.c.l.b16 %v7553
  %v7586 = vunpack.c.l.b16 %v7554
  %v7587 = vunpack.c.l.b16 %v7555
  %v7588 = vunpack.c.l.b16 %v7556
  %v7589 = vunpack.c.l.b16 %v7557
  %v7590 = vunpack.c.l.b16 %v7558
  %v7591 = vunpack.c.l.b16 %v7559
  %v7592 = vunpack.c.l.b16 %v7560
  %v7593 = vpack.c.b16 %v7578, %v7577
  %v7594 = vpack.c.b16 %v7580, %v7579
  %v7595 = vpack.c.b16 %v7582, %v7581
  %v7596 = vpack.c.b16 %v7584, %v7583
  %v7597 = vpack.c.b16 %v7586, %v7585
  %v7598 = vpack.c.b16 %v7588, %v7587
  %v7599 = vpack.c.b16 %v7590, %v7589
  %v7600 = vpack.c.b16 %v7592, %v7591
  %7609 = vmatprep.subr.bf16.mxu0 0
  %7610 = vmatpush1.bf16.msra.mxu0 %v7600
  %7611 = vmatprep.subr.bf16.mxu0 0
  %7612 = vmatpush1.bf16.msra.mxu0 %v7599
  %7613 = vmatprep.subr.bf16.mxu0 0
  %7614 = vmatpush1.bf16.msra.mxu0 %v7598
  %7615 = vmatprep.subr.bf16.mxu0 0
  %7616 = vmatpush1.bf16.msra.mxu0 %v7597
  %7617 = vmatprep.subr.bf16.mxu0 0
  %7618 = vmatpush1.bf16.msra.mxu0 %v7596
  %7619 = vmatprep.subr.bf16.mxu0 0
  %7620 = vmatpush1.bf16.msra.mxu0 %v7595
  %7621 = vmatprep.subr.bf16.mxu0 0
  %7622 = vmatpush1.bf16.msra.mxu0 %v7594
  %7623 = vmatprep.subr.bf16.mxu0 0
  %7624 = vmatpush1.bf16.msra.mxu0 %v7593
  %7625 = vmatprep.subr.bf16.mxu0 0
  %7626 = vmatpush2.bf16.msra.mxu0 0
  %7627 = vmatprep.subr.bf16.mxu0 0
  %7628 = vmatpush2.bf16.msra.mxu0 0
  %7629 = vmatprep.subr.bf16.mxu0 0
  %7630 = vmatpush2.bf16.msra.mxu0 0
  %7631 = vmatprep.subr.bf16.mxu0 0
  %7632 = vmatpush2.bf16.msra.mxu0 0
  %7633 = vmatprep.subr.bf16.mxu0 0
  %7634 = vmatpush2.bf16.msra.mxu0 0
  %7635 = vmatprep.subr.bf16.mxu0 0
  %7636 = vmatpush2.bf16.msra.mxu0 0
  %7637 = vmatprep.subr.bf16.mxu0 0
  %7638 = vmatpush2.bf16.msra.mxu0 0
  %7639 = vmatprep.subr.bf16.mxu0 0
  %7640 = vmatpush2.bf16.msra.mxu0 0
  %7641 = vmatprep.mubr.bf16.mxu0 0
  %7642 = vmatmul.mubr.bf16.gmra.mxu0 %v6647
  %v7643 = vpop.f32.mrf.mxu0
  %v7644 = vadd.f32 0.0, %v7643
  %v7645 = vpop.f32.mrf.mxu0
  %v7646 = vpop.f32.mrf.mxu0
  %v7647 = vadd.f32 0.0, %v7646
  %v7648 = vpop.f32.mrf.mxu0
  %7649 = vdwg.mxu0
  %v7650 = vpack.c.bf16 %v7647, %v7644
  %s7651 = scalar_lea.vmem %s8, 80
  %v7652 = vld [vmem:[%s7651] sm:$0xf]
  %v7653 = vld [vmem:[%s7651 + $0x4] sm:$0xf]
  %v7654 = vld [vmem:[%s7651 + $0x8] sm:$0xf]
  %v7655 = vld [vmem:[%s7651 + $0xc] sm:$0xf]
  %v7660 = vunpack.c.l.b16 %v7652
  %v7661 = vunpack.c.l.b16 %v7653
  %v7662 = vunpack.c.l.b16 %v7654
  %v7663 = vunpack.c.l.b16 %v7655
  %v7664 = vpack.c.b16 %v7661, %v7660
  %v7665 = vpack.c.b16 %v7663, %v7662
  %v7667 = vsel %vm6880, %v7664, 0
  %v7670 = vsel %vm6880, %v7665, 0
  %7672 = vmatprep.subr.bf16.mxu0 0
  %7673 = vmatpush1.bf16.msra.mxu0 0
  %7674 = vmatprep.subr.bf16.mxu0 0
  %7675 = vmatpush1.bf16.msra.mxu0 0
  %7676 = vmatprep.subr.bf16.mxu0 0
  %7677 = vmatpush1.bf16.msra.mxu0 0
  %7678 = vmatprep.subr.bf16.mxu0 0
  %7679 = vmatpush1.bf16.msra.mxu0 0
  %7680 = vmatprep.subr.bf16.mxu0 0
  %7681 = vmatpush1.bf16.msra.mxu0 0
  %7682 = vmatprep.subr.bf16.mxu0 0
  %7683 = vmatpush1.bf16.msra.mxu0 0
  %7684 = vmatprep.subr.bf16.mxu0 0
  %7685 = vmatpush1.bf16.msra.mxu0 0
  %7686 = vmatprep.subr.bf16.mxu0 0
  %7687 = vmatpush1.bf16.msra.mxu0 %v7650
  %7688 = vmatprep.subr.bf16.mxu0 0
  %7689 = vmatpush2.bf16.msra.mxu0 0
  %7690 = vmatprep.subr.bf16.mxu0 0
  %7691 = vmatpush2.bf16.msra.mxu0 0
  %7692 = vmatprep.subr.bf16.mxu0 0
  %7693 = vmatpush2.bf16.msra.mxu0 0
  %7694 = vmatprep.subr.bf16.mxu0 0
  %7695 = vmatpush2.bf16.msra.mxu0 0
  %7696 = vmatprep.subr.bf16.mxu0 0
  %7697 = vmatpush2.bf16.msra.mxu0 0
  %7698 = vmatprep.subr.bf16.mxu0 0
  %7699 = vmatpush2.bf16.msra.mxu0 0
  %7700 = vmatprep.subr.bf16.mxu0 0
  %7701 = vmatpush2.bf16.msra.mxu0 0
  %7702 = vmatprep.subr.bf16.mxu0 0
  %7703 = vmatpush2.bf16.msra.mxu0 0
  %7704 = vmatprep.mubr.bf16.mxu0 0
  %7705 = vmatmul.mubr.bf16.gmra.mxu0 %v7667
  %v7706 = vpop.f32.mrf.mxu0
  %v7707 = vadd.f32 0.0, %v7706
  %v7708 = vpop.f32.mrf.mxu0
  %v7709 = vpop.f32.mrf.mxu0
  %v7710 = vadd.f32 0.0, %v7709
  %v7711 = vpop.f32.mrf.mxu0
  %7712 = vmatprep.mubr.bf16.mxu0 0
  %7713 = vmatmul.mubr.bf16.gmra.mxu0 %v7670
  %v7714 = vpop.f32.mrf.mxu0
  %v7715 = vadd.f32 0.0, %v7714
  %v7716 = vpop.f32.mrf.mxu0
  %v7717 = vpop.f32.mrf.mxu0
  %v7718 = vadd.f32 0.0, %v7717
  %v7719 = vpop.f32.mrf.mxu0
  %7720 = vdwg.mxu0
  %v7721 = vadd.f32 %v7540, %v7707
  %v7722 = vadd.f32 %v7541, %v7710
  %v7723 = vadd.f32 %v7542, %v7715
  %v7724 = vadd.f32 %v7543, %v7718
  %s7725 = scalar_lea.vmem %s9, 384
  %v7726 = vld [vmem:[%s7725] sm:$0xf]
  %v7727 = vld [vmem:[%s7725 + $0x4] sm:$0xf]
  %v7728 = vld [vmem:[%s7725 + $0x8] sm:$0xf]
  %v7729 = vld [vmem:[%s7725 + $0xc] sm:$0xf]
  %v7730 = vld [vmem:[%s7725 + $0x10] sm:$0xf]
  %v7731 = vld [vmem:[%s7725 + $0x14] sm:$0xf]
  %v7732 = vld [vmem:[%s7725 + $0x18] sm:$0xf]
  %v7733 = vld [vmem:[%s7725 + $0x1c] sm:$0xf]
  %v7734 = vld [vmem:[%s7725 + $0x20] sm:$0xf]
  %v7735 = vld [vmem:[%s7725 + $0x24] sm:$0xf]
  %v7736 = vld [vmem:[%s7725 + $0x28] sm:$0xf]
  %v7737 = vld [vmem:[%s7725 + $0x2c] sm:$0xf]
  %v7738 = vld [vmem:[%s7725 + $0x30] sm:$0xf]
  %v7739 = vld [vmem:[%s7725 + $0x34] sm:$0xf]
  %v7740 = vld [vmem:[%s7725 + $0x38] sm:$0xf]
  %v7741 = vld [vmem:[%s7725 + $0x3c] sm:$0xf]
  %v7758 = vunpack.c.l.b16 %v7726
  %v7759 = vunpack.c.l.b16 %v7727
  %v7760 = vunpack.c.l.b16 %v7728
  %v7761 = vunpack.c.l.b16 %v7729
  %v7762 = vunpack.c.l.b16 %v7730
  %v7763 = vunpack.c.l.b16 %v7731
  %v7764 = vunpack.c.l.b16 %v7732
  %v7765 = vunpack.c.l.b16 %v7733
  %v7766 = vunpack.c.l.b16 %v7734
  %v7767 = vunpack.c.l.b16 %v7735
  %v7768 = vunpack.c.l.b16 %v7736
  %v7769 = vunpack.c.l.b16 %v7737
  %v7770 = vunpack.c.l.b16 %v7738
  %v7771 = vunpack.c.l.b16 %v7739
  %v7772 = vunpack.c.l.b16 %v7740
  %v7773 = vunpack.c.l.b16 %v7741
  %v7774 = vpack.c.b16 %v7759, %v7758
  %v7775 = vpack.c.b16 %v7761, %v7760
  %v7776 = vpack.c.b16 %v7763, %v7762
  %v7777 = vpack.c.b16 %v7765, %v7764
  %v7778 = vpack.c.b16 %v7767, %v7766
  %v7779 = vpack.c.b16 %v7769, %v7768
  %v7780 = vpack.c.b16 %v7771, %v7770
  %v7781 = vpack.c.b16 %v7773, %v7772
  %7790 = vmatprep.subr.bf16.mxu0 0
  %7791 = vmatpush1.bf16.msra.mxu0 %v7781
  %7792 = vmatprep.subr.bf16.mxu0 0
  %7793 = vmatpush1.bf16.msra.mxu0 %v7780
  %7794 = vmatprep.subr.bf16.mxu0 0
  %7795 = vmatpush1.bf16.msra.mxu0 %v7779
  %7796 = vmatprep.subr.bf16.mxu0 0
  %7797 = vmatpush1.bf16.msra.mxu0 %v7778
  %7798 = vmatprep.subr.bf16.mxu0 0
  %7799 = vmatpush1.bf16.msra.mxu0 %v7777
  %7800 = vmatprep.subr.bf16.mxu0 0
  %7801 = vmatpush1.bf16.msra.mxu0 %v7776
  %7802 = vmatprep.subr.bf16.mxu0 0
  %7803 = vmatpush1.bf16.msra.mxu0 %v7775
  %7804 = vmatprep.subr.bf16.mxu0 0
  %7805 = vmatpush1.bf16.msra.mxu0 %v7774
  %7806 = vmatprep.subr.bf16.mxu0 0
  %7807 = vmatpush2.bf16.msra.mxu0 0
  %7808 = vmatprep.subr.bf16.mxu0 0
  %7809 = vmatpush2.bf16.msra.mxu0 0
  %7810 = vmatprep.subr.bf16.mxu0 0
  %7811 = vmatpush2.bf16.msra.mxu0 0
  %7812 = vmatprep.subr.bf16.mxu0 0
  %7813 = vmatpush2.bf16.msra.mxu0 0
  %7814 = vmatprep.subr.bf16.mxu0 0
  %7815 = vmatpush2.bf16.msra.mxu0 0
  %7816 = vmatprep.subr.bf16.mxu0 0
  %7817 = vmatpush2.bf16.msra.mxu0 0
  %7818 = vmatprep.subr.bf16.mxu0 0
  %7819 = vmatpush2.bf16.msra.mxu0 0
  %7820 = vmatprep.subr.bf16.mxu0 0
  %7821 = vmatpush2.bf16.msra.mxu0 0
  %7822 = vmatprep.mubr.bf16.mxu0 0
  %7823 = vmatmul.mubr.bf16.gmra.mxu0 %v6647
  %v7824 = vpop.f32.mrf.mxu0
  %v7825 = vadd.f32 0.0, %v7824
  %v7826 = vpop.f32.mrf.mxu0
  %v7827 = vpop.f32.mrf.mxu0
  %v7828 = vadd.f32 0.0, %v7827
  %v7829 = vpop.f32.mrf.mxu0
  %7830 = vdwg.mxu0
  %v7831 = vpack.c.bf16 %v7828, %v7825
  %s7832 = scalar_lea.vmem %s8, 96
  %v7833 = vld [vmem:[%s7832] sm:$0xf]
  %v7834 = vld [vmem:[%s7832 + $0x4] sm:$0xf]
  %v7835 = vld [vmem:[%s7832 + $0x8] sm:$0xf]
  %v7836 = vld [vmem:[%s7832 + $0xc] sm:$0xf]
  %v7841 = vunpack.c.l.b16 %v7833
  %v7842 = vunpack.c.l.b16 %v7834
  %v7843 = vunpack.c.l.b16 %v7835
  %v7844 = vunpack.c.l.b16 %v7836
  %v7845 = vpack.c.b16 %v7842, %v7841
  %v7846 = vpack.c.b16 %v7844, %v7843
  %v7848 = vsel %vm6880, %v7845, 0
  %v7851 = vsel %vm6880, %v7846, 0
  %7853 = vmatprep.subr.bf16.mxu0 0
  %7854 = vmatpush1.bf16.msra.mxu0 0
  %7855 = vmatprep.subr.bf16.mxu0 0
  %7856 = vmatpush1.bf16.msra.mxu0 0
  %7857 = vmatprep.subr.bf16.mxu0 0
  %7858 = vmatpush1.bf16.msra.mxu0 0
  %7859 = vmatprep.subr.bf16.mxu0 0
  %7860 = vmatpush1.bf16.msra.mxu0 0
  %7861 = vmatprep.subr.bf16.mxu0 0
  %7862 = vmatpush1.bf16.msra.mxu0 0
  %7863 = vmatprep.subr.bf16.mxu0 0
  %7864 = vmatpush1.bf16.msra.mxu0 0
  %7865 = vmatprep.subr.bf16.mxu0 0
  %7866 = vmatpush1.bf16.msra.mxu0 0
  %7867 = vmatprep.subr.bf16.mxu0 0
  %7868 = vmatpush1.bf16.msra.mxu0 %v7831
  %7869 = vmatprep.subr.bf16.mxu0 0
  %7870 = vmatpush2.bf16.msra.mxu0 0
  %7871 = vmatprep.subr.bf16.mxu0 0
  %7872 = vmatpush2.bf16.msra.mxu0 0
  %7873 = vmatprep.subr.bf16.mxu0 0
  %7874 = vmatpush2.bf16.msra.mxu0 0
  %7875 = vmatprep.subr.bf16.mxu0 0
  %7876 = vmatpush2.bf16.msra.mxu0 0
  %7877 = vmatprep.subr.bf16.mxu0 0
  %7878 = vmatpush2.bf16.msra.mxu0 0
  %7879 = vmatprep.subr.bf16.mxu0 0
  %7880 = vmatpush2.bf16.msra.mxu0 0
  %7881 = vmatprep.subr.bf16.mxu0 0
  %7882 = vmatpush2.bf16.msra.mxu0 0
  %7883 = vmatprep.subr.bf16.mxu0 0
  %7884 = vmatpush2.bf16.msra.mxu0 0
  %7885 = vmatprep.mubr.bf16.mxu0 0
  %7886 = vmatmul.mubr.bf16.gmra.mxu0 %v7848
  %v7887 = vpop.f32.mrf.mxu0
  %v7888 = vadd.f32 0.0, %v7887
  %v7889 = vpop.f32.mrf.mxu0
  %v7890 = vpop.f32.mrf.mxu0
  %v7891 = vadd.f32 0.0, %v7890
  %v7892 = vpop.f32.mrf.mxu0
  %7893 = vmatprep.mubr.bf16.mxu0 0
  %7894 = vmatmul.mubr.bf16.gmra.mxu0 %v7851
  %v7895 = vpop.f32.mrf.mxu0
  %v7896 = vadd.f32 0.0, %v7895
  %v7897 = vpop.f32.mrf.mxu0
  %v7898 = vpop.f32.mrf.mxu0
  %v7899 = vadd.f32 0.0, %v7898
  %v7900 = vpop.f32.mrf.mxu0
  %7901 = vdwg.mxu0
  %v7902 = vadd.f32 %v7721, %v7888
  %v7903 = vadd.f32 %v7722, %v7891
  %v7904 = vadd.f32 %v7723, %v7896
  %v7905 = vadd.f32 %v7724, %v7899
  %s7906 = scalar_lea.vmem %s9, 448
  %v7907 = vld [vmem:[%s7906] sm:$0xf]
  %v7908 = vld [vmem:[%s7906 + $0x4] sm:$0xf]
  %v7909 = vld [vmem:[%s7906 + $0x8] sm:$0xf]
  %v7910 = vld [vmem:[%s7906 + $0xc] sm:$0xf]
  %v7911 = vld [vmem:[%s7906 + $0x10] sm:$0xf]
  %v7912 = vld [vmem:[%s7906 + $0x14] sm:$0xf]
  %v7913 = vld [vmem:[%s7906 + $0x18] sm:$0xf]
  %v7914 = vld [vmem:[%s7906 + $0x1c] sm:$0xf]
  %v7915 = vld [vmem:[%s7906 + $0x20] sm:$0xf]
  %v7916 = vld [vmem:[%s7906 + $0x24] sm:$0xf]
  %v7917 = vld [vmem:[%s7906 + $0x28] sm:$0xf]
  %v7918 = vld [vmem:[%s7906 + $0x2c] sm:$0xf]
  %v7919 = vld [vmem:[%s7906 + $0x30] sm:$0xf]
  %v7920 = vld [vmem:[%s7906 + $0x34] sm:$0xf]
  %v7921 = vld [vmem:[%s7906 + $0x38] sm:$0xf]
  %v7922 = vld [vmem:[%s7906 + $0x3c] sm:$0xf]
  %v7939 = vunpack.c.l.b16 %v7907
  %v7940 = vunpack.c.l.b16 %v7908
  %v7941 = vunpack.c.l.b16 %v7909
  %v7942 = vunpack.c.l.b16 %v7910
  %v7943 = vunpack.c.l.b16 %v7911
  %v7944 = vunpack.c.l.b16 %v7912
  %v7945 = vunpack.c.l.b16 %v7913
  %v7946 = vunpack.c.l.b16 %v7914
  %v7947 = vunpack.c.l.b16 %v7915
  %v7948 = vunpack.c.l.b16 %v7916
  %v7949 = vunpack.c.l.b16 %v7917
  %v7950 = vunpack.c.l.b16 %v7918
  %v7951 = vunpack.c.l.b16 %v7919
  %v7952 = vunpack.c.l.b16 %v7920
  %v7953 = vunpack.c.l.b16 %v7921
  %v7954 = vunpack.c.l.b16 %v7922
  %v7955 = vpack.c.b16 %v7940, %v7939
  %v7956 = vpack.c.b16 %v7942, %v7941
  %v7957 = vpack.c.b16 %v7944, %v7943
  %v7958 = vpack.c.b16 %v7946, %v7945
  %v7959 = vpack.c.b16 %v7948, %v7947
  %v7960 = vpack.c.b16 %v7950, %v7949
  %v7961 = vpack.c.b16 %v7952, %v7951
  %v7962 = vpack.c.b16 %v7954, %v7953
  %7971 = vmatprep.subr.bf16.mxu0 0
  %7972 = vmatpush1.bf16.msra.mxu0 %v7962
  %7973 = vmatprep.subr.bf16.mxu0 0
  %7974 = vmatpush1.bf16.msra.mxu0 %v7961
  %7975 = vmatprep.subr.bf16.mxu0 0
  %7976 = vmatpush1.bf16.msra.mxu0 %v7960
  %7977 = vmatprep.subr.bf16.mxu0 0
  %7978 = vmatpush1.bf16.msra.mxu0 %v7959
  %7979 = vmatprep.subr.bf16.mxu0 0
  %7980 = vmatpush1.bf16.msra.mxu0 %v7958
  %7981 = vmatprep.subr.bf16.mxu0 0
  %7982 = vmatpush1.bf16.msra.mxu0 %v7957
  %7983 = vmatprep.subr.bf16.mxu0 0
  %7984 = vmatpush1.bf16.msra.mxu0 %v7956
  %7985 = vmatprep.subr.bf16.mxu0 0
  %7986 = vmatpush1.bf16.msra.mxu0 %v7955
  %7987 = vmatprep.subr.bf16.mxu0 0
  %7988 = vmatpush2.bf16.msra.mxu0 0
  %7989 = vmatprep.subr.bf16.mxu0 0
  %7990 = vmatpush2.bf16.msra.mxu0 0
  %7991 = vmatprep.subr.bf16.mxu0 0
  %7992 = vmatpush2.bf16.msra.mxu0 0
  %7993 = vmatprep.subr.bf16.mxu0 0
  %7994 = vmatpush2.bf16.msra.mxu0 0
  %7995 = vmatprep.subr.bf16.mxu0 0
  %7996 = vmatpush2.bf16.msra.mxu0 0
  %7997 = vmatprep.subr.bf16.mxu0 0
  %7998 = vmatpush2.bf16.msra.mxu0 0
  %7999 = vmatprep.subr.bf16.mxu0 0
  %8000 = vmatpush2.bf16.msra.mxu0 0
  %8001 = vmatprep.subr.bf16.mxu0 0
  %8002 = vmatpush2.bf16.msra.mxu0 0
  %8003 = vmatprep.mubr.bf16.mxu0 0
  %8004 = vmatmul.mubr.bf16.gmra.mxu0 %v6647
  %v8005 = vpop.f32.mrf.mxu0
  %v8006 = vadd.f32 0.0, %v8005
  %v8007 = vpop.f32.mrf.mxu0
  %v8008 = vpop.f32.mrf.mxu0
  %v8009 = vadd.f32 0.0, %v8008
  %v8010 = vpop.f32.mrf.mxu0
  %8011 = vdwg.mxu0
  %v8012 = vpack.c.bf16 %v8009, %v8006
  %s8013 = scalar_lea.vmem %s8, 112
  %v8014 = vld [vmem:[%s8013] sm:$0xf]
  %v8015 = vld [vmem:[%s8013 + $0x4] sm:$0xf]
  %v8016 = vld [vmem:[%s8013 + $0x8] sm:$0xf]
  %v8017 = vld [vmem:[%s8013 + $0xc] sm:$0xf]
  %v8022 = vunpack.c.l.b16 %v8014
  %v8023 = vunpack.c.l.b16 %v8015
  %v8024 = vunpack.c.l.b16 %v8016
  %v8025 = vunpack.c.l.b16 %v8017
  %v8026 = vpack.c.b16 %v8023, %v8022
  %v8027 = vpack.c.b16 %v8025, %v8024
  %v8029 = vsel %vm6880, %v8026, 0
  %v8032 = vsel %vm6880, %v8027, 0
  %8034 = vmatprep.subr.bf16.mxu0 0
  %8035 = vmatpush1.bf16.msra.mxu0 0
  %8036 = vmatprep.subr.bf16.mxu0 0
  %8037 = vmatpush1.bf16.msra.mxu0 0
  %8038 = vmatprep.subr.bf16.mxu0 0
  %8039 = vmatpush1.bf16.msra.mxu0 0
  %8040 = vmatprep.subr.bf16.mxu0 0
  %8041 = vmatpush1.bf16.msra.mxu0 0
  %8042 = vmatprep.subr.bf16.mxu0 0
  %8043 = vmatpush1.bf16.msra.mxu0 0
  %8044 = vmatprep.subr.bf16.mxu0 0
  %8045 = vmatpush1.bf16.msra.mxu0 0
  %8046 = vmatprep.subr.bf16.mxu0 0
  %8047 = vmatpush1.bf16.msra.mxu0 0
  %8048 = vmatprep.subr.bf16.mxu0 0
  %8049 = vmatpush1.bf16.msra.mxu0 %v8012
  %8050 = vmatprep.subr.bf16.mxu0 0
  %8051 = vmatpush2.bf16.msra.mxu0 0
  %8052 = vmatprep.subr.bf16.mxu0 0
  %8053 = vmatpush2.bf16.msra.mxu0 0
  %8054 = vmatprep.subr.bf16.mxu0 0
  %8055 = vmatpush2.bf16.msra.mxu0 0
  %8056 = vmatprep.subr.bf16.mxu0 0
  %8057 = vmatpush2.bf16.msra.mxu0 0
  %8058 = vmatprep.subr.bf16.mxu0 0
  %8059 = vmatpush2.bf16.msra.mxu0 0
  %8060 = vmatprep.subr.bf16.mxu0 0
  %8061 = vmatpush2.bf16.msra.mxu0 0
  %8062 = vmatprep.subr.bf16.mxu0 0
  %8063 = vmatpush2.bf16.msra.mxu0 0
  %8064 = vmatprep.subr.bf16.mxu0 0
  %8065 = vmatpush2.bf16.msra.mxu0 0
  %8066 = vmatprep.mubr.bf16.mxu0 0
  %8067 = vmatmul.mubr.bf16.gmra.mxu0 %v8029
  %v8068 = vpop.f32.mrf.mxu0
  %v8069 = vadd.f32 0.0, %v8068
  %v8070 = vpop.f32.mrf.mxu0
  %v8071 = vpop.f32.mrf.mxu0
  %v8072 = vadd.f32 0.0, %v8071
  %v8073 = vpop.f32.mrf.mxu0
  %8074 = vmatprep.mubr.bf16.mxu0 0
  %8075 = vmatmul.mubr.bf16.gmra.mxu0 %v8032
  %v8076 = vpop.f32.mrf.mxu0
  %v8077 = vadd.f32 0.0, %v8076
  %v8078 = vpop.f32.mrf.mxu0
  %v8079 = vpop.f32.mrf.mxu0
  %v8080 = vadd.f32 0.0, %v8079
  %v8081 = vpop.f32.mrf.mxu0
  %8082 = vdwg.mxu0
  %v8083 = vadd.f32 %v7902, %v8069
  %v8084 = vadd.f32 %v7903, %v8072
  %v8085 = vadd.f32 %v7904, %v8077
  %v8086 = vadd.f32 %v7905, %v8080
  %s8087 = scalar_lea.vmem %s9, 512
  %v8088 = vld [vmem:[%s8087] sm:$0xf]
  %v8089 = vld [vmem:[%s8087 + $0x4] sm:$0xf]
  %v8090 = vld [vmem:[%s8087 + $0x8] sm:$0xf]
  %v8091 = vld [vmem:[%s8087 + $0xc] sm:$0xf]
  %v8092 = vld [vmem:[%s8087 + $0x10] sm:$0xf]
  %v8093 = vld [vmem:[%s8087 + $0x14] sm:$0xf]
  %v8094 = vld [vmem:[%s8087 + $0x18] sm:$0xf]
  %v8095 = vld [vmem:[%s8087 + $0x1c] sm:$0xf]
  %v8096 = vld [vmem:[%s8087 + $0x20] sm:$0xf]
  %v8097 = vld [vmem:[%s8087 + $0x24] sm:$0xf]
  %v8098 = vld [vmem:[%s8087 + $0x28] sm:$0xf]
  %v8099 = vld [vmem:[%s8087 + $0x2c] sm:$0xf]
  %v8100 = vld [vmem:[%s8087 + $0x30] sm:$0xf]
  %v8101 = vld [vmem:[%s8087 + $0x34] sm:$0xf]
  %v8102 = vld [vmem:[%s8087 + $0x38] sm:$0xf]
  %v8103 = vld [vmem:[%s8087 + $0x3c] sm:$0xf]
  %v8120 = vunpack.c.l.b16 %v8088
  %v8121 = vunpack.c.l.b16 %v8089
  %v8122 = vunpack.c.l.b16 %v8090
  %v8123 = vunpack.c.l.b16 %v8091
  %v8124 = vunpack.c.l.b16 %v8092
  %v8125 = vunpack.c.l.b16 %v8093
  %v8126 = vunpack.c.l.b16 %v8094
  %v8127 = vunpack.c.l.b16 %v8095
  %v8128 = vunpack.c.l.b16 %v8096
  %v8129 = vunpack.c.l.b16 %v8097
  %v8130 = vunpack.c.l.b16 %v8098
  %v8131 = vunpack.c.l.b16 %v8099
  %v8132 = vunpack.c.l.b16 %v8100
  %v8133 = vunpack.c.l.b16 %v8101
  %v8134 = vunpack.c.l.b16 %v8102
  %v8135 = vunpack.c.l.b16 %v8103
  %v8136 = vpack.c.b16 %v8121, %v8120
  %v8137 = vpack.c.b16 %v8123, %v8122
  %v8138 = vpack.c.b16 %v8125, %v8124
  %v8139 = vpack.c.b16 %v8127, %v8126
  %v8140 = vpack.c.b16 %v8129, %v8128
  %v8141 = vpack.c.b16 %v8131, %v8130
  %v8142 = vpack.c.b16 %v8133, %v8132
  %v8143 = vpack.c.b16 %v8135, %v8134
  %8152 = vmatprep.subr.bf16.mxu0 0
  %8153 = vmatpush1.bf16.msra.mxu0 %v8143
  %8154 = vmatprep.subr.bf16.mxu0 0
  %8155 = vmatpush1.bf16.msra.mxu0 %v8142
  %8156 = vmatprep.subr.bf16.mxu0 0
  %8157 = vmatpush1.bf16.msra.mxu0 %v8141
  %8158 = vmatprep.subr.bf16.mxu0 0
  %8159 = vmatpush1.bf16.msra.mxu0 %v8140
  %8160 = vmatprep.subr.bf16.mxu0 0
  %8161 = vmatpush1.bf16.msra.mxu0 %v8139
  %8162 = vmatprep.subr.bf16.mxu0 0
  %8163 = vmatpush1.bf16.msra.mxu0 %v8138
  %8164 = vmatprep.subr.bf16.mxu0 0
  %8165 = vmatpush1.bf16.msra.mxu0 %v8137
  %8166 = vmatprep.subr.bf16.mxu0 0
  %8167 = vmatpush1.bf16.msra.mxu0 %v8136
  %8168 = vmatprep.subr.bf16.mxu0 0
  %8169 = vmatpush2.bf16.msra.mxu0 0
  %8170 = vmatprep.subr.bf16.mxu0 0
  %8171 = vmatpush2.bf16.msra.mxu0 0
  %8172 = vmatprep.subr.bf16.mxu0 0
  %8173 = vmatpush2.bf16.msra.mxu0 0
  %8174 = vmatprep.subr.bf16.mxu0 0
  %8175 = vmatpush2.bf16.msra.mxu0 0
  %8176 = vmatprep.subr.bf16.mxu0 0
  %8177 = vmatpush2.bf16.msra.mxu0 0
  %8178 = vmatprep.subr.bf16.mxu0 0
  %8179 = vmatpush2.bf16.msra.mxu0 0
  %8180 = vmatprep.subr.bf16.mxu0 0
  %8181 = vmatpush2.bf16.msra.mxu0 0
  %8182 = vmatprep.subr.bf16.mxu0 0
  %8183 = vmatpush2.bf16.msra.mxu0 0
  %8184 = vmatprep.mubr.bf16.mxu0 0
  %8185 = vmatmul.mubr.bf16.gmra.mxu0 %v6647
  %v8186 = vpop.f32.mrf.mxu0
  %v8187 = vadd.f32 0.0, %v8186
  %v8188 = vpop.f32.mrf.mxu0
  %v8189 = vpop.f32.mrf.mxu0
  %v8190 = vadd.f32 0.0, %v8189
  %v8191 = vpop.f32.mrf.mxu0
  %8192 = vdwg.mxu0
  %v8193 = vpack.c.bf16 %v8190, %v8187
  %s8194 = scalar_lea.vmem %s8, 128
  %v8195 = vld [vmem:[%s8194] sm:$0xf]
  %v8196 = vld [vmem:[%s8194 + $0x4] sm:$0xf]
  %v8197 = vld [vmem:[%s8194 + $0x8] sm:$0xf]
  %v8198 = vld [vmem:[%s8194 + $0xc] sm:$0xf]
  %v8203 = vunpack.c.l.b16 %v8195
  %v8204 = vunpack.c.l.b16 %v8196
  %v8205 = vunpack.c.l.b16 %v8197
  %v8206 = vunpack.c.l.b16 %v8198
  %v8207 = vpack.c.b16 %v8204, %v8203
  %v8208 = vpack.c.b16 %v8206, %v8205
  %v8210 = vsel %vm6880, %v8207, 0
  %v8213 = vsel %vm6880, %v8208, 0
  %8215 = vmatprep.subr.bf16.mxu0 0
  %8216 = vmatpush1.bf16.msra.mxu0 0
  %8217 = vmatprep.subr.bf16.mxu0 0
  %8218 = vmatpush1.bf16.msra.mxu0 0
  %8219 = vmatprep.subr.bf16.mxu0 0
  %8220 = vmatpush1.bf16.msra.mxu0 0
  %8221 = vmatprep.subr.bf16.mxu0 0
  %8222 = vmatpush1.bf16.msra.mxu0 0
  %8223 = vmatprep.subr.bf16.mxu0 0
  %8224 = vmatpush1.bf16.msra.mxu0 0
  %8225 = vmatprep.subr.bf16.mxu0 0
  %8226 = vmatpush1.bf16.msra.mxu0 0
  %8227 = vmatprep.subr.bf16.mxu0 0
  %8228 = vmatpush1.bf16.msra.mxu0 0
  %8229 = vmatprep.subr.bf16.mxu0 0
  %8230 = vmatpush1.bf16.msra.mxu0 %v8193
  %8231 = vmatprep.subr.bf16.mxu0 0
  %8232 = vmatpush2.bf16.msra.mxu0 0
  %8233 = vmatprep.subr.bf16.mxu0 0
  %8234 = vmatpush2.bf16.msra.mxu0 0
  %8235 = vmatprep.subr.bf16.mxu0 0
  %8236 = vmatpush2.bf16.msra.mxu0 0
  %8237 = vmatprep.subr.bf16.mxu0 0
  %8238 = vmatpush2.bf16.msra.mxu0 0
  %8239 = vmatprep.subr.bf16.mxu0 0
  %8240 = vmatpush2.bf16.msra.mxu0 0
  %8241 = vmatprep.subr.bf16.mxu0 0
  %8242 = vmatpush2.bf16.msra.mxu0 0
  %8243 = vmatprep.subr.bf16.mxu0 0
  %8244 = vmatpush2.bf16.msra.mxu0 0
  %8245 = vmatprep.subr.bf16.mxu0 0
  %8246 = vmatpush2.bf16.msra.mxu0 0
  %8247 = vmatprep.mubr.bf16.mxu0 0
  %8248 = vmatmul.mubr.bf16.gmra.mxu0 %v8210
  %v8249 = vpop.f32.mrf.mxu0
  %v8250 = vadd.f32 0.0, %v8249
  %v8251 = vpop.f32.mrf.mxu0
  %v8252 = vpop.f32.mrf.mxu0
  %v8253 = vadd.f32 0.0, %v8252
  %v8254 = vpop.f32.mrf.mxu0
  %8255 = vmatprep.mubr.bf16.mxu0 0
  %8256 = vmatmul.mubr.bf16.gmra.mxu0 %v8213
  %v8257 = vpop.f32.mrf.mxu0
  %v8258 = vadd.f32 0.0, %v8257
  %v8259 = vpop.f32.mrf.mxu0
  %v8260 = vpop.f32.mrf.mxu0
  %v8261 = vadd.f32 0.0, %v8260
  %v8262 = vpop.f32.mrf.mxu0
  %8263 = vdwg.mxu0
  %v8264 = vadd.f32 %v8083, %v8250
  %v8265 = vadd.f32 %v8084, %v8253
  %v8266 = vadd.f32 %v8085, %v8258
  %v8267 = vadd.f32 %v8086, %v8261
  %s8268 = scalar_lea.vmem %s9, 576
  %v8269 = vld [vmem:[%s8268] sm:$0xf]
  %v8270 = vld [vmem:[%s8268 + $0x4] sm:$0xf]
  %v8271 = vld [vmem:[%s8268 + $0x8] sm:$0xf]
  %v8272 = vld [vmem:[%s8268 + $0xc] sm:$0xf]
  %v8273 = vld [vmem:[%s8268 + $0x10] sm:$0xf]
  %v8274 = vld [vmem:[%s8268 + $0x14] sm:$0xf]
  %v8275 = vld [vmem:[%s8268 + $0x18] sm:$0xf]
  %v8276 = vld [vmem:[%s8268 + $0x1c] sm:$0xf]
  %v8277 = vld [vmem:[%s8268 + $0x20] sm:$0xf]
  %v8278 = vld [vmem:[%s8268 + $0x24] sm:$0xf]
  %v8279 = vld [vmem:[%s8268 + $0x28] sm:$0xf]
  %v8280 = vld [vmem:[%s8268 + $0x2c] sm:$0xf]
  %v8281 = vld [vmem:[%s8268 + $0x30] sm:$0xf]
  %v8282 = vld [vmem:[%s8268 + $0x34] sm:$0xf]
  %v8283 = vld [vmem:[%s8268 + $0x38] sm:$0xf]
  %v8284 = vld [vmem:[%s8268 + $0x3c] sm:$0xf]
  %v8301 = vunpack.c.l.b16 %v8269
  %v8302 = vunpack.c.l.b16 %v8270
  %v8303 = vunpack.c.l.b16 %v8271
  %v8304 = vunpack.c.l.b16 %v8272
  %v8305 = vunpack.c.l.b16 %v8273
  %v8306 = vunpack.c.l.b16 %v8274
  %v8307 = vunpack.c.l.b16 %v8275
  %v8308 = vunpack.c.l.b16 %v8276
  %v8309 = vunpack.c.l.b16 %v8277
  %v8310 = vunpack.c.l.b16 %v8278
  %v8311 = vunpack.c.l.b16 %v8279
  %v8312 = vunpack.c.l.b16 %v8280
  %v8313 = vunpack.c.l.b16 %v8281
  %v8314 = vunpack.c.l.b16 %v8282
  %v8315 = vunpack.c.l.b16 %v8283
  %v8316 = vunpack.c.l.b16 %v8284
  %v8317 = vpack.c.b16 %v8302, %v8301
  %v8318 = vpack.c.b16 %v8304, %v8303
  %v8319 = vpack.c.b16 %v8306, %v8305
  %v8320 = vpack.c.b16 %v8308, %v8307
  %v8321 = vpack.c.b16 %v8310, %v8309
  %v8322 = vpack.c.b16 %v8312, %v8311
  %v8323 = vpack.c.b16 %v8314, %v8313
  %v8324 = vpack.c.b16 %v8316, %v8315
  %8333 = vmatprep.subr.bf16.mxu0 0
  %8334 = vmatpush1.bf16.msra.mxu0 %v8324
  %8335 = vmatprep.subr.bf16.mxu0 0
  %8336 = vmatpush1.bf16.msra.mxu0 %v8323
  %8337 = vmatprep.subr.bf16.mxu0 0
  %8338 = vmatpush1.bf16.msra.mxu0 %v8322
  %8339 = vmatprep.subr.bf16.mxu0 0
  %8340 = vmatpush1.bf16.msra.mxu0 %v8321
  %8341 = vmatprep.subr.bf16.mxu0 0
  %8342 = vmatpush1.bf16.msra.mxu0 %v8320
  %8343 = vmatprep.subr.bf16.mxu0 0
  %8344 = vmatpush1.bf16.msra.mxu0 %v8319
  %8345 = vmatprep.subr.bf16.mxu0 0
  %8346 = vmatpush1.bf16.msra.mxu0 %v8318
  %8347 = vmatprep.subr.bf16.mxu0 0
  %8348 = vmatpush1.bf16.msra.mxu0 %v8317
  %8349 = vmatprep.subr.bf16.mxu0 0
  %8350 = vmatpush2.bf16.msra.mxu0 0
  %8351 = vmatprep.subr.bf16.mxu0 0
  %8352 = vmatpush2.bf16.msra.mxu0 0
  %8353 = vmatprep.subr.bf16.mxu0 0
  %8354 = vmatpush2.bf16.msra.mxu0 0
  %8355 = vmatprep.subr.bf16.mxu0 0
  %8356 = vmatpush2.bf16.msra.mxu0 0
  %8357 = vmatprep.subr.bf16.mxu0 0
  %8358 = vmatpush2.bf16.msra.mxu0 0
  %8359 = vmatprep.subr.bf16.mxu0 0
  %8360 = vmatpush2.bf16.msra.mxu0 0
  %8361 = vmatprep.subr.bf16.mxu0 0
  %8362 = vmatpush2.bf16.msra.mxu0 0
  %8363 = vmatprep.subr.bf16.mxu0 0
  %8364 = vmatpush2.bf16.msra.mxu0 0
  %8365 = vmatprep.mubr.bf16.mxu0 0
  %8366 = vmatmul.mubr.bf16.gmra.mxu0 %v6647
  %v8367 = vpop.f32.mrf.mxu0
  %v8368 = vadd.f32 0.0, %v8367
  %v8369 = vpop.f32.mrf.mxu0
  %v8370 = vpop.f32.mrf.mxu0
  %v8371 = vadd.f32 0.0, %v8370
  %v8372 = vpop.f32.mrf.mxu0
  %8373 = vdwg.mxu0
  %v8374 = vpack.c.bf16 %v8371, %v8368
  %s8375 = scalar_lea.vmem %s8, 144
  %v8376 = vld [vmem:[%s8375] sm:$0xf]
  %v8377 = vld [vmem:[%s8375 + $0x4] sm:$0xf]
  %v8378 = vld [vmem:[%s8375 + $0x8] sm:$0xf]
  %v8379 = vld [vmem:[%s8375 + $0xc] sm:$0xf]
  %v8384 = vunpack.c.l.b16 %v8376
  %v8385 = vunpack.c.l.b16 %v8377
  %v8386 = vunpack.c.l.b16 %v8378
  %v8387 = vunpack.c.l.b16 %v8379
  %v8388 = vpack.c.b16 %v8385, %v8384
  %v8389 = vpack.c.b16 %v8387, %v8386
  %v8391 = vsel %vm6880, %v8388, 0
  %v8394 = vsel %vm6880, %v8389, 0
  %8396 = vmatprep.subr.bf16.mxu0 0
  %8397 = vmatpush1.bf16.msra.mxu0 0
  %8398 = vmatprep.subr.bf16.mxu0 0
  %8399 = vmatpush1.bf16.msra.mxu0 0
  %8400 = vmatprep.subr.bf16.mxu0 0
  %8401 = vmatpush1.bf16.msra.mxu0 0
  %8402 = vmatprep.subr.bf16.mxu0 0
  %8403 = vmatpush1.bf16.msra.mxu0 0
  %8404 = vmatprep.subr.bf16.mxu0 0
  %8405 = vmatpush1.bf16.msra.mxu0 0
  %8406 = vmatprep.subr.bf16.mxu0 0
  %8407 = vmatpush1.bf16.msra.mxu0 0
  %8408 = vmatprep.subr.bf16.mxu0 0
  %8409 = vmatpush1.bf16.msra.mxu0 0
  %8410 = vmatprep.subr.bf16.mxu0 0
  %8411 = vmatpush1.bf16.msra.mxu0 %v8374
  %8412 = vmatprep.subr.bf16.mxu0 0
  %8413 = vmatpush2.bf16.msra.mxu0 0
  %8414 = vmatprep.subr.bf16.mxu0 0
  %8415 = vmatpush2.bf16.msra.mxu0 0
  %8416 = vmatprep.subr.bf16.mxu0 0
  %8417 = vmatpush2.bf16.msra.mxu0 0
  %8418 = vmatprep.subr.bf16.mxu0 0
  %8419 = vmatpush2.bf16.msra.mxu0 0
  %8420 = vmatprep.subr.bf16.mxu0 0
  %8421 = vmatpush2.bf16.msra.mxu0 0
  %8422 = vmatprep.subr.bf16.mxu0 0
  %8423 = vmatpush2.bf16.msra.mxu0 0
  %8424 = vmatprep.subr.bf16.mxu0 0
  %8425 = vmatpush2.bf16.msra.mxu0 0
  %8426 = vmatprep.subr.bf16.mxu0 0
  %8427 = vmatpush2.bf16.msra.mxu0 0
  %8428 = vmatprep.mubr.bf16.mxu0 0
  %8429 = vmatmul.mubr.bf16.gmra.mxu0 %v8391
  %v8430 = vpop.f32.mrf.mxu0
  %v8431 = vadd.f32 0.0, %v8430
  %v8432 = vpop.f32.mrf.mxu0
  %v8433 = vpop.f32.mrf.mxu0
  %v8434 = vadd.f32 0.0, %v8433
  %v8435 = vpop.f32.mrf.mxu0
  %8436 = vmatprep.mubr.bf16.mxu0 0
  %8437 = vmatmul.mubr.bf16.gmra.mxu0 %v8394
  %v8438 = vpop.f32.mrf.mxu0
  %v8439 = vadd.f32 0.0, %v8438
  %v8440 = vpop.f32.mrf.mxu0
  %v8441 = vpop.f32.mrf.mxu0
  %v8442 = vadd.f32 0.0, %v8441
  %v8443 = vpop.f32.mrf.mxu0
  %8444 = vdwg.mxu0
  %v8445 = vadd.f32 %v8264, %v8431
  %v8446 = vadd.f32 %v8265, %v8434
  %v8447 = vadd.f32 %v8266, %v8439
  %v8448 = vadd.f32 %v8267, %v8442
  %s8449 = scalar_lea.vmem %s9, 640
  %v8450 = vld [vmem:[%s8449] sm:$0xf]
  %v8451 = vld [vmem:[%s8449 + $0x4] sm:$0xf]
  %v8452 = vld [vmem:[%s8449 + $0x8] sm:$0xf]
  %v8453 = vld [vmem:[%s8449 + $0xc] sm:$0xf]
  %v8454 = vld [vmem:[%s8449 + $0x10] sm:$0xf]
  %v8455 = vld [vmem:[%s8449 + $0x14] sm:$0xf]
  %v8456 = vld [vmem:[%s8449 + $0x18] sm:$0xf]
  %v8457 = vld [vmem:[%s8449 + $0x1c] sm:$0xf]
  %v8458 = vld [vmem:[%s8449 + $0x20] sm:$0xf]
  %v8459 = vld [vmem:[%s8449 + $0x24] sm:$0xf]
  %v8460 = vld [vmem:[%s8449 + $0x28] sm:$0xf]
  %v8461 = vld [vmem:[%s8449 + $0x2c] sm:$0xf]
  %v8462 = vld [vmem:[%s8449 + $0x30] sm:$0xf]
  %v8463 = vld [vmem:[%s8449 + $0x34] sm:$0xf]
  %v8464 = vld [vmem:[%s8449 + $0x38] sm:$0xf]
  %v8465 = vld [vmem:[%s8449 + $0x3c] sm:$0xf]
  %v8482 = vunpack.c.l.b16 %v8450
  %v8483 = vunpack.c.l.b16 %v8451
  %v8484 = vunpack.c.l.b16 %v8452
  %v8485 = vunpack.c.l.b16 %v8453
  %v8486 = vunpack.c.l.b16 %v8454
  %v8487 = vunpack.c.l.b16 %v8455
  %v8488 = vunpack.c.l.b16 %v8456
  %v8489 = vunpack.c.l.b16 %v8457
  %v8490 = vunpack.c.l.b16 %v8458
  %v8491 = vunpack.c.l.b16 %v8459
  %v8492 = vunpack.c.l.b16 %v8460
  %v8493 = vunpack.c.l.b16 %v8461
  %v8494 = vunpack.c.l.b16 %v8462
  %v8495 = vunpack.c.l.b16 %v8463
  %v8496 = vunpack.c.l.b16 %v8464
  %v8497 = vunpack.c.l.b16 %v8465
  %v8498 = vpack.c.b16 %v8483, %v8482
  %v8499 = vpack.c.b16 %v8485, %v8484
  %v8500 = vpack.c.b16 %v8487, %v8486
  %v8501 = vpack.c.b16 %v8489, %v8488
  %v8502 = vpack.c.b16 %v8491, %v8490
  %v8503 = vpack.c.b16 %v8493, %v8492
  %v8504 = vpack.c.b16 %v8495, %v8494
  %v8505 = vpack.c.b16 %v8497, %v8496
  %8514 = vmatprep.subr.bf16.mxu0 0
  %8515 = vmatpush1.bf16.msra.mxu0 %v8505
  %8516 = vmatprep.subr.bf16.mxu0 0
  %8517 = vmatpush1.bf16.msra.mxu0 %v8504
  %8518 = vmatprep.subr.bf16.mxu0 0
  %8519 = vmatpush1.bf16.msra.mxu0 %v8503
  %8520 = vmatprep.subr.bf16.mxu0 0
  %8521 = vmatpush1.bf16.msra.mxu0 %v8502
  %8522 = vmatprep.subr.bf16.mxu0 0
  %8523 = vmatpush1.bf16.msra.mxu0 %v8501
  %8524 = vmatprep.subr.bf16.mxu0 0
  %8525 = vmatpush1.bf16.msra.mxu0 %v8500
  %8526 = vmatprep.subr.bf16.mxu0 0
  %8527 = vmatpush1.bf16.msra.mxu0 %v8499
  %8528 = vmatprep.subr.bf16.mxu0 0
  %8529 = vmatpush1.bf16.msra.mxu0 %v8498
  %8530 = vmatprep.subr.bf16.mxu0 0
  %8531 = vmatpush2.bf16.msra.mxu0 0
  %8532 = vmatprep.subr.bf16.mxu0 0
  %8533 = vmatpush2.bf16.msra.mxu0 0
  %8534 = vmatprep.subr.bf16.mxu0 0
  %8535 = vmatpush2.bf16.msra.mxu0 0
  %8536 = vmatprep.subr.bf16.mxu0 0
  %8537 = vmatpush2.bf16.msra.mxu0 0
  %8538 = vmatprep.subr.bf16.mxu0 0
  %8539 = vmatpush2.bf16.msra.mxu0 0
  %8540 = vmatprep.subr.bf16.mxu0 0
  %8541 = vmatpush2.bf16.msra.mxu0 0
  %8542 = vmatprep.subr.bf16.mxu0 0
  %8543 = vmatpush2.bf16.msra.mxu0 0
  %8544 = vmatprep.subr.bf16.mxu0 0
  %8545 = vmatpush2.bf16.msra.mxu0 0
  %8546 = vmatprep.mubr.bf16.mxu0 0
  %8547 = vmatmul.mubr.bf16.gmra.mxu0 %v6647
  %v8548 = vpop.f32.mrf.mxu0
  %v8549 = vadd.f32 0.0, %v8548
  %v8550 = vpop.f32.mrf.mxu0
  %v8551 = vpop.f32.mrf.mxu0
  %v8552 = vadd.f32 0.0, %v8551
  %v8553 = vpop.f32.mrf.mxu0
  %8554 = vdwg.mxu0
  %v8555 = vpack.c.bf16 %v8552, %v8549
  %s8556 = scalar_lea.vmem %s8, 160
  %v8557 = vld [vmem:[%s8556] sm:$0xf]
  %v8558 = vld [vmem:[%s8556 + $0x4] sm:$0xf]
  %v8559 = vld [vmem:[%s8556 + $0x8] sm:$0xf]
  %v8560 = vld [vmem:[%s8556 + $0xc] sm:$0xf]
  %v8565 = vunpack.c.l.b16 %v8557
  %v8566 = vunpack.c.l.b16 %v8558
  %v8567 = vunpack.c.l.b16 %v8559
  %v8568 = vunpack.c.l.b16 %v8560
  %v8569 = vpack.c.b16 %v8566, %v8565
  %v8570 = vpack.c.b16 %v8568, %v8567
  %v8572 = vsel %vm6880, %v8569, 0
  %v8575 = vsel %vm6880, %v8570, 0
  %8577 = vmatprep.subr.bf16.mxu0 0
  %8578 = vmatpush1.bf16.msra.mxu0 0
  %8579 = vmatprep.subr.bf16.mxu0 0
  %8580 = vmatpush1.bf16.msra.mxu0 0
  %8581 = vmatprep.subr.bf16.mxu0 0
  %8582 = vmatpush1.bf16.msra.mxu0 0
  %8583 = vmatprep.subr.bf16.mxu0 0
  %8584 = vmatpush1.bf16.msra.mxu0 0
  %8585 = vmatprep.subr.bf16.mxu0 0
  %8586 = vmatpush1.bf16.msra.mxu0 0
  %8587 = vmatprep.subr.bf16.mxu0 0
  %8588 = vmatpush1.bf16.msra.mxu0 0
  %8589 = vmatprep.subr.bf16.mxu0 0
  %8590 = vmatpush1.bf16.msra.mxu0 0
  %8591 = vmatprep.subr.bf16.mxu0 0
  %8592 = vmatpush1.bf16.msra.mxu0 %v8555
  %8593 = vmatprep.subr.bf16.mxu0 0
  %8594 = vmatpush2.bf16.msra.mxu0 0
  %8595 = vmatprep.subr.bf16.mxu0 0
  %8596 = vmatpush2.bf16.msra.mxu0 0
  %8597 = vmatprep.subr.bf16.mxu0 0
  %8598 = vmatpush2.bf16.msra.mxu0 0
  %8599 = vmatprep.subr.bf16.mxu0 0
  %8600 = vmatpush2.bf16.msra.mxu0 0
  %8601 = vmatprep.subr.bf16.mxu0 0
  %8602 = vmatpush2.bf16.msra.mxu0 0
  %8603 = vmatprep.subr.bf16.mxu0 0
  %8604 = vmatpush2.bf16.msra.mxu0 0
  %8605 = vmatprep.subr.bf16.mxu0 0
  %8606 = vmatpush2.bf16.msra.mxu0 0
  %8607 = vmatprep.subr.bf16.mxu0 0
  %8608 = vmatpush2.bf16.msra.mxu0 0
  %8609 = vmatprep.mubr.bf16.mxu0 0
  %8610 = vmatmul.mubr.bf16.gmra.mxu0 %v8572
  %v8611 = vpop.f32.mrf.mxu0
  %v8612 = vadd.f32 0.0, %v8611
  %v8613 = vpop.f32.mrf.mxu0
  %v8614 = vpop.f32.mrf.mxu0
  %v8615 = vadd.f32 0.0, %v8614
  %v8616 = vpop.f32.mrf.mxu0
  %8617 = vmatprep.mubr.bf16.mxu0 0
  %8618 = vmatmul.mubr.bf16.gmra.mxu0 %v8575
  %v8619 = vpop.f32.mrf.mxu0
  %v8620 = vadd.f32 0.0, %v8619
  %v8621 = vpop.f32.mrf.mxu0
  %v8622 = vpop.f32.mrf.mxu0
  %v8623 = vadd.f32 0.0, %v8622
  %v8624 = vpop.f32.mrf.mxu0
  %8625 = vdwg.mxu0
  %v8626 = vadd.f32 %v8445, %v8612
  %v8627 = vadd.f32 %v8446, %v8615
  %v8628 = vadd.f32 %v8447, %v8620
  %v8629 = vadd.f32 %v8448, %v8623
  %s8630 = scalar_lea.vmem %s9, 704
  %v8631 = vld [vmem:[%s8630] sm:$0xf]
  %v8632 = vld [vmem:[%s8630 + $0x4] sm:$0xf]
  %v8633 = vld [vmem:[%s8630 + $0x8] sm:$0xf]
  %v8634 = vld [vmem:[%s8630 + $0xc] sm:$0xf]
  %v8635 = vld [vmem:[%s8630 + $0x10] sm:$0xf]
  %v8636 = vld [vmem:[%s8630 + $0x14] sm:$0xf]
  %v8637 = vld [vmem:[%s8630 + $0x18] sm:$0xf]
  %v8638 = vld [vmem:[%s8630 + $0x1c] sm:$0xf]
  %v8639 = vld [vmem:[%s8630 + $0x20] sm:$0xf]
  %v8640 = vld [vmem:[%s8630 + $0x24] sm:$0xf]
  %v8641 = vld [vmem:[%s8630 + $0x28] sm:$0xf]
  %v8642 = vld [vmem:[%s8630 + $0x2c] sm:$0xf]
  %v8643 = vld [vmem:[%s8630 + $0x30] sm:$0xf]
  %v8644 = vld [vmem:[%s8630 + $0x34] sm:$0xf]
  %v8645 = vld [vmem:[%s8630 + $0x38] sm:$0xf]
  %v8646 = vld [vmem:[%s8630 + $0x3c] sm:$0xf]
  %v8663 = vunpack.c.l.b16 %v8631
  %v8664 = vunpack.c.l.b16 %v8632
  %v8665 = vunpack.c.l.b16 %v8633
  %v8666 = vunpack.c.l.b16 %v8634
  %v8667 = vunpack.c.l.b16 %v8635
  %v8668 = vunpack.c.l.b16 %v8636
  %v8669 = vunpack.c.l.b16 %v8637
  %v8670 = vunpack.c.l.b16 %v8638
  %v8671 = vunpack.c.l.b16 %v8639
  %v8672 = vunpack.c.l.b16 %v8640
  %v8673 = vunpack.c.l.b16 %v8641
  %v8674 = vunpack.c.l.b16 %v8642
  %v8675 = vunpack.c.l.b16 %v8643
  %v8676 = vunpack.c.l.b16 %v8644
  %v8677 = vunpack.c.l.b16 %v8645
  %v8678 = vunpack.c.l.b16 %v8646
  %v8679 = vpack.c.b16 %v8664, %v8663
  %v8680 = vpack.c.b16 %v8666, %v8665
  %v8681 = vpack.c.b16 %v8668, %v8667
  %v8682 = vpack.c.b16 %v8670, %v8669
  %v8683 = vpack.c.b16 %v8672, %v8671
  %v8684 = vpack.c.b16 %v8674, %v8673
  %v8685 = vpack.c.b16 %v8676, %v8675
  %v8686 = vpack.c.b16 %v8678, %v8677
  %8695 = vmatprep.subr.bf16.mxu0 0
  %8696 = vmatpush1.bf16.msra.mxu0 %v8686
  %8697 = vmatprep.subr.bf16.mxu0 0
  %8698 = vmatpush1.bf16.msra.mxu0 %v8685
  %8699 = vmatprep.subr.bf16.mxu0 0
  %8700 = vmatpush1.bf16.msra.mxu0 %v8684
  %8701 = vmatprep.subr.bf16.mxu0 0
  %8702 = vmatpush1.bf16.msra.mxu0 %v8683
  %8703 = vmatprep.subr.bf16.mxu0 0
  %8704 = vmatpush1.bf16.msra.mxu0 %v8682
  %8705 = vmatprep.subr.bf16.mxu0 0
  %8706 = vmatpush1.bf16.msra.mxu0 %v8681
  %8707 = vmatprep.subr.bf16.mxu0 0
  %8708 = vmatpush1.bf16.msra.mxu0 %v8680
  %8709 = vmatprep.subr.bf16.mxu0 0
  %8710 = vmatpush1.bf16.msra.mxu0 %v8679
  %8711 = vmatprep.subr.bf16.mxu0 0
  %8712 = vmatpush2.bf16.msra.mxu0 0
  %8713 = vmatprep.subr.bf16.mxu0 0
  %8714 = vmatpush2.bf16.msra.mxu0 0
  %8715 = vmatprep.subr.bf16.mxu0 0
  %8716 = vmatpush2.bf16.msra.mxu0 0
  %8717 = vmatprep.subr.bf16.mxu0 0
  %8718 = vmatpush2.bf16.msra.mxu0 0
  %8719 = vmatprep.subr.bf16.mxu0 0
  %8720 = vmatpush2.bf16.msra.mxu0 0
  %8721 = vmatprep.subr.bf16.mxu0 0
  %8722 = vmatpush2.bf16.msra.mxu0 0
  %8723 = vmatprep.subr.bf16.mxu0 0
  %8724 = vmatpush2.bf16.msra.mxu0 0
  %8725 = vmatprep.subr.bf16.mxu0 0
  %8726 = vmatpush2.bf16.msra.mxu0 0
  %8727 = vmatprep.mubr.bf16.mxu0 0
  %8728 = vmatmul.mubr.bf16.gmra.mxu0 %v6647
  %v8729 = vpop.f32.mrf.mxu0
  %v8730 = vadd.f32 0.0, %v8729
  %v8731 = vpop.f32.mrf.mxu0
  %v8732 = vpop.f32.mrf.mxu0
  %v8733 = vadd.f32 0.0, %v8732
  %v8734 = vpop.f32.mrf.mxu0
  %8735 = vdwg.mxu0
  %v8736 = vpack.c.bf16 %v8733, %v8730
  %s8737 = scalar_lea.vmem %s8, 176
  %v8738 = vld [vmem:[%s8737] sm:$0xf]
  %v8739 = vld [vmem:[%s8737 + $0x4] sm:$0xf]
  %v8740 = vld [vmem:[%s8737 + $0x8] sm:$0xf]
  %v8741 = vld [vmem:[%s8737 + $0xc] sm:$0xf]
  %v8746 = vunpack.c.l.b16 %v8738
  %v8747 = vunpack.c.l.b16 %v8739
  %v8748 = vunpack.c.l.b16 %v8740
  %v8749 = vunpack.c.l.b16 %v8741
  %v8750 = vpack.c.b16 %v8747, %v8746
  %v8751 = vpack.c.b16 %v8749, %v8748
  %v8753 = vsel %vm6880, %v8750, 0
  %v8756 = vsel %vm6880, %v8751, 0
  %8758 = vmatprep.subr.bf16.mxu0 0
  %8759 = vmatpush1.bf16.msra.mxu0 0
  %8760 = vmatprep.subr.bf16.mxu0 0
  %8761 = vmatpush1.bf16.msra.mxu0 0
  %8762 = vmatprep.subr.bf16.mxu0 0
  %8763 = vmatpush1.bf16.msra.mxu0 0
  %8764 = vmatprep.subr.bf16.mxu0 0
  %8765 = vmatpush1.bf16.msra.mxu0 0
  %8766 = vmatprep.subr.bf16.mxu0 0
  %8767 = vmatpush1.bf16.msra.mxu0 0
  %8768 = vmatprep.subr.bf16.mxu0 0
  %8769 = vmatpush1.bf16.msra.mxu0 0
  %8770 = vmatprep.subr.bf16.mxu0 0
  %8771 = vmatpush1.bf16.msra.mxu0 0
  %8772 = vmatprep.subr.bf16.mxu0 0
  %8773 = vmatpush1.bf16.msra.mxu0 %v8736
  %8774 = vmatprep.subr.bf16.mxu0 0
  %8775 = vmatpush2.bf16.msra.mxu0 0
  %8776 = vmatprep.subr.bf16.mxu0 0
  %8777 = vmatpush2.bf16.msra.mxu0 0
  %8778 = vmatprep.subr.bf16.mxu0 0
  %8779 = vmatpush2.bf16.msra.mxu0 0
  %8780 = vmatprep.subr.bf16.mxu0 0
  %8781 = vmatpush2.bf16.msra.mxu0 0
  %8782 = vmatprep.subr.bf16.mxu0 0
  %8783 = vmatpush2.bf16.msra.mxu0 0
  %8784 = vmatprep.subr.bf16.mxu0 0
  %8785 = vmatpush2.bf16.msra.mxu0 0
  %8786 = vmatprep.subr.bf16.mxu0 0
  %8787 = vmatpush2.bf16.msra.mxu0 0
  %8788 = vmatprep.subr.bf16.mxu0 0
  %8789 = vmatpush2.bf16.msra.mxu0 0
  %8790 = vmatprep.mubr.bf16.mxu0 0
  %8791 = vmatmul.mubr.bf16.gmra.mxu0 %v8753
  %v8792 = vpop.f32.mrf.mxu0
  %v8793 = vadd.f32 0.0, %v8792
  %v8794 = vpop.f32.mrf.mxu0
  %v8795 = vpop.f32.mrf.mxu0
  %v8796 = vadd.f32 0.0, %v8795
  %v8797 = vpop.f32.mrf.mxu0
  %8798 = vmatprep.mubr.bf16.mxu0 0
  %8799 = vmatmul.mubr.bf16.gmra.mxu0 %v8756
  %v8800 = vpop.f32.mrf.mxu0
  %v8801 = vadd.f32 0.0, %v8800
  %v8802 = vpop.f32.mrf.mxu0
  %v8803 = vpop.f32.mrf.mxu0
  %v8804 = vadd.f32 0.0, %v8803
  %v8805 = vpop.f32.mrf.mxu0
  %8806 = vdwg.mxu0
  %v8807 = vadd.f32 %v8626, %v8793
  %v8808 = vadd.f32 %v8627, %v8796
  %v8809 = vadd.f32 %v8628, %v8801
  %v8810 = vadd.f32 %v8629, %v8804
  %s8811 = scalar_lea.vmem %s9, 768
  %v8812 = vld [vmem:[%s8811] sm:$0xf]
  %v8813 = vld [vmem:[%s8811 + $0x4] sm:$0xf]
  %v8814 = vld [vmem:[%s8811 + $0x8] sm:$0xf]
  %v8815 = vld [vmem:[%s8811 + $0xc] sm:$0xf]
  %v8816 = vld [vmem:[%s8811 + $0x10] sm:$0xf]
  %v8817 = vld [vmem:[%s8811 + $0x14] sm:$0xf]
  %v8818 = vld [vmem:[%s8811 + $0x18] sm:$0xf]
  %v8819 = vld [vmem:[%s8811 + $0x1c] sm:$0xf]
  %v8820 = vld [vmem:[%s8811 + $0x20] sm:$0xf]
  %v8821 = vld [vmem:[%s8811 + $0x24] sm:$0xf]
  %v8822 = vld [vmem:[%s8811 + $0x28] sm:$0xf]
  %v8823 = vld [vmem:[%s8811 + $0x2c] sm:$0xf]
  %v8824 = vld [vmem:[%s8811 + $0x30] sm:$0xf]
  %v8825 = vld [vmem:[%s8811 + $0x34] sm:$0xf]
  %v8826 = vld [vmem:[%s8811 + $0x38] sm:$0xf]
  %v8827 = vld [vmem:[%s8811 + $0x3c] sm:$0xf]
  %v8844 = vunpack.c.l.b16 %v8812
  %v8845 = vunpack.c.l.b16 %v8813
  %v8846 = vunpack.c.l.b16 %v8814
  %v8847 = vunpack.c.l.b16 %v8815
  %v8848 = vunpack.c.l.b16 %v8816
  %v8849 = vunpack.c.l.b16 %v8817
  %v8850 = vunpack.c.l.b16 %v8818
  %v8851 = vunpack.c.l.b16 %v8819
  %v8852 = vunpack.c.l.b16 %v8820
  %v8853 = vunpack.c.l.b16 %v8821
  %v8854 = vunpack.c.l.b16 %v8822
  %v8855 = vunpack.c.l.b16 %v8823
  %v8856 = vunpack.c.l.b16 %v8824
  %v8857 = vunpack.c.l.b16 %v8825
  %v8858 = vunpack.c.l.b16 %v8826
  %v8859 = vunpack.c.l.b16 %v8827
  %v8860 = vpack.c.b16 %v8845, %v8844
  %v8861 = vpack.c.b16 %v8847, %v8846
  %v8862 = vpack.c.b16 %v8849, %v8848
  %v8863 = vpack.c.b16 %v8851, %v8850
  %v8864 = vpack.c.b16 %v8853, %v8852
  %v8865 = vpack.c.b16 %v8855, %v8854
  %v8866 = vpack.c.b16 %v8857, %v8856
  %v8867 = vpack.c.b16 %v8859, %v8858
  %8876 = vmatprep.subr.bf16.mxu0 0
  %8877 = vmatpush1.bf16.msra.mxu0 %v8867
  %8878 = vmatprep.subr.bf16.mxu0 0
  %8879 = vmatpush1.bf16.msra.mxu0 %v8866
  %8880 = vmatprep.subr.bf16.mxu0 0
  %8881 = vmatpush1.bf16.msra.mxu0 %v8865
  %8882 = vmatprep.subr.bf16.mxu0 0
  %8883 = vmatpush1.bf16.msra.mxu0 %v8864
  %8884 = vmatprep.subr.bf16.mxu0 0
  %8885 = vmatpush1.bf16.msra.mxu0 %v8863
  %8886 = vmatprep.subr.bf16.mxu0 0
  %8887 = vmatpush1.bf16.msra.mxu0 %v8862
  %8888 = vmatprep.subr.bf16.mxu0 0
  %8889 = vmatpush1.bf16.msra.mxu0 %v8861
  %8890 = vmatprep.subr.bf16.mxu0 0
  %8891 = vmatpush1.bf16.msra.mxu0 %v8860
  %8892 = vmatprep.subr.bf16.mxu0 0
  %8893 = vmatpush2.bf16.msra.mxu0 0
  %8894 = vmatprep.subr.bf16.mxu0 0
  %8895 = vmatpush2.bf16.msra.mxu0 0
  %8896 = vmatprep.subr.bf16.mxu0 0
  %8897 = vmatpush2.bf16.msra.mxu0 0
  %8898 = vmatprep.subr.bf16.mxu0 0
  %8899 = vmatpush2.bf16.msra.mxu0 0
  %8900 = vmatprep.subr.bf16.mxu0 0
  %8901 = vmatpush2.bf16.msra.mxu0 0
  %8902 = vmatprep.subr.bf16.mxu0 0
  %8903 = vmatpush2.bf16.msra.mxu0 0
  %8904 = vmatprep.subr.bf16.mxu0 0
  %8905 = vmatpush2.bf16.msra.mxu0 0
  %8906 = vmatprep.subr.bf16.mxu0 0
  %8907 = vmatpush2.bf16.msra.mxu0 0
  %8908 = vmatprep.mubr.bf16.mxu0 0
  %8909 = vmatmul.mubr.bf16.gmra.mxu0 %v6647
  %v8910 = vpop.f32.mrf.mxu0
  %v8911 = vadd.f32 0.0, %v8910
  %v8912 = vpop.f32.mrf.mxu0
  %v8913 = vpop.f32.mrf.mxu0
  %v8914 = vadd.f32 0.0, %v8913
  %v8915 = vpop.f32.mrf.mxu0
  %8916 = vdwg.mxu0
  %v8917 = vpack.c.bf16 %v8914, %v8911
  %s8918 = scalar_lea.vmem %s8, 192
  %v8919 = vld [vmem:[%s8918] sm:$0xf]
  %v8920 = vld [vmem:[%s8918 + $0x4] sm:$0xf]
  %v8921 = vld [vmem:[%s8918 + $0x8] sm:$0xf]
  %v8922 = vld [vmem:[%s8918 + $0xc] sm:$0xf]
  %v8927 = vunpack.c.l.b16 %v8919
  %v8928 = vunpack.c.l.b16 %v8920
  %v8929 = vunpack.c.l.b16 %v8921
  %v8930 = vunpack.c.l.b16 %v8922
  %v8931 = vpack.c.b16 %v8928, %v8927
  %v8932 = vpack.c.b16 %v8930, %v8929
  %v8934 = vsel %vm6880, %v8931, 0
  %v8937 = vsel %vm6880, %v8932, 0
  %8939 = vmatprep.subr.bf16.mxu0 0
  %8940 = vmatpush1.bf16.msra.mxu0 0
  %8941 = vmatprep.subr.bf16.mxu0 0
  %8942 = vmatpush1.bf16.msra.mxu0 0
  %8943 = vmatprep.subr.bf16.mxu0 0
  %8944 = vmatpush1.bf16.msra.mxu0 0
  %8945 = vmatprep.subr.bf16.mxu0 0
  %8946 = vmatpush1.bf16.msra.mxu0 0
  %8947 = vmatprep.subr.bf16.mxu0 0
  %8948 = vmatpush1.bf16.msra.mxu0 0
  %8949 = vmatprep.subr.bf16.mxu0 0
  %8950 = vmatpush1.bf16.msra.mxu0 0
  %8951 = vmatprep.subr.bf16.mxu0 0
  %8952 = vmatpush1.bf16.msra.mxu0 0
  %8953 = vmatprep.subr.bf16.mxu0 0
  %8954 = vmatpush1.bf16.msra.mxu0 %v8917
  %8955 = vmatprep.subr.bf16.mxu0 0
  %8956 = vmatpush2.bf16.msra.mxu0 0
  %8957 = vmatprep.subr.bf16.mxu0 0
  %8958 = vmatpush2.bf16.msra.mxu0 0
  %8959 = vmatprep.subr.bf16.mxu0 0
  %8960 = vmatpush2.bf16.msra.mxu0 0
  %8961 = vmatprep.subr.bf16.mxu0 0
  %8962 = vmatpush2.bf16.msra.mxu0 0
  %8963 = vmatprep.subr.bf16.mxu0 0
  %8964 = vmatpush2.bf16.msra.mxu0 0
  %8965 = vmatprep.subr.bf16.mxu0 0
  %8966 = vmatpush2.bf16.msra.mxu0 0
  %8967 = vmatprep.subr.bf16.mxu0 0
  %8968 = vmatpush2.bf16.msra.mxu0 0
  %8969 = vmatprep.subr.bf16.mxu0 0
  %8970 = vmatpush2.bf16.msra.mxu0 0
  %8971 = vmatprep.mubr.bf16.mxu0 0
  %8972 = vmatmul.mubr.bf16.gmra.mxu0 %v8934
  %v8973 = vpop.f32.mrf.mxu0
  %v8974 = vadd.f32 0.0, %v8973
  %v8975 = vpop.f32.mrf.mxu0
  %v8976 = vpop.f32.mrf.mxu0
  %v8977 = vadd.f32 0.0, %v8976
  %v8978 = vpop.f32.mrf.mxu0
  %8979 = vmatprep.mubr.bf16.mxu0 0
  %8980 = vmatmul.mubr.bf16.gmra.mxu0 %v8937
  %v8981 = vpop.f32.mrf.mxu0
  %v8982 = vadd.f32 0.0, %v8981
  %v8983 = vpop.f32.mrf.mxu0
  %v8984 = vpop.f32.mrf.mxu0
  %v8985 = vadd.f32 0.0, %v8984
  %v8986 = vpop.f32.mrf.mxu0
  %8987 = vdwg.mxu0
  %v8988 = vadd.f32 %v8807, %v8974
  %v8989 = vadd.f32 %v8808, %v8977
  %v8990 = vadd.f32 %v8809, %v8982
  %v8991 = vadd.f32 %v8810, %v8985
  %s8992 = scalar_lea.vmem %s9, 832
  %v8993 = vld [vmem:[%s8992] sm:$0xf]
  %v8994 = vld [vmem:[%s8992 + $0x4] sm:$0xf]
  %v8995 = vld [vmem:[%s8992 + $0x8] sm:$0xf]
  %v8996 = vld [vmem:[%s8992 + $0xc] sm:$0xf]
  %v8997 = vld [vmem:[%s8992 + $0x10] sm:$0xf]
  %v8998 = vld [vmem:[%s8992 + $0x14] sm:$0xf]
  %v8999 = vld [vmem:[%s8992 + $0x18] sm:$0xf]
  %v9000 = vld [vmem:[%s8992 + $0x1c] sm:$0xf]
  %v9001 = vld [vmem:[%s8992 + $0x20] sm:$0xf]
  %v9002 = vld [vmem:[%s8992 + $0x24] sm:$0xf]
  %v9003 = vld [vmem:[%s8992 + $0x28] sm:$0xf]
  %v9004 = vld [vmem:[%s8992 + $0x2c] sm:$0xf]
  %v9005 = vld [vmem:[%s8992 + $0x30] sm:$0xf]
  %v9006 = vld [vmem:[%s8992 + $0x34] sm:$0xf]
  %v9007 = vld [vmem:[%s8992 + $0x38] sm:$0xf]
  %v9008 = vld [vmem:[%s8992 + $0x3c] sm:$0xf]
  %v9025 = vunpack.c.l.b16 %v8993
  %v9026 = vunpack.c.l.b16 %v8994
  %v9027 = vunpack.c.l.b16 %v8995
  %v9028 = vunpack.c.l.b16 %v8996
  %v9029 = vunpack.c.l.b16 %v8997
  %v9030 = vunpack.c.l.b16 %v8998
  %v9031 = vunpack.c.l.b16 %v8999
  %v9032 = vunpack.c.l.b16 %v9000
  %v9033 = vunpack.c.l.b16 %v9001
  %v9034 = vunpack.c.l.b16 %v9002
  %v9035 = vunpack.c.l.b16 %v9003
  %v9036 = vunpack.c.l.b16 %v9004
  %v9037 = vunpack.c.l.b16 %v9005
  %v9038 = vunpack.c.l.b16 %v9006
  %v9039 = vunpack.c.l.b16 %v9007
  %v9040 = vunpack.c.l.b16 %v9008
  %v9041 = vpack.c.b16 %v9026, %v9025
  %v9042 = vpack.c.b16 %v9028, %v9027
  %v9043 = vpack.c.b16 %v9030, %v9029
  %v9044 = vpack.c.b16 %v9032, %v9031
  %v9045 = vpack.c.b16 %v9034, %v9033
  %v9046 = vpack.c.b16 %v9036, %v9035
  %v9047 = vpack.c.b16 %v9038, %v9037
  %v9048 = vpack.c.b16 %v9040, %v9039
  %9057 = vmatprep.subr.bf16.mxu0 0
  %9058 = vmatpush1.bf16.msra.mxu0 %v9048
  %9059 = vmatprep.subr.bf16.mxu0 0
  %9060 = vmatpush1.bf16.msra.mxu0 %v9047
  %9061 = vmatprep.subr.bf16.mxu0 0
  %9062 = vmatpush1.bf16.msra.mxu0 %v9046
  %9063 = vmatprep.subr.bf16.mxu0 0
  %9064 = vmatpush1.bf16.msra.mxu0 %v9045
  %9065 = vmatprep.subr.bf16.mxu0 0
  %9066 = vmatpush1.bf16.msra.mxu0 %v9044
  %9067 = vmatprep.subr.bf16.mxu0 0
  %9068 = vmatpush1.bf16.msra.mxu0 %v9043
  %9069 = vmatprep.subr.bf16.mxu0 0
  %9070 = vmatpush1.bf16.msra.mxu0 %v9042
  %9071 = vmatprep.subr.bf16.mxu0 0
  %9072 = vmatpush1.bf16.msra.mxu0 %v9041
  %9073 = vmatprep.subr.bf16.mxu0 0
  %9074 = vmatpush2.bf16.msra.mxu0 0
  %9075 = vmatprep.subr.bf16.mxu0 0
  %9076 = vmatpush2.bf16.msra.mxu0 0
  %9077 = vmatprep.subr.bf16.mxu0 0
  %9078 = vmatpush2.bf16.msra.mxu0 0
  %9079 = vmatprep.subr.bf16.mxu0 0
  %9080 = vmatpush2.bf16.msra.mxu0 0
  %9081 = vmatprep.subr.bf16.mxu0 0
  %9082 = vmatpush2.bf16.msra.mxu0 0
  %9083 = vmatprep.subr.bf16.mxu0 0
  %9084 = vmatpush2.bf16.msra.mxu0 0
  %9085 = vmatprep.subr.bf16.mxu0 0
  %9086 = vmatpush2.bf16.msra.mxu0 0
  %9087 = vmatprep.subr.bf16.mxu0 0
  %9088 = vmatpush2.bf16.msra.mxu0 0
  %9089 = vmatprep.mubr.bf16.mxu0 0
  %9090 = vmatmul.mubr.bf16.gmra.mxu0 %v6647
  %v9091 = vpop.f32.mrf.mxu0
  %v9092 = vadd.f32 0.0, %v9091
  %v9093 = vpop.f32.mrf.mxu0
  %v9094 = vpop.f32.mrf.mxu0
  %v9095 = vadd.f32 0.0, %v9094
  %v9096 = vpop.f32.mrf.mxu0
  %9097 = vdwg.mxu0
  %v9098 = vpack.c.bf16 %v9095, %v9092
  %s9099 = scalar_lea.vmem %s8, 208
  %v9100 = vld [vmem:[%s9099] sm:$0xf]
  %v9101 = vld [vmem:[%s9099 + $0x4] sm:$0xf]
  %v9102 = vld [vmem:[%s9099 + $0x8] sm:$0xf]
  %v9103 = vld [vmem:[%s9099 + $0xc] sm:$0xf]
  %v9108 = vunpack.c.l.b16 %v9100
  %v9109 = vunpack.c.l.b16 %v9101
  %v9110 = vunpack.c.l.b16 %v9102
  %v9111 = vunpack.c.l.b16 %v9103
  %v9112 = vpack.c.b16 %v9109, %v9108
  %v9113 = vpack.c.b16 %v9111, %v9110
  %v9115 = vsel %vm6880, %v9112, 0
  %v9118 = vsel %vm6880, %v9113, 0
  %9120 = vmatprep.subr.bf16.mxu0 0
  %9121 = vmatpush1.bf16.msra.mxu0 0
  %9122 = vmatprep.subr.bf16.mxu0 0
  %9123 = vmatpush1.bf16.msra.mxu0 0
  %9124 = vmatprep.subr.bf16.mxu0 0
  %9125 = vmatpush1.bf16.msra.mxu0 0
  %9126 = vmatprep.subr.bf16.mxu0 0
  %9127 = vmatpush1.bf16.msra.mxu0 0
  %9128 = vmatprep.subr.bf16.mxu0 0
  %9129 = vmatpush1.bf16.msra.mxu0 0
  %9130 = vmatprep.subr.bf16.mxu0 0
  %9131 = vmatpush1.bf16.msra.mxu0 0
  %9132 = vmatprep.subr.bf16.mxu0 0
  %9133 = vmatpush1.bf16.msra.mxu0 0
  %9134 = vmatprep.subr.bf16.mxu0 0
  %9135 = vmatpush1.bf16.msra.mxu0 %v9098
  %9136 = vmatprep.subr.bf16.mxu0 0
  %9137 = vmatpush2.bf16.msra.mxu0 0
  %9138 = vmatprep.subr.bf16.mxu0 0
  %9139 = vmatpush2.bf16.msra.mxu0 0
  %9140 = vmatprep.subr.bf16.mxu0 0
  %9141 = vmatpush2.bf16.msra.mxu0 0
  %9142 = vmatprep.subr.bf16.mxu0 0
  %9143 = vmatpush2.bf16.msra.mxu0 0
  %9144 = vmatprep.subr.bf16.mxu0 0
  %9145 = vmatpush2.bf16.msra.mxu0 0
  %9146 = vmatprep.subr.bf16.mxu0 0
  %9147 = vmatpush2.bf16.msra.mxu0 0
  %9148 = vmatprep.subr.bf16.mxu0 0
  %9149 = vmatpush2.bf16.msra.mxu0 0
  %9150 = vmatprep.subr.bf16.mxu0 0
  %9151 = vmatpush2.bf16.msra.mxu0 0
  %9152 = vmatprep.mubr.bf16.mxu0 0
  %9153 = vmatmul.mubr.bf16.gmra.mxu0 %v9115
  %v9154 = vpop.f32.mrf.mxu0
  %v9155 = vadd.f32 0.0, %v9154
  %v9156 = vpop.f32.mrf.mxu0
  %v9157 = vpop.f32.mrf.mxu0
  %v9158 = vadd.f32 0.0, %v9157
  %v9159 = vpop.f32.mrf.mxu0
  %9160 = vmatprep.mubr.bf16.mxu0 0
  %9161 = vmatmul.mubr.bf16.gmra.mxu0 %v9118
  %v9162 = vpop.f32.mrf.mxu0
  %v9163 = vadd.f32 0.0, %v9162
  %v9164 = vpop.f32.mrf.mxu0
  %v9165 = vpop.f32.mrf.mxu0
  %v9166 = vadd.f32 0.0, %v9165
  %v9167 = vpop.f32.mrf.mxu0
  %9168 = vdwg.mxu0
  %v9169 = vadd.f32 %v8988, %v9155
  %v9170 = vadd.f32 %v8989, %v9158
  %v9171 = vadd.f32 %v8990, %v9163
  %v9172 = vadd.f32 %v8991, %v9166
  %s9173 = scalar_lea.vmem %s9, 896
  %v9174 = vld [vmem:[%s9173] sm:$0xf]
  %v9175 = vld [vmem:[%s9173 + $0x4] sm:$0xf]
  %v9176 = vld [vmem:[%s9173 + $0x8] sm:$0xf]
  %v9177 = vld [vmem:[%s9173 + $0xc] sm:$0xf]
  %v9178 = vld [vmem:[%s9173 + $0x10] sm:$0xf]
  %v9179 = vld [vmem:[%s9173 + $0x14] sm:$0xf]
  %v9180 = vld [vmem:[%s9173 + $0x18] sm:$0xf]
  %v9181 = vld [vmem:[%s9173 + $0x1c] sm:$0xf]
  %v9182 = vld [vmem:[%s9173 + $0x20] sm:$0xf]
  %v9183 = vld [vmem:[%s9173 + $0x24] sm:$0xf]
  %v9184 = vld [vmem:[%s9173 + $0x28] sm:$0xf]
  %v9185 = vld [vmem:[%s9173 + $0x2c] sm:$0xf]
  %v9186 = vld [vmem:[%s9173 + $0x30] sm:$0xf]
  %v9187 = vld [vmem:[%s9173 + $0x34] sm:$0xf]
  %v9188 = vld [vmem:[%s9173 + $0x38] sm:$0xf]
  %v9189 = vld [vmem:[%s9173 + $0x3c] sm:$0xf]
  %v9206 = vunpack.c.l.b16 %v9174
  %v9207 = vunpack.c.l.b16 %v9175
  %v9208 = vunpack.c.l.b16 %v9176
  %v9209 = vunpack.c.l.b16 %v9177
  %v9210 = vunpack.c.l.b16 %v9178
  %v9211 = vunpack.c.l.b16 %v9179
  %v9212 = vunpack.c.l.b16 %v9180
  %v9213 = vunpack.c.l.b16 %v9181
  %v9214 = vunpack.c.l.b16 %v9182
  %v9215 = vunpack.c.l.b16 %v9183
  %v9216 = vunpack.c.l.b16 %v9184
  %v9217 = vunpack.c.l.b16 %v9185
  %v9218 = vunpack.c.l.b16 %v9186
  %v9219 = vunpack.c.l.b16 %v9187
  %v9220 = vunpack.c.l.b16 %v9188
  %v9221 = vunpack.c.l.b16 %v9189
  %v9222 = vpack.c.b16 %v9207, %v9206
  %v9223 = vpack.c.b16 %v9209, %v9208
  %v9224 = vpack.c.b16 %v9211, %v9210
  %v9225 = vpack.c.b16 %v9213, %v9212
  %v9226 = vpack.c.b16 %v9215, %v9214
  %v9227 = vpack.c.b16 %v9217, %v9216
  %v9228 = vpack.c.b16 %v9219, %v9218
  %v9229 = vpack.c.b16 %v9221, %v9220
  %9238 = vmatprep.subr.bf16.mxu0 0
  %9239 = vmatpush1.bf16.msra.mxu0 %v9229
  %9240 = vmatprep.subr.bf16.mxu0 0
  %9241 = vmatpush1.bf16.msra.mxu0 %v9228
  %9242 = vmatprep.subr.bf16.mxu0 0
  %9243 = vmatpush1.bf16.msra.mxu0 %v9227
  %9244 = vmatprep.subr.bf16.mxu0 0
  %9245 = vmatpush1.bf16.msra.mxu0 %v9226
  %9246 = vmatprep.subr.bf16.mxu0 0
  %9247 = vmatpush1.bf16.msra.mxu0 %v9225
  %9248 = vmatprep.subr.bf16.mxu0 0
  %9249 = vmatpush1.bf16.msra.mxu0 %v9224
  %9250 = vmatprep.subr.bf16.mxu0 0
  %9251 = vmatpush1.bf16.msra.mxu0 %v9223
  %9252 = vmatprep.subr.bf16.mxu0 0
  %9253 = vmatpush1.bf16.msra.mxu0 %v9222
  %9254 = vmatprep.subr.bf16.mxu0 0
  %9255 = vmatpush2.bf16.msra.mxu0 0
  %9256 = vmatprep.subr.bf16.mxu0 0
  %9257 = vmatpush2.bf16.msra.mxu0 0
  %9258 = vmatprep.subr.bf16.mxu0 0
  %9259 = vmatpush2.bf16.msra.mxu0 0
  %9260 = vmatprep.subr.bf16.mxu0 0
  %9261 = vmatpush2.bf16.msra.mxu0 0
  %9262 = vmatprep.subr.bf16.mxu0 0
  %9263 = vmatpush2.bf16.msra.mxu0 0
  %9264 = vmatprep.subr.bf16.mxu0 0
  %9265 = vmatpush2.bf16.msra.mxu0 0
  %9266 = vmatprep.subr.bf16.mxu0 0
  %9267 = vmatpush2.bf16.msra.mxu0 0
  %9268 = vmatprep.subr.bf16.mxu0 0
  %9269 = vmatpush2.bf16.msra.mxu0 0
  %9270 = vmatprep.mubr.bf16.mxu0 0
  %9271 = vmatmul.mubr.bf16.gmra.mxu0 %v6647
  %v9272 = vpop.f32.mrf.mxu0
  %v9273 = vadd.f32 0.0, %v9272
  %v9274 = vpop.f32.mrf.mxu0
  %v9275 = vpop.f32.mrf.mxu0
  %v9276 = vadd.f32 0.0, %v9275
  %v9277 = vpop.f32.mrf.mxu0
  %9278 = vdwg.mxu0
  %v9279 = vpack.c.bf16 %v9276, %v9273
  %s9280 = scalar_lea.vmem %s8, 224
  %v9281 = vld [vmem:[%s9280] sm:$0xf]
  %v9282 = vld [vmem:[%s9280 + $0x4] sm:$0xf]
  %v9283 = vld [vmem:[%s9280 + $0x8] sm:$0xf]
  %v9284 = vld [vmem:[%s9280 + $0xc] sm:$0xf]
  %v9289 = vunpack.c.l.b16 %v9281
  %v9290 = vunpack.c.l.b16 %v9282
  %v9291 = vunpack.c.l.b16 %v9283
  %v9292 = vunpack.c.l.b16 %v9284
  %v9293 = vpack.c.b16 %v9290, %v9289
  %v9294 = vpack.c.b16 %v9292, %v9291
  %v9296 = vsel %vm6880, %v9293, 0
  %v9299 = vsel %vm6880, %v9294, 0
  %9301 = vmatprep.subr.bf16.mxu0 0
  %9302 = vmatpush1.bf16.msra.mxu0 0
  %9303 = vmatprep.subr.bf16.mxu0 0
  %9304 = vmatpush1.bf16.msra.mxu0 0
  %9305 = vmatprep.subr.bf16.mxu0 0
  %9306 = vmatpush1.bf16.msra.mxu0 0
  %9307 = vmatprep.subr.bf16.mxu0 0
  %9308 = vmatpush1.bf16.msra.mxu0 0
  %9309 = vmatprep.subr.bf16.mxu0 0
  %9310 = vmatpush1.bf16.msra.mxu0 0
  %9311 = vmatprep.subr.bf16.mxu0 0
  %9312 = vmatpush1.bf16.msra.mxu0 0
  %9313 = vmatprep.subr.bf16.mxu0 0
  %9314 = vmatpush1.bf16.msra.mxu0 0
  %9315 = vmatprep.subr.bf16.mxu0 0
  %9316 = vmatpush1.bf16.msra.mxu0 %v9279
  %9317 = vmatprep.subr.bf16.mxu0 0
  %9318 = vmatpush2.bf16.msra.mxu0 0
  %9319 = vmatprep.subr.bf16.mxu0 0
  %9320 = vmatpush2.bf16.msra.mxu0 0
  %9321 = vmatprep.subr.bf16.mxu0 0
  %9322 = vmatpush2.bf16.msra.mxu0 0
  %9323 = vmatprep.subr.bf16.mxu0 0
  %9324 = vmatpush2.bf16.msra.mxu0 0
  %9325 = vmatprep.subr.bf16.mxu0 0
  %9326 = vmatpush2.bf16.msra.mxu0 0
  %9327 = vmatprep.subr.bf16.mxu0 0
  %9328 = vmatpush2.bf16.msra.mxu0 0
  %9329 = vmatprep.subr.bf16.mxu0 0
  %9330 = vmatpush2.bf16.msra.mxu0 0
  %9331 = vmatprep.subr.bf16.mxu0 0
  %9332 = vmatpush2.bf16.msra.mxu0 0
  %9333 = vmatprep.mubr.bf16.mxu0 0
  %9334 = vmatmul.mubr.bf16.gmra.mxu0 %v9296
  %v9335 = vpop.f32.mrf.mxu0
  %v9336 = vadd.f32 0.0, %v9335
  %v9337 = vpop.f32.mrf.mxu0
  %v9338 = vpop.f32.mrf.mxu0
  %v9339 = vadd.f32 0.0, %v9338
  %v9340 = vpop.f32.mrf.mxu0
  %9341 = vmatprep.mubr.bf16.mxu0 0
  %9342 = vmatmul.mubr.bf16.gmra.mxu0 %v9299
  %v9343 = vpop.f32.mrf.mxu0
  %v9344 = vadd.f32 0.0, %v9343
  %v9345 = vpop.f32.mrf.mxu0
  %v9346 = vpop.f32.mrf.mxu0
  %v9347 = vadd.f32 0.0, %v9346
  %v9348 = vpop.f32.mrf.mxu0
  %9349 = vdwg.mxu0
  %v9350 = vadd.f32 %v9169, %v9336
  %v9351 = vadd.f32 %v9170, %v9339
  %v9352 = vadd.f32 %v9171, %v9344
  %v9353 = vadd.f32 %v9172, %v9347
  %s9354 = scalar_lea.vmem %s9, 960
  %v9355 = vld [vmem:[%s9354] sm:$0xf]
  %v9356 = vld [vmem:[%s9354 + $0x4] sm:$0xf]
  %v9357 = vld [vmem:[%s9354 + $0x8] sm:$0xf]
  %v9358 = vld [vmem:[%s9354 + $0xc] sm:$0xf]
  %v9359 = vld [vmem:[%s9354 + $0x10] sm:$0xf]
  %v9360 = vld [vmem:[%s9354 + $0x14] sm:$0xf]
  %v9361 = vld [vmem:[%s9354 + $0x18] sm:$0xf]
  %v9362 = vld [vmem:[%s9354 + $0x1c] sm:$0xf]
  %v9363 = vld [vmem:[%s9354 + $0x20] sm:$0xf]
  %v9364 = vld [vmem:[%s9354 + $0x24] sm:$0xf]
  %v9365 = vld [vmem:[%s9354 + $0x28] sm:$0xf]
  %v9366 = vld [vmem:[%s9354 + $0x2c] sm:$0xf]
  %v9367 = vld [vmem:[%s9354 + $0x30] sm:$0xf]
  %v9368 = vld [vmem:[%s9354 + $0x34] sm:$0xf]
  %v9369 = vld [vmem:[%s9354 + $0x38] sm:$0xf]
  %v9370 = vld [vmem:[%s9354 + $0x3c] sm:$0xf]
  %v9387 = vunpack.c.l.b16 %v9355
  %v9388 = vunpack.c.l.b16 %v9356
  %v9389 = vunpack.c.l.b16 %v9357
  %v9390 = vunpack.c.l.b16 %v9358
  %v9391 = vunpack.c.l.b16 %v9359
  %v9392 = vunpack.c.l.b16 %v9360
  %v9393 = vunpack.c.l.b16 %v9361
  %v9394 = vunpack.c.l.b16 %v9362
  %v9395 = vunpack.c.l.b16 %v9363
  %v9396 = vunpack.c.l.b16 %v9364
  %v9397 = vunpack.c.l.b16 %v9365
  %v9398 = vunpack.c.l.b16 %v9366
  %v9399 = vunpack.c.l.b16 %v9367
  %v9400 = vunpack.c.l.b16 %v9368
  %v9401 = vunpack.c.l.b16 %v9369
  %v9402 = vunpack.c.l.b16 %v9370
  %v9403 = vpack.c.b16 %v9388, %v9387
  %v9404 = vpack.c.b16 %v9390, %v9389
  %v9405 = vpack.c.b16 %v9392, %v9391
  %v9406 = vpack.c.b16 %v9394, %v9393
  %v9407 = vpack.c.b16 %v9396, %v9395
  %v9408 = vpack.c.b16 %v9398, %v9397
  %v9409 = vpack.c.b16 %v9400, %v9399
  %v9410 = vpack.c.b16 %v9402, %v9401
  %9419 = vmatprep.subr.bf16.mxu0 0
  %9420 = vmatpush1.bf16.msra.mxu0 %v9410
  %9421 = vmatprep.subr.bf16.mxu0 0
  %9422 = vmatpush1.bf16.msra.mxu0 %v9409
  %9423 = vmatprep.subr.bf16.mxu0 0
  %9424 = vmatpush1.bf16.msra.mxu0 %v9408
  %9425 = vmatprep.subr.bf16.mxu0 0
  %9426 = vmatpush1.bf16.msra.mxu0 %v9407
  %9427 = vmatprep.subr.bf16.mxu0 0
  %9428 = vmatpush1.bf16.msra.mxu0 %v9406
  %9429 = vmatprep.subr.bf16.mxu0 0
  %9430 = vmatpush1.bf16.msra.mxu0 %v9405
  %9431 = vmatprep.subr.bf16.mxu0 0
  %9432 = vmatpush1.bf16.msra.mxu0 %v9404
  %9433 = vmatprep.subr.bf16.mxu0 0
  %9434 = vmatpush1.bf16.msra.mxu0 %v9403
  %9435 = vmatprep.subr.bf16.mxu0 0
  %9436 = vmatpush2.bf16.msra.mxu0 0
  %9437 = vmatprep.subr.bf16.mxu0 0
  %9438 = vmatpush2.bf16.msra.mxu0 0
  %9439 = vmatprep.subr.bf16.mxu0 0
  %9440 = vmatpush2.bf16.msra.mxu0 0
  %9441 = vmatprep.subr.bf16.mxu0 0
  %9442 = vmatpush2.bf16.msra.mxu0 0
  %9443 = vmatprep.subr.bf16.mxu0 0
  %9444 = vmatpush2.bf16.msra.mxu0 0
  %9445 = vmatprep.subr.bf16.mxu0 0
  %9446 = vmatpush2.bf16.msra.mxu0 0
  %9447 = vmatprep.subr.bf16.mxu0 0
  %9448 = vmatpush2.bf16.msra.mxu0 0
  %9449 = vmatprep.subr.bf16.mxu0 0
  %9450 = vmatpush2.bf16.msra.mxu0 0
  %9451 = vmatprep.mubr.bf16.mxu0 0
  %9452 = vmatmul.mubr.bf16.gmra.mxu0 %v6647
  %v9453 = vpop.f32.mrf.mxu0
  %v9454 = vadd.f32 0.0, %v9453
  %v9455 = vpop.f32.mrf.mxu0
  %v9456 = vpop.f32.mrf.mxu0
  %v9457 = vadd.f32 0.0, %v9456
  %v9458 = vpop.f32.mrf.mxu0
  %9459 = vdwg.mxu0
  %v9460 = vpack.c.bf16 %v9457, %v9454
  %s9461 = scalar_lea.vmem %s8, 240
  %v9462 = vld [vmem:[%s9461] sm:$0xf]
  %v9463 = vld [vmem:[%s9461 + $0x4] sm:$0xf]
  %v9464 = vld [vmem:[%s9461 + $0x8] sm:$0xf]
  %v9465 = vld [vmem:[%s9461 + $0xc] sm:$0xf]
  %v9470 = vunpack.c.l.b16 %v9462
  %v9471 = vunpack.c.l.b16 %v9463
  %v9472 = vunpack.c.l.b16 %v9464
  %v9473 = vunpack.c.l.b16 %v9465
  %v9474 = vpack.c.b16 %v9471, %v9470
  %v9475 = vpack.c.b16 %v9473, %v9472
  %v9477 = vsel %vm6880, %v9474, 0
  %v9480 = vsel %vm6880, %v9475, 0
  %9482 = vmatprep.subr.bf16.mxu0 0
  %9483 = vmatpush1.bf16.msra.mxu0 0
  %9484 = vmatprep.subr.bf16.mxu0 0
  %9485 = vmatpush1.bf16.msra.mxu0 0
  %9486 = vmatprep.subr.bf16.mxu0 0
  %9487 = vmatpush1.bf16.msra.mxu0 0
  %9488 = vmatprep.subr.bf16.mxu0 0
  %9489 = vmatpush1.bf16.msra.mxu0 0
  %9490 = vmatprep.subr.bf16.mxu0 0
  %9491 = vmatpush1.bf16.msra.mxu0 0
  %9492 = vmatprep.subr.bf16.mxu0 0
  %9493 = vmatpush1.bf16.msra.mxu0 0
  %9494 = vmatprep.subr.bf16.mxu0 0
  %9495 = vmatpush1.bf16.msra.mxu0 0
  %9496 = vmatprep.subr.bf16.mxu0 0
  %9497 = vmatpush1.bf16.msra.mxu0 %v9460
  %9498 = vmatprep.subr.bf16.mxu0 0
  %9499 = vmatpush2.bf16.msra.mxu0 0
  %9500 = vmatprep.subr.bf16.mxu0 0
  %9501 = vmatpush2.bf16.msra.mxu0 0
  %9502 = vmatprep.subr.bf16.mxu0 0
  %9503 = vmatpush2.bf16.msra.mxu0 0
  %9504 = vmatprep.subr.bf16.mxu0 0
  %9505 = vmatpush2.bf16.msra.mxu0 0
  %9506 = vmatprep.subr.bf16.mxu0 0
  %9507 = vmatpush2.bf16.msra.mxu0 0
  %9508 = vmatprep.subr.bf16.mxu0 0
  %9509 = vmatpush2.bf16.msra.mxu0 0
  %9510 = vmatprep.subr.bf16.mxu0 0
  %9511 = vmatpush2.bf16.msra.mxu0 0
  %9512 = vmatprep.subr.bf16.mxu0 0
  %9513 = vmatpush2.bf16.msra.mxu0 0
  %9514 = vmatprep.mubr.bf16.mxu0 0
  %9515 = vmatmul.mubr.bf16.gmra.mxu0 %v9477
  %v9516 = vpop.f32.mrf.mxu0
  %v9517 = vadd.f32 0.0, %v9516
  %v9518 = vpop.f32.mrf.mxu0
  %v9519 = vpop.f32.mrf.mxu0
  %v9520 = vadd.f32 0.0, %v9519
  %v9521 = vpop.f32.mrf.mxu0
  %9522 = vmatprep.mubr.bf16.mxu0 0
  %9523 = vmatmul.mubr.bf16.gmra.mxu0 %v9480
  %v9524 = vpop.f32.mrf.mxu0
  %v9525 = vadd.f32 0.0, %v9524
  %v9526 = vpop.f32.mrf.mxu0
  %v9527 = vpop.f32.mrf.mxu0
  %v9528 = vadd.f32 0.0, %v9527
  %v9529 = vpop.f32.mrf.mxu0
  %9530 = vdwg.mxu0
  %v9531 = vadd.f32 %v9350, %v9517
  %v9532 = vadd.f32 %v9351, %v9520
  %v9533 = vadd.f32 %v9352, %v9525
  %v9534 = vadd.f32 %v9353, %v9528
  %v9535 = vld [vmem:[%s10] sm:$0xff]
  %v9536 = vld [vmem:[%s10 + $0x8] sm:$0xff]
  %v9537 = vld [vmem:[%s10 + $0x10] sm:$0xff]
  %v9538 = vld [vmem:[%s10 + $0x18] sm:$0xff]
  %v9539 = vld [vmem:[%s11] sm:$0xff]
  %v9540 = vld [vmem:[%s11 + $0x8] sm:$0xff]
  %v9541 = vld [vmem:[%s11 + $0x10] sm:$0xff]
  %v9542 = vld [vmem:[%s11 + $0x18] sm:$0xff]
  %vm9543 = vcmask 261120
  %v9544 = vsel %vm9543, %v9531, 0.0
  %9545 = vadd.xlane.f32.xlu0 %v9544
  %v9546 = vpop.xlane.xlu0 %9545
  %v9547 = vsel %vm9543, %v9532, 0.0
  %9548 = vadd.xlane.f32.xlu0 %v9547
  %v9549 = vpop.xlane.xlu0 %9548
  %v9550 = vsel %vm9543, %v9533, 0.0
  %9551 = vadd.xlane.f32.xlu0 %v9550
  %v9552 = vpop.xlane.xlu0 %9551
  %v9553 = vsel %vm9543, %v9534, 0.0
  %9554 = vadd.xlane.f32.xlu0 %v9553
  %v9555 = vpop.xlane.xlu0 %9554
  %v9556 = vmul.f32 %v9546, 0.03125
  %v9557 = vmul.f32 %v9549, 0.03125
  %v9558 = vmul.f32 %v9552, 0.03125
  %v9559 = vmul.f32 %v9555, 0.03125
  %v9560 = vsub.f32 %v9531, %v9556
  %v9561 = vsub.f32 %v9532, %v9557
  %v9562 = vsub.f32 %v9533, %v9558
  %v9563 = vsub.f32 %v9534, %v9559
  %v9564 = vmul.f32 %v9560, %v9560
  %v9565 = vmul.f32 %v9561, %v9561
  %v9566 = vmul.f32 %v9562, %v9562
  %v9567 = vmul.f32 %v9563, %v9563
  %v9568 = vsel %vm9543, %v9564, 0.0
  %9569 = vadd.xlane.f32.xlu0 %v9568
  %v9570 = vpop.xlane.xlu0 %9569
  %v9571 = vsel %vm9543, %v9565, 0.0
  %9572 = vadd.xlane.f32.xlu0 %v9571
  %v9573 = vpop.xlane.xlu0 %9572
  %v9574 = vsel %vm9543, %v9566, 0.0
  %9575 = vadd.xlane.f32.xlu0 %v9574
  %v9576 = vpop.xlane.xlu0 %9575
  %v9577 = vsel %vm9543, %v9567, 0.0
  %9578 = vadd.xlane.f32.xlu0 %v9577
  %v9579 = vpop.xlane.xlu0 %9578
  %v9580 = vmul.f32 %v9570, 0.03125
  %v9581 = vmul.f32 %v9573, 0.03125
  %v9582 = vmul.f32 %v9576, 0.03125
  %v9583 = vmul.f32 %v9579, 0.03125
  %v9584 = vadd.f32 %v9580, 1e-05
  %v9585 = vadd.f32 %v9581, 1e-05
  %v9586 = vadd.f32 %v9582, 1e-05
  %v9587 = vadd.f32 %v9583, 1e-05
  %v9588 = vrsqrt.pop %v9584
  %v9589 = vrsqrt.pop %v9585
  %v9590 = vrsqrt.pop %v9586
  %v9591 = vrsqrt.pop %v9587
  %v9592 = vmul.f32 %v9535, %v9588
  %v9593 = vmul.f32 %v9536, %v9589
  %v9594 = vmul.f32 %v9537, %v9590
  %v9595 = vmul.f32 %v9538, %v9591
  %9597 = vset.pattern.permute.xlu0 0
  %9598 = vperm.xlu0 %9597, %v9592
  %v9599 = vpop.permute.xlu0 %9598
  %9602 = vset.pattern.permute.xlu0 0
  %9603 = vperm.xlu0 %9602, %v9593
  %v9604 = vpop.permute.xlu0 %9603
  %9607 = vset.pattern.permute.xlu0 0
  %9608 = vperm.xlu0 %9607, %v9594
  %v9609 = vpop.permute.xlu0 %9608
  %9612 = vset.pattern.permute.xlu0 0
  %9613 = vperm.xlu0 %9612, %v9595
  %v9614 = vpop.permute.xlu0 %9613
  %v9616 = vmul.f32 %v9599, %v9560
  %v9617 = vmul.f32 %v9604, %v9561
  %v9618 = vmul.f32 %v9609, %v9562
  %v9619 = vmul.f32 %v9614, %v9563
  %9621 = vset.pattern.permute.xlu0 0
  %9622 = vperm.xlu0 %9621, %v9539
  %v9623 = vpop.permute.xlu0 %9622
  %9626 = vset.pattern.permute.xlu0 0
  %9627 = vperm.xlu0 %9626, %v9540
  %v9628 = vpop.permute.xlu0 %9627
  %9631 = vset.pattern.permute.xlu0 0
  %9632 = vperm.xlu0 %9631, %v9541
  %v9633 = vpop.permute.xlu0 %9632
  %9636 = vset.pattern.permute.xlu0 0
  %9637 = vperm.xlu0 %9636, %v9542
  %v9638 = vpop.permute.xlu0 %9637
  %v9640 = vadd.f32 %v9616, %v9623
  %v9641 = vadd.f32 %v9617, %v9628
  %v9642 = vadd.f32 %v9618, %v9633
  %v9643 = vadd.f32 %v9619, %v9638
  %vm9644 = vcmp.ge.f32.partialorder %v9640, 0.0
  %vm9645 = vcmp.ge.f32.partialorder %v9641, 0.0
  %vm9646 = vcmp.ge.f32.partialorder %v9642, 0.0
  %vm9647 = vcmp.ge.f32.partialorder %v9643, 0.0
  %v9648 = vmul.f32 %v9640, 0.2
  %v9649 = vmul.f32 %v9641, 0.2
  %v9650 = vmul.f32 %v9642, 0.2
  %v9651 = vmul.f32 %v9643, 0.2
  %v9652 = vsel %vm9644, %v9640, %v9648
  %v9653 = vsel %vm9645, %v9641, %v9649
  %v9654 = vsel %vm9646, %v9642, %v9650
  %v9655 = vsel %vm9647, %v9643, %v9651
  %v9656 = vpack.c.bf16 %v9653, %v9652
  %v9657 = vpack.c.bf16 %v9655, %v9654
  %v9658 = vld [vmem:[%s13] sm:$0xf]
  %v9659 = vld [vmem:[%s13 + $0x4] sm:$0xf]
  %v9660 = vld [vmem:[%s13 + $0x8] sm:$0xf]
  %v9661 = vld [vmem:[%s13 + $0xc] sm:$0xf]
  %v9666 = vunpack.c.l.b16 %v9658
  %v9667 = vunpack.c.l.b16 %v9659
  %v9668 = vunpack.c.l.b16 %v9660
  %v9669 = vunpack.c.l.b16 %v9661
  %v9670 = vpack.c.b16 %v9667, %v9666
  %v9671 = vpack.c.b16 %v9669, %v9668
  %v9675 = vsel %vm9543, %v9656, 0
  %v9678 = vsel %vm9543, %v9657, 0
  %9680 = vmatprep.subr.bf16.mxu0 0
  %9681 = vmatpush1.bf16.msra.mxu0 0
  %9682 = vmatprep.subr.bf16.mxu0 0
  %9683 = vmatpush1.bf16.msra.mxu0 0
  %9684 = vmatprep.subr.bf16.mxu0 0
  %9685 = vmatpush1.bf16.msra.mxu0 0
  %9686 = vmatprep.subr.bf16.mxu0 0
  %9687 = vmatpush1.bf16.msra.mxu0 0
  %9688 = vmatprep.subr.bf16.mxu0 0
  %9689 = vmatpush1.bf16.msra.mxu0 0
  %9690 = vmatprep.subr.bf16.mxu0 0
  %9691 = vmatpush1.bf16.msra.mxu0 0
  %9692 = vmatprep.subr.bf16.mxu0 0
  %9693 = vmatpush1.bf16.msra.mxu0 %v9671
  %9694 = vmatprep.subr.bf16.mxu0 0
  %9695 = vmatpush1.bf16.msra.mxu0 %v9670
  %9696 = vmatprep.subr.bf16.mxu0 0
  %9697 = vmatpush2.bf16.msra.mxu0 0
  %9698 = vmatprep.subr.bf16.mxu0 0
  %9699 = vmatpush2.bf16.msra.mxu0 0
  %9700 = vmatprep.subr.bf16.mxu0 0
  %9701 = vmatpush2.bf16.msra.mxu0 0
  %9702 = vmatprep.subr.bf16.mxu0 0
  %9703 = vmatpush2.bf16.msra.mxu0 0
  %9704 = vmatprep.subr.bf16.mxu0 0
  %9705 = vmatpush2.bf16.msra.mxu0 0
  %9706 = vmatprep.subr.bf16.mxu0 0
  %9707 = vmatpush2.bf16.msra.mxu0 0
  %9708 = vmatprep.subr.bf16.mxu0 0
  %9709 = vmatpush2.bf16.msra.mxu0 0
  %9710 = vmatprep.subr.bf16.mxu0 0
  %9711 = vmatpush2.bf16.msra.mxu0 0
  %9712 = vmatprep.mubr.bf16.mxu0 0
  %9713 = vmatmul.mubr.bf16.gmra.mxu0 %v9675
  %v9714 = vpop.f32.mrf.mxu0
  %v9715 = vadd.f32 0.0, %v9714
  %v9716 = vpop.f32.mrf.mxu0
  %v9717 = vpop.f32.mrf.mxu0
  %v9718 = vadd.f32 0.0, %v9717
  %v9719 = vpop.f32.mrf.mxu0
  %9720 = vmatprep.mubr.bf16.mxu0 0
  %9721 = vmatmul.mubr.bf16.gmra.mxu0 %v9678
  %v9722 = vpop.f32.mrf.mxu0
  %v9723 = vadd.f32 0.0, %v9722
  %v9724 = vpop.f32.mrf.mxu0
  %v9725 = vpop.f32.mrf.mxu0
  %v9726 = vadd.f32 0.0, %v9725
  %v9727 = vpop.f32.mrf.mxu0
  %9728 = vdwg.mxu0
  %v9729 = vpack.c.bf16 %v9718, %v9715
  %v9730 = vpack.c.bf16 %v9726, %v9723
  %v9731 = vld [vmem:[%s12] sm:$0xf]
  %v9732 = vld [vmem:[%s12 + $0x4] sm:$0xf]
  %v9733 = vld [vmem:[%s12 + $0x8] sm:$0xf]
  %v9734 = vld [vmem:[%s12 + $0xc] sm:$0xf]
  %v9735 = vld [vmem:[%s12 + $0x10] sm:$0xf]
  %v9736 = vld [vmem:[%s12 + $0x14] sm:$0xf]
  %v9737 = vld [vmem:[%s12 + $0x18] sm:$0xf]
  %v9738 = vld [vmem:[%s12 + $0x1c] sm:$0xf]
  %s9739 = scalar_lea.vmem %s13, 16
  %v9740 = vld [vmem:[%s9739] sm:$0xf]
  %v9741 = vld [vmem:[%s9739 + $0x4] sm:$0xf]
  %v9742 = vld [vmem:[%s9739 + $0x8] sm:$0xf]
  %v9743 = vld [vmem:[%s9739 + $0xc] sm:$0xf]
  %v9748 = vunpack.c.l.b16 %v9740
  %v9749 = vunpack.c.l.b16 %v9741
  %v9750 = vunpack.c.l.b16 %v9742
  %v9751 = vunpack.c.l.b16 %v9743
  %v9752 = vpack.c.b16 %v9749, %v9748
  %v9753 = vpack.c.b16 %v9751, %v9750
  %9756 = vmatprep.subr.bf16.mxu0 0
  %9757 = vmatpush1.bf16.msra.mxu0 0
  %9758 = vmatprep.subr.bf16.mxu0 0
  %9759 = vmatpush1.bf16.msra.mxu0 0
  %9760 = vmatprep.subr.bf16.mxu0 0
  %9761 = vmatpush1.bf16.msra.mxu0 0
  %9762 = vmatprep.subr.bf16.mxu0 0
  %9763 = vmatpush1.bf16.msra.mxu0 0
  %9764 = vmatprep.subr.bf16.mxu0 0
  %9765 = vmatpush1.bf16.msra.mxu0 0
  %9766 = vmatprep.subr.bf16.mxu0 0
  %9767 = vmatpush1.bf16.msra.mxu0 0
  %9768 = vmatprep.subr.bf16.mxu0 0
  %9769 = vmatpush1.bf16.msra.mxu0 %v9753
  %9770 = vmatprep.subr.bf16.mxu0 0
  %9771 = vmatpush1.bf16.msra.mxu0 %v9752
  %9772 = vmatprep.subr.bf16.mxu0 0
  %9773 = vmatpush2.bf16.msra.mxu0 0
  %9774 = vmatprep.subr.bf16.mxu0 0
  %9775 = vmatpush2.bf16.msra.mxu0 0
  %9776 = vmatprep.subr.bf16.mxu0 0
  %9777 = vmatpush2.bf16.msra.mxu0 0
  %9778 = vmatprep.subr.bf16.mxu0 0
  %9779 = vmatpush2.bf16.msra.mxu0 0
  %9780 = vmatprep.subr.bf16.mxu0 0
  %9781 = vmatpush2.bf16.msra.mxu0 0
  %9782 = vmatprep.subr.bf16.mxu0 0
  %9783 = vmatpush2.bf16.msra.mxu0 0
  %9784 = vmatprep.subr.bf16.mxu0 0
  %9785 = vmatpush2.bf16.msra.mxu0 0
  %9786 = vmatprep.subr.bf16.mxu0 0
  %9787 = vmatpush2.bf16.msra.mxu0 0
  %9788 = vmatprep.mubr.bf16.mxu0 0
  %9789 = vmatmul.mubr.bf16.gmra.mxu0 %v9675
  %v9790 = vpop.f32.mrf.mxu0
  %v9791 = vadd.f32 0.0, %v9790
  %v9792 = vpop.f32.mrf.mxu0
  %v9793 = vpop.f32.mrf.mxu0
  %v9794 = vadd.f32 0.0, %v9793
  %v9795 = vpop.f32.mrf.mxu0
  %9796 = vmatprep.mubr.bf16.mxu0 0
  %9797 = vmatmul.mubr.bf16.gmra.mxu0 %v9678
  %v9798 = vpop.f32.mrf.mxu0
  %v9799 = vadd.f32 0.0, %v9798
  %v9800 = vpop.f32.mrf.mxu0
  %v9801 = vpop.f32.mrf.mxu0
  %v9802 = vadd.f32 0.0, %v9801
  %v9803 = vpop.f32.mrf.mxu0
  %9804 = vdwg.mxu0
  %v9805 = vpack.c.bf16 %v9794, %v9791
  %v9806 = vpack.c.bf16 %v9802, %v9799
  %s9807 = scalar_lea.vmem %s12, 32
  %v9808 = vld [vmem:[%s9807] sm:$0xf]
  %v9809 = vld [vmem:[%s9807 + $0x4] sm:$0xf]
  %v9810 = vld [vmem:[%s9807 + $0x8] sm:$0xf]
  %v9811 = vld [vmem:[%s9807 + $0xc] sm:$0xf]
  %v9812 = vld [vmem:[%s9807 + $0x10] sm:$0xf]
  %v9813 = vld [vmem:[%s9807 + $0x14] sm:$0xf]
  %v9814 = vld [vmem:[%s9807 + $0x18] sm:$0xf]
  %v9815 = vld [vmem:[%s9807 + $0x1c] sm:$0xf]
  %v9824 = vunpack.c.l.b16 %v9808
  %v9825 = vunpack.c.l.b16 %v9809
  %v9826 = vunpack.c.l.b16 %v9810
  %v9827 = vunpack.c.l.b16 %v9811
  %v9828 = vunpack.c.l.b16 %v9812
  %v9829 = vunpack.c.l.b16 %v9813
  %v9830 = vunpack.c.l.b16 %v9814
  %v9831 = vunpack.c.l.b16 %v9815
  %v9832 = vpack.c.b16 %v9825, %v9824
  %v9833 = vpack.c.b16 %v9827, %v9826
  %v9834 = vpack.c.b16 %v9829, %v9828
  %v9835 = vpack.c.b16 %v9831, %v9830
  %v9837 = vsel %vm9543, %v9832, 0
  %v9840 = vsel %vm9543, %v9833, 0
  %v9843 = vsel %vm9543, %v9834, 0
  %v9846 = vsel %vm9543, %v9835, 0
  %9848 = vmatprep.subr.bf16.mxu0 0
  %9849 = vmatpush1.bf16.msra.mxu0 0
  %9850 = vmatprep.subr.bf16.mxu0 0
  %9851 = vmatpush1.bf16.msra.mxu0 0
  %9852 = vmatprep.subr.bf16.mxu0 0
  %9853 = vmatpush1.bf16.msra.mxu0 0
  %9854 = vmatprep.subr.bf16.mxu0 0
  %9855 = vmatpush1.bf16.msra.mxu0 0
  %9856 = vmatprep.subr.bf16.mxu0 0
  %9857 = vmatpush1.bf16.msra.mxu0 0
  %9858 = vmatprep.subr.bf16.mxu0 0
  %9859 = vmatpush1.bf16.msra.mxu0 0
  %9860 = vmatprep.subr.bf16.mxu0 0
  %9861 = vmatpush1.bf16.msra.mxu0 %v9806
  %9862 = vmatprep.subr.bf16.mxu0 0
  %9863 = vmatpush1.bf16.msra.mxu0 %v9805
  %9864 = vmatprep.subr.bf16.mxu0 0
  %9865 = vmatpush2.bf16.msra.mxu0 0
  %9866 = vmatprep.subr.bf16.mxu0 0
  %9867 = vmatpush2.bf16.msra.mxu0 0
  %9868 = vmatprep.subr.bf16.mxu0 0
  %9869 = vmatpush2.bf16.msra.mxu0 0
  %9870 = vmatprep.subr.bf16.mxu0 0
  %9871 = vmatpush2.bf16.msra.mxu0 0
  %9872 = vmatprep.subr.bf16.mxu0 0
  %9873 = vmatpush2.bf16.msra.mxu0 0
  %9874 = vmatprep.subr.bf16.mxu0 0
  %9875 = vmatpush2.bf16.msra.mxu0 0
  %9876 = vmatprep.subr.bf16.mxu0 0
  %9877 = vmatpush2.bf16.msra.mxu0 0
  %9878 = vmatprep.subr.bf16.mxu0 0
  %9879 = vmatpush2.bf16.msra.mxu0 0
  %9880 = vmatprep.mubr.bf16.mxu0 0
  %9881 = vmatmul.mubr.bf16.gmra.mxu0 %v9837
  %v9882 = vpop.f32.mrf.mxu0
  %v9883 = vadd.f32 0.0, %v9882
  %v9884 = vpop.f32.mrf.mxu0
  %v9885 = vpop.f32.mrf.mxu0
  %v9886 = vadd.f32 0.0, %v9885
  %v9887 = vpop.f32.mrf.mxu0
  %9888 = vmatprep.mubr.bf16.mxu0 0
  %9889 = vmatmul.mubr.bf16.gmra.mxu0 %v9840
  %v9890 = vpop.f32.mrf.mxu0
  %v9891 = vadd.f32 0.0, %v9890
  %v9892 = vpop.f32.mrf.mxu0
  %v9893 = vpop.f32.mrf.mxu0
  %v9894 = vadd.f32 0.0, %v9893
  %v9895 = vpop.f32.mrf.mxu0
  %9896 = vmatprep.mubr.bf16.mxu0 0
  %9897 = vmatmul.mubr.bf16.gmra.mxu0 %v9843
  %v9898 = vpop.f32.mrf.mxu0
  %v9899 = vadd.f32 0.0, %v9898
  %v9900 = vpop.f32.mrf.mxu0
  %v9901 = vpop.f32.mrf.mxu0
  %v9902 = vadd.f32 0.0, %v9901
  %v9903 = vpop.f32.mrf.mxu0
  %9904 = vmatprep.mubr.bf16.mxu0 0
  %9905 = vmatmul.mubr.bf16.gmra.mxu0 %v9846
  %v9906 = vpop.f32.mrf.mxu0
  %v9907 = vadd.f32 0.0, %v9906
  %v9908 = vpop.f32.mrf.mxu0
  %v9909 = vpop.f32.mrf.mxu0
  %v9910 = vadd.f32 0.0, %v9909
  %v9911 = vpop.f32.mrf.mxu0
  %9912 = vdwg.mxu0
  %v9921 = vunpack.c.l.b16 %v9731
  %v9922 = vunpack.c.l.b16 %v9732
  %v9923 = vunpack.c.l.b16 %v9733
  %v9924 = vunpack.c.l.b16 %v9734
  %v9925 = vunpack.c.l.b16 %v9735
  %v9926 = vunpack.c.l.b16 %v9736
  %v9927 = vunpack.c.l.b16 %v9737
  %v9928 = vunpack.c.l.b16 %v9738
  %v9929 = vpack.c.b16 %v9922, %v9921
  %v9930 = vpack.c.b16 %v9924, %v9923
  %v9931 = vpack.c.b16 %v9926, %v9925
  %v9932 = vpack.c.b16 %v9928, %v9927
  %v9934 = vsel %vm9543, %v9929, 0
  %v9937 = vsel %vm9543, %v9930, 0
  %v9940 = vsel %vm9543, %v9931, 0
  %v9943 = vsel %vm9543, %v9932, 0
  %9945 = vmatprep.subr.bf16.mxu0 0
  %9946 = vmatpush1.bf16.msra.mxu0 0
  %9947 = vmatprep.subr.bf16.mxu0 0
  %9948 = vmatpush1.bf16.msra.mxu0 0
  %9949 = vmatprep.subr.bf16.mxu0 0
  %9950 = vmatpush1.bf16.msra.mxu0 0
  %9951 = vmatprep.subr.bf16.mxu0 0
  %9952 = vmatpush1.bf16.msra.mxu0 0
  %9953 = vmatprep.subr.bf16.mxu0 0
  %9954 = vmatpush1.bf16.msra.mxu0 0
  %9955 = vmatprep.subr.bf16.mxu0 0
  %9956 = vmatpush1.bf16.msra.mxu0 0
  %9957 = vmatprep.subr.bf16.mxu0 0
  %9958 = vmatpush1.bf16.msra.mxu0 %v9730
  %9959 = vmatprep.subr.bf16.mxu0 0
  %9960 = vmatpush1.bf16.msra.mxu0 %v9729
  %9961 = vmatprep.subr.bf16.mxu0 0
  %9962 = vmatpush2.bf16.msra.mxu0 0
  %9963 = vmatprep.subr.bf16.mxu0 0
  %9964 = vmatpush2.bf16.msra.mxu0 0
  %9965 = vmatprep.subr.bf16.mxu0 0
  %9966 = vmatpush2.bf16.msra.mxu0 0
  %9967 = vmatprep.subr.bf16.mxu0 0
  %9968 = vmatpush2.bf16.msra.mxu0 0
  %9969 = vmatprep.subr.bf16.mxu0 0
  %9970 = vmatpush2.bf16.msra.mxu0 0
  %9971 = vmatprep.subr.bf16.mxu0 0
  %9972 = vmatpush2.bf16.msra.mxu0 0
  %9973 = vmatprep.subr.bf16.mxu0 0
  %9974 = vmatpush2.bf16.msra.mxu0 0
  %9975 = vmatprep.subr.bf16.mxu0 0
  %9976 = vmatpush2.bf16.msra.mxu0 0
  %9977 = vmatprep.mubr.bf16.mxu0 0
  %9978 = vmatmul.mubr.bf16.gmra.mxu0 %v9934
  %v9979 = vpop.f32.mrf.mxu0
  %v9980 = vadd.f32 %v9883, %v9979
  %v9981 = vpop.f32.mrf.mxu0
  %v9982 = vpop.f32.mrf.mxu0
  %v9983 = vadd.f32 %v9886, %v9982
  %v9984 = vpop.f32.mrf.mxu0
  %9985 = vmatprep.mubr.bf16.mxu0 0
  %9986 = vmatmul.mubr.bf16.gmra.mxu0 %v9937
  %v9987 = vpop.f32.mrf.mxu0
  %v9988 = vadd.f32 %v9891, %v9987
  %v9989 = vpop.f32.mrf.mxu0
  %v9990 = vpop.f32.mrf.mxu0
  %v9991 = vadd.f32 %v9894, %v9990
  %v9992 = vpop.f32.mrf.mxu0
  %9993 = vmatprep.mubr.bf16.mxu0 0
  %9994 = vmatmul.mubr.bf16.gmra.mxu0 %v9940
  %v9995 = vpop.f32.mrf.mxu0
  %v9996 = vadd.f32 %v9899, %v9995
  %v9997 = vpop.f32.mrf.mxu0
  %v9998 = vpop.f32.mrf.mxu0
  %v9999 = vadd.f32 %v9902, %v9998
  %v10000 = vpop.f32.mrf.mxu0
  %10001 = vmatprep.mubr.bf16.mxu0 0
  %10002 = vmatmul.mubr.bf16.gmra.mxu0 %v9943
  %v10003 = vpop.f32.mrf.mxu0
  %v10004 = vadd.f32 %v9907, %v10003
  %v10005 = vpop.f32.mrf.mxu0
  %v10006 = vpop.f32.mrf.mxu0
  %v10007 = vadd.f32 %v9910, %v10006
  %v10008 = vpop.f32.mrf.mxu0
  %10009 = vdwg.mxu0
  %s10010 = scalar_lea.vmem %s13, 32
  %v10011 = vld [vmem:[%s10010] sm:$0xf]
  %v10012 = vld [vmem:[%s10010 + $0x4] sm:$0xf]
  %v10013 = vld [vmem:[%s10010 + $0x8] sm:$0xf]
  %v10014 = vld [vmem:[%s10010 + $0xc] sm:$0xf]
  %v10019 = vunpack.c.l.b16 %v10011
  %v10020 = vunpack.c.l.b16 %v10012
  %v10021 = vunpack.c.l.b16 %v10013
  %v10022 = vunpack.c.l.b16 %v10014
  %v10023 = vpack.c.b16 %v10020, %v10019
  %v10024 = vpack.c.b16 %v10022, %v10021
  %10027 = vmatprep.subr.bf16.mxu0 0
  %10028 = vmatpush1.bf16.msra.mxu0 0
  %10029 = vmatprep.subr.bf16.mxu0 0
  %10030 = vmatpush1.bf16.msra.mxu0 0
  %10031 = vmatprep.subr.bf16.mxu0 0
  %10032 = vmatpush1.bf16.msra.mxu0 0
  %10033 = vmatprep.subr.bf16.mxu0 0
  %10034 = vmatpush1.bf16.msra.mxu0 0
  %10035 = vmatprep.subr.bf16.mxu0 0
  %10036 = vmatpush1.bf16.msra.mxu0 0
  %10037 = vmatprep.subr.bf16.mxu0 0
  %10038 = vmatpush1.bf16.msra.mxu0 0
  %10039 = vmatprep.subr.bf16.mxu0 0
  %10040 = vmatpush1.bf16.msra.mxu0 %v10024
  %10041 = vmatprep.subr.bf16.mxu0 0
  %10042 = vmatpush1.bf16.msra.mxu0 %v10023
  %10043 = vmatprep.subr.bf16.mxu0 0
  %10044 = vmatpush2.bf16.msra.mxu0 0
  %10045 = vmatprep.subr.bf16.mxu0 0
  %10046 = vmatpush2.bf16.msra.mxu0 0
  %10047 = vmatprep.subr.bf16.mxu0 0
  %10048 = vmatpush2.bf16.msra.mxu0 0
  %10049 = vmatprep.subr.bf16.mxu0 0
  %10050 = vmatpush2.bf16.msra.mxu0 0
  %10051 = vmatprep.subr.bf16.mxu0 0
  %10052 = vmatpush2.bf16.msra.mxu0 0
  %10053 = vmatprep.subr.bf16.mxu0 0
  %10054 = vmatpush2.bf16.msra.mxu0 0
  %10055 = vmatprep.subr.bf16.mxu0 0
  %10056 = vmatpush2.bf16.msra.mxu0 0
  %10057 = vmatprep.subr.bf16.mxu0 0
  %10058 = vmatpush2.bf16.msra.mxu0 0
  %10059 = vmatprep.mubr.bf16.mxu0 0
  %10060 = vmatmul.mubr.bf16.gmra.mxu0 %v9675
  %v10061 = vpop.f32.mrf.mxu0
  %v10062 = vadd.f32 0.0, %v10061
  %v10063 = vpop.f32.mrf.mxu0
  %v10064 = vpop.f32.mrf.mxu0
  %v10065 = vadd.f32 0.0, %v10064
  %v10066 = vpop.f32.mrf.mxu0
  %10067 = vmatprep.mubr.bf16.mxu0 0
  %10068 = vmatmul.mubr.bf16.gmra.mxu0 %v9678
  %v10069 = vpop.f32.mrf.mxu0
  %v10070 = vadd.f32 0.0, %v10069
  %v10071 = vpop.f32.mrf.mxu0
  %v10072 = vpop.f32.mrf.mxu0
  %v10073 = vadd.f32 0.0, %v10072
  %v10074 = vpop.f32.mrf.mxu0
  %10075 = vdwg.mxu0
  %v10076 = vpack.c.bf16 %v10065, %v10062
  %v10077 = vpack.c.bf16 %v10073, %v10070
  %s10078 = scalar_lea.vmem %s12, 64
  %v10079 = vld [vmem:[%s10078] sm:$0xf]
  %v10080 = vld [vmem:[%s10078 + $0x4] sm:$0xf]
  %v10081 = vld [vmem:[%s10078 + $0x8] sm:$0xf]
  %v10082 = vld [vmem:[%s10078 + $0xc] sm:$0xf]
  %v10083 = vld [vmem:[%s10078 + $0x10] sm:$0xf]
  %v10084 = vld [vmem:[%s10078 + $0x14] sm:$0xf]
  %v10085 = vld [vmem:[%s10078 + $0x18] sm:$0xf]
  %v10086 = vld [vmem:[%s10078 + $0x1c] sm:$0xf]
  %v10095 = vunpack.c.l.b16 %v10079
  %v10096 = vunpack.c.l.b16 %v10080
  %v10097 = vunpack.c.l.b16 %v10081
  %v10098 = vunpack.c.l.b16 %v10082
  %v10099 = vunpack.c.l.b16 %v10083
  %v10100 = vunpack.c.l.b16 %v10084
  %v10101 = vunpack.c.l.b16 %v10085
  %v10102 = vunpack.c.l.b16 %v10086
  %v10103 = vpack.c.b16 %v10096, %v10095
  %v10104 = vpack.c.b16 %v10098, %v10097
  %v10105 = vpack.c.b16 %v10100, %v10099
  %v10106 = vpack.c.b16 %v10102, %v10101
  %v10108 = vsel %vm9543, %v10103, 0
  %v10111 = vsel %vm9543, %v10104, 0
  %v10114 = vsel %vm9543, %v10105, 0
  %v10117 = vsel %vm9543, %v10106, 0
  %10119 = vmatprep.subr.bf16.mxu0 0
  %10120 = vmatpush1.bf16.msra.mxu0 0
  %10121 = vmatprep.subr.bf16.mxu0 0
  %10122 = vmatpush1.bf16.msra.mxu0 0
  %10123 = vmatprep.subr.bf16.mxu0 0
  %10124 = vmatpush1.bf16.msra.mxu0 0
  %10125 = vmatprep.subr.bf16.mxu0 0
  %10126 = vmatpush1.bf16.msra.mxu0 0
  %10127 = vmatprep.subr.bf16.mxu0 0
  %10128 = vmatpush1.bf16.msra.mxu0 0
  %10129 = vmatprep.subr.bf16.mxu0 0
  %10130 = vmatpush1.bf16.msra.mxu0 0
  %10131 = vmatprep.subr.bf16.mxu0 0
  %10132 = vmatpush1.bf16.msra.mxu0 %v10077
  %10133 = vmatprep.subr.bf16.mxu0 0
  %10134 = vmatpush1.bf16.msra.mxu0 %v10076
  %10135 = vmatprep.subr.bf16.mxu0 0
  %10136 = vmatpush2.bf16.msra.mxu0 0
  %10137 = vmatprep.subr.bf16.mxu0 0
  %10138 = vmatpush2.bf16.msra.mxu0 0
  %10139 = vmatprep.subr.bf16.mxu0 0
  %10140 = vmatpush2.bf16.msra.mxu0 0
  %10141 = vmatprep.subr.bf16.mxu0 0
  %10142 = vmatpush2.bf16.msra.mxu0 0
  %10143 = vmatprep.subr.bf16.mxu0 0
  %10144 = vmatpush2.bf16.msra.mxu0 0
  %10145 = vmatprep.subr.bf16.mxu0 0
  %10146 = vmatpush2.bf16.msra.mxu0 0
  %10147 = vmatprep.subr.bf16.mxu0 0
  %10148 = vmatpush2.bf16.msra.mxu0 0
  %10149 = vmatprep.subr.bf16.mxu0 0
  %10150 = vmatpush2.bf16.msra.mxu0 0
  %10151 = vmatprep.mubr.bf16.mxu0 0
  %10152 = vmatmul.mubr.bf16.gmra.mxu0 %v10108
  %v10153 = vpop.f32.mrf.mxu0
  %v10154 = vadd.f32 0.0, %v10153
  %v10155 = vpop.f32.mrf.mxu0
  %v10156 = vpop.f32.mrf.mxu0
  %v10157 = vadd.f32 0.0, %v10156
  %v10158 = vpop.f32.mrf.mxu0
  %10159 = vmatprep.mubr.bf16.mxu0 0
  %10160 = vmatmul.mubr.bf16.gmra.mxu0 %v10111
  %v10161 = vpop.f32.mrf.mxu0
  %v10162 = vadd.f32 0.0, %v10161
  %v10163 = vpop.f32.mrf.mxu0
  %v10164 = vpop.f32.mrf.mxu0
  %v10165 = vadd.f32 0.0, %v10164
  %v10166 = vpop.f32.mrf.mxu0
  %10167 = vmatprep.mubr.bf16.mxu0 0
  %10168 = vmatmul.mubr.bf16.gmra.mxu0 %v10114
  %v10169 = vpop.f32.mrf.mxu0
  %v10170 = vadd.f32 0.0, %v10169
  %v10171 = vpop.f32.mrf.mxu0
  %v10172 = vpop.f32.mrf.mxu0
  %v10173 = vadd.f32 0.0, %v10172
  %v10174 = vpop.f32.mrf.mxu0
  %10175 = vmatprep.mubr.bf16.mxu0 0
  %10176 = vmatmul.mubr.bf16.gmra.mxu0 %v10117
  %v10177 = vpop.f32.mrf.mxu0
  %v10178 = vadd.f32 0.0, %v10177
  %v10179 = vpop.f32.mrf.mxu0
  %v10180 = vpop.f32.mrf.mxu0
  %v10181 = vadd.f32 0.0, %v10180
  %v10182 = vpop.f32.mrf.mxu0
  %10183 = vdwg.mxu0
  %v10184 = vadd.f32 %v9980, %v10154
  %v10185 = vadd.f32 %v9983, %v10157
  %v10186 = vadd.f32 %v9988, %v10162
  %v10187 = vadd.f32 %v9991, %v10165
  %v10188 = vadd.f32 %v9996, %v10170
  %v10189 = vadd.f32 %v9999, %v10173
  %v10190 = vadd.f32 %v10004, %v10178
  %v10191 = vadd.f32 %v10007, %v10181
  %s10192 = scalar_lea.vmem %s13, 48
  %v10193 = vld [vmem:[%s10192] sm:$0xf]
  %v10194 = vld [vmem:[%s10192 + $0x4] sm:$0xf]
  %v10195 = vld [vmem:[%s10192 + $0x8] sm:$0xf]
  %v10196 = vld [vmem:[%s10192 + $0xc] sm:$0xf]
  %v10201 = vunpack.c.l.b16 %v10193
  %v10202 = vunpack.c.l.b16 %v10194
  %v10203 = vunpack.c.l.b16 %v10195
  %v10204 = vunpack.c.l.b16 %v10196
  %v10205 = vpack.c.b16 %v10202, %v10201
  %v10206 = vpack.c.b16 %v10204, %v10203
  %10209 = vmatprep.subr.bf16.mxu0 0
  %10210 = vmatpush1.bf16.msra.mxu0 0
  %10211 = vmatprep.subr.bf16.mxu0 0
  %10212 = vmatpush1.bf16.msra.mxu0 0
  %10213 = vmatprep.subr.bf16.mxu0 0
  %10214 = vmatpush1.bf16.msra.mxu0 0
  %10215 = vmatprep.subr.bf16.mxu0 0
  %10216 = vmatpush1.bf16.msra.mxu0 0
  %10217 = vmatprep.subr.bf16.mxu0 0
  %10218 = vmatpush1.bf16.msra.mxu0 0
  %10219 = vmatprep.subr.bf16.mxu0 0
  %10220 = vmatpush1.bf16.msra.mxu0 0
  %10221 = vmatprep.subr.bf16.mxu0 0
  %10222 = vmatpush1.bf16.msra.mxu0 %v10206
  %10223 = vmatprep.subr.bf16.mxu0 0
  %10224 = vmatpush1.bf16.msra.mxu0 %v10205
  %10225 = vmatprep.subr.bf16.mxu0 0
  %10226 = vmatpush2.bf16.msra.mxu0 0
  %10227 = vmatprep.subr.bf16.mxu0 0
  %10228 = vmatpush2.bf16.msra.mxu0 0
  %10229 = vmatprep.subr.bf16.mxu0 0
  %10230 = vmatpush2.bf16.msra.mxu0 0
  %10231 = vmatprep.subr.bf16.mxu0 0
  %10232 = vmatpush2.bf16.msra.mxu0 0
  %10233 = vmatprep.subr.bf16.mxu0 0
  %10234 = vmatpush2.bf16.msra.mxu0 0
  %10235 = vmatprep.subr.bf16.mxu0 0
  %10236 = vmatpush2.bf16.msra.mxu0 0
  %10237 = vmatprep.subr.bf16.mxu0 0
  %10238 = vmatpush2.bf16.msra.mxu0 0
  %10239 = vmatprep.subr.bf16.mxu0 0
  %10240 = vmatpush2.bf16.msra.mxu0 0
  %10241 = vmatprep.mubr.bf16.mxu0 0
  %10242 = vmatmul.mubr.bf16.gmra.mxu0 %v9675
  %v10243 = vpop.f32.mrf.mxu0
  %v10244 = vadd.f32 0.0, %v10243
  %v10245 = vpop.f32.mrf.mxu0
  %v10246 = vpop.f32.mrf.mxu0
  %v10247 = vadd.f32 0.0, %v10246
  %v10248 = vpop.f32.mrf.mxu0
  %10249 = vmatprep.mubr.bf16.mxu0 0
  %10250 = vmatmul.mubr.bf16.gmra.mxu0 %v9678
  %v10251 = vpop.f32.mrf.mxu0
  %v10252 = vadd.f32 0.0, %v10251
  %v10253 = vpop.f32.mrf.mxu0
  %v10254 = vpop.f32.mrf.mxu0
  %v10255 = vadd.f32 0.0, %v10254
  %v10256 = vpop.f32.mrf.mxu0
  %10257 = vdwg.mxu0
  %v10258 = vpack.c.bf16 %v10247, %v10244
  %v10259 = vpack.c.bf16 %v10255, %v10252
  %s10260 = scalar_lea.vmem %s12, 96
  %v10261 = vld [vmem:[%s10260] sm:$0xf]
  %v10262 = vld [vmem:[%s10260 + $0x4] sm:$0xf]
  %v10263 = vld [vmem:[%s10260 + $0x8] sm:$0xf]
  %v10264 = vld [vmem:[%s10260 + $0xc] sm:$0xf]
  %v10265 = vld [vmem:[%s10260 + $0x10] sm:$0xf]
  %v10266 = vld [vmem:[%s10260 + $0x14] sm:$0xf]
  %v10267 = vld [vmem:[%s10260 + $0x18] sm:$0xf]
  %v10268 = vld [vmem:[%s10260 + $0x1c] sm:$0xf]
  %v10277 = vunpack.c.l.b16 %v10261
  %v10278 = vunpack.c.l.b16 %v10262
  %v10279 = vunpack.c.l.b16 %v10263
  %v10280 = vunpack.c.l.b16 %v10264
  %v10281 = vunpack.c.l.b16 %v10265
  %v10282 = vunpack.c.l.b16 %v10266
  %v10283 = vunpack.c.l.b16 %v10267
  %v10284 = vunpack.c.l.b16 %v10268
  %v10285 = vpack.c.b16 %v10278, %v10277
  %v10286 = vpack.c.b16 %v10280, %v10279
  %v10287 = vpack.c.b16 %v10282, %v10281
  %v10288 = vpack.c.b16 %v10284, %v10283
  %v10290 = vsel %vm9543, %v10285, 0
  %v10293 = vsel %vm9543, %v10286, 0
  %v10296 = vsel %vm9543, %v10287, 0
  %v10299 = vsel %vm9543, %v10288, 0
  %10301 = vmatprep.subr.bf16.mxu0 0
  %10302 = vmatpush1.bf16.msra.mxu0 0
  %10303 = vmatprep.subr.bf16.mxu0 0
  %10304 = vmatpush1.bf16.msra.mxu0 0
  %10305 = vmatprep.subr.bf16.mxu0 0
  %10306 = vmatpush1.bf16.msra.mxu0 0
  %10307 = vmatprep.subr.bf16.mxu0 0
  %10308 = vmatpush1.bf16.msra.mxu0 0
  %10309 = vmatprep.subr.bf16.mxu0 0
  %10310 = vmatpush1.bf16.msra.mxu0 0
  %10311 = vmatprep.subr.bf16.mxu0 0
  %10312 = vmatpush1.bf16.msra.mxu0 0
  %10313 = vmatprep.subr.bf16.mxu0 0
  %10314 = vmatpush1.bf16.msra.mxu0 %v10259
  %10315 = vmatprep.subr.bf16.mxu0 0
  %10316 = vmatpush1.bf16.msra.mxu0 %v10258
  %10317 = vmatprep.subr.bf16.mxu0 0
  %10318 = vmatpush2.bf16.msra.mxu0 0
  %10319 = vmatprep.subr.bf16.mxu0 0
  %10320 = vmatpush2.bf16.msra.mxu0 0
  %10321 = vmatprep.subr.bf16.mxu0 0
  %10322 = vmatpush2.bf16.msra.mxu0 0
  %10323 = vmatprep.subr.bf16.mxu0 0
  %10324 = vmatpush2.bf16.msra.mxu0 0
  %10325 = vmatprep.subr.bf16.mxu0 0
  %10326 = vmatpush2.bf16.msra.mxu0 0
  %10327 = vmatprep.subr.bf16.mxu0 0
  %10328 = vmatpush2.bf16.msra.mxu0 0
  %10329 = vmatprep.subr.bf16.mxu0 0
  %10330 = vmatpush2.bf16.msra.mxu0 0
  %10331 = vmatprep.subr.bf16.mxu0 0
  %10332 = vmatpush2.bf16.msra.mxu0 0
  %10333 = vmatprep.mubr.bf16.mxu0 0
  %10334 = vmatmul.mubr.bf16.gmra.mxu0 %v10290
  %v10335 = vpop.f32.mrf.mxu0
  %v10336 = vadd.f32 0.0, %v10335
  %v10337 = vpop.f32.mrf.mxu0
  %v10338 = vpop.f32.mrf.mxu0
  %v10339 = vadd.f32 0.0, %v10338
  %v10340 = vpop.f32.mrf.mxu0
  %10341 = vmatprep.mubr.bf16.mxu0 0
  %10342 = vmatmul.mubr.bf16.gmra.mxu0 %v10293
  %v10343 = vpop.f32.mrf.mxu0
  %v10344 = vadd.f32 0.0, %v10343
  %v10345 = vpop.f32.mrf.mxu0
  %v10346 = vpop.f32.mrf.mxu0
  %v10347 = vadd.f32 0.0, %v10346
  %v10348 = vpop.f32.mrf.mxu0
  %10349 = vmatprep.mubr.bf16.mxu0 0
  %10350 = vmatmul.mubr.bf16.gmra.mxu0 %v10296
  %v10351 = vpop.f32.mrf.mxu0
  %v10352 = vadd.f32 0.0, %v10351
  %v10353 = vpop.f32.mrf.mxu0
  %v10354 = vpop.f32.mrf.mxu0
  %v10355 = vadd.f32 0.0, %v10354
  %v10356 = vpop.f32.mrf.mxu0
  %10357 = vmatprep.mubr.bf16.mxu0 0
  %10358 = vmatmul.mubr.bf16.gmra.mxu0 %v10299
  %v10359 = vpop.f32.mrf.mxu0
  %v10360 = vadd.f32 0.0, %v10359
  %v10361 = vpop.f32.mrf.mxu0
  %v10362 = vpop.f32.mrf.mxu0
  %v10363 = vadd.f32 0.0, %v10362
  %v10364 = vpop.f32.mrf.mxu0
  %10365 = vdwg.mxu0
  %v10366 = vadd.f32 %v10184, %v10336
  %v10367 = vadd.f32 %v10185, %v10339
  %v10368 = vadd.f32 %v10186, %v10344
  %v10369 = vadd.f32 %v10187, %v10347
  %v10370 = vadd.f32 %v10188, %v10352
  %v10371 = vadd.f32 %v10189, %v10355
  %v10372 = vadd.f32 %v10190, %v10360
  %v10373 = vadd.f32 %v10191, %v10363
  %s10374 = scalar_lea.vmem %s13, 64
  %v10375 = vld [vmem:[%s10374] sm:$0xf]
  %v10376 = vld [vmem:[%s10374 + $0x4] sm:$0xf]
  %v10377 = vld [vmem:[%s10374 + $0x8] sm:$0xf]
  %v10378 = vld [vmem:[%s10374 + $0xc] sm:$0xf]
  %v10383 = vunpack.c.l.b16 %v10375
  %v10384 = vunpack.c.l.b16 %v10376
  %v10385 = vunpack.c.l.b16 %v10377
  %v10386 = vunpack.c.l.b16 %v10378
  %v10387 = vpack.c.b16 %v10384, %v10383
  %v10388 = vpack.c.b16 %v10386, %v10385
  %10391 = vmatprep.subr.bf16.mxu0 0
  %10392 = vmatpush1.bf16.msra.mxu0 0
  %10393 = vmatprep.subr.bf16.mxu0 0
  %10394 = vmatpush1.bf16.msra.mxu0 0
  %10395 = vmatprep.subr.bf16.mxu0 0
  %10396 = vmatpush1.bf16.msra.mxu0 0
  %10397 = vmatprep.subr.bf16.mxu0 0
  %10398 = vmatpush1.bf16.msra.mxu0 0
  %10399 = vmatprep.subr.bf16.mxu0 0
  %10400 = vmatpush1.bf16.msra.mxu0 0
  %10401 = vmatprep.subr.bf16.mxu0 0
  %10402 = vmatpush1.bf16.msra.mxu0 0
  %10403 = vmatprep.subr.bf16.mxu0 0
  %10404 = vmatpush1.bf16.msra.mxu0 %v10388
  %10405 = vmatprep.subr.bf16.mxu0 0
  %10406 = vmatpush1.bf16.msra.mxu0 %v10387
  %10407 = vmatprep.subr.bf16.mxu0 0
  %10408 = vmatpush2.bf16.msra.mxu0 0
  %10409 = vmatprep.subr.bf16.mxu0 0
  %10410 = vmatpush2.bf16.msra.mxu0 0
  %10411 = vmatprep.subr.bf16.mxu0 0
  %10412 = vmatpush2.bf16.msra.mxu0 0
  %10413 = vmatprep.subr.bf16.mxu0 0
  %10414 = vmatpush2.bf16.msra.mxu0 0
  %10415 = vmatprep.subr.bf16.mxu0 0
  %10416 = vmatpush2.bf16.msra.mxu0 0
  %10417 = vmatprep.subr.bf16.mxu0 0
  %10418 = vmatpush2.bf16.msra.mxu0 0
  %10419 = vmatprep.subr.bf16.mxu0 0
  %10420 = vmatpush2.bf16.msra.mxu0 0
  %10421 = vmatprep.subr.bf16.mxu0 0
  %10422 = vmatpush2.bf16.msra.mxu0 0
  %10423 = vmatprep.mubr.bf16.mxu0 0
  %10424 = vmatmul.mubr.bf16.gmra.mxu0 %v9675
  %v10425 = vpop.f32.mrf.mxu0
  %v10426 = vadd.f32 0.0, %v10425
  %v10427 = vpop.f32.mrf.mxu0
  %v10428 = vpop.f32.mrf.mxu0
  %v10429 = vadd.f32 0.0, %v10428
  %v10430 = vpop.f32.mrf.mxu0
  %10431 = vmatprep.mubr.bf16.mxu0 0
  %10432 = vmatmul.mubr.bf16.gmra.mxu0 %v9678
  %v10433 = vpop.f32.mrf.mxu0
  %v10434 = vadd.f32 0.0, %v10433
  %v10435 = vpop.f32.mrf.mxu0
  %v10436 = vpop.f32.mrf.mxu0
  %v10437 = vadd.f32 0.0, %v10436
  %v10438 = vpop.f32.mrf.mxu0
  %10439 = vdwg.mxu0
  %v10440 = vpack.c.bf16 %v10429, %v10426
  %v10441 = vpack.c.bf16 %v10437, %v10434
  %s10442 = scalar_lea.vmem %s12, 128
  %v10443 = vld [vmem:[%s10442] sm:$0xf]
  %v10444 = vld [vmem:[%s10442 + $0x4] sm:$0xf]
  %v10445 = vld [vmem:[%s10442 + $0x8] sm:$0xf]
  %v10446 = vld [vmem:[%s10442 + $0xc] sm:$0xf]
  %v10447 = vld [vmem:[%s10442 + $0x10] sm:$0xf]
  %v10448 = vld [vmem:[%s10442 + $0x14] sm:$0xf]
  %v10449 = vld [vmem:[%s10442 + $0x18] sm:$0xf]
  %v10450 = vld [vmem:[%s10442 + $0x1c] sm:$0xf]
  %v10459 = vunpack.c.l.b16 %v10443
  %v10460 = vunpack.c.l.b16 %v10444
  %v10461 = vunpack.c.l.b16 %v10445
  %v10462 = vunpack.c.l.b16 %v10446
  %v10463 = vunpack.c.l.b16 %v10447
  %v10464 = vunpack.c.l.b16 %v10448
  %v10465 = vunpack.c.l.b16 %v10449
  %v10466 = vunpack.c.l.b16 %v10450
  %v10467 = vpack.c.b16 %v10460, %v10459
  %v10468 = vpack.c.b16 %v10462, %v10461
  %v10469 = vpack.c.b16 %v10464, %v10463
  %v10470 = vpack.c.b16 %v10466, %v10465
  %v10472 = vsel %vm9543, %v10467, 0
  %v10475 = vsel %vm9543, %v10468, 0
  %v10478 = vsel %vm9543, %v10469, 0
  %v10481 = vsel %vm9543, %v10470, 0
  %10483 = vmatprep.subr.bf16.mxu0 0
  %10484 = vmatpush1.bf16.msra.mxu0 0
  %10485 = vmatprep.subr.bf16.mxu0 0
  %10486 = vmatpush1.bf16.msra.mxu0 0
  %10487 = vmatprep.subr.bf16.mxu0 0
  %10488 = vmatpush1.bf16.msra.mxu0 0
  %10489 = vmatprep.subr.bf16.mxu0 0
  %10490 = vmatpush1.bf16.msra.mxu0 0
  %10491 = vmatprep.subr.bf16.mxu0 0
  %10492 = vmatpush1.bf16.msra.mxu0 0
  %10493 = vmatprep.subr.bf16.mxu0 0
  %10494 = vmatpush1.bf16.msra.mxu0 0
  %10495 = vmatprep.subr.bf16.mxu0 0
  %10496 = vmatpush1.bf16.msra.mxu0 %v10441
  %10497 = vmatprep.subr.bf16.mxu0 0
  %10498 = vmatpush1.bf16.msra.mxu0 %v10440
  %10499 = vmatprep.subr.bf16.mxu0 0
  %10500 = vmatpush2.bf16.msra.mxu0 0
  %10501 = vmatprep.subr.bf16.mxu0 0
  %10502 = vmatpush2.bf16.msra.mxu0 0
  %10503 = vmatprep.subr.bf16.mxu0 0
  %10504 = vmatpush2.bf16.msra.mxu0 0
  %10505 = vmatprep.subr.bf16.mxu0 0
  %10506 = vmatpush2.bf16.msra.mxu0 0
  %10507 = vmatprep.subr.bf16.mxu0 0
  %10508 = vmatpush2.bf16.msra.mxu0 0
  %10509 = vmatprep.subr.bf16.mxu0 0
  %10510 = vmatpush2.bf16.msra.mxu0 0
  %10511 = vmatprep.subr.bf16.mxu0 0
  %10512 = vmatpush2.bf16.msra.mxu0 0
  %10513 = vmatprep.subr.bf16.mxu0 0
  %10514 = vmatpush2.bf16.msra.mxu0 0
  %10515 = vmatprep.mubr.bf16.mxu0 0
  %10516 = vmatmul.mubr.bf16.gmra.mxu0 %v10472
  %v10517 = vpop.f32.mrf.mxu0
  %v10518 = vadd.f32 0.0, %v10517
  %v10519 = vpop.f32.mrf.mxu0
  %v10520 = vpop.f32.mrf.mxu0
  %v10521 = vadd.f32 0.0, %v10520
  %v10522 = vpop.f32.mrf.mxu0
  %10523 = vmatprep.mubr.bf16.mxu0 0
  %10524 = vmatmul.mubr.bf16.gmra.mxu0 %v10475
  %v10525 = vpop.f32.mrf.mxu0
  %v10526 = vadd.f32 0.0, %v10525
  %v10527 = vpop.f32.mrf.mxu0
  %v10528 = vpop.f32.mrf.mxu0
  %v10529 = vadd.f32 0.0, %v10528
  %v10530 = vpop.f32.mrf.mxu0
  %10531 = vmatprep.mubr.bf16.mxu0 0
  %10532 = vmatmul.mubr.bf16.gmra.mxu0 %v10478
  %v10533 = vpop.f32.mrf.mxu0
  %v10534 = vadd.f32 0.0, %v10533
  %v10535 = vpop.f32.mrf.mxu0
  %v10536 = vpop.f32.mrf.mxu0
  %v10537 = vadd.f32 0.0, %v10536
  %v10538 = vpop.f32.mrf.mxu0
  %10539 = vmatprep.mubr.bf16.mxu0 0
  %10540 = vmatmul.mubr.bf16.gmra.mxu0 %v10481
  %v10541 = vpop.f32.mrf.mxu0
  %v10542 = vadd.f32 0.0, %v10541
  %v10543 = vpop.f32.mrf.mxu0
  %v10544 = vpop.f32.mrf.mxu0
  %v10545 = vadd.f32 0.0, %v10544
  %v10546 = vpop.f32.mrf.mxu0
  %10547 = vdwg.mxu0
  %v10548 = vadd.f32 %v10366, %v10518
  %v10549 = vadd.f32 %v10367, %v10521
  %v10550 = vadd.f32 %v10368, %v10526
  %v10551 = vadd.f32 %v10369, %v10529
  %v10552 = vadd.f32 %v10370, %v10534
  %v10553 = vadd.f32 %v10371, %v10537
  %v10554 = vadd.f32 %v10372, %v10542
  %v10555 = vadd.f32 %v10373, %v10545
  %s10556 = scalar_lea.vmem %s13, 80
  %v10557 = vld [vmem:[%s10556] sm:$0xf]
  %v10558 = vld [vmem:[%s10556 + $0x4] sm:$0xf]
  %v10559 = vld [vmem:[%s10556 + $0x8] sm:$0xf]
  %v10560 = vld [vmem:[%s10556 + $0xc] sm:$0xf]
  %v10565 = vunpack.c.l.b16 %v10557
  %v10566 = vunpack.c.l.b16 %v10558
  %v10567 = vunpack.c.l.b16 %v10559
  %v10568 = vunpack.c.l.b16 %v10560
  %v10569 = vpack.c.b16 %v10566, %v10565
  %v10570 = vpack.c.b16 %v10568, %v10567
  %10573 = vmatprep.subr.bf16.mxu0 0
  %10574 = vmatpush1.bf16.msra.mxu0 0
  %10575 = vmatprep.subr.bf16.mxu0 0
  %10576 = vmatpush1.bf16.msra.mxu0 0
  %10577 = vmatprep.subr.bf16.mxu0 0
  %10578 = vmatpush1.bf16.msra.mxu0 0
  %10579 = vmatprep.subr.bf16.mxu0 0
  %10580 = vmatpush1.bf16.msra.mxu0 0
  %10581 = vmatprep.subr.bf16.mxu0 0
  %10582 = vmatpush1.bf16.msra.mxu0 0
  %10583 = vmatprep.subr.bf16.mxu0 0
  %10584 = vmatpush1.bf16.msra.mxu0 0
  %10585 = vmatprep.subr.bf16.mxu0 0
  %10586 = vmatpush1.bf16.msra.mxu0 %v10570
  %10587 = vmatprep.subr.bf16.mxu0 0
  %10588 = vmatpush1.bf16.msra.mxu0 %v10569
  %10589 = vmatprep.subr.bf16.mxu0 0
  %10590 = vmatpush2.bf16.msra.mxu0 0
  %10591 = vmatprep.subr.bf16.mxu0 0
  %10592 = vmatpush2.bf16.msra.mxu0 0
  %10593 = vmatprep.subr.bf16.mxu0 0
  %10594 = vmatpush2.bf16.msra.mxu0 0
  %10595 = vmatprep.subr.bf16.mxu0 0
  %10596 = vmatpush2.bf16.msra.mxu0 0
  %10597 = vmatprep.subr.bf16.mxu0 0
  %10598 = vmatpush2.bf16.msra.mxu0 0
  %10599 = vmatprep.subr.bf16.mxu0 0
  %10600 = vmatpush2.bf16.msra.mxu0 0
  %10601 = vmatprep.subr.bf16.mxu0 0
  %10602 = vmatpush2.bf16.msra.mxu0 0
  %10603 = vmatprep.subr.bf16.mxu0 0
  %10604 = vmatpush2.bf16.msra.mxu0 0
  %10605 = vmatprep.mubr.bf16.mxu0 0
  %10606 = vmatmul.mubr.bf16.gmra.mxu0 %v9675
  %v10607 = vpop.f32.mrf.mxu0
  %v10608 = vadd.f32 0.0, %v10607
  %v10609 = vpop.f32.mrf.mxu0
  %v10610 = vpop.f32.mrf.mxu0
  %v10611 = vadd.f32 0.0, %v10610
  %v10612 = vpop.f32.mrf.mxu0
  %10613 = vmatprep.mubr.bf16.mxu0 0
  %10614 = vmatmul.mubr.bf16.gmra.mxu0 %v9678
  %v10615 = vpop.f32.mrf.mxu0
  %v10616 = vadd.f32 0.0, %v10615
  %v10617 = vpop.f32.mrf.mxu0
  %v10618 = vpop.f32.mrf.mxu0
  %v10619 = vadd.f32 0.0, %v10618
  %v10620 = vpop.f32.mrf.mxu0
  %10621 = vdwg.mxu0
  %v10622 = vpack.c.bf16 %v10611, %v10608
  %v10623 = vpack.c.bf16 %v10619, %v10616
  %s10624 = scalar_lea.vmem %s12, 160
  %v10625 = vld [vmem:[%s10624] sm:$0xf]
  %v10626 = vld [vmem:[%s10624 + $0x4] sm:$0xf]
  %v10627 = vld [vmem:[%s10624 + $0x8] sm:$0xf]
  %v10628 = vld [vmem:[%s10624 + $0xc] sm:$0xf]
  %v10629 = vld [vmem:[%s10624 + $0x10] sm:$0xf]
  %v10630 = vld [vmem:[%s10624 + $0x14] sm:$0xf]
  %v10631 = vld [vmem:[%s10624 + $0x18] sm:$0xf]
  %v10632 = vld [vmem:[%s10624 + $0x1c] sm:$0xf]
  %v10641 = vunpack.c.l.b16 %v10625
  %v10642 = vunpack.c.l.b16 %v10626
  %v10643 = vunpack.c.l.b16 %v10627
  %v10644 = vunpack.c.l.b16 %v10628
  %v10645 = vunpack.c.l.b16 %v10629
  %v10646 = vunpack.c.l.b16 %v10630
  %v10647 = vunpack.c.l.b16 %v10631
  %v10648 = vunpack.c.l.b16 %v10632
  %v10649 = vpack.c.b16 %v10642, %v10641
  %v10650 = vpack.c.b16 %v10644, %v10643
  %v10651 = vpack.c.b16 %v10646, %v10645
  %v10652 = vpack.c.b16 %v10648, %v10647
  %v10654 = vsel %vm9543, %v10649, 0
  %v10657 = vsel %vm9543, %v10650, 0
  %v10660 = vsel %vm9543, %v10651, 0
  %v10663 = vsel %vm9543, %v10652, 0
  %10665 = vmatprep.subr.bf16.mxu0 0
  %10666 = vmatpush1.bf16.msra.mxu0 0
  %10667 = vmatprep.subr.bf16.mxu0 0
  %10668 = vmatpush1.bf16.msra.mxu0 0
  %10669 = vmatprep.subr.bf16.mxu0 0
  %10670 = vmatpush1.bf16.msra.mxu0 0
  %10671 = vmatprep.subr.bf16.mxu0 0
  %10672 = vmatpush1.bf16.msra.mxu0 0
  %10673 = vmatprep.subr.bf16.mxu0 0
  %10674 = vmatpush1.bf16.msra.mxu0 0
  %10675 = vmatprep.subr.bf16.mxu0 0
  %10676 = vmatpush1.bf16.msra.mxu0 0
  %10677 = vmatprep.subr.bf16.mxu0 0
  %10678 = vmatpush1.bf16.msra.mxu0 %v10623
  %10679 = vmatprep.subr.bf16.mxu0 0
  %10680 = vmatpush1.bf16.msra.mxu0 %v10622
  %10681 = vmatprep.subr.bf16.mxu0 0
  %10682 = vmatpush2.bf16.msra.mxu0 0
  %10683 = vmatprep.subr.bf16.mxu0 0
  %10684 = vmatpush2.bf16.msra.mxu0 0
  %10685 = vmatprep.subr.bf16.mxu0 0
  %10686 = vmatpush2.bf16.msra.mxu0 0
  %10687 = vmatprep.subr.bf16.mxu0 0
  %10688 = vmatpush2.bf16.msra.mxu0 0
  %10689 = vmatprep.subr.bf16.mxu0 0
  %10690 = vmatpush2.bf16.msra.mxu0 0
  %10691 = vmatprep.subr.bf16.mxu0 0
  %10692 = vmatpush2.bf16.msra.mxu0 0
  %10693 = vmatprep.subr.bf16.mxu0 0
  %10694 = vmatpush2.bf16.msra.mxu0 0
  %10695 = vmatprep.subr.bf16.mxu0 0
  %10696 = vmatpush2.bf16.msra.mxu0 0
  %10697 = vmatprep.mubr.bf16.mxu0 0
  %10698 = vmatmul.mubr.bf16.gmra.mxu0 %v10654
  %v10699 = vpop.f32.mrf.mxu0
  %v10700 = vadd.f32 0.0, %v10699
  %v10701 = vpop.f32.mrf.mxu0
  %v10702 = vpop.f32.mrf.mxu0
  %v10703 = vadd.f32 0.0, %v10702
  %v10704 = vpop.f32.mrf.mxu0
  %10705 = vmatprep.mubr.bf16.mxu0 0
  %10706 = vmatmul.mubr.bf16.gmra.mxu0 %v10657
  %v10707 = vpop.f32.mrf.mxu0
  %v10708 = vadd.f32 0.0, %v10707
  %v10709 = vpop.f32.mrf.mxu0
  %v10710 = vpop.f32.mrf.mxu0
  %v10711 = vadd.f32 0.0, %v10710
  %v10712 = vpop.f32.mrf.mxu0
  %10713 = vmatprep.mubr.bf16.mxu0 0
  %10714 = vmatmul.mubr.bf16.gmra.mxu0 %v10660
  %v10715 = vpop.f32.mrf.mxu0
  %v10716 = vadd.f32 0.0, %v10715
  %v10717 = vpop.f32.mrf.mxu0
  %v10718 = vpop.f32.mrf.mxu0
  %v10719 = vadd.f32 0.0, %v10718
  %v10720 = vpop.f32.mrf.mxu0
  %10721 = vmatprep.mubr.bf16.mxu0 0
  %10722 = vmatmul.mubr.bf16.gmra.mxu0 %v10663
  %v10723 = vpop.f32.mrf.mxu0
  %v10724 = vadd.f32 0.0, %v10723
  %v10725 = vpop.f32.mrf.mxu0
  %v10726 = vpop.f32.mrf.mxu0
  %v10727 = vadd.f32 0.0, %v10726
  %v10728 = vpop.f32.mrf.mxu0
  %10729 = vdwg.mxu0
  %v10730 = vadd.f32 %v10548, %v10700
  %v10731 = vadd.f32 %v10549, %v10703
  %v10732 = vadd.f32 %v10550, %v10708
  %v10733 = vadd.f32 %v10551, %v10711
  %v10734 = vadd.f32 %v10552, %v10716
  %v10735 = vadd.f32 %v10553, %v10719
  %v10736 = vadd.f32 %v10554, %v10724
  %v10737 = vadd.f32 %v10555, %v10727
  %s10738 = scalar_lea.vmem %s13, 96
  %v10739 = vld [vmem:[%s10738] sm:$0xf]
  %v10740 = vld [vmem:[%s10738 + $0x4] sm:$0xf]
  %v10741 = vld [vmem:[%s10738 + $0x8] sm:$0xf]
  %v10742 = vld [vmem:[%s10738 + $0xc] sm:$0xf]
  %v10747 = vunpack.c.l.b16 %v10739
  %v10748 = vunpack.c.l.b16 %v10740
  %v10749 = vunpack.c.l.b16 %v10741
  %v10750 = vunpack.c.l.b16 %v10742
  %v10751 = vpack.c.b16 %v10748, %v10747
  %v10752 = vpack.c.b16 %v10750, %v10749
  %10755 = vmatprep.subr.bf16.mxu0 0
  %10756 = vmatpush1.bf16.msra.mxu0 0
  %10757 = vmatprep.subr.bf16.mxu0 0
  %10758 = vmatpush1.bf16.msra.mxu0 0
  %10759 = vmatprep.subr.bf16.mxu0 0
  %10760 = vmatpush1.bf16.msra.mxu0 0
  %10761 = vmatprep.subr.bf16.mxu0 0
  %10762 = vmatpush1.bf16.msra.mxu0 0
  %10763 = vmatprep.subr.bf16.mxu0 0
  %10764 = vmatpush1.bf16.msra.mxu0 0
  %10765 = vmatprep.subr.bf16.mxu0 0
  %10766 = vmatpush1.bf16.msra.mxu0 0
  %10767 = vmatprep.subr.bf16.mxu0 0
  %10768 = vmatpush1.bf16.msra.mxu0 %v10752
  %10769 = vmatprep.subr.bf16.mxu0 0
  %10770 = vmatpush1.bf16.msra.mxu0 %v10751
  %10771 = vmatprep.subr.bf16.mxu0 0
  %10772 = vmatpush2.bf16.msra.mxu0 0
  %10773 = vmatprep.subr.bf16.mxu0 0
  %10774 = vmatpush2.bf16.msra.mxu0 0
  %10775 = vmatprep.subr.bf16.mxu0 0
  %10776 = vmatpush2.bf16.msra.mxu0 0
  %10777 = vmatprep.subr.bf16.mxu0 0
  %10778 = vmatpush2.bf16.msra.mxu0 0
  %10779 = vmatprep.subr.bf16.mxu0 0
  %10780 = vmatpush2.bf16.msra.mxu0 0
  %10781 = vmatprep.subr.bf16.mxu0 0
  %10782 = vmatpush2.bf16.msra.mxu0 0
  %10783 = vmatprep.subr.bf16.mxu0 0
  %10784 = vmatpush2.bf16.msra.mxu0 0
  %10785 = vmatprep.subr.bf16.mxu0 0
  %10786 = vmatpush2.bf16.msra.mxu0 0
  %10787 = vmatprep.mubr.bf16.mxu0 0
  %10788 = vmatmul.mubr.bf16.gmra.mxu0 %v9675
  %v10789 = vpop.f32.mrf.mxu0
  %v10790 = vadd.f32 0.0, %v10789
  %v10791 = vpop.f32.mrf.mxu0
  %v10792 = vpop.f32.mrf.mxu0
  %v10793 = vadd.f32 0.0, %v10792
  %v10794 = vpop.f32.mrf.mxu0
  %10795 = vmatprep.mubr.bf16.mxu0 0
  %10796 = vmatmul.mubr.bf16.gmra.mxu0 %v9678
  %v10797 = vpop.f32.mrf.mxu0
  %v10798 = vadd.f32 0.0, %v10797
  %v10799 = vpop.f32.mrf.mxu0
  %v10800 = vpop.f32.mrf.mxu0
  %v10801 = vadd.f32 0.0, %v10800
  %v10802 = vpop.f32.mrf.mxu0
  %10803 = vdwg.mxu0
  %v10804 = vpack.c.bf16 %v10793, %v10790
  %v10805 = vpack.c.bf16 %v10801, %v10798
  %s10806 = scalar_lea.vmem %s12, 192
  %v10807 = vld [vmem:[%s10806] sm:$0xf]
  %v10808 = vld [vmem:[%s10806 + $0x4] sm:$0xf]
  %v10809 = vld [vmem:[%s10806 + $0x8] sm:$0xf]
  %v10810 = vld [vmem:[%s10806 + $0xc] sm:$0xf]
  %v10811 = vld [vmem:[%s10806 + $0x10] sm:$0xf]
  %v10812 = vld [vmem:[%s10806 + $0x14] sm:$0xf]
  %v10813 = vld [vmem:[%s10806 + $0x18] sm:$0xf]
  %v10814 = vld [vmem:[%s10806 + $0x1c] sm:$0xf]
  %v10823 = vunpack.c.l.b16 %v10807
  %v10824 = vunpack.c.l.b16 %v10808
  %v10825 = vunpack.c.l.b16 %v10809
  %v10826 = vunpack.c.l.b16 %v10810
  %v10827 = vunpack.c.l.b16 %v10811
  %v10828 = vunpack.c.l.b16 %v10812
  %v10829 = vunpack.c.l.b16 %v10813
  %v10830 = vunpack.c.l.b16 %v10814
  %v10831 = vpack.c.b16 %v10824, %v10823
  %v10832 = vpack.c.b16 %v10826, %v10825
  %v10833 = vpack.c.b16 %v10828, %v10827
  %v10834 = vpack.c.b16 %v10830, %v10829
  %v10836 = vsel %vm9543, %v10831, 0
  %v10839 = vsel %vm9543, %v10832, 0
  %v10842 = vsel %vm9543, %v10833, 0
  %v10845 = vsel %vm9543, %v10834, 0
  %10847 = vmatprep.subr.bf16.mxu0 0
  %10848 = vmatpush1.bf16.msra.mxu0 0
  %10849 = vmatprep.subr.bf16.mxu0 0
  %10850 = vmatpush1.bf16.msra.mxu0 0
  %10851 = vmatprep.subr.bf16.mxu0 0
  %10852 = vmatpush1.bf16.msra.mxu0 0
  %10853 = vmatprep.subr.bf16.mxu0 0
  %10854 = vmatpush1.bf16.msra.mxu0 0
  %10855 = vmatprep.subr.bf16.mxu0 0
  %10856 = vmatpush1.bf16.msra.mxu0 0
  %10857 = vmatprep.subr.bf16.mxu0 0
  %10858 = vmatpush1.bf16.msra.mxu0 0
  %10859 = vmatprep.subr.bf16.mxu0 0
  %10860 = vmatpush1.bf16.msra.mxu0 %v10805
  %10861 = vmatprep.subr.bf16.mxu0 0
  %10862 = vmatpush1.bf16.msra.mxu0 %v10804
  %10863 = vmatprep.subr.bf16.mxu0 0
  %10864 = vmatpush2.bf16.msra.mxu0 0
  %10865 = vmatprep.subr.bf16.mxu0 0
  %10866 = vmatpush2.bf16.msra.mxu0 0
  %10867 = vmatprep.subr.bf16.mxu0 0
  %10868 = vmatpush2.bf16.msra.mxu0 0
  %10869 = vmatprep.subr.bf16.mxu0 0
  %10870 = vmatpush2.bf16.msra.mxu0 0
  %10871 = vmatprep.subr.bf16.mxu0 0
  %10872 = vmatpush2.bf16.msra.mxu0 0
  %10873 = vmatprep.subr.bf16.mxu0 0
  %10874 = vmatpush2.bf16.msra.mxu0 0
  %10875 = vmatprep.subr.bf16.mxu0 0
  %10876 = vmatpush2.bf16.msra.mxu0 0
  %10877 = vmatprep.subr.bf16.mxu0 0
  %10878 = vmatpush2.bf16.msra.mxu0 0
  %10879 = vmatprep.mubr.bf16.mxu0 0
  %10880 = vmatmul.mubr.bf16.gmra.mxu0 %v10836
  %v10881 = vpop.f32.mrf.mxu0
  %v10882 = vadd.f32 0.0, %v10881
  %v10883 = vpop.f32.mrf.mxu0
  %v10884 = vpop.f32.mrf.mxu0
  %v10885 = vadd.f32 0.0, %v10884
  %v10886 = vpop.f32.mrf.mxu0
  %10887 = vmatprep.mubr.bf16.mxu0 0
  %10888 = vmatmul.mubr.bf16.gmra.mxu0 %v10839
  %v10889 = vpop.f32.mrf.mxu0
  %v10890 = vadd.f32 0.0, %v10889
  %v10891 = vpop.f32.mrf.mxu0
  %v10892 = vpop.f32.mrf.mxu0
  %v10893 = vadd.f32 0.0, %v10892
  %v10894 = vpop.f32.mrf.mxu0
  %10895 = vmatprep.mubr.bf16.mxu0 0
  %10896 = vmatmul.mubr.bf16.gmra.mxu0 %v10842
  %v10897 = vpop.f32.mrf.mxu0
  %v10898 = vadd.f32 0.0, %v10897
  %v10899 = vpop.f32.mrf.mxu0
  %v10900 = vpop.f32.mrf.mxu0
  %v10901 = vadd.f32 0.0, %v10900
  %v10902 = vpop.f32.mrf.mxu0
  %10903 = vmatprep.mubr.bf16.mxu0 0
  %10904 = vmatmul.mubr.bf16.gmra.mxu0 %v10845
  %v10905 = vpop.f32.mrf.mxu0
  %v10906 = vadd.f32 0.0, %v10905
  %v10907 = vpop.f32.mrf.mxu0
  %v10908 = vpop.f32.mrf.mxu0
  %v10909 = vadd.f32 0.0, %v10908
  %v10910 = vpop.f32.mrf.mxu0
  %10911 = vdwg.mxu0
  %v10912 = vadd.f32 %v10730, %v10882
  %v10913 = vadd.f32 %v10731, %v10885
  %v10914 = vadd.f32 %v10732, %v10890
  %v10915 = vadd.f32 %v10733, %v10893
  %v10916 = vadd.f32 %v10734, %v10898
  %v10917 = vadd.f32 %v10735, %v10901
  %v10918 = vadd.f32 %v10736, %v10906
  %v10919 = vadd.f32 %v10737, %v10909
  %s10920 = scalar_lea.vmem %s13, 112
  %v10921 = vld [vmem:[%s10920] sm:$0xf]
  %v10922 = vld [vmem:[%s10920 + $0x4] sm:$0xf]
  %v10923 = vld [vmem:[%s10920 + $0x8] sm:$0xf]
  %v10924 = vld [vmem:[%s10920 + $0xc] sm:$0xf]
  %v10929 = vunpack.c.l.b16 %v10921
  %v10930 = vunpack.c.l.b16 %v10922
  %v10931 = vunpack.c.l.b16 %v10923
  %v10932 = vunpack.c.l.b16 %v10924
  %v10933 = vpack.c.b16 %v10930, %v10929
  %v10934 = vpack.c.b16 %v10932, %v10931
  %10937 = vmatprep.subr.bf16.mxu0 0
  %10938 = vmatpush1.bf16.msra.mxu0 0
  %10939 = vmatprep.subr.bf16.mxu0 0
  %10940 = vmatpush1.bf16.msra.mxu0 0
  %10941 = vmatprep.subr.bf16.mxu0 0
  %10942 = vmatpush1.bf16.msra.mxu0 0
  %10943 = vmatprep.subr.bf16.mxu0 0
  %10944 = vmatpush1.bf16.msra.mxu0 0
  %10945 = vmatprep.subr.bf16.mxu0 0
  %10946 = vmatpush1.bf16.msra.mxu0 0
  %10947 = vmatprep.subr.bf16.mxu0 0
  %10948 = vmatpush1.bf16.msra.mxu0 0
  %10949 = vmatprep.subr.bf16.mxu0 0
  %10950 = vmatpush1.bf16.msra.mxu0 %v10934
  %10951 = vmatprep.subr.bf16.mxu0 0
  %10952 = vmatpush1.bf16.msra.mxu0 %v10933
  %10953 = vmatprep.subr.bf16.mxu0 0
  %10954 = vmatpush2.bf16.msra.mxu0 0
  %10955 = vmatprep.subr.bf16.mxu0 0
  %10956 = vmatpush2.bf16.msra.mxu0 0
  %10957 = vmatprep.subr.bf16.mxu0 0
  %10958 = vmatpush2.bf16.msra.mxu0 0
  %10959 = vmatprep.subr.bf16.mxu0 0
  %10960 = vmatpush2.bf16.msra.mxu0 0
  %10961 = vmatprep.subr.bf16.mxu0 0
  %10962 = vmatpush2.bf16.msra.mxu0 0
  %10963 = vmatprep.subr.bf16.mxu0 0
  %10964 = vmatpush2.bf16.msra.mxu0 0
  %10965 = vmatprep.subr.bf16.mxu0 0
  %10966 = vmatpush2.bf16.msra.mxu0 0
  %10967 = vmatprep.subr.bf16.mxu0 0
  %10968 = vmatpush2.bf16.msra.mxu0 0
  %10969 = vmatprep.mubr.bf16.mxu0 0
  %10970 = vmatmul.mubr.bf16.gmra.mxu0 %v9675
  %v10971 = vpop.f32.mrf.mxu0
  %v10972 = vadd.f32 0.0, %v10971
  %v10973 = vpop.f32.mrf.mxu0
  %v10974 = vpop.f32.mrf.mxu0
  %v10975 = vadd.f32 0.0, %v10974
  %v10976 = vpop.f32.mrf.mxu0
  %10977 = vmatprep.mubr.bf16.mxu0 0
  %10978 = vmatmul.mubr.bf16.gmra.mxu0 %v9678
  %v10979 = vpop.f32.mrf.mxu0
  %v10980 = vadd.f32 0.0, %v10979
  %v10981 = vpop.f32.mrf.mxu0
  %v10982 = vpop.f32.mrf.mxu0
  %v10983 = vadd.f32 0.0, %v10982
  %v10984 = vpop.f32.mrf.mxu0
  %10985 = vdwg.mxu0
  %v10986 = vpack.c.bf16 %v10975, %v10972
  %v10987 = vpack.c.bf16 %v10983, %v10980
  %s10988 = scalar_lea.vmem %s12, 224
  %v10989 = vld [vmem:[%s10988] sm:$0xf]
  %v10990 = vld [vmem:[%s10988 + $0x4] sm:$0xf]
  %v10991 = vld [vmem:[%s10988 + $0x8] sm:$0xf]
  %v10992 = vld [vmem:[%s10988 + $0xc] sm:$0xf]
  %v10993 = vld [vmem:[%s10988 + $0x10] sm:$0xf]
  %v10994 = vld [vmem:[%s10988 + $0x14] sm:$0xf]
  %v10995 = vld [vmem:[%s10988 + $0x18] sm:$0xf]
  %v10996 = vld [vmem:[%s10988 + $0x1c] sm:$0xf]
  %v11005 = vunpack.c.l.b16 %v10989
  %v11006 = vunpack.c.l.b16 %v10990
  %v11007 = vunpack.c.l.b16 %v10991
  %v11008 = vunpack.c.l.b16 %v10992
  %v11009 = vunpack.c.l.b16 %v10993
  %v11010 = vunpack.c.l.b16 %v10994
  %v11011 = vunpack.c.l.b16 %v10995
  %v11012 = vunpack.c.l.b16 %v10996
  %v11013 = vpack.c.b16 %v11006, %v11005
  %v11014 = vpack.c.b16 %v11008, %v11007
  %v11015 = vpack.c.b16 %v11010, %v11009
  %v11016 = vpack.c.b16 %v11012, %v11011
  %v11018 = vsel %vm9543, %v11013, 0
  %v11021 = vsel %vm9543, %v11014, 0
  %v11024 = vsel %vm9543, %v11015, 0
  %v11027 = vsel %vm9543, %v11016, 0
  %11029 = vmatprep.subr.bf16.mxu0 0
  %11030 = vmatpush1.bf16.msra.mxu0 0
  %11031 = vmatprep.subr.bf16.mxu0 0
  %11032 = vmatpush1.bf16.msra.mxu0 0
  %11033 = vmatprep.subr.bf16.mxu0 0
  %11034 = vmatpush1.bf16.msra.mxu0 0
  %11035 = vmatprep.subr.bf16.mxu0 0
  %11036 = vmatpush1.bf16.msra.mxu0 0
  %11037 = vmatprep.subr.bf16.mxu0 0
  %11038 = vmatpush1.bf16.msra.mxu0 0
  %11039 = vmatprep.subr.bf16.mxu0 0
  %11040 = vmatpush1.bf16.msra.mxu0 0
  %11041 = vmatprep.subr.bf16.mxu0 0
  %11042 = vmatpush1.bf16.msra.mxu0 %v10987
  %11043 = vmatprep.subr.bf16.mxu0 0
  %11044 = vmatpush1.bf16.msra.mxu0 %v10986
  %11045 = vmatprep.subr.bf16.mxu0 0
  %11046 = vmatpush2.bf16.msra.mxu0 0
  %11047 = vmatprep.subr.bf16.mxu0 0
  %11048 = vmatpush2.bf16.msra.mxu0 0
  %11049 = vmatprep.subr.bf16.mxu0 0
  %11050 = vmatpush2.bf16.msra.mxu0 0
  %11051 = vmatprep.subr.bf16.mxu0 0
  %11052 = vmatpush2.bf16.msra.mxu0 0
  %11053 = vmatprep.subr.bf16.mxu0 0
  %11054 = vmatpush2.bf16.msra.mxu0 0
  %11055 = vmatprep.subr.bf16.mxu0 0
  %11056 = vmatpush2.bf16.msra.mxu0 0
  %11057 = vmatprep.subr.bf16.mxu0 0
  %11058 = vmatpush2.bf16.msra.mxu0 0
  %11059 = vmatprep.subr.bf16.mxu0 0
  %11060 = vmatpush2.bf16.msra.mxu0 0
  %11061 = vmatprep.mubr.bf16.mxu0 0
  %11062 = vmatmul.mubr.bf16.gmra.mxu0 %v11018
  %v11063 = vpop.f32.mrf.mxu0
  %v11064 = vadd.f32 0.0, %v11063
  %v11065 = vpop.f32.mrf.mxu0
  %v11066 = vpop.f32.mrf.mxu0
  %v11067 = vadd.f32 0.0, %v11066
  %v11068 = vpop.f32.mrf.mxu0
  %11069 = vmatprep.mubr.bf16.mxu0 0
  %11070 = vmatmul.mubr.bf16.gmra.mxu0 %v11021
  %v11071 = vpop.f32.mrf.mxu0
  %v11072 = vadd.f32 0.0, %v11071
  %v11073 = vpop.f32.mrf.mxu0
  %v11074 = vpop.f32.mrf.mxu0
  %v11075 = vadd.f32 0.0, %v11074
  %v11076 = vpop.f32.mrf.mxu0
  %11077 = vmatprep.mubr.bf16.mxu0 0
  %11078 = vmatmul.mubr.bf16.gmra.mxu0 %v11024
  %v11079 = vpop.f32.mrf.mxu0
  %v11080 = vadd.f32 0.0, %v11079
  %v11081 = vpop.f32.mrf.mxu0
  %v11082 = vpop.f32.mrf.mxu0
  %v11083 = vadd.f32 0.0, %v11082
  %v11084 = vpop.f32.mrf.mxu0
  %11085 = vmatprep.mubr.bf16.mxu0 0
  %11086 = vmatmul.mubr.bf16.gmra.mxu0 %v11027
  %v11087 = vpop.f32.mrf.mxu0
  %v11088 = vadd.f32 0.0, %v11087
  %v11089 = vpop.f32.mrf.mxu0
  %v11090 = vpop.f32.mrf.mxu0
  %v11091 = vadd.f32 0.0, %v11090
  %v11092 = vpop.f32.mrf.mxu0
  %11093 = vdwg.mxu0
  %v11094 = vadd.f32 %v10912, %v11064
  %v11095 = vadd.f32 %v10913, %v11067
  %v11096 = vadd.f32 %v10914, %v11072
  %v11097 = vadd.f32 %v10915, %v11075
  %v11098 = vadd.f32 %v10916, %v11080
  %v11099 = vadd.f32 %v10917, %v11083
  %v11100 = vadd.f32 %v10918, %v11088
  %v11101 = vadd.f32 %v10919, %v11091
  %s11102 = scalar_lea.vmem %s13, 128
  %v11103 = vld [vmem:[%s11102] sm:$0xf]
  %v11104 = vld [vmem:[%s11102 + $0x4] sm:$0xf]
  %v11105 = vld [vmem:[%s11102 + $0x8] sm:$0xf]
  %v11106 = vld [vmem:[%s11102 + $0xc] sm:$0xf]
  %v11111 = vunpack.c.l.b16 %v11103
  %v11112 = vunpack.c.l.b16 %v11104
  %v11113 = vunpack.c.l.b16 %v11105
  %v11114 = vunpack.c.l.b16 %v11106
  %v11115 = vpack.c.b16 %v11112, %v11111
  %v11116 = vpack.c.b16 %v11114, %v11113
  %11119 = vmatprep.subr.bf16.mxu0 0
  %11120 = vmatpush1.bf16.msra.mxu0 0
  %11121 = vmatprep.subr.bf16.mxu0 0
  %11122 = vmatpush1.bf16.msra.mxu0 0
  %11123 = vmatprep.subr.bf16.mxu0 0
  %11124 = vmatpush1.bf16.msra.mxu0 0
  %11125 = vmatprep.subr.bf16.mxu0 0
  %11126 = vmatpush1.bf16.msra.mxu0 0
  %11127 = vmatprep.subr.bf16.mxu0 0
  %11128 = vmatpush1.bf16.msra.mxu0 0
  %11129 = vmatprep.subr.bf16.mxu0 0
  %11130 = vmatpush1.bf16.msra.mxu0 0
  %11131 = vmatprep.subr.bf16.mxu0 0
  %11132 = vmatpush1.bf16.msra.mxu0 %v11116
  %11133 = vmatprep.subr.bf16.mxu0 0
  %11134 = vmatpush1.bf16.msra.mxu0 %v11115
  %11135 = vmatprep.subr.bf16.mxu0 0
  %11136 = vmatpush2.bf16.msra.mxu0 0
  %11137 = vmatprep.subr.bf16.mxu0 0
  %11138 = vmatpush2.bf16.msra.mxu0 0
  %11139 = vmatprep.subr.bf16.mxu0 0
  %11140 = vmatpush2.bf16.msra.mxu0 0
  %11141 = vmatprep.subr.bf16.mxu0 0
  %11142 = vmatpush2.bf16.msra.mxu0 0
  %11143 = vmatprep.subr.bf16.mxu0 0
  %11144 = vmatpush2.bf16.msra.mxu0 0
  %11145 = vmatprep.subr.bf16.mxu0 0
  %11146 = vmatpush2.bf16.msra.mxu0 0
  %11147 = vmatprep.subr.bf16.mxu0 0
  %11148 = vmatpush2.bf16.msra.mxu0 0
  %11149 = vmatprep.subr.bf16.mxu0 0
  %11150 = vmatpush2.bf16.msra.mxu0 0
  %11151 = vmatprep.mubr.bf16.mxu0 0
  %11152 = vmatmul.mubr.bf16.gmra.mxu0 %v9675
  %v11153 = vpop.f32.mrf.mxu0
  %v11154 = vadd.f32 0.0, %v11153
  %v11155 = vpop.f32.mrf.mxu0
  %v11156 = vpop.f32.mrf.mxu0
  %v11157 = vadd.f32 0.0, %v11156
  %v11158 = vpop.f32.mrf.mxu0
  %11159 = vmatprep.mubr.bf16.mxu0 0
  %11160 = vmatmul.mubr.bf16.gmra.mxu0 %v9678
  %v11161 = vpop.f32.mrf.mxu0
  %v11162 = vadd.f32 0.0, %v11161
  %v11163 = vpop.f32.mrf.mxu0
  %v11164 = vpop.f32.mrf.mxu0
  %v11165 = vadd.f32 0.0, %v11164
  %v11166 = vpop.f32.mrf.mxu0
  %11167 = vdwg.mxu0
  %v11168 = vpack.c.bf16 %v11157, %v11154
  %v11169 = vpack.c.bf16 %v11165, %v11162
  %s11170 = scalar_lea.vmem %s12, 256
  %v11171 = vld [vmem:[%s11170] sm:$0xf]
  %v11172 = vld [vmem:[%s11170 + $0x4] sm:$0xf]
  %v11173 = vld [vmem:[%s11170 + $0x8] sm:$0xf]
  %v11174 = vld [vmem:[%s11170 + $0xc] sm:$0xf]
  %v11175 = vld [vmem:[%s11170 + $0x10] sm:$0xf]
  %v11176 = vld [vmem:[%s11170 + $0x14] sm:$0xf]
  %v11177 = vld [vmem:[%s11170 + $0x18] sm:$0xf]
  %v11178 = vld [vmem:[%s11170 + $0x1c] sm:$0xf]
  %v11187 = vunpack.c.l.b16 %v11171
  %v11188 = vunpack.c.l.b16 %v11172
  %v11189 = vunpack.c.l.b16 %v11173
  %v11190 = vunpack.c.l.b16 %v11174
  %v11191 = vunpack.c.l.b16 %v11175
  %v11192 = vunpack.c.l.b16 %v11176
  %v11193 = vunpack.c.l.b16 %v11177
  %v11194 = vunpack.c.l.b16 %v11178
  %v11195 = vpack.c.b16 %v11188, %v11187
  %v11196 = vpack.c.b16 %v11190, %v11189
  %v11197 = vpack.c.b16 %v11192, %v11191
  %v11198 = vpack.c.b16 %v11194, %v11193
  %v11200 = vsel %vm9543, %v11195, 0
  %v11203 = vsel %vm9543, %v11196, 0
  %v11206 = vsel %vm9543, %v11197, 0
  %v11209 = vsel %vm9543, %v11198, 0
  %11211 = vmatprep.subr.bf16.mxu0 0
  %11212 = vmatpush1.bf16.msra.mxu0 0
  %11213 = vmatprep.subr.bf16.mxu0 0
  %11214 = vmatpush1.bf16.msra.mxu0 0
  %11215 = vmatprep.subr.bf16.mxu0 0
  %11216 = vmatpush1.bf16.msra.mxu0 0
  %11217 = vmatprep.subr.bf16.mxu0 0
  %11218 = vmatpush1.bf16.msra.mxu0 0
  %11219 = vmatprep.subr.bf16.mxu0 0
  %11220 = vmatpush1.bf16.msra.mxu0 0
  %11221 = vmatprep.subr.bf16.mxu0 0
  %11222 = vmatpush1.bf16.msra.mxu0 0
  %11223 = vmatprep.subr.bf16.mxu0 0
  %11224 = vmatpush1.bf16.msra.mxu0 %v11169
  %11225 = vmatprep.subr.bf16.mxu0 0
  %11226 = vmatpush1.bf16.msra.mxu0 %v11168
  %11227 = vmatprep.subr.bf16.mxu0 0
  %11228 = vmatpush2.bf16.msra.mxu0 0
  %11229 = vmatprep.subr.bf16.mxu0 0
  %11230 = vmatpush2.bf16.msra.mxu0 0
  %11231 = vmatprep.subr.bf16.mxu0 0
  %11232 = vmatpush2.bf16.msra.mxu0 0
  %11233 = vmatprep.subr.bf16.mxu0 0
  %11234 = vmatpush2.bf16.msra.mxu0 0
  %11235 = vmatprep.subr.bf16.mxu0 0
  %11236 = vmatpush2.bf16.msra.mxu0 0
  %11237 = vmatprep.subr.bf16.mxu0 0
  %11238 = vmatpush2.bf16.msra.mxu0 0
  %11239 = vmatprep.subr.bf16.mxu0 0
  %11240 = vmatpush2.bf16.msra.mxu0 0
  %11241 = vmatprep.subr.bf16.mxu0 0
  %11242 = vmatpush2.bf16.msra.mxu0 0
  %11243 = vmatprep.mubr.bf16.mxu0 0
  %11244 = vmatmul.mubr.bf16.gmra.mxu0 %v11200
  %v11245 = vpop.f32.mrf.mxu0
  %v11246 = vadd.f32 0.0, %v11245
  %v11247 = vpop.f32.mrf.mxu0
  %v11248 = vpop.f32.mrf.mxu0
  %v11249 = vadd.f32 0.0, %v11248
  %v11250 = vpop.f32.mrf.mxu0
  %11251 = vmatprep.mubr.bf16.mxu0 0
  %11252 = vmatmul.mubr.bf16.gmra.mxu0 %v11203
  %v11253 = vpop.f32.mrf.mxu0
  %v11254 = vadd.f32 0.0, %v11253
  %v11255 = vpop.f32.mrf.mxu0
  %v11256 = vpop.f32.mrf.mxu0
  %v11257 = vadd.f32 0.0, %v11256
  %v11258 = vpop.f32.mrf.mxu0
  %11259 = vmatprep.mubr.bf16.mxu0 0
  %11260 = vmatmul.mubr.bf16.gmra.mxu0 %v11206
  %v11261 = vpop.f32.mrf.mxu0
  %v11262 = vadd.f32 0.0, %v11261
  %v11263 = vpop.f32.mrf.mxu0
  %v11264 = vpop.f32.mrf.mxu0
  %v11265 = vadd.f32 0.0, %v11264
  %v11266 = vpop.f32.mrf.mxu0
  %11267 = vmatprep.mubr.bf16.mxu0 0
  %11268 = vmatmul.mubr.bf16.gmra.mxu0 %v11209
  %v11269 = vpop.f32.mrf.mxu0
  %v11270 = vadd.f32 0.0, %v11269
  %v11271 = vpop.f32.mrf.mxu0
  %v11272 = vpop.f32.mrf.mxu0
  %v11273 = vadd.f32 0.0, %v11272
  %v11274 = vpop.f32.mrf.mxu0
  %11275 = vdwg.mxu0
  %v11276 = vadd.f32 %v11094, %v11246
  %v11277 = vadd.f32 %v11095, %v11249
  %v11278 = vadd.f32 %v11096, %v11254
  %v11279 = vadd.f32 %v11097, %v11257
  %v11280 = vadd.f32 %v11098, %v11262
  %v11281 = vadd.f32 %v11099, %v11265
  %v11282 = vadd.f32 %v11100, %v11270
  %v11283 = vadd.f32 %v11101, %v11273
  %v11284 = vld [vmem:[%s14] sm:$0xff]
  %v11285 = vld [vmem:[%s14 + $0x8] sm:$0xff]
  %v11286 = vld [vmem:[%s14 + $0x10] sm:$0xff]
  %v11287 = vld [vmem:[%s14 + $0x18] sm:$0xff]
  %v11288 = vld [vmem:[%s14 + $0x20] sm:$0xff]
  %v11289 = vld [vmem:[%s14 + $0x28] sm:$0xff]
  %v11290 = vld [vmem:[%s14 + $0x30] sm:$0xff]
  %v11291 = vld [vmem:[%s14 + $0x38] sm:$0xff]
  %v11292 = vld [vmem:[%s15] sm:$0xff]
  %v11293 = vld [vmem:[%s15 + $0x8] sm:$0xff]
  %v11294 = vld [vmem:[%s15 + $0x10] sm:$0xff]
  %v11295 = vld [vmem:[%s15 + $0x18] sm:$0xff]
  %v11296 = vld [vmem:[%s15 + $0x20] sm:$0xff]
  %v11297 = vld [vmem:[%s15 + $0x28] sm:$0xff]
  %v11298 = vld [vmem:[%s15 + $0x30] sm:$0xff]
  %v11299 = vld [vmem:[%s15 + $0x38] sm:$0xff]
  %v11300 = vsel %vm960, %v11276, 0.0
  %11301 = vadd.xlane.f32.xlu0 %v11300
  %v11302 = vpop.xlane.xlu0 %11301
  %v11303 = vsel %vm960, %v11277, 0.0
  %11304 = vadd.xlane.f32.xlu0 %v11303
  %v11305 = vpop.xlane.xlu0 %11304
  %v11306 = vsel %vm960, %v11278, 0.0
  %11307 = vadd.xlane.f32.xlu0 %v11306
  %v11308 = vpop.xlane.xlu0 %11307
  %v11309 = vsel %vm960, %v11279, 0.0
  %11310 = vadd.xlane.f32.xlu0 %v11309
  %v11311 = vpop.xlane.xlu0 %11310
  %v11312 = vsel %vm960, %v11280, 0.0
  %11313 = vadd.xlane.f32.xlu0 %v11312
  %v11314 = vpop.xlane.xlu0 %11313
  %v11315 = vsel %vm960, %v11281, 0.0
  %11316 = vadd.xlane.f32.xlu0 %v11315
  %v11317 = vpop.xlane.xlu0 %11316
  %v11318 = vsel %vm960, %v11282, 0.0
  %11319 = vadd.xlane.f32.xlu0 %v11318
  %v11320 = vpop.xlane.xlu0 %11319
  %v11321 = vsel %vm960, %v11283, 0.0
  %11322 = vadd.xlane.f32.xlu0 %v11321
  %v11323 = vpop.xlane.xlu0 %11322
  %v11324 = vmul.f32 %v11302, 0.125
  %v11325 = vmul.f32 %v11305, 0.125
  %v11326 = vmul.f32 %v11308, 0.125
  %v11327 = vmul.f32 %v11311, 0.125
  %v11328 = vmul.f32 %v11314, 0.125
  %v11329 = vmul.f32 %v11317, 0.125
  %v11330 = vmul.f32 %v11320, 0.125
  %v11331 = vmul.f32 %v11323, 0.125
  %v11332 = vsub.f32 %v11276, %v11324
  %v11333 = vsub.f32 %v11277, %v11325
  %v11334 = vsub.f32 %v11278, %v11326
  %v11335 = vsub.f32 %v11279, %v11327
  %v11336 = vsub.f32 %v11280, %v11328
  %v11337 = vsub.f32 %v11281, %v11329
  %v11338 = vsub.f32 %v11282, %v11330
  %v11339 = vsub.f32 %v11283, %v11331
  %v11340 = vmul.f32 %v11332, %v11332
  %v11341 = vmul.f32 %v11333, %v11333
  %v11342 = vmul.f32 %v11334, %v11334
  %v11343 = vmul.f32 %v11335, %v11335
  %v11344 = vmul.f32 %v11336, %v11336
  %v11345 = vmul.f32 %v11337, %v11337
  %v11346 = vmul.f32 %v11338, %v11338
  %v11347 = vmul.f32 %v11339, %v11339
  %v11348 = vsel %vm960, %v11340, 0.0
  %11349 = vadd.xlane.f32.xlu0 %v11348
  %v11350 = vpop.xlane.xlu0 %11349
  %v11351 = vsel %vm960, %v11341, 0.0
  %11352 = vadd.xlane.f32.xlu0 %v11351
  %v11353 = vpop.xlane.xlu0 %11352
  %v11354 = vsel %vm960, %v11342, 0.0
  %11355 = vadd.xlane.f32.xlu0 %v11354
  %v11356 = vpop.xlane.xlu0 %11355
  %v11357 = vsel %vm960, %v11343, 0.0
  %11358 = vadd.xlane.f32.xlu0 %v11357
  %v11359 = vpop.xlane.xlu0 %11358
  %v11360 = vsel %vm960, %v11344, 0.0
  %11361 = vadd.xlane.f32.xlu0 %v11360
  %v11362 = vpop.xlane.xlu0 %11361
  %v11363 = vsel %vm960, %v11345, 0.0
  %11364 = vadd.xlane.f32.xlu0 %v11363
  %v11365 = vpop.xlane.xlu0 %11364
  %v11366 = vsel %vm960, %v11346, 0.0
  %11367 = vadd.xlane.f32.xlu0 %v11366
  %v11368 = vpop.xlane.xlu0 %11367
  %v11369 = vsel %vm960, %v11347, 0.0
  %11370 = vadd.xlane.f32.xlu0 %v11369
  %v11371 = vpop.xlane.xlu0 %11370
  %v11372 = vmul.f32 %v11350, 0.125
  %v11373 = vmul.f32 %v11353, 0.125
  %v11374 = vmul.f32 %v11356, 0.125
  %v11375 = vmul.f32 %v11359, 0.125
  %v11376 = vmul.f32 %v11362, 0.125
  %v11377 = vmul.f32 %v11365, 0.125
  %v11378 = vmul.f32 %v11368, 0.125
  %v11379 = vmul.f32 %v11371, 0.125
  %v11380 = vadd.f32 %v11372, 1e-05
  %v11381 = vadd.f32 %v11373, 1e-05
  %v11382 = vadd.f32 %v11374, 1e-05
  %v11383 = vadd.f32 %v11375, 1e-05
  %v11384 = vadd.f32 %v11376, 1e-05
  %v11385 = vadd.f32 %v11377, 1e-05
  %v11386 = vadd.f32 %v11378, 1e-05
  %v11387 = vadd.f32 %v11379, 1e-05
  %v11388 = vrsqrt.pop %v11380
  %v11389 = vrsqrt.pop %v11381
  %v11390 = vrsqrt.pop %v11382
  %v11391 = vrsqrt.pop %v11383
  %v11392 = vrsqrt.pop %v11384
  %v11393 = vrsqrt.pop %v11385
  %v11394 = vrsqrt.pop %v11386
  %v11395 = vrsqrt.pop %v11387
  %v11396 = vmul.f32 %v11284, %v11388
  %v11397 = vmul.f32 %v11285, %v11389
  %v11398 = vmul.f32 %v11286, %v11390
  %v11399 = vmul.f32 %v11287, %v11391
  %v11400 = vmul.f32 %v11288, %v11392
  %v11401 = vmul.f32 %v11289, %v11393
  %v11402 = vmul.f32 %v11290, %v11394
  %v11403 = vmul.f32 %v11291, %v11395
  %11405 = vset.pattern.permute.xlu0 0
  %11406 = vperm.xlu0 %11405, %v11396
  %v11407 = vpop.permute.xlu0 %11406
  %11410 = vset.pattern.permute.xlu0 0
  %11411 = vperm.xlu0 %11410, %v11397
  %v11412 = vpop.permute.xlu0 %11411
  %11415 = vset.pattern.permute.xlu0 0
  %11416 = vperm.xlu0 %11415, %v11398
  %v11417 = vpop.permute.xlu0 %11416
  %11420 = vset.pattern.permute.xlu0 0
  %11421 = vperm.xlu0 %11420, %v11399
  %v11422 = vpop.permute.xlu0 %11421
  %11425 = vset.pattern.permute.xlu0 0
  %11426 = vperm.xlu0 %11425, %v11400
  %v11427 = vpop.permute.xlu0 %11426
  %11430 = vset.pattern.permute.xlu0 0
  %11431 = vperm.xlu0 %11430, %v11401
  %v11432 = vpop.permute.xlu0 %11431
  %11435 = vset.pattern.permute.xlu0 0
  %11436 = vperm.xlu0 %11435, %v11402
  %v11437 = vpop.permute.xlu0 %11436
  %11440 = vset.pattern.permute.xlu0 0
  %11441 = vperm.xlu0 %11440, %v11403
  %v11442 = vpop.permute.xlu0 %11441
  %v11444 = vmul.f32 %v11407, %v11332
  %v11445 = vmul.f32 %v11412, %v11333
  %v11446 = vmul.f32 %v11417, %v11334
  %v11447 = vmul.f32 %v11422, %v11335
  %v11448 = vmul.f32 %v11427, %v11336
  %v11449 = vmul.f32 %v11432, %v11337
  %v11450 = vmul.f32 %v11437, %v11338
  %v11451 = vmul.f32 %v11442, %v11339
  %11453 = vset.pattern.permute.xlu0 0
  %11454 = vperm.xlu0 %11453, %v11292
  %v11455 = vpop.permute.xlu0 %11454
  %11458 = vset.pattern.permute.xlu0 0
  %11459 = vperm.xlu0 %11458, %v11293
  %v11460 = vpop.permute.xlu0 %11459
  %11463 = vset.pattern.permute.xlu0 0
  %11464 = vperm.xlu0 %11463, %v11294
  %v11465 = vpop.permute.xlu0 %11464
  %11468 = vset.pattern.permute.xlu0 0
  %11469 = vperm.xlu0 %11468, %v11295
  %v11470 = vpop.permute.xlu0 %11469
  %11473 = vset.pattern.permute.xlu0 0
  %11474 = vperm.xlu0 %11473, %v11296
  %v11475 = vpop.permute.xlu0 %11474
  %11478 = vset.pattern.permute.xlu0 0
  %11479 = vperm.xlu0 %11478, %v11297
  %v11480 = vpop.permute.xlu0 %11479
  %11483 = vset.pattern.permute.xlu0 0
  %11484 = vperm.xlu0 %11483, %v11298
  %v11485 = vpop.permute.xlu0 %11484
  %11488 = vset.pattern.permute.xlu0 0
  %11489 = vperm.xlu0 %11488, %v11299
  %v11490 = vpop.permute.xlu0 %11489
  %v11492 = vadd.f32 %v11444, %v11455
  %v11493 = vadd.f32 %v11445, %v11460
  %v11494 = vadd.f32 %v11446, %v11465
  %v11495 = vadd.f32 %v11447, %v11470
  %v11496 = vadd.f32 %v11448, %v11475
  %v11497 = vadd.f32 %v11449, %v11480
  %v11498 = vadd.f32 %v11450, %v11485
  %v11499 = vadd.f32 %v11451, %v11490
  %vm11500 = vcmp.ge.f32.partialorder %v11492, 0.0
  %vm11501 = vcmp.ge.f32.partialorder %v11493, 0.0
  %vm11502 = vcmp.ge.f32.partialorder %v11494, 0.0
  %vm11503 = vcmp.ge.f32.partialorder %v11495, 0.0
  %vm11504 = vcmp.ge.f32.partialorder %v11496, 0.0
  %vm11505 = vcmp.ge.f32.partialorder %v11497, 0.0
  %vm11506 = vcmp.ge.f32.partialorder %v11498, 0.0
  %vm11507 = vcmp.ge.f32.partialorder %v11499, 0.0
  %v11508 = vmul.f32 %v11492, 0.2
  %v11509 = vmul.f32 %v11493, 0.2
  %v11510 = vmul.f32 %v11494, 0.2
  %v11511 = vmul.f32 %v11495, 0.2
  %v11512 = vmul.f32 %v11496, 0.2
  %v11513 = vmul.f32 %v11497, 0.2
  %v11514 = vmul.f32 %v11498, 0.2
  %v11515 = vmul.f32 %v11499, 0.2
  %v11516 = vsel %vm11500, %v11492, %v11508
  %v11517 = vsel %vm11501, %v11493, %v11509
  %v11518 = vsel %vm11502, %v11494, %v11510
  %v11519 = vsel %vm11503, %v11495, %v11511
  %v11520 = vsel %vm11504, %v11496, %v11512
  %v11521 = vsel %vm11505, %v11497, %v11513
  %v11522 = vsel %vm11506, %v11498, %v11514
  %v11523 = vsel %vm11507, %v11499, %v11515
  %v11524 = vld [vmem:[%s16] sm:$0x1]
  %vm11525 = vcmask 523264
  %v11527 = vsel %vm11525, %v11524, 0
  %11529 = vmatprep.subr.mxu0 0.0
  %11530 = vmatpush1.msra.mxu0 0.0
  %11531 = vmatprep.subr.mxu0 0.0
  %11532 = vmatpush1.msra.mxu0 0.0
  %11533 = vmatprep.subr.mxu0 0.0
  %11534 = vmatpush1.msra.mxu0 0.0
  %11535 = vmatprep.subr.mxu0 0.0
  %11536 = vmatpush1.msra.mxu0 0.0
  %11537 = vmatprep.subr.mxu0 0.0
  %11538 = vmatpush1.msra.mxu0 0.0
  %11539 = vmatprep.subr.mxu0 0.0
  %11540 = vmatpush1.msra.mxu0 0.0
  %11541 = vmatprep.subr.mxu0 0.0
  %11542 = vmatpush1.msra.mxu0 0.0
  %11543 = vmatprep.subr.mxu0 0.0
  %11544 = vmatpush1.msra.mxu0 0.0
  %11545 = vmatprep.subr.mxu0 0.0
  %11546 = vmatpush1.msra.mxu0 %v11523
  %11547 = vmatprep.subr.mxu0 0.0
  %11548 = vmatpush1.msra.mxu0 %v11522
  %11549 = vmatprep.subr.mxu0 0.0
  %11550 = vmatpush1.msra.mxu0 %v11521
  %11551 = vmatprep.subr.mxu0 0.0
  %11552 = vmatpush1.msra.mxu0 %v11520
  %11553 = vmatprep.subr.mxu0 0.0
  %11554 = vmatpush1.msra.mxu0 %v11519
  %11555 = vmatprep.subr.mxu0 0.0
  %11556 = vmatpush1.msra.mxu0 %v11518
  %11557 = vmatprep.subr.mxu0 0.0
  %11558 = vmatpush1.msra.mxu0 %v11517
  %11559 = vmatprep.subr.mxu0 0.0
  %11560 = vmatpush1.msra.mxu0 %v11516
  %11561 = vmatprep.subr.mxu0 0.0
  %11562 = vmatpush2.msra.mxu0 0.0
  %11563 = vmatprep.subr.mxu0 0.0
  %11564 = vmatpush2.msra.mxu0 0.0
  %11565 = vmatprep.subr.mxu0 0.0
  %11566 = vmatpush2.msra.mxu0 0.0
  %11567 = vmatprep.subr.mxu0 0.0
  %11568 = vmatpush2.msra.mxu0 0.0
  %11569 = vmatprep.subr.mxu0 0.0
  %11570 = vmatpush2.msra.mxu0 0.0
  %11571 = vmatprep.subr.mxu0 0.0
  %11572 = vmatpush2.msra.mxu0 0.0
  %11573 = vmatprep.subr.mxu0 0.0
  %11574 = vmatpush2.msra.mxu0 0.0
  %11575 = vmatprep.subr.mxu0 0.0
  %11576 = vmatpush2.msra.mxu0 0.0
  %11577 = vmatprep.subr.mxu0 0.0
  %11578 = vmatpush2.msra.mxu0 0.0
  %11579 = vmatprep.subr.mxu0 0.0
  %11580 = vmatpush2.msra.mxu0 0.0
  %11581 = vmatprep.subr.mxu0 0.0
  %11582 = vmatpush2.msra.mxu0 0.0
  %11583 = vmatprep.subr.mxu0 0.0
  %11584 = vmatpush2.msra.mxu0 0.0
  %11585 = vmatprep.subr.mxu0 0.0
  %11586 = vmatpush2.msra.mxu0 0.0
  %11587 = vmatprep.subr.mxu0 0.0
  %11588 = vmatpush2.msra.mxu0 0.0
  %11589 = vmatprep.subr.mxu0 0.0
  %11590 = vmatpush2.msra.mxu0 0.0
  %11591 = vmatprep.subr.mxu0 0.0
  %11592 = vmatpush2.msra.mxu0 0.0
  %11593 = vmatprep.mubr.f32.mxu0 0.0
  %11594 = vmatmul.mubr.f32.gmra.mxu0 %v11527
  %v11595 = vpop.f32.mrf.mxu0
  %v11596 = vadd.f32 0.0, %v11595
  %v11597 = vpop.f32.mrf.mxu0
  %11598 = vdwg.mxu0
  %v11599 = vsub.f32 0.0, %v11596
  %v11600 = vmul.f32 %v11599, 1.442695
  %v11601 = vpow.pop %v11600
  %v11602 = vadd.f32 %v11601, 1.0
  %v11603 = vrcp.pop %v11602
  %v11604 = vmul.f32 1.0, %v11603
  %vm11605 = vcmask 57344
  %11606 = vst.msk [vmem:[%s17] sm:$0x1] %vm11605, %v11604
  // Predicated region
  $region70: #{discriminator_forward.1} parent=0 // pred_check
    _
  $region71: #{discriminator_forward.1} parent=0 // pred_check_branch
    %11608 = sbr.rel (0) target = $region73
  $region72: #{discriminator_forward.1} parent=0 // pred_region
    _
  $region73: #{discriminator_forward.1} parent=0 // pred_fallthru
    _
  // Predicated region
  $region74: #{discriminator_forward.1} parent=0 // pred_check
    _
  $region75: #{discriminator_forward.1} parent=0 // pred_check_branch
    %11610 = sbr.rel (0) target = $region77
  $region76: #{discriminator_forward.1} parent=0 // pred_region
    _
  $region77: #{discriminator_forward.1} parent=0 // pred_fallthru
    _

</llo_original>
